<compile_context>
chip_gen: v5e
topology: v5e:2x2
jax: 0.10.0
libtpu: 0.0.40
codegen_flags: <defaults>
</compile_context>

<pallas_src>
import jax
import jax.numpy as jnp
from jax.experimental import pallas as pl
from jax.experimental.pallas import tpu as pltpu


_VMEM = pl.BlockSpec(memory_space=pltpu.MemorySpace.VMEM)
_LANE = 128


def _round_up(x, m):
    return ((x + m - 1) // m) * m


# ---------------------------------------------------------------------------
# Pallas kernel: out = relu(x @ w + b), whole arrays resident in VMEM.
# x, w bf16 (MXU-native); accumulate f32; bias/ReLU epilogue in f32.
# ---------------------------------------------------------------------------
def _mm_bias_relu_kernel(x_ref, w_ref, b_ref, o_ref):
    acc = jnp.dot(x_ref[...], w_ref[...], preferred_element_type=jnp.float32)
    o_ref[...] = jnp.maximum(acc + b_ref[...], 0.0).astype(o_ref.dtype)


def matmul_bias_relu(x, w, b_row, out_dtype=jnp.bfloat16):
    """x: (M, K) bf16, w: (K, N) bf16, b_row: (1, N) f32 -> (M, N) out_dtype."""
    M, K = x.shape
    N = w.shape[1]
    m_pad = max(8, _round_up(M, 8))            # sublane-aligned M only
    if m_pad != M:
        x = jnp.pad(x, ((0, m_pad - M), (0, 0)))

    cost = pl.CostEstimate(
        flops=2 * m_pad * K * N,
        transcendentals=0,
        bytes_accessed=(m_pad * K + K * N) * 2 + N * 4 + m_pad * N * 2,
    )
    out = pl.pallas_call(
        _mm_bias_relu_kernel,
        out_shape=jax.ShapeDtypeStruct((m_pad, N), out_dtype),
        in_specs=[_VMEM, _VMEM, _VMEM],
        out_specs=_VMEM,
        cost_estimate=cost,
    )(x, w, b_row)
    return out if m_pad == M else out[:M]


# ---------------------------------------------------------------------------
# Pallas kernel: fused conv4 + Flatten + Linear/ReLU + Linear/ReLU + Linear
#
# x is the conv4 im2col patch matrix laid out per batch row as
# (n_pos * K4) columns (spatial-position-major).  The Flatten is folded into
# the per-position loop: acc1 += relu(x_p @ W4 + b4) @ W1[p-block].
# All slices start at multiples of 128 lanes / 8 sublanes.
# ---------------------------------------------------------------------------
def _tail_kernel(x_ref, w4_ref, b4_ref, w1_ref, b1_ref, w2_ref, b2_ref,
                 w3_ref, b3_ref, o_ref):
    m = x_ref.shape[0]
    k4 = w4_ref.shape[0]                 # conv4 im2col K (kh*kw*C)
    n4 = w4_ref.shape[1]                 # conv4 out channels
    n_pos = x_ref.shape[1] // k4         # spatial positions folded into lanes
    n1 = w1_ref.shape[1]

    acc1 = jnp.zeros((m, n1), jnp.float32)
    for p in range(n_pos):               # static, fully unrolled
        xp = x_ref[:, p * k4:(p + 1) * k4]                       # lane-aligned
        hp = jnp.dot(xp, w4_ref[...], preferred_element_type=jnp.float32)
        hp = jnp.maximum(hp + b4_ref[...], 0.0).astype(jnp.bfloat16)
        w1p = w1_ref[p * n4:(p + 1) * n4, :]                     # sublane-aligned
        acc1 += jnp.dot(hp, w1p, preferred_element_type=jnp.float32)

    h1 = jnp.maximum(acc1 + b1_ref[...], 0.0).astype(jnp.bfloat16)
    h2 = jnp.dot(h1, w2_ref[...], preferred_element_type=jnp.float32)
    h2 = jnp.maximum(h2 + b2_ref[...], 0.0).astype(jnp.bfloat16)
    out = jnp.dot(h2, w3_ref[...], preferred_element_type=jnp.float32)
    o_ref[...] = (out + b3_ref[...]).astype(o_ref.dtype)


def conv4_dense_tail(x, w4, b4, w1, b1, w2, b2, w3, b3):
    """x: (N, n_pos*K4) bf16 conv4 patches (position-major) -> (N, n_actions) f32."""
    M, KP = x.shape
    k4, n4 = w4.shape
    n_pos = KP // k4
    n1, n2, n3 = w1.shape[1], w2.shape[1], w3.shape[1]

    m_pad = max(8, _round_up(M, 8))
    if m_pad != M:
        x = jnp.pad(x, ((0, m_pad - M), (0, 0)))

    flops = 2 * m_pad * (n_pos * k4 * n4 + n_pos * n4 * n1 + n1 * n2 + n2 * n3)
    bytes_acc = ((m_pad * KP + k4 * n4 + n_pos * n4 * n1 + n1 * n2 + n2 * n3) * 2
                 + (n4 + n1 + n2 + n3) * 4 + m_pad * n3 * 4)
    cost = pl.CostEstimate(flops=flops, transcendentals=0,
                           bytes_accessed=bytes_acc)
    out = pl.pallas_call(
        _tail_kernel,
        out_shape=jax.ShapeDtypeStruct((m_pad, n3), jnp.float32),
        in_specs=[_VMEM] * 9,
        out_specs=_VMEM,
        cost_estimate=cost,
    )(x, w4, b4, w1, b1, w2, b2, w3, b3)
    return out if m_pad == M else out[:M]


# ---------------------------------------------------------------------------
# Conv2d = im2col (XLA glue) + Pallas matmul kernel
# ---------------------------------------------------------------------------
def _im2col(x_nhwc, kh, kw, stride):
    """x: (N, H, W, C) -> patches (N*Ho*Wo, kh*kw*C) in [kh, kw, C] order."""
    n, h, w, c = x_nhwc.shape
    ho = (h - kh) // stride + 1
    wo = (w - kw) // stride + 1
    cols = []
    for i in range(kh):
        for j in range(kw):
            cols.append(
                x_nhwc[:, i:i + stride * ho:stride, j:j + stride * wo:stride, :]
            )
    patches = jnp.concatenate(cols, axis=-1)
    return patches.reshape(n * ho * wo, kh * kw * c), ho, wo


def conv2d_relu(x_nhwc, w_mat, b_row, ksize, stride):
    """x: (N,H,W,C) bf16; w_mat: (kh*kw*C, OC) bf16; b_row: (1,OC) f32 -> NHWC bf16."""
    n = x_nhwc.shape[0]
    oc = w_mat.shape[1]
    patches, ho, wo = _im2col(x_nhwc, ksize, ksize, stride)
    out = matmul_bias_relu(patches, w_mat, b_row, out_dtype=jnp.bfloat16)
    return out.reshape(n, ho, wo, oc)


# ---------------------------------------------------------------------------
# Parameter construction (PyTorch layout) and kernel-ready conversion
# ---------------------------------------------------------------------------
def _out_sz(s, k, st):
    return (s - k) // st + 1


def init_params(key, input_channels, n_actions, height, width):
    """Deterministic synthetic params in PyTorch layout (conv OIHW, linear (in,out))."""
    def conv_p(k, oc, ic, ks):
        k1, k2 = jax.random.split(k)
        scale = (2.0 / (ic * ks * ks)) ** 0.5
        w = scale * jax.random.normal(k1, (oc, ic, ks, ks), jnp.float32)
        b = 0.01 * jax.random.normal(k2, (oc,), jnp.float32)
        return w, b

    def lin_p(k, fin, fout):
        k1, k2 = jax.random.split(k)
        scale = (2.0 / fin) ** 0.5
        w = scale * jax.random.normal(k1, (fin, fout), jnp.float32)
        b = 0.01 * jax.random.normal(k2, (fout,), jnp.float32)
        return w, b

    keys = jax.random.split(key, 7)
    params = {}
    params["c1"] = conv_p(keys[0], 32, input_channels, 8)
    params["c2"] = conv_p(keys[1], 64, 32, 4)
    params["c3"] = conv_p(keys[2], 128, 64, 3)
    params["c4"] = conv_p(keys[3], 256, 128, 3)

    h = _out_sz(_out_sz(_out_sz(_out_sz(height, 8, 4), 4, 2), 3, 1), 3, 1)
    w = _out_sz(_out_sz(_out_sz(_out_sz(width, 8, 4), 4, 2), 3, 1), 3, 1)
    flat_size = 256 * h * w

    params["l1"] = lin_p(keys[4], flat_size, 512)
    params["l2"] = lin_p(keys[5], 512, 256)
    params["l3"] = lin_p(keys[6], 256, n_actions)
    return params, (h, w)


def _prep_conv(w, b, ic_pad, oc_pad):
    """OIHW -> (kh*kw*ic_pad, oc_pad) bf16 matrix matching the im2col [kh,kw,C]
    column order; padded in/out channels are zero so results are unchanged."""
    oc, ic, kh, kw = w.shape
    w = jnp.transpose(w, (2, 3, 1, 0))                       # (kh, kw, ic, oc)
    w = jnp.pad(w, ((0, 0), (0, 0), (0, ic_pad - ic), (0, oc_pad - oc)))
    w_mat = w.reshape(kh * kw * ic_pad, oc_pad)
    b = jnp.pad(b, (0, oc_pad - oc))
    return w_mat.astype(jnp.bfloat16), b.reshape(1, oc_pad).astype(jnp.float32)


def prepare_params(params, conv_hw):
    """Kernel-ready layout:
      * conv weights -> im2col matrices with channels padded to 128 lanes
        (intermediate activations become lane-dense, padded channels are 0)
      * l1 weight rows permuted from NCHW-flatten to NHWC-flatten order
      * all weights bf16, all biases kept f32 as (1, N) rows
    """
    h4, w4 = conv_hw
    prep = {}
    prev_c_pad = params["c1"][0].shape[1]          # raw input channels (no pad)
    for name in ("c1", "c2", "c3", "c4"):
        w, b = params[name]
        oc = w.shape[0]
        oc_pad = _round_up(oc, _LANE)
        prep[name] = _prep_conv(w, b, prev_c_pad, oc_pad)
        prev_c_pad = oc_pad

    w1, b1 = params["l1"]
    fout = w1.shape[1]
    c4_oc = params["c4"][0].shape[0]
    c4_pad = _round_up(c4_oc, _LANE)
    # rows of w1 are indexed (c, h, w) [NCHW flatten]; re-index to (h, w, c)
    # and pad c to the padded conv4 output width.
    w1_perm = w1.reshape(c4_oc, h4, w4, fout).transpose(1, 2, 0, 3)  # (h,w,c,f)
    w1_perm = jnp.pad(w1_perm, ((0, 0), (0, 0), (0, c4_pad - c4_oc), (0, 0)))
    prep["l1"] = (w1_perm.reshape(h4 * w4 * c4_pad, fout).astype(jnp.bfloat16),
                  b1.reshape(1, -1).astype(jnp.float32))
    for name in ("l2", "l3"):
        w, b = params[name]
        prep[name] = (w.astype(jnp.bfloat16),
                      b.reshape(1, -1).astype(jnp.float32))
    return prep


# ---------------------------------------------------------------------------
# Forward pass (matches DQNnetwork.forward)
# ---------------------------------------------------------------------------
def dqn_forward(prep, state_nchw):
    x = jnp.transpose(state_nchw, (0, 2, 3, 1)).astype(jnp.bfloat16)  # -> NHWC
    x = conv2d_relu(x, *prep["c1"], ksize=8, stride=4)
    x = conv2d_relu(x, *prep["c2"], ksize=4, stride=2)
    x = conv2d_relu(x, *prep["c3"], ksize=3, stride=1)
    # conv4 + Flatten + dense head fused: lay out conv4 patches per batch row
    # (position-major) so the Flatten folds into the kernel.
    n = x.shape[0]
    patches, ho, wo = _im2col(x, 3, 3, 1)
    x_tail = patches.reshape(n, ho * wo * patches.shape[1])
    return conv4_dense_tail(x_tail, *prep["c4"], *prep["l1"],
                            *prep["l2"], *prep["l3"])        # (n, n_actions) f32


# ---------------------------------------------------------------------------
# Pure-JAX f32 reference (original PyTorch semantics) for validation
# ---------------------------------------------------------------------------
def dqn_reference(params, state):
    x = state
    for name, st in (("c1", 4), ("c2", 2), ("c3", 1), ("c4", 1)):
        w, b = params[name]
        x = jax.lax.conv_general_dilated(
            x, w, (st, st), "VALID",
            dimension_numbers=("NCHW", "OIHW", "NCHW"))
        x = jax.nn.relu(x + b.reshape(1, -1, 1, 1))
    x = x.reshape(x.shape[0], -1)                 # NCHW flatten (torch Flatten)
    w, b = params["l1"]; x = jax.nn.relu(x @ w + b)
    w, b = params["l2"]; x = jax.nn.relu(x @ w + b)
    w, b = params["l3"]; x = x @ w + b
    return x


if __name__ == "__main__":
    batch = 2
    input_channels = 4
    height = width = 64            # 64 -> 15 -> 6 -> 4 -> 2 ; flat = 256*2*2 = 1024
    n_actions = 6

    key = jax.random.PRNGKey(0)
    k_param, k_in = jax.random.split(key)
    params, conv_hw = init_params(k_param, input_channels, n_actions, height, width)
    prep = prepare_params(params, conv_hw)
    state = jax.random.normal(
        k_in, (batch, input_channels, height, width), jnp.float32
    )

    fwd = jax.jit(dqn_forward)
    actions = fwd(prep, state)
    jax.block_until_ready(actions)

    assert actions.shape == (batch, n_actions)
    assert bool(jnp.all(jnp.isfinite(actions)))

    ref = dqn_reference(params, state)
    max_err = float(jnp.max(jnp.abs(actions - ref)))
    assert max_err < 0.5, f"mismatch vs f32 reference: max_err={max_err}"

    print("KERNEL_OK")
</pallas_src>

<mosaic_0001>
module attributes {stable_mosaic.version = 11 : i64} {
  func.func @_mm_bias_relu_kernel(%arg0: memref<456x256xbf16, #tpu.memory_space<vmem>>, %arg1: memref<256x128xbf16, #tpu.memory_space<vmem>>, %arg2: memref<1x128xf32, #tpu.memory_space<vmem>>, %arg3: memref<456x128xbf16, #tpu.memory_space<vmem>>) attributes {dimension_semantics = [], scalar_prefetch = 0 : i64, scratch_operands = 0 : i64, tpu.core_type = #tpu.core_type<tc>} {
    %c0 = arith.constant 0 : index
    %c0_0 = arith.constant 0 : index
    %0 = vector.load %arg0[%c0, %c0_0] : memref<456x256xbf16, #tpu.memory_space<vmem>>, vector<456x256xbf16>
    %c0_1 = arith.constant 0 : index
    %c0_2 = arith.constant 0 : index
    %1 = vector.load %arg1[%c0_1, %c0_2] : memref<256x128xbf16, #tpu.memory_space<vmem>>, vector<256x128xbf16>
    %cst = arith.constant dense<0.000000e+00> : vector<456x128xf32>
    %2 = tpu.matmul %0, %1, %cst {dimension_numbers = #tpu.dot_dimension_numbers<[1], [0], [0], [1], [0, 0, 1, 1], [], []>} : vector<456x256xbf16>, vector<256x128xbf16>, vector<456x128xf32> -> vector<456x128xf32>
    %c0_3 = arith.constant 0 : index
    %c0_4 = arith.constant 0 : index
    %3 = vector.load %arg2[%c0_3, %c0_4] : memref<1x128xf32, #tpu.memory_space<vmem>>, vector<1x128xf32>
    %4 = vector.broadcast %3 : vector<1x128xf32> to vector<456x128xf32>
    %5 = arith.addf %2, %4 : vector<456x128xf32>
    %cst_5 = arith.constant 0.000000e+00 : f32
    %6 = vector.broadcast %cst_5 : f32 to vector<456x128xf32>
    %7 = arith.maximumf %5, %6 : vector<456x128xf32>
    %8 = arith.truncf %7 : vector<456x128xf32> to vector<456x128xbf16>
    %c0_6 = arith.constant 0 : index
    %c0_7 = arith.constant 0 : index
    %9 = vector.load %arg3[%c0_6, %c0_7] : memref<456x128xbf16, #tpu.memory_space<vmem>>, vector<456x128xbf16>
    tpu.vector_store %arg3[%c0_6, %c0_7], %8 {strides = array<i32>} : memref<456x128xbf16, #tpu.memory_space<vmem>>, vector<456x128xbf16>,
    return
  }
}

module attributes {stable_mosaic.version = 11 : i64} {
  func.func @_mm_bias_relu_kernel(%arg0: memref<72x2048xbf16, #tpu.memory_space<vmem>>, %arg1: memref<2048x128xbf16, #tpu.memory_space<vmem>>, %arg2: memref<1x128xf32, #tpu.memory_space<vmem>>, %arg3: memref<72x128xbf16, #tpu.memory_space<vmem>>) attributes {dimension_semantics = [], scalar_prefetch = 0 : i64, scratch_operands = 0 : i64, tpu.core_type = #tpu.core_type<tc>} {
    %c0 = arith.constant 0 : index
    %c0_0 = arith.constant 0 : index
    %0 = vector.load %arg0[%c0, %c0_0] : memref<72x2048xbf16, #tpu.memory_space<vmem>>, vector<72x2048xbf16>
    %c0_1 = arith.constant 0 : index
    %c0_2 = arith.constant 0 : index
    %1 = vector.load %arg1[%c0_1, %c0_2] : memref<2048x128xbf16, #tpu.memory_space<vmem>>, vector<2048x128xbf16>
    %cst = arith.constant dense<0.000000e+00> : vector<72x128xf32>
    %2 = tpu.matmul %0, %1, %cst {dimension_numbers = #tpu.dot_dimension_numbers<[1], [0], [0], [1], [0, 0, 1, 1], [], []>} : vector<72x2048xbf16>, vector<2048x128xbf16>, vector<72x128xf32> -> vector<72x128xf32>
    %c0_3 = arith.constant 0 : index
    %c0_4 = arith.constant 0 : index
    %3 = vector.load %arg2[%c0_3, %c0_4] : memref<1x128xf32, #tpu.memory_space<vmem>>, vector<1x128xf32>
    %4 = vector.broadcast %3 : vector<1x128xf32> to vector<72x128xf32>
    %5 = arith.addf %2, %4 : vector<72x128xf32>
    %cst_5 = arith.constant 0.000000e+00 : f32
    %6 = vector.broadcast %cst_5 : f32 to vector<72x128xf32>
    %7 = arith.maximumf %5, %6 : vector<72x128xf32>
    %8 = arith.truncf %7 : vector<72x128xf32> to vector<72x128xbf16>
    %c0_6 = arith.constant 0 : index
    %c0_7 = arith.constant 0 : index
    %9 = vector.load %arg3[%c0_6, %c0_7] : memref<72x128xbf16, #tpu.memory_space<vmem>>, vector<72x128xbf16>
    tpu.vector_store %arg3[%c0_6, %c0_7], %8 {strides = array<i32>} : memref<72x128xbf16, #tpu.memory_space<vmem>>, vector<72x128xbf16>,
    return
  }
}

module attributes {stable_mosaic.version = 11 : i64} {
  func.func @_mm_bias_relu_kernel(%arg0: memref<32x1152xbf16, #tpu.memory_space<vmem>>, %arg1: memref<1152x128xbf16, #tpu.memory_space<vmem>>, %arg2: memref<1x128xf32, #tpu.memory_space<vmem>>, %arg3: memref<32x128xbf16, #tpu.memory_space<vmem>>) attributes {dimension_semantics = [], scalar_prefetch = 0 : i64, scratch_operands = 0 : i64, tpu.core_type = #tpu.core_type<tc>} {
    %c0 = arith.constant 0 : index
    %c0_0 = arith.constant 0 : index
    %0 = vector.load %arg0[%c0, %c0_0] : memref<32x1152xbf16, #tpu.memory_space<vmem>>, vector<32x1152xbf16>
    %c0_1 = arith.constant 0 : index
    %c0_2 = arith.constant 0 : index
    %1 = vector.load %arg1[%c0_1, %c0_2] : memref<1152x128xbf16, #tpu.memory_space<vmem>>, vector<1152x128xbf16>
    %cst = arith.constant dense<0.000000e+00> : vector<32x128xf32>
    %2 = tpu.matmul %0, %1, %cst {dimension_numbers = #tpu.dot_dimension_numbers<[1], [0], [0], [1], [0, 0, 1, 1], [], []>} : vector<32x1152xbf16>, vector<1152x128xbf16>, vector<32x128xf32> -> vector<32x128xf32>
    %c0_3 = arith.constant 0 : index
    %c0_4 = arith.constant 0 : index
    %3 = vector.load %arg2[%c0_3, %c0_4] : memref<1x128xf32, #tpu.memory_space<vmem>>, vector<1x128xf32>
    %4 = vector.broadcast %3 : vector<1x128xf32> to vector<32x128xf32>
    %5 = arith.addf %2, %4 : vector<32x128xf32>
    %cst_5 = arith.constant 0.000000e+00 : f32
    %6 = vector.broadcast %cst_5 : f32 to vector<32x128xf32>
    %7 = arith.maximumf %5, %6 : vector<32x128xf32>
    %8 = arith.truncf %7 : vector<32x128xf32> to vector<32x128xbf16>
    %c0_6 = arith.constant 0 : index
    %c0_7 = arith.constant 0 : index
    %9 = vector.load %arg3[%c0_6, %c0_7] : memref<32x128xbf16, #tpu.memory_space<vmem>>, vector<32x128xbf16>
    tpu.vector_store %arg3[%c0_6, %c0_7], %8 {strides = array<i32>} : memref<32x128xbf16, #tpu.memory_space<vmem>>, vector<32x128xbf16>,
    return
  }
}

module attributes {stable_mosaic.version = 11 : i64} {
  func.func @_tail_kernel(%arg0: memref<8x4608xbf16, #tpu.memory_space<vmem>>, %arg1: memref<1152x256xbf16, #tpu.memory_space<vmem>>, %arg2: memref<1x256xf32, #tpu.memory_space<vmem>>, %arg3: memref<1024x512xbf16, #tpu.memory_space<vmem>>, %arg4: memref<1x512xf32, #tpu.memory_space<vmem>>, %arg5: memref<512x256xbf16, #tpu.memory_space<vmem>>, %arg6: memref<1x256xf32, #tpu.memory_space<vmem>>, %arg7: memref<256x6xbf16, #tpu.memory_space<vmem>>, %arg8: memref<1x6xf32, #tpu.memory_space<vmem>>, %arg9: memref<8x6xf32, #tpu.memory_space<vmem>>) attributes {dimension_semantics = [], scalar_prefetch = 0 : i64, scratch_operands = 0 : i64, tpu.core_type = #tpu.core_type<tc>} {
    %cst = arith.constant 0.000000e+00 : f32
    %0 = vector.broadcast %cst : f32 to vector<8x512xf32>
    %c0 = arith.constant 0 : index
    %c0_0 = arith.constant 0 : index
    %1 = vector.load %arg0[%c0, %c0_0] : memref<8x4608xbf16, #tpu.memory_space<vmem>>, vector<8x1152xbf16>
    %c0_1 = arith.constant 0 : index
    %c0_2 = arith.constant 0 : index
    %2 = vector.load %arg1[%c0_1, %c0_2] : memref<1152x256xbf16, #tpu.memory_space<vmem>>, vector<1152x256xbf16>
    %cst_3 = arith.constant dense<0.000000e+00> : vector<8x256xf32>
    %3 = tpu.matmul %1, %2, %cst_3 {dimension_numbers = #tpu.dot_dimension_numbers<[1], [0], [0], [1], [0, 0, 1, 1], [], []>} : vector<8x1152xbf16>, vector<1152x256xbf16>, vector<8x256xf32> -> vector<8x256xf32>
    %c0_4 = arith.constant 0 : index
    %c0_5 = arith.constant 0 : index
    %4 = vector.load %arg2[%c0_4, %c0_5] : memref<1x256xf32, #tpu.memory_space<vmem>>, vector<1x256xf32>
    %5 = vector.broadcast %4 : vector<1x256xf32> to vector<8x256xf32>
    %6 = arith.addf %3, %5 : vector<8x256xf32>
    %cst_6 = arith.constant 0.000000e+00 : f32
    %7 = vector.broadcast %cst_6 : f32 to vector<8x256xf32>
    %8 = arith.maximumf %6, %7 : vector<8x256xf32>
    %9 = arith.truncf %8 : vector<8x256xf32> to vector<8x256xbf16>
    %c0_7 = arith.constant 0 : index
    %c0_8 = arith.constant 0 : index
    %10 = vector.load %arg3[%c0_7, %c0_8] : memref<1024x512xbf16, #tpu.memory_space<vmem>>, vector<256x512xbf16>
    %cst_9 = arith.constant dense<0.000000e+00> : vector<8x512xf32>
    %11 = tpu.matmul %9, %10, %cst_9 {dimension_numbers = #tpu.dot_dimension_numbers<[1], [0], [0], [1], [0, 0, 1, 1], [], []>} : vector<8x256xbf16>, vector<256x512xbf16>, vector<8x512xf32> -> vector<8x512xf32>
    %12 = arith.addf %0, %11 : vector<8x512xf32>
    %c0_10 = arith.constant 0 : index
    %c1152 = arith.constant 1152 : index
    %13 = vector.load %arg0[%c0_10, %c1152] : memref<8x4608xbf16, #tpu.memory_space<vmem>>, vector<8x1152xbf16>
    %c0_11 = arith.constant 0 : index
    %c0_12 = arith.constant 0 : index
    %14 = vector.load %arg1[%c0_11, %c0_12] : memref<1152x256xbf16, #tpu.memory_space<vmem>>, vector<1152x256xbf16>
    %cst_13 = arith.constant dense<0.000000e+00> : vector<8x256xf32>
    %15 = tpu.matmul %13, %14, %cst_13 {dimension_numbers = #tpu.dot_dimension_numbers<[1], [0], [0], [1], [0, 0, 1, 1], [], []>} : vector<8x1152xbf16>, vector<1152x256xbf16>, vector<8x256xf32> -> vector<8x256xf32>
    %c0_14 = arith.constant 0 : index
    %c0_15 = arith.constant 0 : index
    %16 = vector.load %arg2[%c0_14, %c0_15] : memref<1x256xf32, #tpu.memory_space<vmem>>, vector<1x256xf32>
    %17 = vector.broadcast %16 : vector<1x256xf32> to vector<8x256xf32>
    %18 = arith.addf %15, %17 : vector<8x256xf32>
    %cst_16 = arith.constant 0.000000e+00 : f32
    %19 = vector.broadcast %cst_16 : f32 to vector<8x256xf32>
    %20 = arith.maximumf %18, %19 : vector<8x256xf32>
    %21 = arith.truncf %20 : vector<8x256xf32> to vector<8x256xbf16>
    %c256 = arith.constant 256 : index
    %c0_17 = arith.constant 0 : index
    %22 = vector.load %arg3[%c256, %c0_17] : memref<1024x512xbf16, #tpu.memory_space<vmem>>, vector<256x512xbf16>
    %cst_18 = arith.constant dense<0.000000e+00> : vector<8x512xf32>
    %23 = tpu.matmul %21, %22, %cst_18 {dimension_numbers = #tpu.dot_dimension_numbers<[1], [0], [0], [1], [0, 0, 1, 1], [], []>} : vector<8x256xbf16>, vector<256x512xbf16>, vector<8x512xf32> -> vector<8x512xf32>
    %24 = arith.addf %12, %23 : vector<8x512xf32>
    %c0_19 = arith.constant 0 : index
    %c2304 = arith.constant 2304 : index
    %25 = vector.load %arg0[%c0_19, %c2304] : memref<8x4608xbf16, #tpu.memory_space<vmem>>, vector<8x1152xbf16>
    %c0_20 = arith.constant 0 : index
    %c0_21 = arith.constant 0 : index
    %26 = vector.load %arg1[%c0_20, %c0_21] : memref<1152x256xbf16, #tpu.memory_space<vmem>>, vector<1152x256xbf16>
    %cst_22 = arith.constant dense<0.000000e+00> : vector<8x256xf32>
    %27 = tpu.matmul %25, %26, %cst_22 {dimension_numbers = #tpu.dot_dimension_numbers<[1], [0], [0], [1], [0, 0, 1, 1], [], []>} : vector<8x1152xbf16>, vector<1152x256xbf16>, vector<8x256xf32> -> vector<8x256xf32>
    %c0_23 = arith.constant 0 : index
    %c0_24 = arith.constant 0 : index
    %28 = vector.load %arg2[%c0_23, %c0_24] : memref<1x256xf32, #tpu.memory_space<vmem>>, vector<1x256xf32>
    %29 = vector.broadcast %28 : vector<1x256xf32> to vector<8x256xf32>
    %30 = arith.addf %27, %29 : vector<8x256xf32>
    %cst_25 = arith.constant 0.000000e+00 : f32
    %31 = vector.broadcast %cst_25 : f32 to vector<8x256xf32>
    %32 = arith.maximumf %30, %31 : vector<8x256xf32>
    %33 = arith.truncf %32 : vector<8x256xf32> to vector<8x256xbf16>
    %c512 = arith.constant 512 : index
    %c0_26 = arith.constant 0 : index
    %34 = vector.load %arg3[%c512, %c0_26] : memref<1024x512xbf16, #tpu.memory_space<vmem>>, vector<256x512xbf16>
    %cst_27 = arith.constant dense<0.000000e+00> : vector<8x512xf32>
    %35 = tpu.matmul %33, %34, %cst_27 {dimension_numbers = #tpu.dot_dimension_numbers<[1], [0], [0], [1], [0, 0, 1, 1], [], []>} : vector<8x256xbf16>, vector<256x512xbf16>, vector<8x512xf32> -> vector<8x512xf32>
    %36 = arith.addf %24, %35 : vector<8x512xf32>
    %c0_28 = arith.constant 0 : index
    %c3456 = arith.constant 3456 : index
    %37 = vector.load %arg0[%c0_28, %c3456] : memref<8x4608xbf16, #tpu.memory_space<vmem>>, vector<8x1152xbf16>
    %c0_29 = arith.constant 0 : index
    %c0_30 = arith.constant 0 : index
    %38 = vector.load %arg1[%c0_29, %c0_30] : memref<1152x256xbf16, #tpu.memory_space<vmem>>, vector<1152x256xbf16>
    %cst_31 = arith.constant dense<0.000000e+00> : vector<8x256xf32>
    %39 = tpu.matmul %37, %38, %cst_31 {dimension_numbers = #tpu.dot_dimension_numbers<[1], [0], [0], [1], [0, 0, 1, 1], [], []>} : vector<8x1152xbf16>, vector<1152x256xbf16>, vector<8x256xf32> -> vector<8x256xf32>
    %c0_32 = arith.constant 0 : index
    %c0_33 = arith.constant 0 : index
    %40 = vector.load %arg2[%c0_32, %c0_33] : memref<1x256xf32, #tpu.memory_space<vmem>>, vector<1x256xf32>
    %41 = vector.broadcast %40 : vector<1x256xf32> to vector<8x256xf32>
    %42 = arith.addf %39, %41 : vector<8x256xf32>
    %cst_34 = arith.constant 0.000000e+00 : f32
    %43 = vector.broadcast %cst_34 : f32 to vector<8x256xf32>
    %44 = arith.maximumf %42, %43 : vector<8x256xf32>
    %45 = arith.truncf %44 : vector<8x256xf32> to vector<8x256xbf16>
    %c768 = arith.constant 768 : index
    %c0_35 = arith.constant 0 : index
    %46 = vector.load %arg3[%c768, %c0_35] : memref<1024x512xbf16, #tpu.memory_space<vmem>>, vector<256x512xbf16>
    %cst_36 = arith.constant dense<0.000000e+00> : vector<8x512xf32>
    %47 = tpu.matmul %45, %46, %cst_36 {dimension_numbers = #tpu.dot_dimension_numbers<[1], [0], [0], [1], [0, 0, 1, 1], [], []>} : vector<8x256xbf16>, vector<256x512xbf16>, vector<8x512xf32> -> vector<8x512xf32>
    %48 = arith.addf %36, %47 : vector<8x512xf32>
    %c0_37 = arith.constant 0 : index
    %c0_38 = arith.constant 0 : index
    %49 = vector.load %arg4[%c0_37, %c0_38] : memref<1x512xf32, #tpu.memory_space<vmem>>, vector<1x512xf32>
    %50 = vector.broadcast %49 : vector<1x512xf32> to vector<8x512xf32>
    %51 = arith.addf %48, %50 : vector<8x512xf32>
    %cst_39 = arith.constant 0.000000e+00 : f32
    %52 = vector.broadcast %cst_39 : f32 to vector<8x512xf32>
    %53 = arith.maximumf %51, %52 : vector<8x512xf32>
    %54 = arith.truncf %53 : vector<8x512xf32> to vector<8x512xbf16>
    %c0_40 = arith.constant 0 : index
    %c0_41 = arith.constant 0 : index
    %55 = vector.load %arg5[%c0_40, %c0_41] : memref<512x256xbf16, #tpu.memory_space<vmem>>, vector<512x256xbf16>
    %cst_42 = arith.constant dense<0.000000e+00> : vector<8x256xf32>
    %56 = tpu.matmul %54, %55, %cst_42 {dimension_numbers = #tpu.dot_dimension_numbers<[1], [0], [0], [1], [0, 0, 1, 1], [], []>} : vector<8x512xbf16>, vector<512x256xbf16>, vector<8x256xf32> -> vector<8x256xf32>
    %c0_43 = arith.constant 0 : index
    %c0_44 = arith.constant 0 : index
    %57 = vector.load %arg6[%c0_43, %c0_44] : memref<1x256xf32, #tpu.memory_space<vmem>>, vector<1x256xf32>
    %58 = vector.broadcast %57 : vector<1x256xf32> to vector<8x256xf32>
    %59 = arith.addf %56, %58 : vector<8x256xf32>
    %cst_45 = arith.constant 0.000000e+00 : f32
    %60 = vector.broadcast %cst_45 : f32 to vector<8x256xf32>
    %61 = arith.maximumf %59, %60 : vector<8x256xf32>
    %62 = arith.truncf %61 : vector<8x256xf32> to vector<8x256xbf16>
    %c0_46 = arith.constant 0 : index
    %c0_47 = arith.constant 0 : index
    %63 = vector.load %arg7[%c0_46, %c0_47] : memref<256x6xbf16, #tpu.memory_space<vmem>>, vector<256x6xbf16>
    %cst_48 = arith.constant dense<0.000000e+00> : vector<8x6xf32>
    %64 = tpu.matmul %62, %63, %cst_48 {dimension_numbers = #tpu.dot_dimension_numbers<[1], [0], [0], [1], [0, 0, 1, 1], [], []>} : vector<8x256xbf16>, vector<256x6xbf16>, vector<8x6xf32> -> vector<8x6xf32>
    %c0_49 = arith.constant 0 : index
    %c0_50 = arith.constant 0 : index
    %65 = vector.load %arg8[%c0_49, %c0_50] : memref<1x6xf32, #tpu.memory_space<vmem>>, vector<1x6xf32>
    %66 = vector.broadcast %65 : vector<1x6xf32> to vector<8x6xf32>
    %67 = arith.addf %64, %66 : vector<8x6xf32>
    %c0_51 = arith.constant 0 : index
    %c0_52 = arith.constant 0 : index
    %68 = vector.load %arg9[%c0_51, %c0_52] : memref<8x6xf32, #tpu.memory_space<vmem>>, vector<8x6xf32>
    tpu.vector_store %arg9[%c0_51, %c0_52], %67 {strides = array<i32>} : memref<8x6xf32, #tpu.memory_space<vmem>>, vector<8x6xf32>,
    return
  }
}

</mosaic_0001>

<llo_original>
// kernel: dqn_forward.4
$region0: #{dqn_forward.4}
  #allocation0 [shape = 'u32[]', space=smem, size = 0x4, offset = 0x4, fixed_abs, tag = 'smem constant byte address 0x4 - core index']
  #allocation1 [shape = 'u32[72,128]{1,0:T(1,128)}', space=vmem, size = 0x9000, scoped, tag = 'internal scratch']
  %s0 = inlined_call_operand.vmem [shape: bf16[456,256], index: 0, kind: input, shape index: {}]
  %s1 = inlined_call_operand.vmem [shape: bf16[256,128], index: 1, kind: input, shape index: {}]
  %s2 = inlined_call_operand.vmem [shape: f32[1,128], index: 2, kind: input, shape index: {}]
  %s3 = inlined_call_operand.vmem [shape: bf16[456,128], index: 3, kind: output, shape index: {}]
  %s4 = sld [smem:[#allocation0]]
  $region22: #{dqn_forward.4} parent=0
    _
  %s6 = ssub.s32 1, %s4
  %s7 = scalar_select 0, %s6, %s4
  // Predicated region
  $region2: #{dqn_forward.4} parent=0 // pred_check
    _
  $region3: #{dqn_forward.4} parent=0 // pred_check_branch
    %9 = sbr.rel (0) target = $region5
  $region4: #{dqn_forward.4} parent=0 // pred_region
    _
  $region5: #{dqn_forward.4} parent=0 // pred_fallthru
    _
  // Predicated region
  $region6: #{dqn_forward.4} parent=0 // pred_check
    _
  $region7: #{dqn_forward.4} parent=0 // pred_check_branch
    %11 = sbr.rel (0) target = $region9
  $region8: #{dqn_forward.4} parent=0 // pred_region
    _
  $region9: #{dqn_forward.4} parent=0 // pred_fallthru
    _
  // Predicated region
  $region10: #{dqn_forward.4} parent=0 // pred_check
    _
  $region11: #{dqn_forward.4} parent=0 // pred_check_branch
    %13 = sbr.rel (0) target = $region13
  $region12: #{dqn_forward.4} parent=0 // pred_region
    _
  $region13: #{dqn_forward.4} parent=0 // pred_fallthru
    _
  %v14 = vld [vmem:[%s0] sm:$0xff]
  %v15 = vld [vmem:[%s0 + $0x8] sm:$0xff]
  %v16 = vld [vmem:[%s0 + $0x10] sm:$0xff]
  %v17 = vld [vmem:[%s0 + $0x18] sm:$0xff]
  %v18 = vld [vmem:[%s0 + $0x20] sm:$0xff]
  %v19 = vld [vmem:[%s0 + $0x28] sm:$0xff]
  %v20 = vld [vmem:[%s0 + $0x30] sm:$0xff]
  %v21 = vld [vmem:[%s0 + $0x38] sm:$0xff]
  %v22 = vld [vmem:[%s0 + $0x40] sm:$0xff]
  %v23 = vld [vmem:[%s0 + $0x48] sm:$0xff]
  %v24 = vld [vmem:[%s0 + $0x50] sm:$0xff]
  %v25 = vld [vmem:[%s0 + $0x58] sm:$0xff]
  %v26 = vld [vmem:[%s0 + $0x60] sm:$0xff]
  %v27 = vld [vmem:[%s0 + $0x68] sm:$0xff]
  %v28 = vld [vmem:[%s0 + $0x70] sm:$0xff]
  %v29 = vld [vmem:[%s0 + $0x78] sm:$0xff]
  %v30 = vld [vmem:[%s0 + $0x80] sm:$0xff]
  %v31 = vld [vmem:[%s0 + $0x88] sm:$0xff]
  %v32 = vld [vmem:[%s0 + $0x90] sm:$0xff]
  %v33 = vld [vmem:[%s0 + $0x98] sm:$0xff]
  %v34 = vld [vmem:[%s0 + $0xa0] sm:$0xff]
  %v35 = vld [vmem:[%s0 + $0xa8] sm:$0xff]
  %v36 = vld [vmem:[%s0 + $0xb0] sm:$0xff]
  %v37 = vld [vmem:[%s0 + $0xb8] sm:$0xff]
  %v38 = vld [vmem:[%s0 + $0xc0] sm:$0xff]
  %v39 = vld [vmem:[%s0 + $0xc8] sm:$0xff]
  %v40 = vld [vmem:[%s0 + $0xd0] sm:$0xff]
  %v41 = vld [vmem:[%s0 + $0xd8] sm:$0xff]
  %v42 = vld [vmem:[%s0 + $0xe0] sm:$0xff]
  %v43 = vld [vmem:[%s0 + $0xe8] sm:$0xff]
  %v44 = vld [vmem:[%s0 + $0xf0] sm:$0xff]
  %v45 = vld [vmem:[%s0 + $0xf8] sm:$0xff]
  %v46 = vld [vmem:[%s0 + $0x100] sm:$0xff]
  %v47 = vld [vmem:[%s0 + $0x108] sm:$0xff]
  %v48 = vld [vmem:[%s0 + $0x110] sm:$0xff]
  %v49 = vld [vmem:[%s0 + $0x118] sm:$0xff]
  %v50 = vld [vmem:[%s0 + $0x120] sm:$0xff]
  %v51 = vld [vmem:[%s0 + $0x128] sm:$0xff]
  %v52 = vld [vmem:[%s0 + $0x130] sm:$0xff]
  %v53 = vld [vmem:[%s0 + $0x138] sm:$0xff]
  %v54 = vld [vmem:[%s0 + $0x140] sm:$0xff]
  %v55 = vld [vmem:[%s0 + $0x148] sm:$0xff]
  %v56 = vld [vmem:[%s0 + $0x150] sm:$0xff]
  %v57 = vld [vmem:[%s0 + $0x158] sm:$0xff]
  %v58 = vld [vmem:[%s0 + $0x160] sm:$0xff]
  %v59 = vld [vmem:[%s0 + $0x168] sm:$0xff]
  %v60 = vld [vmem:[%s0 + $0x170] sm:$0xff]
  %v61 = vld [vmem:[%s0 + $0x178] sm:$0xff]
  %v62 = vld [vmem:[%s0 + $0x180] sm:$0xff]
  %v63 = vld [vmem:[%s0 + $0x188] sm:$0xff]
  %v64 = vld [vmem:[%s0 + $0x190] sm:$0xff]
  %v65 = vld [vmem:[%s0 + $0x198] sm:$0xff]
  %v66 = vld [vmem:[%s0 + $0x1a0] sm:$0xff]
  %v67 = vld [vmem:[%s0 + $0x1a8] sm:$0xff]
  %v68 = vld [vmem:[%s0 + $0x1b0] sm:$0xff]
  %v69 = vld [vmem:[%s0 + $0x1b8] sm:$0xff]
  %v70 = vld [vmem:[%s0 + $0x1c0] sm:$0xff]
  %v71 = vld [vmem:[%s1] sm:$0xf]
  %v72 = vld [vmem:[%s1 + $0x4] sm:$0xf]
  %v73 = vld [vmem:[%s1 + $0x8] sm:$0xf]
  %v74 = vld [vmem:[%s1 + $0xc] sm:$0xf]
  %v75 = vld [vmem:[%s1 + $0x10] sm:$0xf]
  %v76 = vld [vmem:[%s1 + $0x14] sm:$0xf]
  %v77 = vld [vmem:[%s1 + $0x18] sm:$0xf]
  %v78 = vld [vmem:[%s1 + $0x1c] sm:$0xf]
  %v79 = vld [vmem:[%s1 + $0x20] sm:$0xf]
  %v80 = vld [vmem:[%s1 + $0x24] sm:$0xf]
  %v81 = vld [vmem:[%s1 + $0x28] sm:$0xf]
  %v82 = vld [vmem:[%s1 + $0x2c] sm:$0xf]
  %v83 = vld [vmem:[%s1 + $0x30] sm:$0xf]
  %v84 = vld [vmem:[%s1 + $0x34] sm:$0xf]
  %v85 = vld [vmem:[%s1 + $0x38] sm:$0xf]
  %v86 = vld [vmem:[%s1 + $0x3c] sm:$0xf]
  %v87 = vld [vmem:[%s1 + $0x40] sm:$0xf]
  %v88 = vld [vmem:[%s1 + $0x44] sm:$0xf]
  %v89 = vld [vmem:[%s1 + $0x48] sm:$0xf]
  %v90 = vld [vmem:[%s1 + $0x4c] sm:$0xf]
  %v91 = vld [vmem:[%s1 + $0x50] sm:$0xf]
  %v92 = vld [vmem:[%s1 + $0x54] sm:$0xf]
  %v93 = vld [vmem:[%s1 + $0x58] sm:$0xf]
  %v94 = vld [vmem:[%s1 + $0x5c] sm:$0xf]
  %v95 = vld [vmem:[%s1 + $0x60] sm:$0xf]
  %v96 = vld [vmem:[%s1 + $0x64] sm:$0xf]
  %v97 = vld [vmem:[%s1 + $0x68] sm:$0xf]
  %v98 = vld [vmem:[%s1 + $0x6c] sm:$0xf]
  %v99 = vld [vmem:[%s1 + $0x70] sm:$0xf]
  %v100 = vld [vmem:[%s1 + $0x74] sm:$0xf]
  %v101 = vld [vmem:[%s1 + $0x78] sm:$0xf]
  %v102 = vld [vmem:[%s1 + $0x7c] sm:$0xf]
  %v103 = vld [vmem:[%s2] sm:$0x1]
  %v105 = vperm.slane %v103, 0
  %v164 = vunpack.c.l.b16 %v14
  %v165 = vunpack.c.h.b16 %v14
  %v166 = vunpack.c.l.b16 %v15
  %v167 = vunpack.c.h.b16 %v15
  %v168 = vunpack.c.l.b16 %v16
  %v169 = vunpack.c.h.b16 %v16
  %v170 = vunpack.c.l.b16 %v17
  %v171 = vunpack.c.h.b16 %v17
  %v172 = vunpack.c.l.b16 %v18
  %v173 = vunpack.c.h.b16 %v18
  %v174 = vunpack.c.l.b16 %v19
  %v175 = vunpack.c.h.b16 %v19
  %v176 = vunpack.c.l.b16 %v20
  %v177 = vunpack.c.h.b16 %v20
  %v178 = vunpack.c.l.b16 %v21
  %v179 = vunpack.c.h.b16 %v21
  %v180 = vunpack.c.l.b16 %v22
  %v181 = vunpack.c.h.b16 %v22
  %v182 = vunpack.c.l.b16 %v23
  %v183 = vunpack.c.h.b16 %v23
  %v184 = vunpack.c.l.b16 %v24
  %v185 = vunpack.c.h.b16 %v24
  %v186 = vunpack.c.l.b16 %v25
  %v187 = vunpack.c.h.b16 %v25
  %v188 = vunpack.c.l.b16 %v26
  %v189 = vunpack.c.h.b16 %v26
  %v190 = vunpack.c.l.b16 %v27
  %v191 = vunpack.c.h.b16 %v27
  %v192 = vunpack.c.l.b16 %v28
  %v193 = vunpack.c.h.b16 %v28
  %v194 = vunpack.c.l.b16 %v29
  %v195 = vunpack.c.h.b16 %v29
  %v196 = vunpack.c.l.b16 %v30
  %v197 = vunpack.c.h.b16 %v30
  %v198 = vunpack.c.l.b16 %v31
  %v199 = vunpack.c.h.b16 %v31
  %v200 = vunpack.c.l.b16 %v32
  %v201 = vunpack.c.h.b16 %v32
  %v202 = vunpack.c.l.b16 %v33
  %v203 = vunpack.c.h.b16 %v33
  %v204 = vunpack.c.l.b16 %v34
  %v205 = vunpack.c.h.b16 %v34
  %v206 = vunpack.c.l.b16 %v35
  %v207 = vunpack.c.h.b16 %v35
  %v208 = vunpack.c.l.b16 %v36
  %v209 = vunpack.c.h.b16 %v36
  %v210 = vunpack.c.l.b16 %v37
  %v211 = vunpack.c.h.b16 %v37
  %v212 = vunpack.c.l.b16 %v38
  %v213 = vunpack.c.h.b16 %v38
  %v214 = vunpack.c.l.b16 %v39
  %v215 = vunpack.c.h.b16 %v39
  %v216 = vunpack.c.l.b16 %v40
  %v217 = vunpack.c.h.b16 %v40
  %v218 = vunpack.c.l.b16 %v41
  %v219 = vunpack.c.h.b16 %v41
  %v220 = vunpack.c.l.b16 %v42
  %v221 = vunpack.c.h.b16 %v42
  %v222 = vunpack.c.l.b16 %v43
  %v223 = vunpack.c.h.b16 %v43
  %v224 = vunpack.c.l.b16 %v44
  %v225 = vunpack.c.h.b16 %v44
  %v226 = vunpack.c.l.b16 %v45
  %v227 = vunpack.c.h.b16 %v45
  %v228 = vunpack.c.l.b16 %v46
  %v229 = vunpack.c.h.b16 %v46
  %v230 = vunpack.c.l.b16 %v47
  %v231 = vunpack.c.h.b16 %v47
  %v232 = vunpack.c.l.b16 %v48
  %v233 = vunpack.c.h.b16 %v48
  %v234 = vunpack.c.l.b16 %v49
  %v235 = vunpack.c.h.b16 %v49
  %v236 = vunpack.c.l.b16 %v50
  %v237 = vunpack.c.h.b16 %v50
  %v238 = vunpack.c.l.b16 %v51
  %v239 = vunpack.c.h.b16 %v51
  %v240 = vunpack.c.l.b16 %v52
  %v241 = vunpack.c.h.b16 %v52
  %v242 = vunpack.c.l.b16 %v53
  %v243 = vunpack.c.h.b16 %v53
  %v244 = vunpack.c.l.b16 %v54
  %v245 = vunpack.c.h.b16 %v54
  %v246 = vunpack.c.l.b16 %v55
  %v247 = vunpack.c.h.b16 %v55
  %v248 = vunpack.c.l.b16 %v56
  %v249 = vunpack.c.h.b16 %v56
  %v250 = vunpack.c.l.b16 %v57
  %v251 = vunpack.c.h.b16 %v57
  %v252 = vunpack.c.l.b16 %v58
  %v253 = vunpack.c.h.b16 %v58
  %v254 = vunpack.c.l.b16 %v59
  %v255 = vunpack.c.h.b16 %v59
  %v256 = vunpack.c.l.b16 %v60
  %v257 = vunpack.c.h.b16 %v60
  %v258 = vunpack.c.l.b16 %v61
  %v259 = vunpack.c.h.b16 %v61
  %v260 = vunpack.c.l.b16 %v62
  %v261 = vunpack.c.h.b16 %v62
  %v262 = vunpack.c.l.b16 %v63
  %v263 = vunpack.c.h.b16 %v63
  %v264 = vunpack.c.l.b16 %v64
  %v265 = vunpack.c.h.b16 %v64
  %v266 = vunpack.c.l.b16 %v65
  %v267 = vunpack.c.h.b16 %v65
  %v268 = vunpack.c.l.b16 %v66
  %v269 = vunpack.c.h.b16 %v66
  %v270 = vunpack.c.l.b16 %v67
  %v271 = vunpack.c.h.b16 %v67
  %v272 = vunpack.c.l.b16 %v68
  %v273 = vunpack.c.h.b16 %v68
  %v274 = vunpack.c.l.b16 %v69
  %v275 = vunpack.c.h.b16 %v69
  %v276 = vunpack.c.l.b16 %v70
  %v277 = vunpack.c.h.b16 %v70
  %v278 = vpack.c.b16 %v166, %v164
  %v279 = vpack.c.b16 %v167, %v165
  %v280 = vpack.c.b16 %v170, %v168
  %v281 = vpack.c.b16 %v171, %v169
  %v282 = vpack.c.b16 %v174, %v172
  %v283 = vpack.c.b16 %v175, %v173
  %v284 = vpack.c.b16 %v178, %v176
  %v285 = vpack.c.b16 %v179, %v177
  %v286 = vpack.c.b16 %v182, %v180
  %v287 = vpack.c.b16 %v183, %v181
  %v288 = vpack.c.b16 %v186, %v184
  %v289 = vpack.c.b16 %v187, %v185
  %v290 = vpack.c.b16 %v190, %v188
  %v291 = vpack.c.b16 %v191, %v189
  %v292 = vpack.c.b16 %v194, %v192
  %v293 = vpack.c.b16 %v195, %v193
  %v294 = vpack.c.b16 %v198, %v196
  %v295 = vpack.c.b16 %v199, %v197
  %v296 = vpack.c.b16 %v202, %v200
  %v297 = vpack.c.b16 %v203, %v201
  %v298 = vpack.c.b16 %v206, %v204
  %v299 = vpack.c.b16 %v207, %v205
  %v300 = vpack.c.b16 %v210, %v208
  %v301 = vpack.c.b16 %v211, %v209
  %v302 = vpack.c.b16 %v214, %v212
  %v303 = vpack.c.b16 %v215, %v213
  %v304 = vpack.c.b16 %v218, %v216
  %v305 = vpack.c.b16 %v219, %v217
  %v306 = vpack.c.b16 %v222, %v220
  %v307 = vpack.c.b16 %v223, %v221
  %v308 = vpack.c.b16 %v226, %v224
  %v309 = vpack.c.b16 %v227, %v225
  %v310 = vpack.c.b16 %v230, %v228
  %v311 = vpack.c.b16 %v231, %v229
  %v312 = vpack.c.b16 %v234, %v232
  %v313 = vpack.c.b16 %v235, %v233
  %v314 = vpack.c.b16 %v238, %v236
  %v315 = vpack.c.b16 %v239, %v237
  %v316 = vpack.c.b16 %v242, %v240
  %v317 = vpack.c.b16 %v243, %v241
  %v318 = vpack.c.b16 %v246, %v244
  %v319 = vpack.c.b16 %v247, %v245
  %v320 = vpack.c.b16 %v250, %v248
  %v321 = vpack.c.b16 %v251, %v249
  %v322 = vpack.c.b16 %v254, %v252
  %v323 = vpack.c.b16 %v255, %v253
  %v324 = vpack.c.b16 %v258, %v256
  %v325 = vpack.c.b16 %v259, %v257
  %v326 = vpack.c.b16 %v262, %v260
  %v327 = vpack.c.b16 %v263, %v261
  %v328 = vpack.c.b16 %v266, %v264
  %v329 = vpack.c.b16 %v267, %v265
  %v330 = vpack.c.b16 %v270, %v268
  %v331 = vpack.c.b16 %v271, %v269
  %v332 = vpack.c.b16 %v274, %v272
  %v333 = vpack.c.b16 %v275, %v273
  %v334 = vpack.c.b16 %v276, %v276
  %v335 = vpack.c.b16 %v277, %v277
  %v426 = vunpack.c.l.b16 %v71
  %v427 = vunpack.c.l.b16 %v72
  %v428 = vunpack.c.l.b16 %v73
  %v429 = vunpack.c.l.b16 %v74
  %v430 = vunpack.c.l.b16 %v75
  %v431 = vunpack.c.l.b16 %v76
  %v432 = vunpack.c.l.b16 %v77
  %v433 = vunpack.c.l.b16 %v78
  %v434 = vunpack.c.l.b16 %v79
  %v435 = vunpack.c.l.b16 %v80
  %v436 = vunpack.c.l.b16 %v81
  %v437 = vunpack.c.l.b16 %v82
  %v438 = vunpack.c.l.b16 %v83
  %v439 = vunpack.c.l.b16 %v84
  %v440 = vunpack.c.l.b16 %v85
  %v441 = vunpack.c.l.b16 %v86
  %v442 = vunpack.c.l.b16 %v87
  %v443 = vunpack.c.l.b16 %v88
  %v444 = vunpack.c.l.b16 %v89
  %v445 = vunpack.c.l.b16 %v90
  %v446 = vunpack.c.l.b16 %v91
  %v447 = vunpack.c.l.b16 %v92
  %v448 = vunpack.c.l.b16 %v93
  %v449 = vunpack.c.l.b16 %v94
  %v450 = vunpack.c.l.b16 %v95
  %v451 = vunpack.c.l.b16 %v96
  %v452 = vunpack.c.l.b16 %v97
  %v453 = vunpack.c.l.b16 %v98
  %v454 = vunpack.c.l.b16 %v99
  %v455 = vunpack.c.l.b16 %v100
  %v456 = vunpack.c.l.b16 %v101
  %v457 = vunpack.c.l.b16 %v102
  %v458 = vpack.c.b16 %v427, %v426
  %v459 = vpack.c.b16 %v429, %v428
  %v460 = vpack.c.b16 %v431, %v430
  %v461 = vpack.c.b16 %v433, %v432
  %v462 = vpack.c.b16 %v435, %v434
  %v463 = vpack.c.b16 %v437, %v436
  %v464 = vpack.c.b16 %v439, %v438
  %v465 = vpack.c.b16 %v441, %v440
  %v466 = vpack.c.b16 %v443, %v442
  %v467 = vpack.c.b16 %v445, %v444
  %v468 = vpack.c.b16 %v447, %v446
  %v469 = vpack.c.b16 %v449, %v448
  %v470 = vpack.c.b16 %v451, %v450
  %v471 = vpack.c.b16 %v453, %v452
  %v472 = vpack.c.b16 %v455, %v454
  %v473 = vpack.c.b16 %v457, %v456
  %490 = vmatpush.bf16.msra.mxu0 %v465
  %491 = vmatpush.bf16.msra.mxu0 %v464
  %492 = vmatpush.bf16.msra.mxu0 %v463
  %493 = vmatpush.bf16.msra.mxu0 %v462
  %494 = vmatpush.bf16.msra.mxu0 %v461
  %495 = vmatpush.bf16.msra.mxu0 %v460
  %496 = vmatpush.bf16.msra.mxu0 %v459
  %497 = vmatpush.bf16.msra.mxu0 %v458
  %498 = vmatmul.bf16.gmra.mxu0 %v278
  %v499 = vpop.f32.mrf.mxu0
  %v500 = vadd.f32 %v105, %v499
  %v501 = vpop.f32.mrf.mxu0
  %v502 = vadd.f32 %v105, %v501
  %503 = vmatmul.bf16.gmra.mxu0 %v280
  %v504 = vpop.f32.mrf.mxu0
  %v505 = vadd.f32 %v105, %v504
  %v506 = vpop.f32.mrf.mxu0
  %v507 = vadd.f32 %v105, %v506
  %508 = vmatmul.bf16.gmra.mxu0 %v282
  %v509 = vpop.f32.mrf.mxu0
  %v510 = vadd.f32 %v105, %v509
  %v511 = vpop.f32.mrf.mxu0
  %v512 = vadd.f32 %v105, %v511
  %513 = vmatmul.bf16.gmra.mxu0 %v284
  %v514 = vpop.f32.mrf.mxu0
  %v515 = vadd.f32 %v105, %v514
  %v516 = vpop.f32.mrf.mxu0
  %v517 = vadd.f32 %v105, %v516
  %518 = vmatmul.bf16.gmra.mxu0 %v286
  %v519 = vpop.f32.mrf.mxu0
  %v520 = vadd.f32 %v105, %v519
  %v521 = vpop.f32.mrf.mxu0
  %v522 = vadd.f32 %v105, %v521
  %523 = vmatmul.bf16.gmra.mxu0 %v288
  %v524 = vpop.f32.mrf.mxu0
  %v525 = vadd.f32 %v105, %v524
  %v526 = vpop.f32.mrf.mxu0
  %v527 = vadd.f32 %v105, %v526
  %528 = vmatmul.bf16.gmra.mxu0 %v290
  %v529 = vpop.f32.mrf.mxu0
  %v530 = vadd.f32 %v105, %v529
  %v531 = vpop.f32.mrf.mxu0
  %v532 = vadd.f32 %v105, %v531
  %533 = vmatmul.bf16.gmra.mxu0 %v292
  %v534 = vpop.f32.mrf.mxu0
  %v535 = vadd.f32 %v105, %v534
  %v536 = vpop.f32.mrf.mxu0
  %v537 = vadd.f32 %v105, %v536
  %538 = vmatmul.bf16.gmra.mxu0 %v294
  %v539 = vpop.f32.mrf.mxu0
  %v540 = vadd.f32 %v105, %v539
  %v541 = vpop.f32.mrf.mxu0
  %v542 = vadd.f32 %v105, %v541
  %543 = vmatmul.bf16.gmra.mxu0 %v296
  %v544 = vpop.f32.mrf.mxu0
  %v545 = vadd.f32 %v105, %v544
  %v546 = vpop.f32.mrf.mxu0
  %v547 = vadd.f32 %v105, %v546
  %548 = vmatmul.bf16.gmra.mxu0 %v298
  %v549 = vpop.f32.mrf.mxu0
  %v550 = vadd.f32 %v105, %v549
  %v551 = vpop.f32.mrf.mxu0
  %v552 = vadd.f32 %v105, %v551
  %553 = vmatmul.bf16.gmra.mxu0 %v300
  %v554 = vpop.f32.mrf.mxu0
  %v555 = vadd.f32 %v105, %v554
  %v556 = vpop.f32.mrf.mxu0
  %v557 = vadd.f32 %v105, %v556
  %558 = vmatmul.bf16.gmra.mxu0 %v302
  %v559 = vpop.f32.mrf.mxu0
  %v560 = vadd.f32 %v105, %v559
  %v561 = vpop.f32.mrf.mxu0
  %v562 = vadd.f32 %v105, %v561
  %563 = vmatmul.bf16.gmra.mxu0 %v304
  %v564 = vpop.f32.mrf.mxu0
  %v565 = vadd.f32 %v105, %v564
  %v566 = vpop.f32.mrf.mxu0
  %v567 = vadd.f32 %v105, %v566
  %568 = vmatmul.bf16.gmra.mxu0 %v306
  %v569 = vpop.f32.mrf.mxu0
  %v570 = vadd.f32 %v105, %v569
  %v571 = vpop.f32.mrf.mxu0
  %v572 = vadd.f32 %v105, %v571
  %573 = vmatmul.bf16.gmra.mxu0 %v308
  %v574 = vpop.f32.mrf.mxu0
  %v575 = vadd.f32 %v105, %v574
  %v576 = vpop.f32.mrf.mxu0
  %v577 = vadd.f32 %v105, %v576
  %578 = vmatmul.bf16.gmra.mxu0 %v310
  %v579 = vpop.f32.mrf.mxu0
  %v580 = vadd.f32 %v105, %v579
  %v581 = vpop.f32.mrf.mxu0
  %v582 = vadd.f32 %v105, %v581
  %583 = vmatmul.bf16.gmra.mxu0 %v312
  %v584 = vpop.f32.mrf.mxu0
  %v585 = vadd.f32 %v105, %v584
  %v586 = vpop.f32.mrf.mxu0
  %v587 = vadd.f32 %v105, %v586
  %588 = vmatmul.bf16.gmra.mxu0 %v314
  %v589 = vpop.f32.mrf.mxu0
  %v590 = vadd.f32 %v105, %v589
  %v591 = vpop.f32.mrf.mxu0
  %v592 = vadd.f32 %v105, %v591
  %593 = vmatmul.bf16.gmra.mxu0 %v316
  %v594 = vpop.f32.mrf.mxu0
  %v595 = vadd.f32 %v105, %v594
  %v596 = vpop.f32.mrf.mxu0
  %v597 = vadd.f32 %v105, %v596
  %598 = vmatmul.bf16.gmra.mxu0 %v318
  %v599 = vpop.f32.mrf.mxu0
  %v600 = vadd.f32 %v105, %v599
  %v601 = vpop.f32.mrf.mxu0
  %v602 = vadd.f32 %v105, %v601
  %603 = vmatmul.bf16.gmra.mxu0 %v320
  %v604 = vpop.f32.mrf.mxu0
  %v605 = vadd.f32 %v105, %v604
  %v606 = vpop.f32.mrf.mxu0
  %v607 = vadd.f32 %v105, %v606
  %608 = vmatmul.bf16.gmra.mxu0 %v322
  %v609 = vpop.f32.mrf.mxu0
  %v610 = vadd.f32 %v105, %v609
  %v611 = vpop.f32.mrf.mxu0
  %v612 = vadd.f32 %v105, %v611
  %613 = vmatmul.bf16.gmra.mxu0 %v324
  %v614 = vpop.f32.mrf.mxu0
  %v615 = vadd.f32 %v105, %v614
  %v616 = vpop.f32.mrf.mxu0
  %v617 = vadd.f32 %v105, %v616
  %618 = vmatmul.bf16.gmra.mxu0 %v326
  %v619 = vpop.f32.mrf.mxu0
  %v620 = vadd.f32 %v105, %v619
  %v621 = vpop.f32.mrf.mxu0
  %v622 = vadd.f32 %v105, %v621
  %623 = vmatmul.bf16.gmra.mxu0 %v328
  %v624 = vpop.f32.mrf.mxu0
  %v625 = vadd.f32 %v105, %v624
  %v626 = vpop.f32.mrf.mxu0
  %v627 = vadd.f32 %v105, %v626
  %628 = vmatmul.bf16.gmra.mxu0 %v330
  %v629 = vpop.f32.mrf.mxu0
  %v630 = vadd.f32 %v105, %v629
  %v631 = vpop.f32.mrf.mxu0
  %v632 = vadd.f32 %v105, %v631
  %633 = vmatmul.bf16.gmra.mxu0 %v332
  %v634 = vpop.f32.mrf.mxu0
  %v635 = vadd.f32 %v105, %v634
  %v636 = vpop.f32.mrf.mxu0
  %v637 = vadd.f32 %v105, %v636
  %638 = vmatmul.bf16.gmra.mxu0 %v334
  %v639 = vpop.f32.mrf.mxu0
  %v640 = vadd.f32 %v105, %v639
  %v641 = vpop.f32.mrf.mxu0
  %642 = vdwg.mxu0
  %643 = vmatpush.bf16.msra.mxu0 %v473
  %644 = vmatpush.bf16.msra.mxu0 %v472
  %645 = vmatpush.bf16.msra.mxu0 %v471
  %646 = vmatpush.bf16.msra.mxu0 %v470
  %647 = vmatpush.bf16.msra.mxu0 %v469
  %648 = vmatpush.bf16.msra.mxu0 %v468
  %649 = vmatpush.bf16.msra.mxu0 %v467
  %650 = vmatpush.bf16.msra.mxu0 %v466
  %651 = vmatmul.bf16.gmra.mxu0 %v279
  %v652 = vpop.f32.mrf.mxu0
  %v653 = vadd.f32 %v500, %v652
  %v654 = vpop.f32.mrf.mxu0
  %v655 = vadd.f32 %v502, %v654
  %656 = vmatmul.bf16.gmra.mxu0 %v281
  %v657 = vpop.f32.mrf.mxu0
  %v658 = vadd.f32 %v505, %v657
  %v659 = vpop.f32.mrf.mxu0
  %v660 = vadd.f32 %v507, %v659
  %661 = vmatmul.bf16.gmra.mxu0 %v283
  %v662 = vpop.f32.mrf.mxu0
  %v663 = vadd.f32 %v510, %v662
  %v664 = vpop.f32.mrf.mxu0
  %v665 = vadd.f32 %v512, %v664
  %666 = vmatmul.bf16.gmra.mxu0 %v285
  %v667 = vpop.f32.mrf.mxu0
  %v668 = vadd.f32 %v515, %v667
  %v669 = vpop.f32.mrf.mxu0
  %v670 = vadd.f32 %v517, %v669
  %671 = vmatmul.bf16.gmra.mxu0 %v287
  %v672 = vpop.f32.mrf.mxu0
  %v673 = vadd.f32 %v520, %v672
  %v674 = vpop.f32.mrf.mxu0
  %v675 = vadd.f32 %v522, %v674
  %676 = vmatmul.bf16.gmra.mxu0 %v289
  %v677 = vpop.f32.mrf.mxu0
  %v678 = vadd.f32 %v525, %v677
  %v679 = vpop.f32.mrf.mxu0
  %v680 = vadd.f32 %v527, %v679
  %681 = vmatmul.bf16.gmra.mxu0 %v291
  %v682 = vpop.f32.mrf.mxu0
  %v683 = vadd.f32 %v530, %v682
  %v684 = vpop.f32.mrf.mxu0
  %v685 = vadd.f32 %v532, %v684
  %686 = vmatmul.bf16.gmra.mxu0 %v293
  %v687 = vpop.f32.mrf.mxu0
  %v688 = vadd.f32 %v535, %v687
  %v689 = vpop.f32.mrf.mxu0
  %v690 = vadd.f32 %v537, %v689
  %691 = vmatmul.bf16.gmra.mxu0 %v295
  %v692 = vpop.f32.mrf.mxu0
  %v693 = vadd.f32 %v540, %v692
  %v694 = vpop.f32.mrf.mxu0
  %v695 = vadd.f32 %v542, %v694
  %696 = vmatmul.bf16.gmra.mxu0 %v297
  %v697 = vpop.f32.mrf.mxu0
  %v698 = vadd.f32 %v545, %v697
  %v699 = vpop.f32.mrf.mxu0
  %v700 = vadd.f32 %v547, %v699
  %701 = vmatmul.bf16.gmra.mxu0 %v299
  %v702 = vpop.f32.mrf.mxu0
  %v703 = vadd.f32 %v550, %v702
  %v704 = vpop.f32.mrf.mxu0
  %v705 = vadd.f32 %v552, %v704
  %706 = vmatmul.bf16.gmra.mxu0 %v301
  %v707 = vpop.f32.mrf.mxu0
  %v708 = vadd.f32 %v555, %v707
  %v709 = vpop.f32.mrf.mxu0
  %v710 = vadd.f32 %v557, %v709
  %711 = vmatmul.bf16.gmra.mxu0 %v303
  %v712 = vpop.f32.mrf.mxu0
  %v713 = vadd.f32 %v560, %v712
  %v714 = vpop.f32.mrf.mxu0
  %v715 = vadd.f32 %v562, %v714
  %716 = vmatmul.bf16.gmra.mxu0 %v305
  %v717 = vpop.f32.mrf.mxu0
  %v718 = vadd.f32 %v565, %v717
  %v719 = vpop.f32.mrf.mxu0
  %v720 = vadd.f32 %v567, %v719
  %721 = vmatmul.bf16.gmra.mxu0 %v307
  %v722 = vpop.f32.mrf.mxu0
  %v723 = vadd.f32 %v570, %v722
  %v724 = vpop.f32.mrf.mxu0
  %v725 = vadd.f32 %v572, %v724
  %726 = vmatmul.bf16.gmra.mxu0 %v309
  %v727 = vpop.f32.mrf.mxu0
  %v728 = vadd.f32 %v575, %v727
  %v729 = vpop.f32.mrf.mxu0
  %v730 = vadd.f32 %v577, %v729
  %731 = vmatmul.bf16.gmra.mxu0 %v311
  %v732 = vpop.f32.mrf.mxu0
  %v733 = vadd.f32 %v580, %v732
  %v734 = vpop.f32.mrf.mxu0
  %v735 = vadd.f32 %v582, %v734
  %736 = vmatmul.bf16.gmra.mxu0 %v313
  %v737 = vpop.f32.mrf.mxu0
  %v738 = vadd.f32 %v585, %v737
  %v739 = vpop.f32.mrf.mxu0
  %v740 = vadd.f32 %v587, %v739
  %741 = vmatmul.bf16.gmra.mxu0 %v315
  %v742 = vpop.f32.mrf.mxu0
  %v743 = vadd.f32 %v590, %v742
  %v744 = vpop.f32.mrf.mxu0
  %v745 = vadd.f32 %v592, %v744
  %746 = vmatmul.bf16.gmra.mxu0 %v317
  %v747 = vpop.f32.mrf.mxu0
  %v748 = vadd.f32 %v595, %v747
  %v749 = vpop.f32.mrf.mxu0
  %v750 = vadd.f32 %v597, %v749
  %751 = vmatmul.bf16.gmra.mxu0 %v319
  %v752 = vpop.f32.mrf.mxu0
  %v753 = vadd.f32 %v600, %v752
  %v754 = vpop.f32.mrf.mxu0
  %v755 = vadd.f32 %v602, %v754
  %756 = vmatmul.bf16.gmra.mxu0 %v321
  %v757 = vpop.f32.mrf.mxu0
  %v758 = vadd.f32 %v605, %v757
  %v759 = vpop.f32.mrf.mxu0
  %v760 = vadd.f32 %v607, %v759
  %761 = vmatmul.bf16.gmra.mxu0 %v323
  %v762 = vpop.f32.mrf.mxu0
  %v763 = vadd.f32 %v610, %v762
  %v764 = vpop.f32.mrf.mxu0
  %v765 = vadd.f32 %v612, %v764
  %766 = vmatmul.bf16.gmra.mxu0 %v325
  %v767 = vpop.f32.mrf.mxu0
  %v768 = vadd.f32 %v615, %v767
  %v769 = vpop.f32.mrf.mxu0
  %v770 = vadd.f32 %v617, %v769
  %771 = vmatmul.bf16.gmra.mxu0 %v327
  %v772 = vpop.f32.mrf.mxu0
  %v773 = vadd.f32 %v620, %v772
  %v774 = vpop.f32.mrf.mxu0
  %v775 = vadd.f32 %v622, %v774
  %776 = vmatmul.bf16.gmra.mxu0 %v329
  %v777 = vpop.f32.mrf.mxu0
  %v778 = vadd.f32 %v625, %v777
  %v779 = vpop.f32.mrf.mxu0
  %v780 = vadd.f32 %v627, %v779
  %781 = vmatmul.bf16.gmra.mxu0 %v331
  %v782 = vpop.f32.mrf.mxu0
  %v783 = vadd.f32 %v630, %v782
  %v784 = vpop.f32.mrf.mxu0
  %v785 = vadd.f32 %v632, %v784
  %786 = vmatmul.bf16.gmra.mxu0 %v333
  %v787 = vpop.f32.mrf.mxu0
  %v788 = vadd.f32 %v635, %v787
  %v789 = vpop.f32.mrf.mxu0
  %v790 = vadd.f32 %v637, %v789
  %791 = vmatmul.bf16.gmra.mxu0 %v335
  %v792 = vpop.f32.mrf.mxu0
  %v793 = vadd.f32 %v640, %v792
  %v794 = vpop.f32.mrf.mxu0
  %795 = vdwg.mxu0
  %v796 = vmax.f32 %v653, 0.0
  %v797 = vmax.f32 %v655, 0.0
  %v798 = vmax.f32 %v658, 0.0
  %v799 = vmax.f32 %v660, 0.0
  %v800 = vmax.f32 %v663, 0.0
  %v801 = vmax.f32 %v665, 0.0
  %v802 = vmax.f32 %v668, 0.0
  %v803 = vmax.f32 %v670, 0.0
  %v804 = vmax.f32 %v673, 0.0
  %v805 = vmax.f32 %v675, 0.0
  %v806 = vmax.f32 %v678, 0.0
  %v807 = vmax.f32 %v680, 0.0
  %v808 = vmax.f32 %v683, 0.0
  %v809 = vmax.f32 %v685, 0.0
  %v810 = vmax.f32 %v688, 0.0
  %v811 = vmax.f32 %v690, 0.0
  %v812 = vmax.f32 %v693, 0.0
  %v813 = vmax.f32 %v695, 0.0
  %v814 = vmax.f32 %v698, 0.0
  %v815 = vmax.f32 %v700, 0.0
  %v816 = vmax.f32 %v703, 0.0
  %v817 = vmax.f32 %v705, 0.0
  %v818 = vmax.f32 %v708, 0.0
  %v819 = vmax.f32 %v710, 0.0
  %v820 = vmax.f32 %v713, 0.0
  %v821 = vmax.f32 %v715, 0.0
  %v822 = vmax.f32 %v718, 0.0
  %v823 = vmax.f32 %v720, 0.0
  %v824 = vmax.f32 %v723, 0.0
  %v825 = vmax.f32 %v725, 0.0
  %v826 = vmax.f32 %v728, 0.0
  %v827 = vmax.f32 %v730, 0.0
  %v828 = vmax.f32 %v733, 0.0
  %v829 = vmax.f32 %v735, 0.0
  %v830 = vmax.f32 %v738, 0.0
  %v831 = vmax.f32 %v740, 0.0
  %v832 = vmax.f32 %v743, 0.0
  %v833 = vmax.f32 %v745, 0.0
  %v834 = vmax.f32 %v748, 0.0
  %v835 = vmax.f32 %v750, 0.0
  %v836 = vmax.f32 %v753, 0.0
  %v837 = vmax.f32 %v755, 0.0
  %v838 = vmax.f32 %v758, 0.0
  %v839 = vmax.f32 %v760, 0.0
  %v840 = vmax.f32 %v763, 0.0
  %v841 = vmax.f32 %v765, 0.0
  %v842 = vmax.f32 %v768, 0.0
  %v843 = vmax.f32 %v770, 0.0
  %v844 = vmax.f32 %v773, 0.0
  %v845 = vmax.f32 %v775, 0.0
  %v846 = vmax.f32 %v778, 0.0
  %v847 = vmax.f32 %v780, 0.0
  %v848 = vmax.f32 %v783, 0.0
  %v849 = vmax.f32 %v785, 0.0
  %v850 = vmax.f32 %v788, 0.0
  %v851 = vmax.f32 %v790, 0.0
  %v852 = vmax.f32 %v793, 0.0
  %v853 = vpack.c.bf16 %v796, %v796
  %v854 = vpack.c.bf16 %v797, %v797
  %v855 = vpack.c.bf16 %v798, %v798
  %v856 = vpack.c.bf16 %v799, %v799
  %v857 = vpack.c.bf16 %v800, %v800
  %v858 = vpack.c.bf16 %v801, %v801
  %v859 = vpack.c.bf16 %v802, %v802
  %v860 = vpack.c.bf16 %v803, %v803
  %v861 = vpack.c.bf16 %v804, %v804
  %v862 = vpack.c.bf16 %v805, %v805
  %v863 = vpack.c.bf16 %v806, %v806
  %v864 = vpack.c.bf16 %v807, %v807
  %v865 = vpack.c.bf16 %v808, %v808
  %v866 = vpack.c.bf16 %v809, %v809
  %v867 = vpack.c.bf16 %v810, %v810
  %v868 = vpack.c.bf16 %v811, %v811
  %v869 = vpack.c.bf16 %v812, %v812
  %v870 = vpack.c.bf16 %v813, %v813
  %v871 = vpack.c.bf16 %v814, %v814
  %v872 = vpack.c.bf16 %v815, %v815
  %v873 = vpack.c.bf16 %v816, %v816
  %v874 = vpack.c.bf16 %v817, %v817
  %v875 = vpack.c.bf16 %v818, %v818
  %v876 = vpack.c.bf16 %v819, %v819
  %v877 = vpack.c.bf16 %v820, %v820
  %v878 = vpack.c.bf16 %v821, %v821
  %v879 = vpack.c.bf16 %v822, %v822
  %v880 = vpack.c.bf16 %v823, %v823
  %v881 = vpack.c.bf16 %v824, %v824
  %v882 = vpack.c.bf16 %v825, %v825
  %v883 = vpack.c.bf16 %v826, %v826
  %v884 = vpack.c.bf16 %v827, %v827
  %v885 = vpack.c.bf16 %v828, %v828
  %v886 = vpack.c.bf16 %v829, %v829
  %v887 = vpack.c.bf16 %v830, %v830
  %v888 = vpack.c.bf16 %v831, %v831
  %v889 = vpack.c.bf16 %v832, %v832
  %v890 = vpack.c.bf16 %v833, %v833
  %v891 = vpack.c.bf16 %v834, %v834
  %v892 = vpack.c.bf16 %v835, %v835
  %v893 = vpack.c.bf16 %v836, %v836
  %v894 = vpack.c.bf16 %v837, %v837
  %v895 = vpack.c.bf16 %v838, %v838
  %v896 = vpack.c.bf16 %v839, %v839
  %v897 = vpack.c.bf16 %v840, %v840
  %v898 = vpack.c.bf16 %v841, %v841
  %v899 = vpack.c.bf16 %v842, %v842
  %v900 = vpack.c.bf16 %v843, %v843
  %v901 = vpack.c.bf16 %v844, %v844
  %v902 = vpack.c.bf16 %v845, %v845
  %v903 = vpack.c.bf16 %v846, %v846
  %v904 = vpack.c.bf16 %v847, %v847
  %v905 = vpack.c.bf16 %v848, %v848
  %v906 = vpack.c.bf16 %v849, %v849
  %v907 = vpack.c.bf16 %v850, %v850
  %v908 = vpack.c.bf16 %v851, %v851
  %v909 = vpack.c.bf16 %v852, %v852
  %910 = vst [vmem:[%s3] sm:$0xf] %v853
  %911 = vst [vmem:[%s3 + $0x4] sm:$0xf] %v854
  %912 = vst [vmem:[%s3 + $0x8] sm:$0xf] %v855
  %913 = vst [vmem:[%s3 + $0xc] sm:$0xf] %v856
  %914 = vst [vmem:[%s3 + $0x10] sm:$0xf] %v857
  %915 = vst [vmem:[%s3 + $0x14] sm:$0xf] %v858
  %916 = vst [vmem:[%s3 + $0x18] sm:$0xf] %v859
  %917 = vst [vmem:[%s3 + $0x1c] sm:$0xf] %v860
  %918 = vst [vmem:[%s3 + $0x20] sm:$0xf] %v861
  %919 = vst [vmem:[%s3 + $0x24] sm:$0xf] %v862
  %920 = vst [vmem:[%s3 + $0x28] sm:$0xf] %v863
  %921 = vst [vmem:[%s3 + $0x2c] sm:$0xf] %v864
  %922 = vst [vmem:[%s3 + $0x30] sm:$0xf] %v865
  %923 = vst [vmem:[%s3 + $0x34] sm:$0xf] %v866
  %924 = vst [vmem:[%s3 + $0x38] sm:$0xf] %v867
  %925 = vst [vmem:[%s3 + $0x3c] sm:$0xf] %v868
  %926 = vst [vmem:[%s3 + $0x40] sm:$0xf] %v869
  %927 = vst [vmem:[%s3 + $0x44] sm:$0xf] %v870
  %928 = vst [vmem:[%s3 + $0x48] sm:$0xf] %v871
  %929 = vst [vmem:[%s3 + $0x4c] sm:$0xf] %v872
  %930 = vst [vmem:[%s3 + $0x50] sm:$0xf] %v873
  %931 = vst [vmem:[%s3 + $0x54] sm:$0xf] %v874
  %932 = vst [vmem:[%s3 + $0x58] sm:$0xf] %v875
  %933 = vst [vmem:[%s3 + $0x5c] sm:$0xf] %v876
  %934 = vst [vmem:[%s3 + $0x60] sm:$0xf] %v877
  %935 = vst [vmem:[%s3 + $0x64] sm:$0xf] %v878
  %936 = vst [vmem:[%s3 + $0x68] sm:$0xf] %v879
  %937 = vst [vmem:[%s3 + $0x6c] sm:$0xf] %v880
  %938 = vst [vmem:[%s3 + $0x70] sm:$0xf] %v881
  %939 = vst [vmem:[%s3 + $0x74] sm:$0xf] %v882
  %940 = vst [vmem:[%s3 + $0x78] sm:$0xf] %v883
  %941 = vst [vmem:[%s3 + $0x7c] sm:$0xf] %v884
  %942 = vst [vmem:[%s3 + $0x80] sm:$0xf] %v885
  %943 = vst [vmem:[%s3 + $0x84] sm:$0xf] %v886
  %944 = vst [vmem:[%s3 + $0x88] sm:$0xf] %v887
  %945 = vst [vmem:[%s3 + $0x8c] sm:$0xf] %v888
  %946 = vst [vmem:[%s3 + $0x90] sm:$0xf] %v889
  %947 = vst [vmem:[%s3 + $0x94] sm:$0xf] %v890
  %948 = vst [vmem:[%s3 + $0x98] sm:$0xf] %v891
  %949 = vst [vmem:[%s3 + $0x9c] sm:$0xf] %v892
  %950 = vst [vmem:[%s3 + $0xa0] sm:$0xf] %v893
  %951 = vst [vmem:[%s3 + $0xa4] sm:$0xf] %v894
  %952 = vst [vmem:[%s3 + $0xa8] sm:$0xf] %v895
  %953 = vst [vmem:[%s3 + $0xac] sm:$0xf] %v896
  %954 = vst [vmem:[%s3 + $0xb0] sm:$0xf] %v897
  %955 = vst [vmem:[%s3 + $0xb4] sm:$0xf] %v898
  %956 = vst [vmem:[%s3 + $0xb8] sm:$0xf] %v899
  %957 = vst [vmem:[%s3 + $0xbc] sm:$0xf] %v900
  %958 = vst [vmem:[%s3 + $0xc0] sm:$0xf] %v901
  %959 = vst [vmem:[%s3 + $0xc4] sm:$0xf] %v902
  %960 = vst [vmem:[%s3 + $0xc8] sm:$0xf] %v903
  %961 = vst [vmem:[%s3 + $0xcc] sm:$0xf] %v904
  %962 = vst [vmem:[%s3 + $0xd0] sm:$0xf] %v905
  %963 = vst [vmem:[%s3 + $0xd4] sm:$0xf] %v906
  %964 = vst [vmem:[%s3 + $0xd8] sm:$0xf] %v907
  %965 = vst [vmem:[%s3 + $0xdc] sm:$0xf] %v908
  %966 = vst [vmem:[%s3 + $0xe0] sm:$0xf] %v909
  // Predicated region
  $region14: #{dqn_forward.4} parent=0 // pred_check
    _
  $region15: #{dqn_forward.4} parent=0 // pred_check_branch
    %968 = sbr.rel (0) target = $region17
  $region16: #{dqn_forward.4} parent=0 // pred_region
    _
  $region17: #{dqn_forward.4} parent=0 // pred_fallthru
    _
  // Predicated region
  $region18: #{dqn_forward.4} parent=0 // pred_check
    _
  $region19: #{dqn_forward.4} parent=0 // pred_check_branch
    %970 = sbr.rel (0) target = $region21
  $region20: #{dqn_forward.4} parent=0 // pred_region
    _
  $region21: #{dqn_forward.4} parent=0 // pred_fallthru
    _

// kernel: dqn_forward.5
$region0: #{dqn_forward.5}
  #allocation0 [shape = 'u32[]', space=smem, size = 0x4, offset = 0x4, fixed_abs, tag = 'smem constant byte address 0x4 - core index']
  #allocation1 [shape = 'u32[72,128]{1,0:T(1,128)}', space=vmem, size = 0x9000, scoped, tag = 'internal scratch']
  %s0 = inlined_call_operand.vmem [shape: bf16[72,2048], index: 0, kind: input, shape index: {}]
  %s1 = inlined_call_operand.vmem [shape: bf16[2048,128], index: 1, kind: input, shape index: {}]
  %s2 = inlined_call_operand.vmem [shape: f32[1,128], index: 2, kind: input, shape index: {}]
  %s3 = inlined_call_operand.vmem [shape: bf16[72,128], index: 3, kind: output, shape index: {}]
  %s4 = sld [smem:[#allocation0]]
  $region22: #{dqn_forward.5} parent=0
    _
  %s6 = ssub.s32 1, %s4
  %s7 = scalar_select 0, %s6, %s4
  // Predicated region
  $region2: #{dqn_forward.5} parent=0 // pred_check
    _
  $region3: #{dqn_forward.5} parent=0 // pred_check_branch
    %9 = sbr.rel (0) target = $region5
  $region4: #{dqn_forward.5} parent=0 // pred_region
    _
  $region5: #{dqn_forward.5} parent=0 // pred_fallthru
    _
  // Predicated region
  $region6: #{dqn_forward.5} parent=0 // pred_check
    _
  $region7: #{dqn_forward.5} parent=0 // pred_check_branch
    %11 = sbr.rel (0) target = $region9
  $region8: #{dqn_forward.5} parent=0 // pred_region
    _
  $region9: #{dqn_forward.5} parent=0 // pred_fallthru
    _
  // Predicated region
  $region10: #{dqn_forward.5} parent=0 // pred_check
    _
  $region11: #{dqn_forward.5} parent=0 // pred_check_branch
    %13 = sbr.rel (0) target = $region13
  $region12: #{dqn_forward.5} parent=0 // pred_region
    _
  $region13: #{dqn_forward.5} parent=0 // pred_fallthru
    _
  %v14 = vld [vmem:[%s0] sm:$0xff]
  %v15 = vld [vmem:[%s0 + $0x8] sm:$0xff]
  %v16 = vld [vmem:[%s0 + $0x10] sm:$0xff]
  %v17 = vld [vmem:[%s0 + $0x18] sm:$0xff]
  %v18 = vld [vmem:[%s0 + $0x20] sm:$0xff]
  %v19 = vld [vmem:[%s0 + $0x28] sm:$0xff]
  %v20 = vld [vmem:[%s0 + $0x30] sm:$0xff]
  %v21 = vld [vmem:[%s0 + $0x38] sm:$0xff]
  %v22 = vld [vmem:[%s0 + $0x40] sm:$0xff]
  %v23 = vld [vmem:[%s0 + $0x48] sm:$0xff]
  %v24 = vld [vmem:[%s0 + $0x50] sm:$0xff]
  %v25 = vld [vmem:[%s0 + $0x58] sm:$0xff]
  %v26 = vld [vmem:[%s0 + $0x60] sm:$0xff]
  %v27 = vld [vmem:[%s0 + $0x68] sm:$0xff]
  %v28 = vld [vmem:[%s0 + $0x70] sm:$0xff]
  %v29 = vld [vmem:[%s0 + $0x78] sm:$0xff]
  %v30 = vld [vmem:[%s0 + $0x80] sm:$0xff]
  %v31 = vld [vmem:[%s0 + $0x88] sm:$0xff]
  %v32 = vld [vmem:[%s0 + $0x90] sm:$0xff]
  %v33 = vld [vmem:[%s0 + $0x98] sm:$0xff]
  %v34 = vld [vmem:[%s0 + $0xa0] sm:$0xff]
  %v35 = vld [vmem:[%s0 + $0xa8] sm:$0xff]
  %v36 = vld [vmem:[%s0 + $0xb0] sm:$0xff]
  %v37 = vld [vmem:[%s0 + $0xb8] sm:$0xff]
  %v38 = vld [vmem:[%s0 + $0xc0] sm:$0xff]
  %v39 = vld [vmem:[%s0 + $0xc8] sm:$0xff]
  %v40 = vld [vmem:[%s0 + $0xd0] sm:$0xff]
  %v41 = vld [vmem:[%s0 + $0xd8] sm:$0xff]
  %v42 = vld [vmem:[%s0 + $0xe0] sm:$0xff]
  %v43 = vld [vmem:[%s0 + $0xe8] sm:$0xff]
  %v44 = vld [vmem:[%s0 + $0xf0] sm:$0xff]
  %v45 = vld [vmem:[%s0 + $0xf8] sm:$0xff]
  %v46 = vld [vmem:[%s0 + $0x100] sm:$0xff]
  %v47 = vld [vmem:[%s0 + $0x108] sm:$0xff]
  %v48 = vld [vmem:[%s0 + $0x110] sm:$0xff]
  %v49 = vld [vmem:[%s0 + $0x118] sm:$0xff]
  %v50 = vld [vmem:[%s0 + $0x120] sm:$0xff]
  %v51 = vld [vmem:[%s0 + $0x128] sm:$0xff]
  %v52 = vld [vmem:[%s0 + $0x130] sm:$0xff]
  %v53 = vld [vmem:[%s0 + $0x138] sm:$0xff]
  %v54 = vld [vmem:[%s0 + $0x140] sm:$0xff]
  %v55 = vld [vmem:[%s0 + $0x148] sm:$0xff]
  %v56 = vld [vmem:[%s0 + $0x150] sm:$0xff]
  %v57 = vld [vmem:[%s0 + $0x158] sm:$0xff]
  %v58 = vld [vmem:[%s0 + $0x160] sm:$0xff]
  %v59 = vld [vmem:[%s0 + $0x168] sm:$0xff]
  %v60 = vld [vmem:[%s0 + $0x170] sm:$0xff]
  %v61 = vld [vmem:[%s0 + $0x178] sm:$0xff]
  %v62 = vld [vmem:[%s0 + $0x180] sm:$0xff]
  %v63 = vld [vmem:[%s0 + $0x188] sm:$0xff]
  %v64 = vld [vmem:[%s0 + $0x190] sm:$0xff]
  %v65 = vld [vmem:[%s0 + $0x198] sm:$0xff]
  %v66 = vld [vmem:[%s0 + $0x1a0] sm:$0xff]
  %v67 = vld [vmem:[%s0 + $0x1a8] sm:$0xff]
  %v68 = vld [vmem:[%s0 + $0x1b0] sm:$0xff]
  %v69 = vld [vmem:[%s0 + $0x1b8] sm:$0xff]
  %v70 = vld [vmem:[%s0 + $0x1c0] sm:$0xff]
  %v71 = vld [vmem:[%s0 + $0x1c8] sm:$0xff]
  %v72 = vld [vmem:[%s0 + $0x1d0] sm:$0xff]
  %v73 = vld [vmem:[%s0 + $0x1d8] sm:$0xff]
  %v74 = vld [vmem:[%s0 + $0x1e0] sm:$0xff]
  %v75 = vld [vmem:[%s0 + $0x1e8] sm:$0xff]
  %v76 = vld [vmem:[%s0 + $0x1f0] sm:$0xff]
  %v77 = vld [vmem:[%s0 + $0x1f8] sm:$0xff]
  %v78 = vld [vmem:[%s0 + $0x200] sm:$0xff]
  %v79 = vld [vmem:[%s0 + $0x208] sm:$0xff]
  %v80 = vld [vmem:[%s0 + $0x210] sm:$0xff]
  %v81 = vld [vmem:[%s0 + $0x218] sm:$0xff]
  %v82 = vld [vmem:[%s0 + $0x220] sm:$0xff]
  %v83 = vld [vmem:[%s0 + $0x228] sm:$0xff]
  %v84 = vld [vmem:[%s0 + $0x230] sm:$0xff]
  %v85 = vld [vmem:[%s0 + $0x238] sm:$0xff]
  %v86 = vld [vmem:[%s1] sm:$0xf]
  %v87 = vld [vmem:[%s1 + $0x4] sm:$0xf]
  %v88 = vld [vmem:[%s1 + $0x8] sm:$0xf]
  %v89 = vld [vmem:[%s1 + $0xc] sm:$0xf]
  %v90 = vld [vmem:[%s1 + $0x10] sm:$0xf]
  %v91 = vld [vmem:[%s1 + $0x14] sm:$0xf]
  %v92 = vld [vmem:[%s1 + $0x18] sm:$0xf]
  %v93 = vld [vmem:[%s1 + $0x1c] sm:$0xf]
  %v94 = vld [vmem:[%s1 + $0x20] sm:$0xf]
  %v95 = vld [vmem:[%s1 + $0x24] sm:$0xf]
  %v96 = vld [vmem:[%s1 + $0x28] sm:$0xf]
  %v97 = vld [vmem:[%s1 + $0x2c] sm:$0xf]
  %v98 = vld [vmem:[%s1 + $0x30] sm:$0xf]
  %v99 = vld [vmem:[%s1 + $0x34] sm:$0xf]
  %v100 = vld [vmem:[%s1 + $0x38] sm:$0xf]
  %v101 = vld [vmem:[%s1 + $0x3c] sm:$0xf]
  %v102 = vld [vmem:[%s1 + $0x40] sm:$0xf]
  %v103 = vld [vmem:[%s1 + $0x44] sm:$0xf]
  %v104 = vld [vmem:[%s1 + $0x48] sm:$0xf]
  %v105 = vld [vmem:[%s1 + $0x4c] sm:$0xf]
  %v106 = vld [vmem:[%s1 + $0x50] sm:$0xf]
  %v107 = vld [vmem:[%s1 + $0x54] sm:$0xf]
  %v108 = vld [vmem:[%s1 + $0x58] sm:$0xf]
  %v109 = vld [vmem:[%s1 + $0x5c] sm:$0xf]
  %v110 = vld [vmem:[%s1 + $0x60] sm:$0xf]
  %v111 = vld [vmem:[%s1 + $0x64] sm:$0xf]
  %v112 = vld [vmem:[%s1 + $0x68] sm:$0xf]
  %v113 = vld [vmem:[%s1 + $0x6c] sm:$0xf]
  %v114 = vld [vmem:[%s1 + $0x70] sm:$0xf]
  %v115 = vld [vmem:[%s1 + $0x74] sm:$0xf]
  %v116 = vld [vmem:[%s1 + $0x78] sm:$0xf]
  %v117 = vld [vmem:[%s1 + $0x7c] sm:$0xf]
  %v118 = vld [vmem:[%s1 + $0x80] sm:$0xf]
  %v119 = vld [vmem:[%s1 + $0x84] sm:$0xf]
  %v120 = vld [vmem:[%s1 + $0x88] sm:$0xf]
  %v121 = vld [vmem:[%s1 + $0x8c] sm:$0xf]
  %v122 = vld [vmem:[%s1 + $0x90] sm:$0xf]
  %v123 = vld [vmem:[%s1 + $0x94] sm:$0xf]
  %v124 = vld [vmem:[%s1 + $0x98] sm:$0xf]
  %v125 = vld [vmem:[%s1 + $0x9c] sm:$0xf]
  %v126 = vld [vmem:[%s1 + $0xa0] sm:$0xf]
  %v127 = vld [vmem:[%s1 + $0xa4] sm:$0xf]
  %v128 = vld [vmem:[%s1 + $0xa8] sm:$0xf]
  %v129 = vld [vmem:[%s1 + $0xac] sm:$0xf]
  %v130 = vld [vmem:[%s1 + $0xb0] sm:$0xf]
  %v131 = vld [vmem:[%s1 + $0xb4] sm:$0xf]
  %v132 = vld [vmem:[%s1 + $0xb8] sm:$0xf]
  %v133 = vld [vmem:[%s1 + $0xbc] sm:$0xf]
  %v134 = vld [vmem:[%s1 + $0xc0] sm:$0xf]
  %v135 = vld [vmem:[%s1 + $0xc4] sm:$0xf]
  %v136 = vld [vmem:[%s1 + $0xc8] sm:$0xf]
  %v137 = vld [vmem:[%s1 + $0xcc] sm:$0xf]
  %v138 = vld [vmem:[%s1 + $0xd0] sm:$0xf]
  %v139 = vld [vmem:[%s1 + $0xd4] sm:$0xf]
  %v140 = vld [vmem:[%s1 + $0xd8] sm:$0xf]
  %v141 = vld [vmem:[%s1 + $0xdc] sm:$0xf]
  %v142 = vld [vmem:[%s1 + $0xe0] sm:$0xf]
  %v143 = vld [vmem:[%s1 + $0xe4] sm:$0xf]
  %v144 = vld [vmem:[%s1 + $0xe8] sm:$0xf]
  %v145 = vld [vmem:[%s1 + $0xec] sm:$0xf]
  %v146 = vld [vmem:[%s1 + $0xf0] sm:$0xf]
  %v147 = vld [vmem:[%s1 + $0xf4] sm:$0xf]
  %v148 = vld [vmem:[%s1 + $0xf8] sm:$0xf]
  %v149 = vld [vmem:[%s1 + $0xfc] sm:$0xf]
  %v150 = vld [vmem:[%s1 + $0x100] sm:$0xf]
  %v151 = vld [vmem:[%s1 + $0x104] sm:$0xf]
  %v152 = vld [vmem:[%s1 + $0x108] sm:$0xf]
  %v153 = vld [vmem:[%s1 + $0x10c] sm:$0xf]
  %v154 = vld [vmem:[%s1 + $0x110] sm:$0xf]
  %v155 = vld [vmem:[%s1 + $0x114] sm:$0xf]
  %v156 = vld [vmem:[%s1 + $0x118] sm:$0xf]
  %v157 = vld [vmem:[%s1 + $0x11c] sm:$0xf]
  %v158 = vld [vmem:[%s1 + $0x120] sm:$0xf]
  %v159 = vld [vmem:[%s1 + $0x124] sm:$0xf]
  %v160 = vld [vmem:[%s1 + $0x128] sm:$0xf]
  %v161 = vld [vmem:[%s1 + $0x12c] sm:$0xf]
  %v162 = vld [vmem:[%s1 + $0x130] sm:$0xf]
  %v163 = vld [vmem:[%s1 + $0x134] sm:$0xf]
  %v164 = vld [vmem:[%s1 + $0x138] sm:$0xf]
  %v165 = vld [vmem:[%s1 + $0x13c] sm:$0xf]
  %v166 = vld [vmem:[%s1 + $0x140] sm:$0xf]
  %v167 = vld [vmem:[%s1 + $0x144] sm:$0xf]
  %v168 = vld [vmem:[%s1 + $0x148] sm:$0xf]
  %v169 = vld [vmem:[%s1 + $0x14c] sm:$0xf]
  %v170 = vld [vmem:[%s1 + $0x150] sm:$0xf]
  %v171 = vld [vmem:[%s1 + $0x154] sm:$0xf]
  %v172 = vld [vmem:[%s1 + $0x158] sm:$0xf]
  %v173 = vld [vmem:[%s1 + $0x15c] sm:$0xf]
  %v174 = vld [vmem:[%s1 + $0x160] sm:$0xf]
  %v175 = vld [vmem:[%s1 + $0x164] sm:$0xf]
  %v176 = vld [vmem:[%s1 + $0x168] sm:$0xf]
  %v177 = vld [vmem:[%s1 + $0x16c] sm:$0xf]
  %v178 = vld [vmem:[%s1 + $0x170] sm:$0xf]
  %v179 = vld [vmem:[%s1 + $0x174] sm:$0xf]
  %v180 = vld [vmem:[%s1 + $0x178] sm:$0xf]
  %v181 = vld [vmem:[%s1 + $0x17c] sm:$0xf]
  %v182 = vld [vmem:[%s1 + $0x180] sm:$0xf]
  %v183 = vld [vmem:[%s1 + $0x184] sm:$0xf]
  %v184 = vld [vmem:[%s1 + $0x188] sm:$0xf]
  %v185 = vld [vmem:[%s1 + $0x18c] sm:$0xf]
  %v186 = vld [vmem:[%s1 + $0x190] sm:$0xf]
  %v187 = vld [vmem:[%s1 + $0x194] sm:$0xf]
  %v188 = vld [vmem:[%s1 + $0x198] sm:$0xf]
  %v189 = vld [vmem:[%s1 + $0x19c] sm:$0xf]
  %v190 = vld [vmem:[%s1 + $0x1a0] sm:$0xf]
  %v191 = vld [vmem:[%s1 + $0x1a4] sm:$0xf]
  %v192 = vld [vmem:[%s1 + $0x1a8] sm:$0xf]
  %v193 = vld [vmem:[%s1 + $0x1ac] sm:$0xf]
  %v194 = vld [vmem:[%s1 + $0x1b0] sm:$0xf]
  %v195 = vld [vmem:[%s1 + $0x1b4] sm:$0xf]
  %v196 = vld [vmem:[%s1 + $0x1b8] sm:$0xf]
  %v197 = vld [vmem:[%s1 + $0x1bc] sm:$0xf]
  %v198 = vld [vmem:[%s1 + $0x1c0] sm:$0xf]
  %v199 = vld [vmem:[%s1 + $0x1c4] sm:$0xf]
  %v200 = vld [vmem:[%s1 + $0x1c8] sm:$0xf]
  %v201 = vld [vmem:[%s1 + $0x1cc] sm:$0xf]
  %v202 = vld [vmem:[%s1 + $0x1d0] sm:$0xf]
  %v203 = vld [vmem:[%s1 + $0x1d4] sm:$0xf]
  %v204 = vld [vmem:[%s1 + $0x1d8] sm:$0xf]
  %v205 = vld [vmem:[%s1 + $0x1dc] sm:$0xf]
  %v206 = vld [vmem:[%s1 + $0x1e0] sm:$0xf]
  %v207 = vld [vmem:[%s1 + $0x1e4] sm:$0xf]
  %v208 = vld [vmem:[%s1 + $0x1e8] sm:$0xf]
  %v209 = vld [vmem:[%s1 + $0x1ec] sm:$0xf]
  %v210 = vld [vmem:[%s1 + $0x1f0] sm:$0xf]
  %v211 = vld [vmem:[%s1 + $0x1f4] sm:$0xf]
  %v212 = vld [vmem:[%s1 + $0x1f8] sm:$0xf]
  %v213 = vld [vmem:[%s1 + $0x1fc] sm:$0xf]
  %v214 = vld [vmem:[%s1 + $0x200] sm:$0xf]
  %v215 = vld [vmem:[%s1 + $0x204] sm:$0xf]
  %v216 = vld [vmem:[%s1 + $0x208] sm:$0xf]
  %v217 = vld [vmem:[%s1 + $0x20c] sm:$0xf]
  %v218 = vld [vmem:[%s1 + $0x210] sm:$0xf]
  %v219 = vld [vmem:[%s1 + $0x214] sm:$0xf]
  %v220 = vld [vmem:[%s1 + $0x218] sm:$0xf]
  %v221 = vld [vmem:[%s1 + $0x21c] sm:$0xf]
  %v222 = vld [vmem:[%s1 + $0x220] sm:$0xf]
  %v223 = vld [vmem:[%s1 + $0x224] sm:$0xf]
  %v224 = vld [vmem:[%s1 + $0x228] sm:$0xf]
  %v225 = vld [vmem:[%s1 + $0x22c] sm:$0xf]
  %v226 = vld [vmem:[%s1 + $0x230] sm:$0xf]
  %v227 = vld [vmem:[%s1 + $0x234] sm:$0xf]
  %v228 = vld [vmem:[%s1 + $0x238] sm:$0xf]
  %v229 = vld [vmem:[%s1 + $0x23c] sm:$0xf]
  %v230 = vld [vmem:[%s1 + $0x240] sm:$0xf]
  %v231 = vld [vmem:[%s1 + $0x244] sm:$0xf]
  %v232 = vld [vmem:[%s1 + $0x248] sm:$0xf]
  %v233 = vld [vmem:[%s1 + $0x24c] sm:$0xf]
  %v234 = vld [vmem:[%s1 + $0x250] sm:$0xf]
  %v235 = vld [vmem:[%s1 + $0x254] sm:$0xf]
  %v236 = vld [vmem:[%s1 + $0x258] sm:$0xf]
  %v237 = vld [vmem:[%s1 + $0x25c] sm:$0xf]
  %v238 = vld [vmem:[%s1 + $0x260] sm:$0xf]
  %v239 = vld [vmem:[%s1 + $0x264] sm:$0xf]
  %v240 = vld [vmem:[%s1 + $0x268] sm:$0xf]
  %v241 = vld [vmem:[%s1 + $0x26c] sm:$0xf]
  %v242 = vld [vmem:[%s1 + $0x270] sm:$0xf]
  %v243 = vld [vmem:[%s1 + $0x274] sm:$0xf]
  %v244 = vld [vmem:[%s1 + $0x278] sm:$0xf]
  %v245 = vld [vmem:[%s1 + $0x27c] sm:$0xf]
  %v246 = vld [vmem:[%s1 + $0x280] sm:$0xf]
  %v247 = vld [vmem:[%s1 + $0x284] sm:$0xf]
  %v248 = vld [vmem:[%s1 + $0x288] sm:$0xf]
  %v249 = vld [vmem:[%s1 + $0x28c] sm:$0xf]
  %v250 = vld [vmem:[%s1 + $0x290] sm:$0xf]
  %v251 = vld [vmem:[%s1 + $0x294] sm:$0xf]
  %v252 = vld [vmem:[%s1 + $0x298] sm:$0xf]
  %v253 = vld [vmem:[%s1 + $0x29c] sm:$0xf]
  %v254 = vld [vmem:[%s1 + $0x2a0] sm:$0xf]
  %v255 = vld [vmem:[%s1 + $0x2a4] sm:$0xf]
  %v256 = vld [vmem:[%s1 + $0x2a8] sm:$0xf]
  %v257 = vld [vmem:[%s1 + $0x2ac] sm:$0xf]
  %v258 = vld [vmem:[%s1 + $0x2b0] sm:$0xf]
  %v259 = vld [vmem:[%s1 + $0x2b4] sm:$0xf]
  %v260 = vld [vmem:[%s1 + $0x2b8] sm:$0xf]
  %v261 = vld [vmem:[%s1 + $0x2bc] sm:$0xf]
  %v262 = vld [vmem:[%s1 + $0x2c0] sm:$0xf]
  %v263 = vld [vmem:[%s1 + $0x2c4] sm:$0xf]
  %v264 = vld [vmem:[%s1 + $0x2c8] sm:$0xf]
  %v265 = vld [vmem:[%s1 + $0x2cc] sm:$0xf]
  %v266 = vld [vmem:[%s1 + $0x2d0] sm:$0xf]
  %v267 = vld [vmem:[%s1 + $0x2d4] sm:$0xf]
  %v268 = vld [vmem:[%s1 + $0x2d8] sm:$0xf]
  %v269 = vld [vmem:[%s1 + $0x2dc] sm:$0xf]
  %v270 = vld [vmem:[%s1 + $0x2e0] sm:$0xf]
  %v271 = vld [vmem:[%s1 + $0x2e4] sm:$0xf]
  %v272 = vld [vmem:[%s1 + $0x2e8] sm:$0xf]
  %v273 = vld [vmem:[%s1 + $0x2ec] sm:$0xf]
  %v274 = vld [vmem:[%s1 + $0x2f0] sm:$0xf]
  %v275 = vld [vmem:[%s1 + $0x2f4] sm:$0xf]
  %v276 = vld [vmem:[%s1 + $0x2f8] sm:$0xf]
  %v277 = vld [vmem:[%s1 + $0x2fc] sm:$0xf]
  %v278 = vld [vmem:[%s1 + $0x300] sm:$0xf]
  %v279 = vld [vmem:[%s1 + $0x304] sm:$0xf]
  %v280 = vld [vmem:[%s1 + $0x308] sm:$0xf]
  %v281 = vld [vmem:[%s1 + $0x30c] sm:$0xf]
  %v282 = vld [vmem:[%s1 + $0x310] sm:$0xf]
  %v283 = vld [vmem:[%s1 + $0x314] sm:$0xf]
  %v284 = vld [vmem:[%s1 + $0x318] sm:$0xf]
  %v285 = vld [vmem:[%s1 + $0x31c] sm:$0xf]
  %v286 = vld [vmem:[%s1 + $0x320] sm:$0xf]
  %v287 = vld [vmem:[%s1 + $0x324] sm:$0xf]
  %v288 = vld [vmem:[%s1 + $0x328] sm:$0xf]
  %v289 = vld [vmem:[%s1 + $0x32c] sm:$0xf]
  %v290 = vld [vmem:[%s1 + $0x330] sm:$0xf]
  %v291 = vld [vmem:[%s1 + $0x334] sm:$0xf]
  %v292 = vld [vmem:[%s1 + $0x338] sm:$0xf]
  %v293 = vld [vmem:[%s1 + $0x33c] sm:$0xf]
  %v294 = vld [vmem:[%s1 + $0x340] sm:$0xf]
  %v295 = vld [vmem:[%s1 + $0x344] sm:$0xf]
  %v296 = vld [vmem:[%s1 + $0x348] sm:$0xf]
  %v297 = vld [vmem:[%s1 + $0x34c] sm:$0xf]
  %v298 = vld [vmem:[%s1 + $0x350] sm:$0xf]
  %v299 = vld [vmem:[%s1 + $0x354] sm:$0xf]
  %v300 = vld [vmem:[%s1 + $0x358] sm:$0xf]
  %v301 = vld [vmem:[%s1 + $0x35c] sm:$0xf]
  %v302 = vld [vmem:[%s1 + $0x360] sm:$0xf]
  %v303 = vld [vmem:[%s1 + $0x364] sm:$0xf]
  %v304 = vld [vmem:[%s1 + $0x368] sm:$0xf]
  %v305 = vld [vmem:[%s1 + $0x36c] sm:$0xf]
  %v306 = vld [vmem:[%s1 + $0x370] sm:$0xf]
  %v307 = vld [vmem:[%s1 + $0x374] sm:$0xf]
  %v308 = vld [vmem:[%s1 + $0x378] sm:$0xf]
  %v309 = vld [vmem:[%s1 + $0x37c] sm:$0xf]
  %v310 = vld [vmem:[%s1 + $0x380] sm:$0xf]
  %v311 = vld [vmem:[%s1 + $0x384] sm:$0xf]
  %v312 = vld [vmem:[%s1 + $0x388] sm:$0xf]
  %v313 = vld [vmem:[%s1 + $0x38c] sm:$0xf]
  %v314 = vld [vmem:[%s1 + $0x390] sm:$0xf]
  %v315 = vld [vmem:[%s1 + $0x394] sm:$0xf]
  %v316 = vld [vmem:[%s1 + $0x398] sm:$0xf]
  %v317 = vld [vmem:[%s1 + $0x39c] sm:$0xf]
  %v318 = vld [vmem:[%s1 + $0x3a0] sm:$0xf]
  %v319 = vld [vmem:[%s1 + $0x3a4] sm:$0xf]
  %v320 = vld [vmem:[%s1 + $0x3a8] sm:$0xf]
  %v321 = vld [vmem:[%s1 + $0x3ac] sm:$0xf]
  %v322 = vld [vmem:[%s1 + $0x3b0] sm:$0xf]
  %v323 = vld [vmem:[%s1 + $0x3b4] sm:$0xf]
  %v324 = vld [vmem:[%s1 + $0x3b8] sm:$0xf]
  %v325 = vld [vmem:[%s1 + $0x3bc] sm:$0xf]
  %v326 = vld [vmem:[%s1 + $0x3c0] sm:$0xf]
  %v327 = vld [vmem:[%s1 + $0x3c4] sm:$0xf]
  %v328 = vld [vmem:[%s1 + $0x3c8] sm:$0xf]
  %v329 = vld [vmem:[%s1 + $0x3cc] sm:$0xf]
  %v330 = vld [vmem:[%s1 + $0x3d0] sm:$0xf]
  %v331 = vld [vmem:[%s1 + $0x3d4] sm:$0xf]
  %v332 = vld [vmem:[%s1 + $0x3d8] sm:$0xf]
  %v333 = vld [vmem:[%s1 + $0x3dc] sm:$0xf]
  %v334 = vld [vmem:[%s1 + $0x3e0] sm:$0xf]
  %v335 = vld [vmem:[%s1 + $0x3e4] sm:$0xf]
  %v336 = vld [vmem:[%s1 + $0x3e8] sm:$0xf]
  %v337 = vld [vmem:[%s1 + $0x3ec] sm:$0xf]
  %v338 = vld [vmem:[%s1 + $0x3f0] sm:$0xf]
  %v339 = vld [vmem:[%s1 + $0x3f4] sm:$0xf]
  %v340 = vld [vmem:[%s1 + $0x3f8] sm:$0xf]
  %v341 = vld [vmem:[%s1 + $0x3fc] sm:$0xf]
  %v342 = vld [vmem:[%s2] sm:$0x1]
  %v344 = vperm.slane %v342, 0
  %v418 = vunpack.c.l.b16 %v14
  %v419 = vunpack.c.h.b16 %v14
  %v420 = vunpack.c.l.b16 %v15
  %v421 = vunpack.c.h.b16 %v15
  %v422 = vunpack.c.l.b16 %v16
  %v423 = vunpack.c.h.b16 %v16
  %v424 = vunpack.c.l.b16 %v17
  %v425 = vunpack.c.h.b16 %v17
  %v426 = vunpack.c.l.b16 %v18
  %v427 = vunpack.c.h.b16 %v18
  %v428 = vunpack.c.l.b16 %v19
  %v429 = vunpack.c.h.b16 %v19
  %v430 = vunpack.c.l.b16 %v20
  %v431 = vunpack.c.h.b16 %v20
  %v432 = vunpack.c.l.b16 %v21
  %v433 = vunpack.c.h.b16 %v21
  %v434 = vunpack.c.l.b16 %v22
  %v435 = vunpack.c.h.b16 %v22
  %v436 = vunpack.c.l.b16 %v23
  %v437 = vunpack.c.h.b16 %v23
  %v438 = vunpack.c.l.b16 %v24
  %v439 = vunpack.c.h.b16 %v24
  %v440 = vunpack.c.l.b16 %v25
  %v441 = vunpack.c.h.b16 %v25
  %v442 = vunpack.c.l.b16 %v26
  %v443 = vunpack.c.h.b16 %v26
  %v444 = vunpack.c.l.b16 %v27
  %v445 = vunpack.c.h.b16 %v27
  %v446 = vunpack.c.l.b16 %v28
  %v447 = vunpack.c.h.b16 %v28
  %v448 = vunpack.c.l.b16 %v29
  %v449 = vunpack.c.h.b16 %v29
  %v450 = vunpack.c.l.b16 %v30
  %v451 = vunpack.c.h.b16 %v30
  %v452 = vunpack.c.l.b16 %v31
  %v453 = vunpack.c.h.b16 %v31
  %v454 = vunpack.c.l.b16 %v32
  %v455 = vunpack.c.h.b16 %v32
  %v456 = vunpack.c.l.b16 %v33
  %v457 = vunpack.c.h.b16 %v33
  %v458 = vunpack.c.l.b16 %v34
  %v459 = vunpack.c.h.b16 %v34
  %v460 = vunpack.c.l.b16 %v35
  %v461 = vunpack.c.h.b16 %v35
  %v462 = vunpack.c.l.b16 %v36
  %v463 = vunpack.c.h.b16 %v36
  %v464 = vunpack.c.l.b16 %v37
  %v465 = vunpack.c.h.b16 %v37
  %v466 = vunpack.c.l.b16 %v38
  %v467 = vunpack.c.h.b16 %v38
  %v468 = vunpack.c.l.b16 %v39
  %v469 = vunpack.c.h.b16 %v39
  %v470 = vunpack.c.l.b16 %v40
  %v471 = vunpack.c.h.b16 %v40
  %v472 = vunpack.c.l.b16 %v41
  %v473 = vunpack.c.h.b16 %v41
  %v474 = vunpack.c.l.b16 %v42
  %v475 = vunpack.c.h.b16 %v42
  %v476 = vunpack.c.l.b16 %v43
  %v477 = vunpack.c.h.b16 %v43
  %v478 = vunpack.c.l.b16 %v44
  %v479 = vunpack.c.h.b16 %v44
  %v480 = vunpack.c.l.b16 %v45
  %v481 = vunpack.c.h.b16 %v45
  %v482 = vunpack.c.l.b16 %v46
  %v483 = vunpack.c.h.b16 %v46
  %v484 = vunpack.c.l.b16 %v47
  %v485 = vunpack.c.h.b16 %v47
  %v486 = vunpack.c.l.b16 %v48
  %v487 = vunpack.c.h.b16 %v48
  %v488 = vunpack.c.l.b16 %v49
  %v489 = vunpack.c.h.b16 %v49
  %v490 = vunpack.c.l.b16 %v50
  %v491 = vunpack.c.h.b16 %v50
  %v492 = vunpack.c.l.b16 %v51
  %v493 = vunpack.c.h.b16 %v51
  %v494 = vunpack.c.l.b16 %v52
  %v495 = vunpack.c.h.b16 %v52
  %v496 = vunpack.c.l.b16 %v53
  %v497 = vunpack.c.h.b16 %v53
  %v498 = vunpack.c.l.b16 %v54
  %v499 = vunpack.c.h.b16 %v54
  %v500 = vunpack.c.l.b16 %v55
  %v501 = vunpack.c.h.b16 %v55
  %v502 = vunpack.c.l.b16 %v56
  %v503 = vunpack.c.h.b16 %v56
  %v504 = vunpack.c.l.b16 %v57
  %v505 = vunpack.c.h.b16 %v57
  %v506 = vunpack.c.l.b16 %v58
  %v507 = vunpack.c.h.b16 %v58
  %v508 = vunpack.c.l.b16 %v59
  %v509 = vunpack.c.h.b16 %v59
  %v510 = vunpack.c.l.b16 %v60
  %v511 = vunpack.c.h.b16 %v60
  %v512 = vunpack.c.l.b16 %v61
  %v513 = vunpack.c.h.b16 %v61
  %v514 = vunpack.c.l.b16 %v62
  %v515 = vunpack.c.h.b16 %v62
  %v516 = vunpack.c.l.b16 %v63
  %v517 = vunpack.c.h.b16 %v63
  %v518 = vunpack.c.l.b16 %v64
  %v519 = vunpack.c.h.b16 %v64
  %v520 = vunpack.c.l.b16 %v65
  %v521 = vunpack.c.h.b16 %v65
  %v522 = vunpack.c.l.b16 %v66
  %v523 = vunpack.c.h.b16 %v66
  %v524 = vunpack.c.l.b16 %v67
  %v525 = vunpack.c.h.b16 %v67
  %v526 = vunpack.c.l.b16 %v68
  %v527 = vunpack.c.h.b16 %v68
  %v528 = vunpack.c.l.b16 %v69
  %v529 = vunpack.c.h.b16 %v69
  %v530 = vunpack.c.l.b16 %v70
  %v531 = vunpack.c.h.b16 %v70
  %v532 = vunpack.c.l.b16 %v71
  %v533 = vunpack.c.h.b16 %v71
  %v534 = vunpack.c.l.b16 %v72
  %v535 = vunpack.c.h.b16 %v72
  %v536 = vunpack.c.l.b16 %v73
  %v537 = vunpack.c.h.b16 %v73
  %v538 = vunpack.c.l.b16 %v74
  %v539 = vunpack.c.h.b16 %v74
  %v540 = vunpack.c.l.b16 %v75
  %v541 = vunpack.c.h.b16 %v75
  %v542 = vunpack.c.l.b16 %v76
  %v543 = vunpack.c.h.b16 %v76
  %v544 = vunpack.c.l.b16 %v77
  %v545 = vunpack.c.h.b16 %v77
  %v546 = vunpack.c.l.b16 %v78
  %v547 = vunpack.c.h.b16 %v78
  %v548 = vunpack.c.l.b16 %v79
  %v549 = vunpack.c.h.b16 %v79
  %v550 = vunpack.c.l.b16 %v80
  %v551 = vunpack.c.h.b16 %v80
  %v552 = vunpack.c.l.b16 %v81
  %v553 = vunpack.c.h.b16 %v81
  %v554 = vunpack.c.l.b16 %v82
  %v555 = vunpack.c.h.b16 %v82
  %v556 = vunpack.c.l.b16 %v83
  %v557 = vunpack.c.h.b16 %v83
  %v558 = vunpack.c.l.b16 %v84
  %v559 = vunpack.c.h.b16 %v84
  %v560 = vunpack.c.l.b16 %v85
  %v561 = vunpack.c.h.b16 %v85
  %v562 = vpack.c.b16 %v434, %v418
  %v563 = vpack.c.b16 %v435, %v419
  %v564 = vpack.c.b16 %v436, %v420
  %v565 = vpack.c.b16 %v437, %v421
  %v566 = vpack.c.b16 %v438, %v422
  %v567 = vpack.c.b16 %v439, %v423
  %v568 = vpack.c.b16 %v440, %v424
  %v569 = vpack.c.b16 %v441, %v425
  %v570 = vpack.c.b16 %v442, %v426
  %v571 = vpack.c.b16 %v443, %v427
  %v572 = vpack.c.b16 %v444, %v428
  %v573 = vpack.c.b16 %v445, %v429
  %v574 = vpack.c.b16 %v446, %v430
  %v575 = vpack.c.b16 %v447, %v431
  %v576 = vpack.c.b16 %v448, %v432
  %v577 = vpack.c.b16 %v449, %v433
  %v578 = vpack.c.b16 %v466, %v450
  %v579 = vpack.c.b16 %v467, %v451
  %v580 = vpack.c.b16 %v468, %v452
  %v581 = vpack.c.b16 %v469, %v453
  %v582 = vpack.c.b16 %v470, %v454
  %v583 = vpack.c.b16 %v471, %v455
  %v584 = vpack.c.b16 %v472, %v456
  %v585 = vpack.c.b16 %v473, %v457
  %v586 = vpack.c.b16 %v474, %v458
  %v587 = vpack.c.b16 %v475, %v459
  %v588 = vpack.c.b16 %v476, %v460
  %v589 = vpack.c.b16 %v477, %v461
  %v590 = vpack.c.b16 %v478, %v462
  %v591 = vpack.c.b16 %v479, %v463
  %v592 = vpack.c.b16 %v480, %v464
  %v593 = vpack.c.b16 %v481, %v465
  %v594 = vpack.c.b16 %v498, %v482
  %v595 = vpack.c.b16 %v499, %v483
  %v596 = vpack.c.b16 %v500, %v484
  %v597 = vpack.c.b16 %v501, %v485
  %v598 = vpack.c.b16 %v502, %v486
  %v599 = vpack.c.b16 %v503, %v487
  %v600 = vpack.c.b16 %v504, %v488
  %v601 = vpack.c.b16 %v505, %v489
  %v602 = vpack.c.b16 %v506, %v490
  %v603 = vpack.c.b16 %v507, %v491
  %v604 = vpack.c.b16 %v508, %v492
  %v605 = vpack.c.b16 %v509, %v493
  %v606 = vpack.c.b16 %v510, %v494
  %v607 = vpack.c.b16 %v511, %v495
  %v608 = vpack.c.b16 %v512, %v496
  %v609 = vpack.c.b16 %v513, %v497
  %v610 = vpack.c.b16 %v530, %v514
  %v611 = vpack.c.b16 %v531, %v515
  %v612 = vpack.c.b16 %v532, %v516
  %v613 = vpack.c.b16 %v533, %v517
  %v614 = vpack.c.b16 %v534, %v518
  %v615 = vpack.c.b16 %v535, %v519
  %v616 = vpack.c.b16 %v536, %v520
  %v617 = vpack.c.b16 %v537, %v521
  %v618 = vpack.c.b16 %v538, %v522
  %v619 = vpack.c.b16 %v539, %v523
  %v620 = vpack.c.b16 %v540, %v524
  %v621 = vpack.c.b16 %v541, %v525
  %v622 = vpack.c.b16 %v542, %v526
  %v623 = vpack.c.b16 %v543, %v527
  %v624 = vpack.c.b16 %v544, %v528
  %v625 = vpack.c.b16 %v545, %v529
  %v626 = vpack.c.b16 %v546, %v546
  %v627 = vpack.c.b16 %v547, %v547
  %v628 = vpack.c.b16 %v548, %v548
  %v629 = vpack.c.b16 %v549, %v549
  %v630 = vpack.c.b16 %v550, %v550
  %v631 = vpack.c.b16 %v551, %v551
  %v632 = vpack.c.b16 %v552, %v552
  %v633 = vpack.c.b16 %v553, %v553
  %v634 = vpack.c.b16 %v554, %v554
  %v635 = vpack.c.b16 %v555, %v555
  %v636 = vpack.c.b16 %v556, %v556
  %v637 = vpack.c.b16 %v557, %v557
  %v638 = vpack.c.b16 %v558, %v558
  %v639 = vpack.c.b16 %v559, %v559
  %v640 = vpack.c.b16 %v560, %v560
  %v641 = vpack.c.b16 %v561, %v561
  %v978 = vunpack.c.l.b16 %v86
  %v979 = vunpack.c.l.b16 %v87
  %v980 = vunpack.c.l.b16 %v88
  %v981 = vunpack.c.l.b16 %v89
  %v982 = vunpack.c.l.b16 %v90
  %v983 = vunpack.c.l.b16 %v91
  %v984 = vunpack.c.l.b16 %v92
  %v985 = vunpack.c.l.b16 %v93
  %v986 = vunpack.c.l.b16 %v94
  %v987 = vunpack.c.l.b16 %v95
  %v988 = vunpack.c.l.b16 %v96
  %v989 = vunpack.c.l.b16 %v97
  %v990 = vunpack.c.l.b16 %v98
  %v991 = vunpack.c.l.b16 %v99
  %v992 = vunpack.c.l.b16 %v100
  %v993 = vunpack.c.l.b16 %v101
  %v994 = vunpack.c.l.b16 %v102
  %v995 = vunpack.c.l.b16 %v103
  %v996 = vunpack.c.l.b16 %v104
  %v997 = vunpack.c.l.b16 %v105
  %v998 = vunpack.c.l.b16 %v106
  %v999 = vunpack.c.l.b16 %v107
  %v1000 = vunpack.c.l.b16 %v108
  %v1001 = vunpack.c.l.b16 %v109
  %v1002 = vunpack.c.l.b16 %v110
  %v1003 = vunpack.c.l.b16 %v111
  %v1004 = vunpack.c.l.b16 %v112
  %v1005 = vunpack.c.l.b16 %v113
  %v1006 = vunpack.c.l.b16 %v114
  %v1007 = vunpack.c.l.b16 %v115
  %v1008 = vunpack.c.l.b16 %v116
  %v1009 = vunpack.c.l.b16 %v117
  %v1010 = vunpack.c.l.b16 %v118
  %v1011 = vunpack.c.l.b16 %v119
  %v1012 = vunpack.c.l.b16 %v120
  %v1013 = vunpack.c.l.b16 %v121
  %v1014 = vunpack.c.l.b16 %v122
  %v1015 = vunpack.c.l.b16 %v123
  %v1016 = vunpack.c.l.b16 %v124
  %v1017 = vunpack.c.l.b16 %v125
  %v1018 = vunpack.c.l.b16 %v126
  %v1019 = vunpack.c.l.b16 %v127
  %v1020 = vunpack.c.l.b16 %v128
  %v1021 = vunpack.c.l.b16 %v129
  %v1022 = vunpack.c.l.b16 %v130
  %v1023 = vunpack.c.l.b16 %v131
  %v1024 = vunpack.c.l.b16 %v132
  %v1025 = vunpack.c.l.b16 %v133
  %v1026 = vunpack.c.l.b16 %v134
  %v1027 = vunpack.c.l.b16 %v135
  %v1028 = vunpack.c.l.b16 %v136
  %v1029 = vunpack.c.l.b16 %v137
  %v1030 = vunpack.c.l.b16 %v138
  %v1031 = vunpack.c.l.b16 %v139
  %v1032 = vunpack.c.l.b16 %v140
  %v1033 = vunpack.c.l.b16 %v141
  %v1034 = vunpack.c.l.b16 %v142
  %v1035 = vunpack.c.l.b16 %v143
  %v1036 = vunpack.c.l.b16 %v144
  %v1037 = vunpack.c.l.b16 %v145
  %v1038 = vunpack.c.l.b16 %v146
  %v1039 = vunpack.c.l.b16 %v147
  %v1040 = vunpack.c.l.b16 %v148
  %v1041 = vunpack.c.l.b16 %v149
  %v1042 = vunpack.c.l.b16 %v150
  %v1043 = vunpack.c.l.b16 %v151
  %v1044 = vunpack.c.l.b16 %v152
  %v1045 = vunpack.c.l.b16 %v153
  %v1046 = vunpack.c.l.b16 %v154
  %v1047 = vunpack.c.l.b16 %v155
  %v1048 = vunpack.c.l.b16 %v156
  %v1049 = vunpack.c.l.b16 %v157
  %v1050 = vunpack.c.l.b16 %v158
  %v1051 = vunpack.c.l.b16 %v159
  %v1052 = vunpack.c.l.b16 %v160
  %v1053 = vunpack.c.l.b16 %v161
  %v1054 = vunpack.c.l.b16 %v162
  %v1055 = vunpack.c.l.b16 %v163
  %v1056 = vunpack.c.l.b16 %v164
  %v1057 = vunpack.c.l.b16 %v165
  %v1058 = vunpack.c.l.b16 %v166
  %v1059 = vunpack.c.l.b16 %v167
  %v1060 = vunpack.c.l.b16 %v168
  %v1061 = vunpack.c.l.b16 %v169
  %v1062 = vunpack.c.l.b16 %v170
  %v1063 = vunpack.c.l.b16 %v171
  %v1064 = vunpack.c.l.b16 %v172
  %v1065 = vunpack.c.l.b16 %v173
  %v1066 = vunpack.c.l.b16 %v174
  %v1067 = vunpack.c.l.b16 %v175
  %v1068 = vunpack.c.l.b16 %v176
  %v1069 = vunpack.c.l.b16 %v177
  %v1070 = vunpack.c.l.b16 %v178
  %v1071 = vunpack.c.l.b16 %v179
  %v1072 = vunpack.c.l.b16 %v180
  %v1073 = vunpack.c.l.b16 %v181
  %v1074 = vunpack.c.l.b16 %v182
  %v1075 = vunpack.c.l.b16 %v183
  %v1076 = vunpack.c.l.b16 %v184
  %v1077 = vunpack.c.l.b16 %v185
  %v1078 = vunpack.c.l.b16 %v186
  %v1079 = vunpack.c.l.b16 %v187
  %v1080 = vunpack.c.l.b16 %v188
  %v1081 = vunpack.c.l.b16 %v189
  %v1082 = vunpack.c.l.b16 %v190
  %v1083 = vunpack.c.l.b16 %v191
  %v1084 = vunpack.c.l.b16 %v192
  %v1085 = vunpack.c.l.b16 %v193
  %v1086 = vunpack.c.l.b16 %v194
  %v1087 = vunpack.c.l.b16 %v195
  %v1088 = vunpack.c.l.b16 %v196
  %v1089 = vunpack.c.l.b16 %v197
  %v1090 = vunpack.c.l.b16 %v198
  %v1091 = vunpack.c.l.b16 %v199
  %v1092 = vunpack.c.l.b16 %v200
  %v1093 = vunpack.c.l.b16 %v201
  %v1094 = vunpack.c.l.b16 %v202
  %v1095 = vunpack.c.l.b16 %v203
  %v1096 = vunpack.c.l.b16 %v204
  %v1097 = vunpack.c.l.b16 %v205
  %v1098 = vunpack.c.l.b16 %v206
  %v1099 = vunpack.c.l.b16 %v207
  %v1100 = vunpack.c.l.b16 %v208
  %v1101 = vunpack.c.l.b16 %v209
  %v1102 = vunpack.c.l.b16 %v210
  %v1103 = vunpack.c.l.b16 %v211
  %v1104 = vunpack.c.l.b16 %v212
  %v1105 = vunpack.c.l.b16 %v213
  %v1106 = vunpack.c.l.b16 %v214
  %v1107 = vunpack.c.l.b16 %v215
  %v1108 = vunpack.c.l.b16 %v216
  %v1109 = vunpack.c.l.b16 %v217
  %v1110 = vunpack.c.l.b16 %v218
  %v1111 = vunpack.c.l.b16 %v219
  %v1112 = vunpack.c.l.b16 %v220
  %v1113 = vunpack.c.l.b16 %v221
  %v1114 = vunpack.c.l.b16 %v222
  %v1115 = vunpack.c.l.b16 %v223
  %v1116 = vunpack.c.l.b16 %v224
  %v1117 = vunpack.c.l.b16 %v225
  %v1118 = vunpack.c.l.b16 %v226
  %v1119 = vunpack.c.l.b16 %v227
  %v1120 = vunpack.c.l.b16 %v228
  %v1121 = vunpack.c.l.b16 %v229
  %v1122 = vunpack.c.l.b16 %v230
  %v1123 = vunpack.c.l.b16 %v231
  %v1124 = vunpack.c.l.b16 %v232
  %v1125 = vunpack.c.l.b16 %v233
  %v1126 = vunpack.c.l.b16 %v234
  %v1127 = vunpack.c.l.b16 %v235
  %v1128 = vunpack.c.l.b16 %v236
  %v1129 = vunpack.c.l.b16 %v237
  %v1130 = vunpack.c.l.b16 %v238
  %v1131 = vunpack.c.l.b16 %v239
  %v1132 = vunpack.c.l.b16 %v240
  %v1133 = vunpack.c.l.b16 %v241
  %v1134 = vunpack.c.l.b16 %v242
  %v1135 = vunpack.c.l.b16 %v243
  %v1136 = vunpack.c.l.b16 %v244
  %v1137 = vunpack.c.l.b16 %v245
  %v1138 = vunpack.c.l.b16 %v246
  %v1139 = vunpack.c.l.b16 %v247
  %v1140 = vunpack.c.l.b16 %v248
  %v1141 = vunpack.c.l.b16 %v249
  %v1142 = vunpack.c.l.b16 %v250
  %v1143 = vunpack.c.l.b16 %v251
  %v1144 = vunpack.c.l.b16 %v252
  %v1145 = vunpack.c.l.b16 %v253
  %v1146 = vunpack.c.l.b16 %v254
  %v1147 = vunpack.c.l.b16 %v255
  %v1148 = vunpack.c.l.b16 %v256
  %v1149 = vunpack.c.l.b16 %v257
  %v1150 = vunpack.c.l.b16 %v258
  %v1151 = vunpack.c.l.b16 %v259
  %v1152 = vunpack.c.l.b16 %v260
  %v1153 = vunpack.c.l.b16 %v261
  %v1154 = vunpack.c.l.b16 %v262
  %v1155 = vunpack.c.l.b16 %v263
  %v1156 = vunpack.c.l.b16 %v264
  %v1157 = vunpack.c.l.b16 %v265
  %v1158 = vunpack.c.l.b16 %v266
  %v1159 = vunpack.c.l.b16 %v267
  %v1160 = vunpack.c.l.b16 %v268
  %v1161 = vunpack.c.l.b16 %v269
  %v1162 = vunpack.c.l.b16 %v270
  %v1163 = vunpack.c.l.b16 %v271
  %v1164 = vunpack.c.l.b16 %v272
  %v1165 = vunpack.c.l.b16 %v273
  %v1166 = vunpack.c.l.b16 %v274
  %v1167 = vunpack.c.l.b16 %v275
  %v1168 = vunpack.c.l.b16 %v276
  %v1169 = vunpack.c.l.b16 %v277
  %v1170 = vunpack.c.l.b16 %v278
  %v1171 = vunpack.c.l.b16 %v279
  %v1172 = vunpack.c.l.b16 %v280
  %v1173 = vunpack.c.l.b16 %v281
  %v1174 = vunpack.c.l.b16 %v282
  %v1175 = vunpack.c.l.b16 %v283
  %v1176 = vunpack.c.l.b16 %v284
  %v1177 = vunpack.c.l.b16 %v285
  %v1178 = vunpack.c.l.b16 %v286
  %v1179 = vunpack.c.l.b16 %v287
  %v1180 = vunpack.c.l.b16 %v288
  %v1181 = vunpack.c.l.b16 %v289
  %v1182 = vunpack.c.l.b16 %v290
  %v1183 = vunpack.c.l.b16 %v291
  %v1184 = vunpack.c.l.b16 %v292
  %v1185 = vunpack.c.l.b16 %v293
  %v1186 = vunpack.c.l.b16 %v294
  %v1187 = vunpack.c.l.b16 %v295
  %v1188 = vunpack.c.l.b16 %v296
  %v1189 = vunpack.c.l.b16 %v297
  %v1190 = vunpack.c.l.b16 %v298
  %v1191 = vunpack.c.l.b16 %v299
  %v1192 = vunpack.c.l.b16 %v300
  %v1193 = vunpack.c.l.b16 %v301
  %v1194 = vunpack.c.l.b16 %v302
  %v1195 = vunpack.c.l.b16 %v303
  %v1196 = vunpack.c.l.b16 %v304
  %v1197 = vunpack.c.l.b16 %v305
  %v1198 = vunpack.c.l.b16 %v306
  %v1199 = vunpack.c.l.b16 %v307
  %v1200 = vunpack.c.l.b16 %v308
  %v1201 = vunpack.c.l.b16 %v309
  %v1202 = vunpack.c.l.b16 %v310
  %v1203 = vunpack.c.l.b16 %v311
  %v1204 = vunpack.c.l.b16 %v312
  %v1205 = vunpack.c.l.b16 %v313
  %v1206 = vunpack.c.l.b16 %v314
  %v1207 = vunpack.c.l.b16 %v315
  %v1208 = vunpack.c.l.b16 %v316
  %v1209 = vunpack.c.l.b16 %v317
  %v1210 = vunpack.c.l.b16 %v318
  %v1211 = vunpack.c.l.b16 %v319
  %v1212 = vunpack.c.l.b16 %v320
  %v1213 = vunpack.c.l.b16 %v321
  %v1214 = vunpack.c.l.b16 %v322
  %v1215 = vunpack.c.l.b16 %v323
  %v1216 = vunpack.c.l.b16 %v324
  %v1217 = vunpack.c.l.b16 %v325
  %v1218 = vunpack.c.l.b16 %v326
  %v1219 = vunpack.c.l.b16 %v327
  %v1220 = vunpack.c.l.b16 %v328
  %v1221 = vunpack.c.l.b16 %v329
  %v1222 = vunpack.c.l.b16 %v330
  %v1223 = vunpack.c.l.b16 %v331
  %v1224 = vunpack.c.l.b16 %v332
  %v1225 = vunpack.c.l.b16 %v333
  %v1226 = vunpack.c.l.b16 %v334
  %v1227 = vunpack.c.l.b16 %v335
  %v1228 = vunpack.c.l.b16 %v336
  %v1229 = vunpack.c.l.b16 %v337
  %v1230 = vunpack.c.l.b16 %v338
  %v1231 = vunpack.c.l.b16 %v339
  %v1232 = vunpack.c.l.b16 %v340
  %v1233 = vunpack.c.l.b16 %v341
  %v1234 = vpack.c.b16 %v979, %v978
  %v1235 = vpack.c.b16 %v981, %v980
  %v1236 = vpack.c.b16 %v983, %v982
  %v1237 = vpack.c.b16 %v985, %v984
  %v1238 = vpack.c.b16 %v987, %v986
  %v1239 = vpack.c.b16 %v989, %v988
  %v1240 = vpack.c.b16 %v991, %v990
  %v1241 = vpack.c.b16 %v993, %v992
  %v1242 = vpack.c.b16 %v995, %v994
  %v1243 = vpack.c.b16 %v997, %v996
  %v1244 = vpack.c.b16 %v999, %v998
  %v1245 = vpack.c.b16 %v1001, %v1000
  %v1246 = vpack.c.b16 %v1003, %v1002
  %v1247 = vpack.c.b16 %v1005, %v1004
  %v1248 = vpack.c.b16 %v1007, %v1006
  %v1249 = vpack.c.b16 %v1009, %v1008
  %v1250 = vpack.c.b16 %v1011, %v1010
  %v1251 = vpack.c.b16 %v1013, %v1012
  %v1252 = vpack.c.b16 %v1015, %v1014
  %v1253 = vpack.c.b16 %v1017, %v1016
  %v1254 = vpack.c.b16 %v1019, %v1018
  %v1255 = vpack.c.b16 %v1021, %v1020
  %v1256 = vpack.c.b16 %v1023, %v1022
  %v1257 = vpack.c.b16 %v1025, %v1024
  %v1258 = vpack.c.b16 %v1027, %v1026
  %v1259 = vpack.c.b16 %v1029, %v1028
  %v1260 = vpack.c.b16 %v1031, %v1030
  %v1261 = vpack.c.b16 %v1033, %v1032
  %v1262 = vpack.c.b16 %v1035, %v1034
  %v1263 = vpack.c.b16 %v1037, %v1036
  %v1264 = vpack.c.b16 %v1039, %v1038
  %v1265 = vpack.c.b16 %v1041, %v1040
  %v1266 = vpack.c.b16 %v1043, %v1042
  %v1267 = vpack.c.b16 %v1045, %v1044
  %v1268 = vpack.c.b16 %v1047, %v1046
  %v1269 = vpack.c.b16 %v1049, %v1048
  %v1270 = vpack.c.b16 %v1051, %v1050
  %v1271 = vpack.c.b16 %v1053, %v1052
  %v1272 = vpack.c.b16 %v1055, %v1054
  %v1273 = vpack.c.b16 %v1057, %v1056
  %v1274 = vpack.c.b16 %v1059, %v1058
  %v1275 = vpack.c.b16 %v1061, %v1060
  %v1276 = vpack.c.b16 %v1063, %v1062
  %v1277 = vpack.c.b16 %v1065, %v1064
  %v1278 = vpack.c.b16 %v1067, %v1066
  %v1279 = vpack.c.b16 %v1069, %v1068
  %v1280 = vpack.c.b16 %v1071, %v1070
  %v1281 = vpack.c.b16 %v1073, %v1072
  %v1282 = vpack.c.b16 %v1075, %v1074
  %v1283 = vpack.c.b16 %v1077, %v1076
  %v1284 = vpack.c.b16 %v1079, %v1078
  %v1285 = vpack.c.b16 %v1081, %v1080
  %v1286 = vpack.c.b16 %v1083, %v1082
  %v1287 = vpack.c.b16 %v1085, %v1084
  %v1288 = vpack.c.b16 %v1087, %v1086
  %v1289 = vpack.c.b16 %v1089, %v1088
  %v1290 = vpack.c.b16 %v1091, %v1090
  %v1291 = vpack.c.b16 %v1093, %v1092
  %v1292 = vpack.c.b16 %v1095, %v1094
  %v1293 = vpack.c.b16 %v1097, %v1096
  %v1294 = vpack.c.b16 %v1099, %v1098
  %v1295 = vpack.c.b16 %v1101, %v1100
  %v1296 = vpack.c.b16 %v1103, %v1102
  %v1297 = vpack.c.b16 %v1105, %v1104
  %v1298 = vpack.c.b16 %v1107, %v1106
  %v1299 = vpack.c.b16 %v1109, %v1108
  %v1300 = vpack.c.b16 %v1111, %v1110
  %v1301 = vpack.c.b16 %v1113, %v1112
  %v1302 = vpack.c.b16 %v1115, %v1114
  %v1303 = vpack.c.b16 %v1117, %v1116
  %v1304 = vpack.c.b16 %v1119, %v1118
  %v1305 = vpack.c.b16 %v1121, %v1120
  %v1306 = vpack.c.b16 %v1123, %v1122
  %v1307 = vpack.c.b16 %v1125, %v1124
  %v1308 = vpack.c.b16 %v1127, %v1126
  %v1309 = vpack.c.b16 %v1129, %v1128
  %v1310 = vpack.c.b16 %v1131, %v1130
  %v1311 = vpack.c.b16 %v1133, %v1132
  %v1312 = vpack.c.b16 %v1135, %v1134
  %v1313 = vpack.c.b16 %v1137, %v1136
  %v1314 = vpack.c.b16 %v1139, %v1138
  %v1315 = vpack.c.b16 %v1141, %v1140
  %v1316 = vpack.c.b16 %v1143, %v1142
  %v1317 = vpack.c.b16 %v1145, %v1144
  %v1318 = vpack.c.b16 %v1147, %v1146
  %v1319 = vpack.c.b16 %v1149, %v1148
  %v1320 = vpack.c.b16 %v1151, %v1150
  %v1321 = vpack.c.b16 %v1153, %v1152
  %v1322 = vpack.c.b16 %v1155, %v1154
  %v1323 = vpack.c.b16 %v1157, %v1156
  %v1324 = vpack.c.b16 %v1159, %v1158
  %v1325 = vpack.c.b16 %v1161, %v1160
  %v1326 = vpack.c.b16 %v1163, %v1162
  %v1327 = vpack.c.b16 %v1165, %v1164
  %v1328 = vpack.c.b16 %v1167, %v1166
  %v1329 = vpack.c.b16 %v1169, %v1168
  %v1330 = vpack.c.b16 %v1171, %v1170
  %v1331 = vpack.c.b16 %v1173, %v1172
  %v1332 = vpack.c.b16 %v1175, %v1174
  %v1333 = vpack.c.b16 %v1177, %v1176
  %v1334 = vpack.c.b16 %v1179, %v1178
  %v1335 = vpack.c.b16 %v1181, %v1180
  %v1336 = vpack.c.b16 %v1183, %v1182
  %v1337 = vpack.c.b16 %v1185, %v1184
  %v1338 = vpack.c.b16 %v1187, %v1186
  %v1339 = vpack.c.b16 %v1189, %v1188
  %v1340 = vpack.c.b16 %v1191, %v1190
  %v1341 = vpack.c.b16 %v1193, %v1192
  %v1342 = vpack.c.b16 %v1195, %v1194
  %v1343 = vpack.c.b16 %v1197, %v1196
  %v1344 = vpack.c.b16 %v1199, %v1198
  %v1345 = vpack.c.b16 %v1201, %v1200
  %v1346 = vpack.c.b16 %v1203, %v1202
  %v1347 = vpack.c.b16 %v1205, %v1204
  %v1348 = vpack.c.b16 %v1207, %v1206
  %v1349 = vpack.c.b16 %v1209, %v1208
  %v1350 = vpack.c.b16 %v1211, %v1210
  %v1351 = vpack.c.b16 %v1213, %v1212
  %v1352 = vpack.c.b16 %v1215, %v1214
  %v1353 = vpack.c.b16 %v1217, %v1216
  %v1354 = vpack.c.b16 %v1219, %v1218
  %v1355 = vpack.c.b16 %v1221, %v1220
  %v1356 = vpack.c.b16 %v1223, %v1222
  %v1357 = vpack.c.b16 %v1225, %v1224
  %v1358 = vpack.c.b16 %v1227, %v1226
  %v1359 = vpack.c.b16 %v1229, %v1228
  %v1360 = vpack.c.b16 %v1231, %v1230
  %v1361 = vpack.c.b16 %v1233, %v1232
  %1490 = vmatpush.bf16.msra.mxu0 %v1241
  %1491 = vmatpush.bf16.msra.mxu0 %v1240
  %1492 = vmatpush.bf16.msra.mxu0 %v1239
  %1493 = vmatpush.bf16.msra.mxu0 %v1238
  %1494 = vmatpush.bf16.msra.mxu0 %v1237
  %1495 = vmatpush.bf16.msra.mxu0 %v1236
  %1496 = vmatpush.bf16.msra.mxu0 %v1235
  %1497 = vmatpush.bf16.msra.mxu0 %v1234
  %1498 = vmatmul.bf16.gmra.mxu0 %v562
  %v1499 = vpop.f32.mrf.mxu0
  %v1500 = vadd.f32 %v344, %v1499
  %v1501 = vpop.f32.mrf.mxu0
  %v1502 = vadd.f32 %v344, %v1501
  %1503 = vmatmul.bf16.gmra.mxu0 %v578
  %v1504 = vpop.f32.mrf.mxu0
  %v1505 = vadd.f32 %v344, %v1504
  %v1506 = vpop.f32.mrf.mxu0
  %v1507 = vadd.f32 %v344, %v1506
  %1508 = vmatmul.bf16.gmra.mxu0 %v594
  %v1509 = vpop.f32.mrf.mxu0
  %v1510 = vadd.f32 %v344, %v1509
  %v1511 = vpop.f32.mrf.mxu0
  %v1512 = vadd.f32 %v344, %v1511
  %1513 = vmatmul.bf16.gmra.mxu0 %v610
  %v1514 = vpop.f32.mrf.mxu0
  %v1515 = vadd.f32 %v344, %v1514
  %v1516 = vpop.f32.mrf.mxu0
  %v1517 = vadd.f32 %v344, %v1516
  %1518 = vmatmul.bf16.gmra.mxu0 %v626
  %v1519 = vpop.f32.mrf.mxu0
  %v1520 = vadd.f32 %v344, %v1519
  %v1521 = vpop.f32.mrf.mxu0
  %1522 = vdwg.mxu0
  %1523 = vmatpush.bf16.msra.mxu0 %v1249
  %1524 = vmatpush.bf16.msra.mxu0 %v1248
  %1525 = vmatpush.bf16.msra.mxu0 %v1247
  %1526 = vmatpush.bf16.msra.mxu0 %v1246
  %1527 = vmatpush.bf16.msra.mxu0 %v1245
  %1528 = vmatpush.bf16.msra.mxu0 %v1244
  %1529 = vmatpush.bf16.msra.mxu0 %v1243
  %1530 = vmatpush.bf16.msra.mxu0 %v1242
  %1531 = vmatmul.bf16.gmra.mxu0 %v563
  %v1532 = vpop.f32.mrf.mxu0
  %v1533 = vadd.f32 %v1500, %v1532
  %v1534 = vpop.f32.mrf.mxu0
  %v1535 = vadd.f32 %v1502, %v1534
  %1536 = vmatmul.bf16.gmra.mxu0 %v579
  %v1537 = vpop.f32.mrf.mxu0
  %v1538 = vadd.f32 %v1505, %v1537
  %v1539 = vpop.f32.mrf.mxu0
  %v1540 = vadd.f32 %v1507, %v1539
  %1541 = vmatmul.bf16.gmra.mxu0 %v595
  %v1542 = vpop.f32.mrf.mxu0
  %v1543 = vadd.f32 %v1510, %v1542
  %v1544 = vpop.f32.mrf.mxu0
  %v1545 = vadd.f32 %v1512, %v1544
  %1546 = vmatmul.bf16.gmra.mxu0 %v611
  %v1547 = vpop.f32.mrf.mxu0
  %v1548 = vadd.f32 %v1515, %v1547
  %v1549 = vpop.f32.mrf.mxu0
  %v1550 = vadd.f32 %v1517, %v1549
  %1551 = vmatmul.bf16.gmra.mxu0 %v627
  %v1552 = vpop.f32.mrf.mxu0
  %v1553 = vadd.f32 %v1520, %v1552
  %v1554 = vpop.f32.mrf.mxu0
  %1555 = vdwg.mxu0
  %1556 = vmatpush.bf16.msra.mxu0 %v1257
  %1557 = vmatpush.bf16.msra.mxu0 %v1256
  %1558 = vmatpush.bf16.msra.mxu0 %v1255
  %1559 = vmatpush.bf16.msra.mxu0 %v1254
  %1560 = vmatpush.bf16.msra.mxu0 %v1253
  %1561 = vmatpush.bf16.msra.mxu0 %v1252
  %1562 = vmatpush.bf16.msra.mxu0 %v1251
  %1563 = vmatpush.bf16.msra.mxu0 %v1250
  %1564 = vmatmul.bf16.gmra.mxu0 %v564
  %v1565 = vpop.f32.mrf.mxu0
  %v1566 = vadd.f32 %v1533, %v1565
  %v1567 = vpop.f32.mrf.mxu0
  %v1568 = vadd.f32 %v1535, %v1567
  %1569 = vmatmul.bf16.gmra.mxu0 %v580
  %v1570 = vpop.f32.mrf.mxu0
  %v1571 = vadd.f32 %v1538, %v1570
  %v1572 = vpop.f32.mrf.mxu0
  %v1573 = vadd.f32 %v1540, %v1572
  %1574 = vmatmul.bf16.gmra.mxu0 %v596
  %v1575 = vpop.f32.mrf.mxu0
  %v1576 = vadd.f32 %v1543, %v1575
  %v1577 = vpop.f32.mrf.mxu0
  %v1578 = vadd.f32 %v1545, %v1577
  %1579 = vmatmul.bf16.gmra.mxu0 %v612
  %v1580 = vpop.f32.mrf.mxu0
  %v1581 = vadd.f32 %v1548, %v1580
  %v1582 = vpop.f32.mrf.mxu0
  %v1583 = vadd.f32 %v1550, %v1582
  %1584 = vmatmul.bf16.gmra.mxu0 %v628
  %v1585 = vpop.f32.mrf.mxu0
  %v1586 = vadd.f32 %v1553, %v1585
  %v1587 = vpop.f32.mrf.mxu0
  %1588 = vdwg.mxu0
  %1589 = vmatpush.bf16.msra.mxu0 %v1265
  %1590 = vmatpush.bf16.msra.mxu0 %v1264
  %1591 = vmatpush.bf16.msra.mxu0 %v1263
  %1592 = vmatpush.bf16.msra.mxu0 %v1262
  %1593 = vmatpush.bf16.msra.mxu0 %v1261
  %1594 = vmatpush.bf16.msra.mxu0 %v1260
  %1595 = vmatpush.bf16.msra.mxu0 %v1259
  %1596 = vmatpush.bf16.msra.mxu0 %v1258
  %1597 = vmatmul.bf16.gmra.mxu0 %v565
  %v1598 = vpop.f32.mrf.mxu0
  %v1599 = vadd.f32 %v1566, %v1598
  %v1600 = vpop.f32.mrf.mxu0
  %v1601 = vadd.f32 %v1568, %v1600
  %1602 = vmatmul.bf16.gmra.mxu0 %v581
  %v1603 = vpop.f32.mrf.mxu0
  %v1604 = vadd.f32 %v1571, %v1603
  %v1605 = vpop.f32.mrf.mxu0
  %v1606 = vadd.f32 %v1573, %v1605
  %1607 = vmatmul.bf16.gmra.mxu0 %v597
  %v1608 = vpop.f32.mrf.mxu0
  %v1609 = vadd.f32 %v1576, %v1608
  %v1610 = vpop.f32.mrf.mxu0
  %v1611 = vadd.f32 %v1578, %v1610
  %1612 = vmatmul.bf16.gmra.mxu0 %v613
  %v1613 = vpop.f32.mrf.mxu0
  %v1614 = vadd.f32 %v1581, %v1613
  %v1615 = vpop.f32.mrf.mxu0
  %v1616 = vadd.f32 %v1583, %v1615
  %1617 = vmatmul.bf16.gmra.mxu0 %v629
  %v1618 = vpop.f32.mrf.mxu0
  %v1619 = vadd.f32 %v1586, %v1618
  %v1620 = vpop.f32.mrf.mxu0
  %1621 = vdwg.mxu0
  %1622 = vmatpush.bf16.msra.mxu0 %v1273
  %1623 = vmatpush.bf16.msra.mxu0 %v1272
  %1624 = vmatpush.bf16.msra.mxu0 %v1271
  %1625 = vmatpush.bf16.msra.mxu0 %v1270
  %1626 = vmatpush.bf16.msra.mxu0 %v1269
  %1627 = vmatpush.bf16.msra.mxu0 %v1268
  %1628 = vmatpush.bf16.msra.mxu0 %v1267
  %1629 = vmatpush.bf16.msra.mxu0 %v1266
  %1630 = vmatmul.bf16.gmra.mxu0 %v566
  %v1631 = vpop.f32.mrf.mxu0
  %v1632 = vadd.f32 %v1599, %v1631
  %v1633 = vpop.f32.mrf.mxu0
  %v1634 = vadd.f32 %v1601, %v1633
  %1635 = vmatmul.bf16.gmra.mxu0 %v582
  %v1636 = vpop.f32.mrf.mxu0
  %v1637 = vadd.f32 %v1604, %v1636
  %v1638 = vpop.f32.mrf.mxu0
  %v1639 = vadd.f32 %v1606, %v1638
  %1640 = vmatmul.bf16.gmra.mxu0 %v598
  %v1641 = vpop.f32.mrf.mxu0
  %v1642 = vadd.f32 %v1609, %v1641
  %v1643 = vpop.f32.mrf.mxu0
  %v1644 = vadd.f32 %v1611, %v1643
  %1645 = vmatmul.bf16.gmra.mxu0 %v614
  %v1646 = vpop.f32.mrf.mxu0
  %v1647 = vadd.f32 %v1614, %v1646
  %v1648 = vpop.f32.mrf.mxu0
  %v1649 = vadd.f32 %v1616, %v1648
  %1650 = vmatmul.bf16.gmra.mxu0 %v630
  %v1651 = vpop.f32.mrf.mxu0
  %v1652 = vadd.f32 %v1619, %v1651
  %v1653 = vpop.f32.mrf.mxu0
  %1654 = vdwg.mxu0
  %1655 = vmatpush.bf16.msra.mxu0 %v1281
  %1656 = vmatpush.bf16.msra.mxu0 %v1280
  %1657 = vmatpush.bf16.msra.mxu0 %v1279
  %1658 = vmatpush.bf16.msra.mxu0 %v1278
  %1659 = vmatpush.bf16.msra.mxu0 %v1277
  %1660 = vmatpush.bf16.msra.mxu0 %v1276
  %1661 = vmatpush.bf16.msra.mxu0 %v1275
  %1662 = vmatpush.bf16.msra.mxu0 %v1274
  %1663 = vmatmul.bf16.gmra.mxu0 %v567
  %v1664 = vpop.f32.mrf.mxu0
  %v1665 = vadd.f32 %v1632, %v1664
  %v1666 = vpop.f32.mrf.mxu0
  %v1667 = vadd.f32 %v1634, %v1666
  %1668 = vmatmul.bf16.gmra.mxu0 %v583
  %v1669 = vpop.f32.mrf.mxu0
  %v1670 = vadd.f32 %v1637, %v1669
  %v1671 = vpop.f32.mrf.mxu0
  %v1672 = vadd.f32 %v1639, %v1671
  %1673 = vmatmul.bf16.gmra.mxu0 %v599
  %v1674 = vpop.f32.mrf.mxu0
  %v1675 = vadd.f32 %v1642, %v1674
  %v1676 = vpop.f32.mrf.mxu0
  %v1677 = vadd.f32 %v1644, %v1676
  %1678 = vmatmul.bf16.gmra.mxu0 %v615
  %v1679 = vpop.f32.mrf.mxu0
  %v1680 = vadd.f32 %v1647, %v1679
  %v1681 = vpop.f32.mrf.mxu0
  %v1682 = vadd.f32 %v1649, %v1681
  %1683 = vmatmul.bf16.gmra.mxu0 %v631
  %v1684 = vpop.f32.mrf.mxu0
  %v1685 = vadd.f32 %v1652, %v1684
  %v1686 = vpop.f32.mrf.mxu0
  %1687 = vdwg.mxu0
  %1688 = vmatpush.bf16.msra.mxu0 %v1289
  %1689 = vmatpush.bf16.msra.mxu0 %v1288
  %1690 = vmatpush.bf16.msra.mxu0 %v1287
  %1691 = vmatpush.bf16.msra.mxu0 %v1286
  %1692 = vmatpush.bf16.msra.mxu0 %v1285
  %1693 = vmatpush.bf16.msra.mxu0 %v1284
  %1694 = vmatpush.bf16.msra.mxu0 %v1283
  %1695 = vmatpush.bf16.msra.mxu0 %v1282
  %1696 = vmatmul.bf16.gmra.mxu0 %v568
  %v1697 = vpop.f32.mrf.mxu0
  %v1698 = vadd.f32 %v1665, %v1697
  %v1699 = vpop.f32.mrf.mxu0
  %v1700 = vadd.f32 %v1667, %v1699
  %1701 = vmatmul.bf16.gmra.mxu0 %v584
  %v1702 = vpop.f32.mrf.mxu0
  %v1703 = vadd.f32 %v1670, %v1702
  %v1704 = vpop.f32.mrf.mxu0
  %v1705 = vadd.f32 %v1672, %v1704
  %1706 = vmatmul.bf16.gmra.mxu0 %v600
  %v1707 = vpop.f32.mrf.mxu0
  %v1708 = vadd.f32 %v1675, %v1707
  %v1709 = vpop.f32.mrf.mxu0
  %v1710 = vadd.f32 %v1677, %v1709
  %1711 = vmatmul.bf16.gmra.mxu0 %v616
  %v1712 = vpop.f32.mrf.mxu0
  %v1713 = vadd.f32 %v1680, %v1712
  %v1714 = vpop.f32.mrf.mxu0
  %v1715 = vadd.f32 %v1682, %v1714
  %1716 = vmatmul.bf16.gmra.mxu0 %v632
  %v1717 = vpop.f32.mrf.mxu0
  %v1718 = vadd.f32 %v1685, %v1717
  %v1719 = vpop.f32.mrf.mxu0
  %1720 = vdwg.mxu0
  %1721 = vmatpush.bf16.msra.mxu0 %v1297
  %1722 = vmatpush.bf16.msra.mxu0 %v1296
  %1723 = vmatpush.bf16.msra.mxu0 %v1295
  %1724 = vmatpush.bf16.msra.mxu0 %v1294
  %1725 = vmatpush.bf16.msra.mxu0 %v1293
  %1726 = vmatpush.bf16.msra.mxu0 %v1292
  %1727 = vmatpush.bf16.msra.mxu0 %v1291
  %1728 = vmatpush.bf16.msra.mxu0 %v1290
  %1729 = vmatmul.bf16.gmra.mxu0 %v569
  %v1730 = vpop.f32.mrf.mxu0
  %v1731 = vadd.f32 %v1698, %v1730
  %v1732 = vpop.f32.mrf.mxu0
  %v1733 = vadd.f32 %v1700, %v1732
  %1734 = vmatmul.bf16.gmra.mxu0 %v585
  %v1735 = vpop.f32.mrf.mxu0
  %v1736 = vadd.f32 %v1703, %v1735
  %v1737 = vpop.f32.mrf.mxu0
  %v1738 = vadd.f32 %v1705, %v1737
  %1739 = vmatmul.bf16.gmra.mxu0 %v601
  %v1740 = vpop.f32.mrf.mxu0
  %v1741 = vadd.f32 %v1708, %v1740
  %v1742 = vpop.f32.mrf.mxu0
  %v1743 = vadd.f32 %v1710, %v1742
  %1744 = vmatmul.bf16.gmra.mxu0 %v617
  %v1745 = vpop.f32.mrf.mxu0
  %v1746 = vadd.f32 %v1713, %v1745
  %v1747 = vpop.f32.mrf.mxu0
  %v1748 = vadd.f32 %v1715, %v1747
  %1749 = vmatmul.bf16.gmra.mxu0 %v633
  %v1750 = vpop.f32.mrf.mxu0
  %v1751 = vadd.f32 %v1718, %v1750
  %v1752 = vpop.f32.mrf.mxu0
  %1753 = vdwg.mxu0
  %1754 = vmatpush.bf16.msra.mxu0 %v1305
  %1755 = vmatpush.bf16.msra.mxu0 %v1304
  %1756 = vmatpush.bf16.msra.mxu0 %v1303
  %1757 = vmatpush.bf16.msra.mxu0 %v1302
  %1758 = vmatpush.bf16.msra.mxu0 %v1301
  %1759 = vmatpush.bf16.msra.mxu0 %v1300
  %1760 = vmatpush.bf16.msra.mxu0 %v1299
  %1761 = vmatpush.bf16.msra.mxu0 %v1298
  %1762 = vmatmul.bf16.gmra.mxu0 %v570
  %v1763 = vpop.f32.mrf.mxu0
  %v1764 = vadd.f32 %v1731, %v1763
  %v1765 = vpop.f32.mrf.mxu0
  %v1766 = vadd.f32 %v1733, %v1765
  %1767 = vmatmul.bf16.gmra.mxu0 %v586
  %v1768 = vpop.f32.mrf.mxu0
  %v1769 = vadd.f32 %v1736, %v1768
  %v1770 = vpop.f32.mrf.mxu0
  %v1771 = vadd.f32 %v1738, %v1770
  %1772 = vmatmul.bf16.gmra.mxu0 %v602
  %v1773 = vpop.f32.mrf.mxu0
  %v1774 = vadd.f32 %v1741, %v1773
  %v1775 = vpop.f32.mrf.mxu0
  %v1776 = vadd.f32 %v1743, %v1775
  %1777 = vmatmul.bf16.gmra.mxu0 %v618
  %v1778 = vpop.f32.mrf.mxu0
  %v1779 = vadd.f32 %v1746, %v1778
  %v1780 = vpop.f32.mrf.mxu0
  %v1781 = vadd.f32 %v1748, %v1780
  %1782 = vmatmul.bf16.gmra.mxu0 %v634
  %v1783 = vpop.f32.mrf.mxu0
  %v1784 = vadd.f32 %v1751, %v1783
  %v1785 = vpop.f32.mrf.mxu0
  %1786 = vdwg.mxu0
  %1787 = vmatpush.bf16.msra.mxu0 %v1313
  %1788 = vmatpush.bf16.msra.mxu0 %v1312
  %1789 = vmatpush.bf16.msra.mxu0 %v1311
  %1790 = vmatpush.bf16.msra.mxu0 %v1310
  %1791 = vmatpush.bf16.msra.mxu0 %v1309
  %1792 = vmatpush.bf16.msra.mxu0 %v1308
  %1793 = vmatpush.bf16.msra.mxu0 %v1307
  %1794 = vmatpush.bf16.msra.mxu0 %v1306
  %1795 = vmatmul.bf16.gmra.mxu0 %v571
  %v1796 = vpop.f32.mrf.mxu0
  %v1797 = vadd.f32 %v1764, %v1796
  %v1798 = vpop.f32.mrf.mxu0
  %v1799 = vadd.f32 %v1766, %v1798
  %1800 = vmatmul.bf16.gmra.mxu0 %v587
  %v1801 = vpop.f32.mrf.mxu0
  %v1802 = vadd.f32 %v1769, %v1801
  %v1803 = vpop.f32.mrf.mxu0
  %v1804 = vadd.f32 %v1771, %v1803
  %1805 = vmatmul.bf16.gmra.mxu0 %v603
  %v1806 = vpop.f32.mrf.mxu0
  %v1807 = vadd.f32 %v1774, %v1806
  %v1808 = vpop.f32.mrf.mxu0
  %v1809 = vadd.f32 %v1776, %v1808
  %1810 = vmatmul.bf16.gmra.mxu0 %v619
  %v1811 = vpop.f32.mrf.mxu0
  %v1812 = vadd.f32 %v1779, %v1811
  %v1813 = vpop.f32.mrf.mxu0
  %v1814 = vadd.f32 %v1781, %v1813
  %1815 = vmatmul.bf16.gmra.mxu0 %v635
  %v1816 = vpop.f32.mrf.mxu0
  %v1817 = vadd.f32 %v1784, %v1816
  %v1818 = vpop.f32.mrf.mxu0
  %1819 = vdwg.mxu0
  %1820 = vmatpush.bf16.msra.mxu0 %v1321
  %1821 = vmatpush.bf16.msra.mxu0 %v1320
  %1822 = vmatpush.bf16.msra.mxu0 %v1319
  %1823 = vmatpush.bf16.msra.mxu0 %v1318
  %1824 = vmatpush.bf16.msra.mxu0 %v1317
  %1825 = vmatpush.bf16.msra.mxu0 %v1316
  %1826 = vmatpush.bf16.msra.mxu0 %v1315
  %1827 = vmatpush.bf16.msra.mxu0 %v1314
  %1828 = vmatmul.bf16.gmra.mxu0 %v572
  %v1829 = vpop.f32.mrf.mxu0
  %v1830 = vadd.f32 %v1797, %v1829
  %v1831 = vpop.f32.mrf.mxu0
  %v1832 = vadd.f32 %v1799, %v1831
  %1833 = vmatmul.bf16.gmra.mxu0 %v588
  %v1834 = vpop.f32.mrf.mxu0
  %v1835 = vadd.f32 %v1802, %v1834
  %v1836 = vpop.f32.mrf.mxu0
  %v1837 = vadd.f32 %v1804, %v1836
  %1838 = vmatmul.bf16.gmra.mxu0 %v604
  %v1839 = vpop.f32.mrf.mxu0
  %v1840 = vadd.f32 %v1807, %v1839
  %v1841 = vpop.f32.mrf.mxu0
  %v1842 = vadd.f32 %v1809, %v1841
  %1843 = vmatmul.bf16.gmra.mxu0 %v620
  %v1844 = vpop.f32.mrf.mxu0
  %v1845 = vadd.f32 %v1812, %v1844
  %v1846 = vpop.f32.mrf.mxu0
  %v1847 = vadd.f32 %v1814, %v1846
  %1848 = vmatmul.bf16.gmra.mxu0 %v636
  %v1849 = vpop.f32.mrf.mxu0
  %v1850 = vadd.f32 %v1817, %v1849
  %v1851 = vpop.f32.mrf.mxu0
  %1852 = vdwg.mxu0
  %1853 = vmatpush.bf16.msra.mxu0 %v1329
  %1854 = vmatpush.bf16.msra.mxu0 %v1328
  %1855 = vmatpush.bf16.msra.mxu0 %v1327
  %1856 = vmatpush.bf16.msra.mxu0 %v1326
  %1857 = vmatpush.bf16.msra.mxu0 %v1325
  %1858 = vmatpush.bf16.msra.mxu0 %v1324
  %1859 = vmatpush.bf16.msra.mxu0 %v1323
  %1860 = vmatpush.bf16.msra.mxu0 %v1322
  %1861 = vmatmul.bf16.gmra.mxu0 %v573
  %v1862 = vpop.f32.mrf.mxu0
  %v1863 = vadd.f32 %v1830, %v1862
  %v1864 = vpop.f32.mrf.mxu0
  %v1865 = vadd.f32 %v1832, %v1864
  %1866 = vmatmul.bf16.gmra.mxu0 %v589
  %v1867 = vpop.f32.mrf.mxu0
  %v1868 = vadd.f32 %v1835, %v1867
  %v1869 = vpop.f32.mrf.mxu0
  %v1870 = vadd.f32 %v1837, %v1869
  %1871 = vmatmul.bf16.gmra.mxu0 %v605
  %v1872 = vpop.f32.mrf.mxu0
  %v1873 = vadd.f32 %v1840, %v1872
  %v1874 = vpop.f32.mrf.mxu0
  %v1875 = vadd.f32 %v1842, %v1874
  %1876 = vmatmul.bf16.gmra.mxu0 %v621
  %v1877 = vpop.f32.mrf.mxu0
  %v1878 = vadd.f32 %v1845, %v1877
  %v1879 = vpop.f32.mrf.mxu0
  %v1880 = vadd.f32 %v1847, %v1879
  %1881 = vmatmul.bf16.gmra.mxu0 %v637
  %v1882 = vpop.f32.mrf.mxu0
  %v1883 = vadd.f32 %v1850, %v1882
  %v1884 = vpop.f32.mrf.mxu0
  %1885 = vdwg.mxu0
  %1886 = vmatpush.bf16.msra.mxu0 %v1337
  %1887 = vmatpush.bf16.msra.mxu0 %v1336
  %1888 = vmatpush.bf16.msra.mxu0 %v1335
  %1889 = vmatpush.bf16.msra.mxu0 %v1334
  %1890 = vmatpush.bf16.msra.mxu0 %v1333
  %1891 = vmatpush.bf16.msra.mxu0 %v1332
  %1892 = vmatpush.bf16.msra.mxu0 %v1331
  %1893 = vmatpush.bf16.msra.mxu0 %v1330
  %1894 = vmatmul.bf16.gmra.mxu0 %v574
  %v1895 = vpop.f32.mrf.mxu0
  %v1896 = vadd.f32 %v1863, %v1895
  %v1897 = vpop.f32.mrf.mxu0
  %v1898 = vadd.f32 %v1865, %v1897
  %1899 = vmatmul.bf16.gmra.mxu0 %v590
  %v1900 = vpop.f32.mrf.mxu0
  %v1901 = vadd.f32 %v1868, %v1900
  %v1902 = vpop.f32.mrf.mxu0
  %v1903 = vadd.f32 %v1870, %v1902
  %1904 = vmatmul.bf16.gmra.mxu0 %v606
  %v1905 = vpop.f32.mrf.mxu0
  %v1906 = vadd.f32 %v1873, %v1905
  %v1907 = vpop.f32.mrf.mxu0
  %v1908 = vadd.f32 %v1875, %v1907
  %1909 = vmatmul.bf16.gmra.mxu0 %v622
  %v1910 = vpop.f32.mrf.mxu0
  %v1911 = vadd.f32 %v1878, %v1910
  %v1912 = vpop.f32.mrf.mxu0
  %v1913 = vadd.f32 %v1880, %v1912
  %1914 = vmatmul.bf16.gmra.mxu0 %v638
  %v1915 = vpop.f32.mrf.mxu0
  %v1916 = vadd.f32 %v1883, %v1915
  %v1917 = vpop.f32.mrf.mxu0
  %1918 = vdwg.mxu0
  %1919 = vmatpush.bf16.msra.mxu0 %v1345
  %1920 = vmatpush.bf16.msra.mxu0 %v1344
  %1921 = vmatpush.bf16.msra.mxu0 %v1343
  %1922 = vmatpush.bf16.msra.mxu0 %v1342
  %1923 = vmatpush.bf16.msra.mxu0 %v1341
  %1924 = vmatpush.bf16.msra.mxu0 %v1340
  %1925 = vmatpush.bf16.msra.mxu0 %v1339
  %1926 = vmatpush.bf16.msra.mxu0 %v1338
  %1927 = vmatmul.bf16.gmra.mxu0 %v575
  %v1928 = vpop.f32.mrf.mxu0
  %v1929 = vadd.f32 %v1896, %v1928
  %v1930 = vpop.f32.mrf.mxu0
  %v1931 = vadd.f32 %v1898, %v1930
  %1932 = vmatmul.bf16.gmra.mxu0 %v591
  %v1933 = vpop.f32.mrf.mxu0
  %v1934 = vadd.f32 %v1901, %v1933
  %v1935 = vpop.f32.mrf.mxu0
  %v1936 = vadd.f32 %v1903, %v1935
  %1937 = vmatmul.bf16.gmra.mxu0 %v607
  %v1938 = vpop.f32.mrf.mxu0
  %v1939 = vadd.f32 %v1906, %v1938
  %v1940 = vpop.f32.mrf.mxu0
  %v1941 = vadd.f32 %v1908, %v1940
  %1942 = vmatmul.bf16.gmra.mxu0 %v623
  %v1943 = vpop.f32.mrf.mxu0
  %v1944 = vadd.f32 %v1911, %v1943
  %v1945 = vpop.f32.mrf.mxu0
  %v1946 = vadd.f32 %v1913, %v1945
  %1947 = vmatmul.bf16.gmra.mxu0 %v639
  %v1948 = vpop.f32.mrf.mxu0
  %v1949 = vadd.f32 %v1916, %v1948
  %v1950 = vpop.f32.mrf.mxu0
  %1951 = vdwg.mxu0
  %1952 = vmatpush.bf16.msra.mxu0 %v1353
  %1953 = vmatpush.bf16.msra.mxu0 %v1352
  %1954 = vmatpush.bf16.msra.mxu0 %v1351
  %1955 = vmatpush.bf16.msra.mxu0 %v1350
  %1956 = vmatpush.bf16.msra.mxu0 %v1349
  %1957 = vmatpush.bf16.msra.mxu0 %v1348
  %1958 = vmatpush.bf16.msra.mxu0 %v1347
  %1959 = vmatpush.bf16.msra.mxu0 %v1346
  %1960 = vmatmul.bf16.gmra.mxu0 %v576
  %v1961 = vpop.f32.mrf.mxu0
  %v1962 = vadd.f32 %v1929, %v1961
  %v1963 = vpop.f32.mrf.mxu0
  %v1964 = vadd.f32 %v1931, %v1963
  %1965 = vmatmul.bf16.gmra.mxu0 %v592
  %v1966 = vpop.f32.mrf.mxu0
  %v1967 = vadd.f32 %v1934, %v1966
  %v1968 = vpop.f32.mrf.mxu0
  %v1969 = vadd.f32 %v1936, %v1968
  %1970 = vmatmul.bf16.gmra.mxu0 %v608
  %v1971 = vpop.f32.mrf.mxu0
  %v1972 = vadd.f32 %v1939, %v1971
  %v1973 = vpop.f32.mrf.mxu0
  %v1974 = vadd.f32 %v1941, %v1973
  %1975 = vmatmul.bf16.gmra.mxu0 %v624
  %v1976 = vpop.f32.mrf.mxu0
  %v1977 = vadd.f32 %v1944, %v1976
  %v1978 = vpop.f32.mrf.mxu0
  %v1979 = vadd.f32 %v1946, %v1978
  %1980 = vmatmul.bf16.gmra.mxu0 %v640
  %v1981 = vpop.f32.mrf.mxu0
  %v1982 = vadd.f32 %v1949, %v1981
  %v1983 = vpop.f32.mrf.mxu0
  %1984 = vdwg.mxu0
  %1985 = vmatpush.bf16.msra.mxu0 %v1361
  %1986 = vmatpush.bf16.msra.mxu0 %v1360
  %1987 = vmatpush.bf16.msra.mxu0 %v1359
  %1988 = vmatpush.bf16.msra.mxu0 %v1358
  %1989 = vmatpush.bf16.msra.mxu0 %v1357
  %1990 = vmatpush.bf16.msra.mxu0 %v1356
  %1991 = vmatpush.bf16.msra.mxu0 %v1355
  %1992 = vmatpush.bf16.msra.mxu0 %v1354
  %1993 = vmatmul.bf16.gmra.mxu0 %v577
  %v1994 = vpop.f32.mrf.mxu0
  %v1995 = vadd.f32 %v1962, %v1994
  %v1996 = vpop.f32.mrf.mxu0
  %v1997 = vadd.f32 %v1964, %v1996
  %1998 = vmatmul.bf16.gmra.mxu0 %v593
  %v1999 = vpop.f32.mrf.mxu0
  %v2000 = vadd.f32 %v1967, %v1999
  %v2001 = vpop.f32.mrf.mxu0
  %v2002 = vadd.f32 %v1969, %v2001
  %2003 = vmatmul.bf16.gmra.mxu0 %v609
  %v2004 = vpop.f32.mrf.mxu0
  %v2005 = vadd.f32 %v1972, %v2004
  %v2006 = vpop.f32.mrf.mxu0
  %v2007 = vadd.f32 %v1974, %v2006
  %2008 = vmatmul.bf16.gmra.mxu0 %v625
  %v2009 = vpop.f32.mrf.mxu0
  %v2010 = vadd.f32 %v1977, %v2009
  %v2011 = vpop.f32.mrf.mxu0
  %v2012 = vadd.f32 %v1979, %v2011
  %2013 = vmatmul.bf16.gmra.mxu0 %v641
  %v2014 = vpop.f32.mrf.mxu0
  %v2015 = vadd.f32 %v1982, %v2014
  %v2016 = vpop.f32.mrf.mxu0
  %2017 = vdwg.mxu0
  %v2018 = vmax.f32 %v1995, 0.0
  %v2019 = vmax.f32 %v1997, 0.0
  %v2020 = vmax.f32 %v2000, 0.0
  %v2021 = vmax.f32 %v2002, 0.0
  %v2022 = vmax.f32 %v2005, 0.0
  %v2023 = vmax.f32 %v2007, 0.0
  %v2024 = vmax.f32 %v2010, 0.0
  %v2025 = vmax.f32 %v2012, 0.0
  %v2026 = vmax.f32 %v2015, 0.0
  %v2027 = vpack.c.bf16 %v2018, %v2018
  %v2028 = vpack.c.bf16 %v2019, %v2019
  %v2029 = vpack.c.bf16 %v2020, %v2020
  %v2030 = vpack.c.bf16 %v2021, %v2021
  %v2031 = vpack.c.bf16 %v2022, %v2022
  %v2032 = vpack.c.bf16 %v2023, %v2023
  %v2033 = vpack.c.bf16 %v2024, %v2024
  %v2034 = vpack.c.bf16 %v2025, %v2025
  %v2035 = vpack.c.bf16 %v2026, %v2026
  %2036 = vst [vmem:[%s3] sm:$0xf] %v2027
  %2037 = vst [vmem:[%s3 + $0x4] sm:$0xf] %v2028
  %2038 = vst [vmem:[%s3 + $0x8] sm:$0xf] %v2029
  %2039 = vst [vmem:[%s3 + $0xc] sm:$0xf] %v2030
  %2040 = vst [vmem:[%s3 + $0x10] sm:$0xf] %v2031
  %2041 = vst [vmem:[%s3 + $0x14] sm:$0xf] %v2032
  %2042 = vst [vmem:[%s3 + $0x18] sm:$0xf] %v2033
  %2043 = vst [vmem:[%s3 + $0x1c] sm:$0xf] %v2034
  %2044 = vst [vmem:[%s3 + $0x20] sm:$0xf] %v2035
  // Predicated region
  $region14: #{dqn_forward.5} parent=0 // pred_check
    _
  $region15: #{dqn_forward.5} parent=0 // pred_check_branch
    %2046 = sbr.rel (0) target = $region17
  $region16: #{dqn_forward.5} parent=0 // pred_region
    _
  $region17: #{dqn_forward.5} parent=0 // pred_fallthru
    _
  // Predicated region
  $region18: #{dqn_forward.5} parent=0 // pred_check
    _
  $region19: #{dqn_forward.5} parent=0 // pred_check_branch
    %2048 = sbr.rel (0) target = $region21
  $region20: #{dqn_forward.5} parent=0 // pred_region
    _
  $region21: #{dqn_forward.5} parent=0 // pred_fallthru
    _

// kernel: dqn_forward.6
$region0: #{dqn_forward.6}
  #allocation0 [shape = 'u32[]', space=smem, size = 0x4, offset = 0x4, fixed_abs, tag = 'smem constant byte address 0x4 - core index']
  #allocation1 [shape = 'u32[72,128]{1,0:T(1,128)}', space=vmem, size = 0x9000, scoped, tag = 'internal scratch']
  %s0 = inlined_call_operand.vmem [shape: bf16[32,1152], index: 0, kind: input, shape index: {}]
  %s1 = inlined_call_operand.vmem [shape: bf16[1152,128], index: 1, kind: input, shape index: {}]
  %s2 = inlined_call_operand.vmem [shape: f32[1,128], index: 2, kind: input, shape index: {}]
  %s3 = inlined_call_operand.vmem [shape: bf16[32,128], index: 3, kind: output, shape index: {}]
  %s4 = sld [smem:[#allocation0]]
  $region22: #{dqn_forward.6} parent=0
    _
  %s6 = ssub.s32 1, %s4
  %s7 = scalar_select 0, %s6, %s4
  // Predicated region
  $region2: #{dqn_forward.6} parent=0 // pred_check
    _
  $region3: #{dqn_forward.6} parent=0 // pred_check_branch
    %9 = sbr.rel (0) target = $region5
  $region4: #{dqn_forward.6} parent=0 // pred_region
    _
  $region5: #{dqn_forward.6} parent=0 // pred_fallthru
    _
  // Predicated region
  $region6: #{dqn_forward.6} parent=0 // pred_check
    _
  $region7: #{dqn_forward.6} parent=0 // pred_check_branch
    %11 = sbr.rel (0) target = $region9
  $region8: #{dqn_forward.6} parent=0 // pred_region
    _
  $region9: #{dqn_forward.6} parent=0 // pred_fallthru
    _
  // Predicated region
  $region10: #{dqn_forward.6} parent=0 // pred_check
    _
  $region11: #{dqn_forward.6} parent=0 // pred_check_branch
    %13 = sbr.rel (0) target = $region13
  $region12: #{dqn_forward.6} parent=0 // pred_region
    _
  $region13: #{dqn_forward.6} parent=0 // pred_fallthru
    _
  %v14 = vld [vmem:[%s0] sm:$0xff]
  %v15 = vld [vmem:[%s0 + $0x8] sm:$0xff]
  %v16 = vld [vmem:[%s0 + $0x10] sm:$0xff]
  %v17 = vld [vmem:[%s0 + $0x18] sm:$0xff]
  %v18 = vld [vmem:[%s0 + $0x20] sm:$0xf]
  %v19 = vld [vmem:[%s0 + $0x24] sm:$0xff]
  %v20 = vld [vmem:[%s0 + $0x2c] sm:$0xff]
  %v21 = vld [vmem:[%s0 + $0x34] sm:$0xff]
  %v22 = vld [vmem:[%s0 + $0x3c] sm:$0xff]
  %v23 = vld [vmem:[%s0 + $0x44] sm:$0xf]
  %v24 = vld [vmem:[%s0 + $0x48] sm:$0xff]
  %v25 = vld [vmem:[%s0 + $0x50] sm:$0xff]
  %v26 = vld [vmem:[%s0 + $0x58] sm:$0xff]
  %v27 = vld [vmem:[%s0 + $0x60] sm:$0xff]
  %v28 = vld [vmem:[%s0 + $0x68] sm:$0xf]
  %v29 = vld [vmem:[%s0 + $0x6c] sm:$0xff]
  %v30 = vld [vmem:[%s0 + $0x74] sm:$0xff]
  %v31 = vld [vmem:[%s0 + $0x7c] sm:$0xff]
  %v32 = vld [vmem:[%s0 + $0x84] sm:$0xff]
  %v33 = vld [vmem:[%s0 + $0x8c] sm:$0xf]
  %v34 = vld [vmem:[%s1] sm:$0xf]
  %v35 = vld [vmem:[%s1 + $0x4] sm:$0xf]
  %v36 = vld [vmem:[%s1 + $0x8] sm:$0xf]
  %v37 = vld [vmem:[%s1 + $0xc] sm:$0xf]
  %v38 = vld [vmem:[%s1 + $0x10] sm:$0xf]
  %v39 = vld [vmem:[%s1 + $0x14] sm:$0xf]
  %v40 = vld [vmem:[%s1 + $0x18] sm:$0xf]
  %v41 = vld [vmem:[%s1 + $0x1c] sm:$0xf]
  %v42 = vld [vmem:[%s1 + $0x20] sm:$0xf]
  %v43 = vld [vmem:[%s1 + $0x24] sm:$0xf]
  %v44 = vld [vmem:[%s1 + $0x28] sm:$0xf]
  %v45 = vld [vmem:[%s1 + $0x2c] sm:$0xf]
  %v46 = vld [vmem:[%s1 + $0x30] sm:$0xf]
  %v47 = vld [vmem:[%s1 + $0x34] sm:$0xf]
  %v48 = vld [vmem:[%s1 + $0x38] sm:$0xf]
  %v49 = vld [vmem:[%s1 + $0x3c] sm:$0xf]
  %v50 = vld [vmem:[%s1 + $0x40] sm:$0xf]
  %v51 = vld [vmem:[%s1 + $0x44] sm:$0xf]
  %v52 = vld [vmem:[%s1 + $0x48] sm:$0xf]
  %v53 = vld [vmem:[%s1 + $0x4c] sm:$0xf]
  %v54 = vld [vmem:[%s1 + $0x50] sm:$0xf]
  %v55 = vld [vmem:[%s1 + $0x54] sm:$0xf]
  %v56 = vld [vmem:[%s1 + $0x58] sm:$0xf]
  %v57 = vld [vmem:[%s1 + $0x5c] sm:$0xf]
  %v58 = vld [vmem:[%s1 + $0x60] sm:$0xf]
  %v59 = vld [vmem:[%s1 + $0x64] sm:$0xf]
  %v60 = vld [vmem:[%s1 + $0x68] sm:$0xf]
  %v61 = vld [vmem:[%s1 + $0x6c] sm:$0xf]
  %v62 = vld [vmem:[%s1 + $0x70] sm:$0xf]
  %v63 = vld [vmem:[%s1 + $0x74] sm:$0xf]
  %v64 = vld [vmem:[%s1 + $0x78] sm:$0xf]
  %v65 = vld [vmem:[%s1 + $0x7c] sm:$0xf]
  %v66 = vld [vmem:[%s1 + $0x80] sm:$0xf]
  %v67 = vld [vmem:[%s1 + $0x84] sm:$0xf]
  %v68 = vld [vmem:[%s1 + $0x88] sm:$0xf]
  %v69 = vld [vmem:[%s1 + $0x8c] sm:$0xf]
  %v70 = vld [vmem:[%s1 + $0x90] sm:$0xf]
  %v71 = vld [vmem:[%s1 + $0x94] sm:$0xf]
  %v72 = vld [vmem:[%s1 + $0x98] sm:$0xf]
  %v73 = vld [vmem:[%s1 + $0x9c] sm:$0xf]
  %v74 = vld [vmem:[%s1 + $0xa0] sm:$0xf]
  %v75 = vld [vmem:[%s1 + $0xa4] sm:$0xf]
  %v76 = vld [vmem:[%s1 + $0xa8] sm:$0xf]
  %v77 = vld [vmem:[%s1 + $0xac] sm:$0xf]
  %v78 = vld [vmem:[%s1 + $0xb0] sm:$0xf]
  %v79 = vld [vmem:[%s1 + $0xb4] sm:$0xf]
  %v80 = vld [vmem:[%s1 + $0xb8] sm:$0xf]
  %v81 = vld [vmem:[%s1 + $0xbc] sm:$0xf]
  %v82 = vld [vmem:[%s1 + $0xc0] sm:$0xf]
  %v83 = vld [vmem:[%s1 + $0xc4] sm:$0xf]
  %v84 = vld [vmem:[%s1 + $0xc8] sm:$0xf]
  %v85 = vld [vmem:[%s1 + $0xcc] sm:$0xf]
  %v86 = vld [vmem:[%s1 + $0xd0] sm:$0xf]
  %v87 = vld [vmem:[%s1 + $0xd4] sm:$0xf]
  %v88 = vld [vmem:[%s1 + $0xd8] sm:$0xf]
  %v89 = vld [vmem:[%s1 + $0xdc] sm:$0xf]
  %v90 = vld [vmem:[%s1 + $0xe0] sm:$0xf]
  %v91 = vld [vmem:[%s1 + $0xe4] sm:$0xf]
  %v92 = vld [vmem:[%s1 + $0xe8] sm:$0xf]
  %v93 = vld [vmem:[%s1 + $0xec] sm:$0xf]
  %v94 = vld [vmem:[%s1 + $0xf0] sm:$0xf]
  %v95 = vld [vmem:[%s1 + $0xf4] sm:$0xf]
  %v96 = vld [vmem:[%s1 + $0xf8] sm:$0xf]
  %v97 = vld [vmem:[%s1 + $0xfc] sm:$0xf]
  %v98 = vld [vmem:[%s1 + $0x100] sm:$0xf]
  %v99 = vld [vmem:[%s1 + $0x104] sm:$0xf]
  %v100 = vld [vmem:[%s1 + $0x108] sm:$0xf]
  %v101 = vld [vmem:[%s1 + $0x10c] sm:$0xf]
  %v102 = vld [vmem:[%s1 + $0x110] sm:$0xf]
  %v103 = vld [vmem:[%s1 + $0x114] sm:$0xf]
  %v104 = vld [vmem:[%s1 + $0x118] sm:$0xf]
  %v105 = vld [vmem:[%s1 + $0x11c] sm:$0xf]
  %v106 = vld [vmem:[%s1 + $0x120] sm:$0xf]
  %v107 = vld [vmem:[%s1 + $0x124] sm:$0xf]
  %v108 = vld [vmem:[%s1 + $0x128] sm:$0xf]
  %v109 = vld [vmem:[%s1 + $0x12c] sm:$0xf]
  %v110 = vld [vmem:[%s1 + $0x130] sm:$0xf]
  %v111 = vld [vmem:[%s1 + $0x134] sm:$0xf]
  %v112 = vld [vmem:[%s1 + $0x138] sm:$0xf]
  %v113 = vld [vmem:[%s1 + $0x13c] sm:$0xf]
  %v114 = vld [vmem:[%s1 + $0x140] sm:$0xf]
  %v115 = vld [vmem:[%s1 + $0x144] sm:$0xf]
  %v116 = vld [vmem:[%s1 + $0x148] sm:$0xf]
  %v117 = vld [vmem:[%s1 + $0x14c] sm:$0xf]
  %v118 = vld [vmem:[%s1 + $0x150] sm:$0xf]
  %v119 = vld [vmem:[%s1 + $0x154] sm:$0xf]
  %v120 = vld [vmem:[%s1 + $0x158] sm:$0xf]
  %v121 = vld [vmem:[%s1 + $0x15c] sm:$0xf]
  %v122 = vld [vmem:[%s1 + $0x160] sm:$0xf]
  %v123 = vld [vmem:[%s1 + $0x164] sm:$0xf]
  %v124 = vld [vmem:[%s1 + $0x168] sm:$0xf]
  %v125 = vld [vmem:[%s1 + $0x16c] sm:$0xf]
  %v126 = vld [vmem:[%s1 + $0x170] sm:$0xf]
  %v127 = vld [vmem:[%s1 + $0x174] sm:$0xf]
  %v128 = vld [vmem:[%s1 + $0x178] sm:$0xf]
  %v129 = vld [vmem:[%s1 + $0x17c] sm:$0xf]
  %v130 = vld [vmem:[%s1 + $0x180] sm:$0xf]
  %v131 = vld [vmem:[%s1 + $0x184] sm:$0xf]
  %v132 = vld [vmem:[%s1 + $0x188] sm:$0xf]
  %v133 = vld [vmem:[%s1 + $0x18c] sm:$0xf]
  %v134 = vld [vmem:[%s1 + $0x190] sm:$0xf]
  %v135 = vld [vmem:[%s1 + $0x194] sm:$0xf]
  %v136 = vld [vmem:[%s1 + $0x198] sm:$0xf]
  %v137 = vld [vmem:[%s1 + $0x19c] sm:$0xf]
  %v138 = vld [vmem:[%s1 + $0x1a0] sm:$0xf]
  %v139 = vld [vmem:[%s1 + $0x1a4] sm:$0xf]
  %v140 = vld [vmem:[%s1 + $0x1a8] sm:$0xf]
  %v141 = vld [vmem:[%s1 + $0x1ac] sm:$0xf]
  %v142 = vld [vmem:[%s1 + $0x1b0] sm:$0xf]
  %v143 = vld [vmem:[%s1 + $0x1b4] sm:$0xf]
  %v144 = vld [vmem:[%s1 + $0x1b8] sm:$0xf]
  %v145 = vld [vmem:[%s1 + $0x1bc] sm:$0xf]
  %v146 = vld [vmem:[%s1 + $0x1c0] sm:$0xf]
  %v147 = vld [vmem:[%s1 + $0x1c4] sm:$0xf]
  %v148 = vld [vmem:[%s1 + $0x1c8] sm:$0xf]
  %v149 = vld [vmem:[%s1 + $0x1cc] sm:$0xf]
  %v150 = vld [vmem:[%s1 + $0x1d0] sm:$0xf]
  %v151 = vld [vmem:[%s1 + $0x1d4] sm:$0xf]
  %v152 = vld [vmem:[%s1 + $0x1d8] sm:$0xf]
  %v153 = vld [vmem:[%s1 + $0x1dc] sm:$0xf]
  %v154 = vld [vmem:[%s1 + $0x1e0] sm:$0xf]
  %v155 = vld [vmem:[%s1 + $0x1e4] sm:$0xf]
  %v156 = vld [vmem:[%s1 + $0x1e8] sm:$0xf]
  %v157 = vld [vmem:[%s1 + $0x1ec] sm:$0xf]
  %v158 = vld [vmem:[%s1 + $0x1f0] sm:$0xf]
  %v159 = vld [vmem:[%s1 + $0x1f4] sm:$0xf]
  %v160 = vld [vmem:[%s1 + $0x1f8] sm:$0xf]
  %v161 = vld [vmem:[%s1 + $0x1fc] sm:$0xf]
  %v162 = vld [vmem:[%s1 + $0x200] sm:$0xf]
  %v163 = vld [vmem:[%s1 + $0x204] sm:$0xf]
  %v164 = vld [vmem:[%s1 + $0x208] sm:$0xf]
  %v165 = vld [vmem:[%s1 + $0x20c] sm:$0xf]
  %v166 = vld [vmem:[%s1 + $0x210] sm:$0xf]
  %v167 = vld [vmem:[%s1 + $0x214] sm:$0xf]
  %v168 = vld [vmem:[%s1 + $0x218] sm:$0xf]
  %v169 = vld [vmem:[%s1 + $0x21c] sm:$0xf]
  %v170 = vld [vmem:[%s1 + $0x220] sm:$0xf]
  %v171 = vld [vmem:[%s1 + $0x224] sm:$0xf]
  %v172 = vld [vmem:[%s1 + $0x228] sm:$0xf]
  %v173 = vld [vmem:[%s1 + $0x22c] sm:$0xf]
  %v174 = vld [vmem:[%s1 + $0x230] sm:$0xf]
  %v175 = vld [vmem:[%s1 + $0x234] sm:$0xf]
  %v176 = vld [vmem:[%s1 + $0x238] sm:$0xf]
  %v177 = vld [vmem:[%s1 + $0x23c] sm:$0xf]
  %v178 = vld [vmem:[%s2] sm:$0x1]
  %v180 = vperm.slane %v178, 0
  %v202 = vunpack.c.l.b16 %v14
  %v203 = vunpack.c.h.b16 %v14
  %v204 = vunpack.c.l.b16 %v15
  %v205 = vunpack.c.h.b16 %v15
  %v206 = vunpack.c.l.b16 %v16
  %v207 = vunpack.c.h.b16 %v16
  %v208 = vunpack.c.l.b16 %v17
  %v209 = vunpack.c.h.b16 %v17
  %v210 = vunpack.c.l.b16 %v18
  %v211 = vunpack.c.l.b16 %v19
  %v212 = vunpack.c.h.b16 %v19
  %v213 = vunpack.c.l.b16 %v20
  %v214 = vunpack.c.h.b16 %v20
  %v215 = vunpack.c.l.b16 %v21
  %v216 = vunpack.c.h.b16 %v21
  %v217 = vunpack.c.l.b16 %v22
  %v218 = vunpack.c.h.b16 %v22
  %v219 = vunpack.c.l.b16 %v23
  %v220 = vunpack.c.l.b16 %v24
  %v221 = vunpack.c.h.b16 %v24
  %v222 = vunpack.c.l.b16 %v25
  %v223 = vunpack.c.h.b16 %v25
  %v224 = vunpack.c.l.b16 %v26
  %v225 = vunpack.c.h.b16 %v26
  %v226 = vunpack.c.l.b16 %v27
  %v227 = vunpack.c.h.b16 %v27
  %v228 = vunpack.c.l.b16 %v28
  %v229 = vunpack.c.l.b16 %v29
  %v230 = vunpack.c.h.b16 %v29
  %v231 = vunpack.c.l.b16 %v30
  %v232 = vunpack.c.h.b16 %v30
  %v233 = vunpack.c.l.b16 %v31
  %v234 = vunpack.c.h.b16 %v31
  %v235 = vunpack.c.l.b16 %v32
  %v236 = vunpack.c.h.b16 %v32
  %v237 = vunpack.c.l.b16 %v33
  %v238 = vpack.c.b16 %v211, %v202
  %v239 = vpack.c.b16 %v212, %v203
  %v240 = vpack.c.b16 %v213, %v204
  %v241 = vpack.c.b16 %v214, %v205
  %v242 = vpack.c.b16 %v215, %v206
  %v243 = vpack.c.b16 %v216, %v207
  %v244 = vpack.c.b16 %v217, %v208
  %v245 = vpack.c.b16 %v218, %v209
  %v246 = vpack.c.b16 %v219, %v210
  %v247 = vpack.c.b16 %v229, %v220
  %v248 = vpack.c.b16 %v230, %v221
  %v249 = vpack.c.b16 %v231, %v222
  %v250 = vpack.c.b16 %v232, %v223
  %v251 = vpack.c.b16 %v233, %v224
  %v252 = vpack.c.b16 %v234, %v225
  %v253 = vpack.c.b16 %v235, %v226
  %v254 = vpack.c.b16 %v236, %v227
  %v255 = vpack.c.b16 %v237, %v228
  %v418 = vunpack.c.l.b16 %v34
  %v419 = vunpack.c.l.b16 %v35
  %v420 = vunpack.c.l.b16 %v36
  %v421 = vunpack.c.l.b16 %v37
  %v422 = vunpack.c.l.b16 %v38
  %v423 = vunpack.c.l.b16 %v39
  %v424 = vunpack.c.l.b16 %v40
  %v425 = vunpack.c.l.b16 %v41
  %v426 = vunpack.c.l.b16 %v42
  %v427 = vunpack.c.l.b16 %v43
  %v428 = vunpack.c.l.b16 %v44
  %v429 = vunpack.c.l.b16 %v45
  %v430 = vunpack.c.l.b16 %v46
  %v431 = vunpack.c.l.b16 %v47
  %v432 = vunpack.c.l.b16 %v48
  %v433 = vunpack.c.l.b16 %v49
  %v434 = vunpack.c.l.b16 %v50
  %v435 = vunpack.c.l.b16 %v51
  %v436 = vunpack.c.l.b16 %v52
  %v437 = vunpack.c.l.b16 %v53
  %v438 = vunpack.c.l.b16 %v54
  %v439 = vunpack.c.l.b16 %v55
  %v440 = vunpack.c.l.b16 %v56
  %v441 = vunpack.c.l.b16 %v57
  %v442 = vunpack.c.l.b16 %v58
  %v443 = vunpack.c.l.b16 %v59
  %v444 = vunpack.c.l.b16 %v60
  %v445 = vunpack.c.l.b16 %v61
  %v446 = vunpack.c.l.b16 %v62
  %v447 = vunpack.c.l.b16 %v63
  %v448 = vunpack.c.l.b16 %v64
  %v449 = vunpack.c.l.b16 %v65
  %v450 = vunpack.c.l.b16 %v66
  %v451 = vunpack.c.l.b16 %v67
  %v452 = vunpack.c.l.b16 %v68
  %v453 = vunpack.c.l.b16 %v69
  %v454 = vunpack.c.l.b16 %v70
  %v455 = vunpack.c.l.b16 %v71
  %v456 = vunpack.c.l.b16 %v72
  %v457 = vunpack.c.l.b16 %v73
  %v458 = vunpack.c.l.b16 %v74
  %v459 = vunpack.c.l.b16 %v75
  %v460 = vunpack.c.l.b16 %v76
  %v461 = vunpack.c.l.b16 %v77
  %v462 = vunpack.c.l.b16 %v78
  %v463 = vunpack.c.l.b16 %v79
  %v464 = vunpack.c.l.b16 %v80
  %v465 = vunpack.c.l.b16 %v81
  %v466 = vunpack.c.l.b16 %v82
  %v467 = vunpack.c.l.b16 %v83
  %v468 = vunpack.c.l.b16 %v84
  %v469 = vunpack.c.l.b16 %v85
  %v470 = vunpack.c.l.b16 %v86
  %v471 = vunpack.c.l.b16 %v87
  %v472 = vunpack.c.l.b16 %v88
  %v473 = vunpack.c.l.b16 %v89
  %v474 = vunpack.c.l.b16 %v90
  %v475 = vunpack.c.l.b16 %v91
  %v476 = vunpack.c.l.b16 %v92
  %v477 = vunpack.c.l.b16 %v93
  %v478 = vunpack.c.l.b16 %v94
  %v479 = vunpack.c.l.b16 %v95
  %v480 = vunpack.c.l.b16 %v96
  %v481 = vunpack.c.l.b16 %v97
  %v482 = vunpack.c.l.b16 %v98
  %v483 = vunpack.c.l.b16 %v99
  %v484 = vunpack.c.l.b16 %v100
  %v485 = vunpack.c.l.b16 %v101
  %v486 = vunpack.c.l.b16 %v102
  %v487 = vunpack.c.l.b16 %v103
  %v488 = vunpack.c.l.b16 %v104
  %v489 = vunpack.c.l.b16 %v105
  %v490 = vunpack.c.l.b16 %v106
  %v491 = vunpack.c.l.b16 %v107
  %v492 = vunpack.c.l.b16 %v108
  %v493 = vunpack.c.l.b16 %v109
  %v494 = vunpack.c.l.b16 %v110
  %v495 = vunpack.c.l.b16 %v111
  %v496 = vunpack.c.l.b16 %v112
  %v497 = vunpack.c.l.b16 %v113
  %v498 = vunpack.c.l.b16 %v114
  %v499 = vunpack.c.l.b16 %v115
  %v500 = vunpack.c.l.b16 %v116
  %v501 = vunpack.c.l.b16 %v117
  %v502 = vunpack.c.l.b16 %v118
  %v503 = vunpack.c.l.b16 %v119
  %v504 = vunpack.c.l.b16 %v120
  %v505 = vunpack.c.l.b16 %v121
  %v506 = vunpack.c.l.b16 %v122
  %v507 = vunpack.c.l.b16 %v123
  %v508 = vunpack.c.l.b16 %v124
  %v509 = vunpack.c.l.b16 %v125
  %v510 = vunpack.c.l.b16 %v126
  %v511 = vunpack.c.l.b16 %v127
  %v512 = vunpack.c.l.b16 %v128
  %v513 = vunpack.c.l.b16 %v129
  %v514 = vunpack.c.l.b16 %v130
  %v515 = vunpack.c.l.b16 %v131
  %v516 = vunpack.c.l.b16 %v132
  %v517 = vunpack.c.l.b16 %v133
  %v518 = vunpack.c.l.b16 %v134
  %v519 = vunpack.c.l.b16 %v135
  %v520 = vunpack.c.l.b16 %v136
  %v521 = vunpack.c.l.b16 %v137
  %v522 = vunpack.c.l.b16 %v138
  %v523 = vunpack.c.l.b16 %v139
  %v524 = vunpack.c.l.b16 %v140
  %v525 = vunpack.c.l.b16 %v141
  %v526 = vunpack.c.l.b16 %v142
  %v527 = vunpack.c.l.b16 %v143
  %v528 = vunpack.c.l.b16 %v144
  %v529 = vunpack.c.l.b16 %v145
  %v530 = vunpack.c.l.b16 %v146
  %v531 = vunpack.c.l.b16 %v147
  %v532 = vunpack.c.l.b16 %v148
  %v533 = vunpack.c.l.b16 %v149
  %v534 = vunpack.c.l.b16 %v150
  %v535 = vunpack.c.l.b16 %v151
  %v536 = vunpack.c.l.b16 %v152
  %v537 = vunpack.c.l.b16 %v153
  %v538 = vunpack.c.l.b16 %v154
  %v539 = vunpack.c.l.b16 %v155
  %v540 = vunpack.c.l.b16 %v156
  %v541 = vunpack.c.l.b16 %v157
  %v542 = vunpack.c.l.b16 %v158
  %v543 = vunpack.c.l.b16 %v159
  %v544 = vunpack.c.l.b16 %v160
  %v545 = vunpack.c.l.b16 %v161
  %v546 = vunpack.c.l.b16 %v162
  %v547 = vunpack.c.l.b16 %v163
  %v548 = vunpack.c.l.b16 %v164
  %v549 = vunpack.c.l.b16 %v165
  %v550 = vunpack.c.l.b16 %v166
  %v551 = vunpack.c.l.b16 %v167
  %v552 = vunpack.c.l.b16 %v168
  %v553 = vunpack.c.l.b16 %v169
  %v554 = vunpack.c.l.b16 %v170
  %v555 = vunpack.c.l.b16 %v171
  %v556 = vunpack.c.l.b16 %v172
  %v557 = vunpack.c.l.b16 %v173
  %v558 = vunpack.c.l.b16 %v174
  %v559 = vunpack.c.l.b16 %v175
  %v560 = vunpack.c.l.b16 %v176
  %v561 = vunpack.c.l.b16 %v177
  %v562 = vpack.c.b16 %v419, %v418
  %v563 = vpack.c.b16 %v421, %v420
  %v564 = vpack.c.b16 %v423, %v422
  %v565 = vpack.c.b16 %v425, %v424
  %v566 = vpack.c.b16 %v427, %v426
  %v567 = vpack.c.b16 %v429, %v428
  %v568 = vpack.c.b16 %v431, %v430
  %v569 = vpack.c.b16 %v433, %v432
  %v570 = vpack.c.b16 %v435, %v434
  %v571 = vpack.c.b16 %v437, %v436
  %v572 = vpack.c.b16 %v439, %v438
  %v573 = vpack.c.b16 %v441, %v440
  %v574 = vpack.c.b16 %v443, %v442
  %v575 = vpack.c.b16 %v445, %v444
  %v576 = vpack.c.b16 %v447, %v446
  %v577 = vpack.c.b16 %v449, %v448
  %v578 = vpack.c.b16 %v451, %v450
  %v579 = vpack.c.b16 %v453, %v452
  %v580 = vpack.c.b16 %v455, %v454
  %v581 = vpack.c.b16 %v457, %v456
  %v582 = vpack.c.b16 %v459, %v458
  %v583 = vpack.c.b16 %v461, %v460
  %v584 = vpack.c.b16 %v463, %v462
  %v585 = vpack.c.b16 %v465, %v464
  %v586 = vpack.c.b16 %v467, %v466
  %v587 = vpack.c.b16 %v469, %v468
  %v588 = vpack.c.b16 %v471, %v470
  %v589 = vpack.c.b16 %v473, %v472
  %v590 = vpack.c.b16 %v475, %v474
  %v591 = vpack.c.b16 %v477, %v476
  %v592 = vpack.c.b16 %v479, %v478
  %v593 = vpack.c.b16 %v481, %v480
  %v594 = vpack.c.b16 %v483, %v482
  %v595 = vpack.c.b16 %v485, %v484
  %v596 = vpack.c.b16 %v487, %v486
  %v597 = vpack.c.b16 %v489, %v488
  %v598 = vpack.c.b16 %v491, %v490
  %v599 = vpack.c.b16 %v493, %v492
  %v600 = vpack.c.b16 %v495, %v494
  %v601 = vpack.c.b16 %v497, %v496
  %v602 = vpack.c.b16 %v499, %v498
  %v603 = vpack.c.b16 %v501, %v500
  %v604 = vpack.c.b16 %v503, %v502
  %v605 = vpack.c.b16 %v505, %v504
  %v606 = vpack.c.b16 %v507, %v506
  %v607 = vpack.c.b16 %v509, %v508
  %v608 = vpack.c.b16 %v511, %v510
  %v609 = vpack.c.b16 %v513, %v512
  %v610 = vpack.c.b16 %v515, %v514
  %v611 = vpack.c.b16 %v517, %v516
  %v612 = vpack.c.b16 %v519, %v518
  %v613 = vpack.c.b16 %v521, %v520
  %v614 = vpack.c.b16 %v523, %v522
  %v615 = vpack.c.b16 %v525, %v524
  %v616 = vpack.c.b16 %v527, %v526
  %v617 = vpack.c.b16 %v529, %v528
  %v618 = vpack.c.b16 %v531, %v530
  %v619 = vpack.c.b16 %v533, %v532
  %v620 = vpack.c.b16 %v535, %v534
  %v621 = vpack.c.b16 %v537, %v536
  %v622 = vpack.c.b16 %v539, %v538
  %v623 = vpack.c.b16 %v541, %v540
  %v624 = vpack.c.b16 %v543, %v542
  %v625 = vpack.c.b16 %v545, %v544
  %v626 = vpack.c.b16 %v547, %v546
  %v627 = vpack.c.b16 %v549, %v548
  %v628 = vpack.c.b16 %v551, %v550
  %v629 = vpack.c.b16 %v553, %v552
  %v630 = vpack.c.b16 %v555, %v554
  %v631 = vpack.c.b16 %v557, %v556
  %v632 = vpack.c.b16 %v559, %v558
  %v633 = vpack.c.b16 %v561, %v560
  %706 = vmatpush.bf16.msra.mxu0 %v569
  %707 = vmatpush.bf16.msra.mxu0 %v568
  %708 = vmatpush.bf16.msra.mxu0 %v567
  %709 = vmatpush.bf16.msra.mxu0 %v566
  %710 = vmatpush.bf16.msra.mxu0 %v565
  %711 = vmatpush.bf16.msra.mxu0 %v564
  %712 = vmatpush.bf16.msra.mxu0 %v563
  %713 = vmatpush.bf16.msra.mxu0 %v562
  %714 = vmatmul.bf16.gmra.mxu0 %v238
  %v715 = vpop.f32.mrf.mxu0
  %v716 = vadd.f32 %v180, %v715
  %v717 = vpop.f32.mrf.mxu0
  %v718 = vadd.f32 %v180, %v717
  %719 = vmatmul.bf16.gmra.mxu0 %v247
  %v720 = vpop.f32.mrf.mxu0
  %v721 = vadd.f32 %v180, %v720
  %v722 = vpop.f32.mrf.mxu0
  %v723 = vadd.f32 %v180, %v722
  %724 = vdwg.mxu0
  %725 = vmatpush.bf16.msra.mxu0 %v577
  %726 = vmatpush.bf16.msra.mxu0 %v576
  %727 = vmatpush.bf16.msra.mxu0 %v575
  %728 = vmatpush.bf16.msra.mxu0 %v574
  %729 = vmatpush.bf16.msra.mxu0 %v573
  %730 = vmatpush.bf16.msra.mxu0 %v572
  %731 = vmatpush.bf16.msra.mxu0 %v571
  %732 = vmatpush.bf16.msra.mxu0 %v570
  %733 = vmatmul.bf16.gmra.mxu0 %v239
  %v734 = vpop.f32.mrf.mxu0
  %v735 = vadd.f32 %v716, %v734
  %v736 = vpop.f32.mrf.mxu0
  %v737 = vadd.f32 %v718, %v736
  %738 = vmatmul.bf16.gmra.mxu0 %v248
  %v739 = vpop.f32.mrf.mxu0
  %v740 = vadd.f32 %v721, %v739
  %v741 = vpop.f32.mrf.mxu0
  %v742 = vadd.f32 %v723, %v741
  %743 = vdwg.mxu0
  %744 = vmatpush.bf16.msra.mxu0 %v585
  %745 = vmatpush.bf16.msra.mxu0 %v584
  %746 = vmatpush.bf16.msra.mxu0 %v583
  %747 = vmatpush.bf16.msra.mxu0 %v582
  %748 = vmatpush.bf16.msra.mxu0 %v581
  %749 = vmatpush.bf16.msra.mxu0 %v580
  %750 = vmatpush.bf16.msra.mxu0 %v579
  %751 = vmatpush.bf16.msra.mxu0 %v578
  %752 = vmatmul.bf16.gmra.mxu0 %v240
  %v753 = vpop.f32.mrf.mxu0
  %v754 = vadd.f32 %v735, %v753
  %v755 = vpop.f32.mrf.mxu0
  %v756 = vadd.f32 %v737, %v755
  %757 = vmatmul.bf16.gmra.mxu0 %v249
  %v758 = vpop.f32.mrf.mxu0
  %v759 = vadd.f32 %v740, %v758
  %v760 = vpop.f32.mrf.mxu0
  %v761 = vadd.f32 %v742, %v760
  %762 = vdwg.mxu0
  %763 = vmatpush.bf16.msra.mxu0 %v593
  %764 = vmatpush.bf16.msra.mxu0 %v592
  %765 = vmatpush.bf16.msra.mxu0 %v591
  %766 = vmatpush.bf16.msra.mxu0 %v590
  %767 = vmatpush.bf16.msra.mxu0 %v589
  %768 = vmatpush.bf16.msra.mxu0 %v588
  %769 = vmatpush.bf16.msra.mxu0 %v587
  %770 = vmatpush.bf16.msra.mxu0 %v586
  %771 = vmatmul.bf16.gmra.mxu0 %v241
  %v772 = vpop.f32.mrf.mxu0
  %v773 = vadd.f32 %v754, %v772
  %v774 = vpop.f32.mrf.mxu0
  %v775 = vadd.f32 %v756, %v774
  %776 = vmatmul.bf16.gmra.mxu0 %v250
  %v777 = vpop.f32.mrf.mxu0
  %v778 = vadd.f32 %v759, %v777
  %v779 = vpop.f32.mrf.mxu0
  %v780 = vadd.f32 %v761, %v779
  %781 = vdwg.mxu0
  %782 = vmatpush.bf16.msra.mxu0 %v601
  %783 = vmatpush.bf16.msra.mxu0 %v600
  %784 = vmatpush.bf16.msra.mxu0 %v599
  %785 = vmatpush.bf16.msra.mxu0 %v598
  %786 = vmatpush.bf16.msra.mxu0 %v597
  %787 = vmatpush.bf16.msra.mxu0 %v596
  %788 = vmatpush.bf16.msra.mxu0 %v595
  %789 = vmatpush.bf16.msra.mxu0 %v594
  %790 = vmatmul.bf16.gmra.mxu0 %v242
  %v791 = vpop.f32.mrf.mxu0
  %v792 = vadd.f32 %v773, %v791
  %v793 = vpop.f32.mrf.mxu0
  %v794 = vadd.f32 %v775, %v793
  %795 = vmatmul.bf16.gmra.mxu0 %v251
  %v796 = vpop.f32.mrf.mxu0
  %v797 = vadd.f32 %v778, %v796
  %v798 = vpop.f32.mrf.mxu0
  %v799 = vadd.f32 %v780, %v798
  %800 = vdwg.mxu0
  %801 = vmatpush.bf16.msra.mxu0 %v609
  %802 = vmatpush.bf16.msra.mxu0 %v608
  %803 = vmatpush.bf16.msra.mxu0 %v607
  %804 = vmatpush.bf16.msra.mxu0 %v606
  %805 = vmatpush.bf16.msra.mxu0 %v605
  %806 = vmatpush.bf16.msra.mxu0 %v604
  %807 = vmatpush.bf16.msra.mxu0 %v603
  %808 = vmatpush.bf16.msra.mxu0 %v602
  %809 = vmatmul.bf16.gmra.mxu0 %v243
  %v810 = vpop.f32.mrf.mxu0
  %v811 = vadd.f32 %v792, %v810
  %v812 = vpop.f32.mrf.mxu0
  %v813 = vadd.f32 %v794, %v812
  %814 = vmatmul.bf16.gmra.mxu0 %v252
  %v815 = vpop.f32.mrf.mxu0
  %v816 = vadd.f32 %v797, %v815
  %v817 = vpop.f32.mrf.mxu0
  %v818 = vadd.f32 %v799, %v817
  %819 = vdwg.mxu0
  %820 = vmatpush.bf16.msra.mxu0 %v617
  %821 = vmatpush.bf16.msra.mxu0 %v616
  %822 = vmatpush.bf16.msra.mxu0 %v615
  %823 = vmatpush.bf16.msra.mxu0 %v614
  %824 = vmatpush.bf16.msra.mxu0 %v613
  %825 = vmatpush.bf16.msra.mxu0 %v612
  %826 = vmatpush.bf16.msra.mxu0 %v611
  %827 = vmatpush.bf16.msra.mxu0 %v610
  %828 = vmatmul.bf16.gmra.mxu0 %v244
  %v829 = vpop.f32.mrf.mxu0
  %v830 = vadd.f32 %v811, %v829
  %v831 = vpop.f32.mrf.mxu0
  %v832 = vadd.f32 %v813, %v831
  %833 = vmatmul.bf16.gmra.mxu0 %v253
  %v834 = vpop.f32.mrf.mxu0
  %v835 = vadd.f32 %v816, %v834
  %v836 = vpop.f32.mrf.mxu0
  %v837 = vadd.f32 %v818, %v836
  %838 = vdwg.mxu0
  %839 = vmatpush.bf16.msra.mxu0 %v625
  %840 = vmatpush.bf16.msra.mxu0 %v624
  %841 = vmatpush.bf16.msra.mxu0 %v623
  %842 = vmatpush.bf16.msra.mxu0 %v622
  %843 = vmatpush.bf16.msra.mxu0 %v621
  %844 = vmatpush.bf16.msra.mxu0 %v620
  %845 = vmatpush.bf16.msra.mxu0 %v619
  %846 = vmatpush.bf16.msra.mxu0 %v618
  %847 = vmatmul.bf16.gmra.mxu0 %v245
  %v848 = vpop.f32.mrf.mxu0
  %v849 = vadd.f32 %v830, %v848
  %v850 = vpop.f32.mrf.mxu0
  %v851 = vadd.f32 %v832, %v850
  %852 = vmatmul.bf16.gmra.mxu0 %v254
  %v853 = vpop.f32.mrf.mxu0
  %v854 = vadd.f32 %v835, %v853
  %v855 = vpop.f32.mrf.mxu0
  %v856 = vadd.f32 %v837, %v855
  %857 = vdwg.mxu0
  %858 = vmatpush.bf16.msra.mxu0 %v633
  %859 = vmatpush.bf16.msra.mxu0 %v632
  %860 = vmatpush.bf16.msra.mxu0 %v631
  %861 = vmatpush.bf16.msra.mxu0 %v630
  %862 = vmatpush.bf16.msra.mxu0 %v629
  %863 = vmatpush.bf16.msra.mxu0 %v628
  %864 = vmatpush.bf16.msra.mxu0 %v627
  %865 = vmatpush.bf16.msra.mxu0 %v626
  %866 = vmatmul.bf16.gmra.mxu0 %v246
  %v867 = vpop.f32.mrf.mxu0
  %v868 = vadd.f32 %v849, %v867
  %v869 = vpop.f32.mrf.mxu0
  %v870 = vadd.f32 %v851, %v869
  %871 = vmatmul.bf16.gmra.mxu0 %v255
  %v872 = vpop.f32.mrf.mxu0
  %v873 = vadd.f32 %v854, %v872
  %v874 = vpop.f32.mrf.mxu0
  %v875 = vadd.f32 %v856, %v874
  %876 = vdwg.mxu0
  %v877 = vmax.f32 %v868, 0.0
  %v878 = vmax.f32 %v870, 0.0
  %v879 = vmax.f32 %v873, 0.0
  %v880 = vmax.f32 %v875, 0.0
  %v881 = vpack.c.bf16 %v877, %v877
  %v882 = vpack.c.bf16 %v878, %v878
  %v883 = vpack.c.bf16 %v879, %v879
  %v884 = vpack.c.bf16 %v880, %v880
  %885 = vst [vmem:[%s3] sm:$0xf] %v881
  %886 = vst [vmem:[%s3 + $0x4] sm:$0xf] %v882
  %887 = vst [vmem:[%s3 + $0x8] sm:$0xf] %v883
  %888 = vst [vmem:[%s3 + $0xc] sm:$0xf] %v884
  // Predicated region
  $region14: #{dqn_forward.6} parent=0 // pred_check
    _
  $region15: #{dqn_forward.6} parent=0 // pred_check_branch
    %890 = sbr.rel (0) target = $region17
  $region16: #{dqn_forward.6} parent=0 // pred_region
    _
  $region17: #{dqn_forward.6} parent=0 // pred_fallthru
    _
  // Predicated region
  $region18: #{dqn_forward.6} parent=0 // pred_check
    _
  $region19: #{dqn_forward.6} parent=0 // pred_check_branch
    %892 = sbr.rel (0) target = $region21
  $region20: #{dqn_forward.6} parent=0 // pred_region
    _
  $region21: #{dqn_forward.6} parent=0 // pred_fallthru
    _

// kernel: dqn_forward.7
$region0: #{dqn_forward.7}
  #allocation0 [shape = 'u32[]', space=smem, size = 0x4, offset = 0x4, fixed_abs, tag = 'smem constant byte address 0x4 - core index']
  #allocation1 [shape = 'u32[72,128]{1,0:T(1,128)}', space=vmem, size = 0x9000, scoped, tag = 'internal scratch']
  %s0 = inlined_call_operand.vmem [shape: bf16[8,4608], index: 0, kind: input, shape index: {}]
  %s1 = inlined_call_operand.vmem [shape: bf16[1152,256], index: 1, kind: input, shape index: {}]
  %s2 = inlined_call_operand.vmem [shape: f32[1,256], index: 2, kind: input, shape index: {}]
  %s3 = inlined_call_operand.vmem [shape: bf16[1024,512], index: 3, kind: input, shape index: {}]
  %s4 = inlined_call_operand.vmem [shape: f32[1,512], index: 4, kind: input, shape index: {}]
  %s5 = inlined_call_operand.vmem [shape: bf16[512,256], index: 5, kind: input, shape index: {}]
  %s6 = inlined_call_operand.vmem [shape: f32[1,256], index: 6, kind: input, shape index: {}]
  %s7 = inlined_call_operand.vmem [shape: bf16[256,6], index: 7, kind: input, shape index: {}]
  %s8 = inlined_call_operand.vmem [shape: f32[1,6], index: 8, kind: input, shape index: {}]
  %s9 = inlined_call_operand.vmem [shape: f32[8,6], index: 9, kind: output, shape index: {}]
  %s10 = sld [smem:[#allocation0]]
  $region46: #{dqn_forward.7} parent=0
    _
  %s12 = ssub.s32 1, %s10
  %s13 = scalar_select 0, %s12, %s10
  // Predicated region
  $region2: #{dqn_forward.7} parent=0 // pred_check
    _
  $region3: #{dqn_forward.7} parent=0 // pred_check_branch
    %15 = sbr.rel (0) target = $region5
  $region4: #{dqn_forward.7} parent=0 // pred_region
    _
  $region5: #{dqn_forward.7} parent=0 // pred_fallthru
    _
  // Predicated region
  $region6: #{dqn_forward.7} parent=0 // pred_check
    _
  $region7: #{dqn_forward.7} parent=0 // pred_check_branch
    %17 = sbr.rel (0) target = $region9
  $region8: #{dqn_forward.7} parent=0 // pred_region
    _
  $region9: #{dqn_forward.7} parent=0 // pred_fallthru
    _
  // Predicated region
  $region10: #{dqn_forward.7} parent=0 // pred_check
    _
  $region11: #{dqn_forward.7} parent=0 // pred_check_branch
    %19 = sbr.rel (0) target = $region13
  $region12: #{dqn_forward.7} parent=0 // pred_region
    _
  $region13: #{dqn_forward.7} parent=0 // pred_fallthru
    _
  // Predicated region
  $region14: #{dqn_forward.7} parent=0 // pred_check
    _
  $region15: #{dqn_forward.7} parent=0 // pred_check_branch
    %21 = sbr.rel (0) target = $region17
  $region16: #{dqn_forward.7} parent=0 // pred_region
    _
  $region17: #{dqn_forward.7} parent=0 // pred_fallthru
    _
  // Predicated region
  $region18: #{dqn_forward.7} parent=0 // pred_check
    _
  $region19: #{dqn_forward.7} parent=0 // pred_check_branch
    %23 = sbr.rel (0) target = $region21
  $region20: #{dqn_forward.7} parent=0 // pred_region
    _
  $region21: #{dqn_forward.7} parent=0 // pred_fallthru
    _
  // Predicated region
  $region22: #{dqn_forward.7} parent=0 // pred_check
    _
  $region23: #{dqn_forward.7} parent=0 // pred_check_branch
    %25 = sbr.rel (0) target = $region25
  $region24: #{dqn_forward.7} parent=0 // pred_region
    _
  $region25: #{dqn_forward.7} parent=0 // pred_fallthru
    _
  // Predicated region
  $region26: #{dqn_forward.7} parent=0 // pred_check
    _
  $region27: #{dqn_forward.7} parent=0 // pred_check_branch
    %27 = sbr.rel (0) target = $region29
  $region28: #{dqn_forward.7} parent=0 // pred_region
    _
  $region29: #{dqn_forward.7} parent=0 // pred_fallthru
    _
  // Predicated region
  $region30: #{dqn_forward.7} parent=0 // pred_check
    _
  $region31: #{dqn_forward.7} parent=0 // pred_check_branch
    %29 = sbr.rel (0) target = $region33
  $region32: #{dqn_forward.7} parent=0 // pred_region
    _
  $region33: #{dqn_forward.7} parent=0 // pred_fallthru
    _
  // Predicated region
  $region34: #{dqn_forward.7} parent=0 // pred_check
    _
  $region35: #{dqn_forward.7} parent=0 // pred_check_branch
    %31 = sbr.rel (0) target = $region37
  $region36: #{dqn_forward.7} parent=0 // pred_region
    _
  $region37: #{dqn_forward.7} parent=0 // pred_fallthru
    _
  %v32 = vld [vmem:[%s0] sm:$0xff]
  %v33 = vld [vmem:[%s0 + $0x8] sm:$0xff]
  %v34 = vld [vmem:[%s0 + $0x10] sm:$0xff]
  %v35 = vld [vmem:[%s0 + $0x18] sm:$0xff]
  %v36 = vld [vmem:[%s0 + $0x20] sm:$0xf]
  %v37 = vld [vmem:[%s1] sm:$0xff]
  %v38 = vld [vmem:[%s1 + $0x8] sm:$0xff]
  %v39 = vld [vmem:[%s1 + $0x10] sm:$0xff]
  %v40 = vld [vmem:[%s1 + $0x18] sm:$0xff]
  %v41 = vld [vmem:[%s1 + $0x20] sm:$0xff]
  %v42 = vld [vmem:[%s1 + $0x28] sm:$0xff]
  %v43 = vld [vmem:[%s1 + $0x30] sm:$0xff]
  %v44 = vld [vmem:[%s1 + $0x38] sm:$0xff]
  %v45 = vld [vmem:[%s1 + $0x40] sm:$0xff]
  %v46 = vld [vmem:[%s1 + $0x48] sm:$0xff]
  %v47 = vld [vmem:[%s1 + $0x50] sm:$0xff]
  %v48 = vld [vmem:[%s1 + $0x58] sm:$0xff]
  %v49 = vld [vmem:[%s1 + $0x60] sm:$0xff]
  %v50 = vld [vmem:[%s1 + $0x68] sm:$0xff]
  %v51 = vld [vmem:[%s1 + $0x70] sm:$0xff]
  %v52 = vld [vmem:[%s1 + $0x78] sm:$0xff]
  %v53 = vld [vmem:[%s1 + $0x80] sm:$0xff]
  %v54 = vld [vmem:[%s1 + $0x88] sm:$0xff]
  %v55 = vld [vmem:[%s1 + $0x90] sm:$0xff]
  %v56 = vld [vmem:[%s1 + $0x98] sm:$0xff]
  %v57 = vld [vmem:[%s1 + $0xa0] sm:$0xff]
  %v58 = vld [vmem:[%s1 + $0xa8] sm:$0xff]
  %v59 = vld [vmem:[%s1 + $0xb0] sm:$0xff]
  %v60 = vld [vmem:[%s1 + $0xb8] sm:$0xff]
  %v61 = vld [vmem:[%s1 + $0xc0] sm:$0xff]
  %v62 = vld [vmem:[%s1 + $0xc8] sm:$0xff]
  %v63 = vld [vmem:[%s1 + $0xd0] sm:$0xff]
  %v64 = vld [vmem:[%s1 + $0xd8] sm:$0xff]
  %v65 = vld [vmem:[%s1 + $0xe0] sm:$0xff]
  %v66 = vld [vmem:[%s1 + $0xe8] sm:$0xff]
  %v67 = vld [vmem:[%s1 + $0xf0] sm:$0xff]
  %v68 = vld [vmem:[%s1 + $0xf8] sm:$0xff]
  %v69 = vld [vmem:[%s1 + $0x100] sm:$0xff]
  %v70 = vld [vmem:[%s1 + $0x108] sm:$0xff]
  %v71 = vld [vmem:[%s1 + $0x110] sm:$0xff]
  %v72 = vld [vmem:[%s1 + $0x118] sm:$0xff]
  %v73 = vld [vmem:[%s1 + $0x120] sm:$0xff]
  %v74 = vld [vmem:[%s1 + $0x128] sm:$0xff]
  %v75 = vld [vmem:[%s1 + $0x130] sm:$0xff]
  %v76 = vld [vmem:[%s1 + $0x138] sm:$0xff]
  %v77 = vld [vmem:[%s1 + $0x140] sm:$0xff]
  %v78 = vld [vmem:[%s1 + $0x148] sm:$0xff]
  %v79 = vld [vmem:[%s1 + $0x150] sm:$0xff]
  %v80 = vld [vmem:[%s1 + $0x158] sm:$0xff]
  %v81 = vld [vmem:[%s1 + $0x160] sm:$0xff]
  %v82 = vld [vmem:[%s1 + $0x168] sm:$0xff]
  %v83 = vld [vmem:[%s1 + $0x170] sm:$0xff]
  %v84 = vld [vmem:[%s1 + $0x178] sm:$0xff]
  %v85 = vld [vmem:[%s1 + $0x180] sm:$0xff]
  %v86 = vld [vmem:[%s1 + $0x188] sm:$0xff]
  %v87 = vld [vmem:[%s1 + $0x190] sm:$0xff]
  %v88 = vld [vmem:[%s1 + $0x198] sm:$0xff]
  %v89 = vld [vmem:[%s1 + $0x1a0] sm:$0xff]
  %v90 = vld [vmem:[%s1 + $0x1a8] sm:$0xff]
  %v91 = vld [vmem:[%s1 + $0x1b0] sm:$0xff]
  %v92 = vld [vmem:[%s1 + $0x1b8] sm:$0xff]
  %v93 = vld [vmem:[%s1 + $0x1c0] sm:$0xff]
  %v94 = vld [vmem:[%s1 + $0x1c8] sm:$0xff]
  %v95 = vld [vmem:[%s1 + $0x1d0] sm:$0xff]
  %v96 = vld [vmem:[%s1 + $0x1d8] sm:$0xff]
  %v97 = vld [vmem:[%s1 + $0x1e0] sm:$0xff]
  %v98 = vld [vmem:[%s1 + $0x1e8] sm:$0xff]
  %v99 = vld [vmem:[%s1 + $0x1f0] sm:$0xff]
  %v100 = vld [vmem:[%s1 + $0x1f8] sm:$0xff]
  %v101 = vld [vmem:[%s1 + $0x200] sm:$0xff]
  %v102 = vld [vmem:[%s1 + $0x208] sm:$0xff]
  %v103 = vld [vmem:[%s1 + $0x210] sm:$0xff]
  %v104 = vld [vmem:[%s1 + $0x218] sm:$0xff]
  %v105 = vld [vmem:[%s1 + $0x220] sm:$0xff]
  %v106 = vld [vmem:[%s1 + $0x228] sm:$0xff]
  %v107 = vld [vmem:[%s1 + $0x230] sm:$0xff]
  %v108 = vld [vmem:[%s1 + $0x238] sm:$0xff]
  %v109 = vld [vmem:[%s1 + $0x240] sm:$0xff]
  %v110 = vld [vmem:[%s1 + $0x248] sm:$0xff]
  %v111 = vld [vmem:[%s1 + $0x250] sm:$0xff]
  %v112 = vld [vmem:[%s1 + $0x258] sm:$0xff]
  %v113 = vld [vmem:[%s1 + $0x260] sm:$0xff]
  %v114 = vld [vmem:[%s1 + $0x268] sm:$0xff]
  %v115 = vld [vmem:[%s1 + $0x270] sm:$0xff]
  %v116 = vld [vmem:[%s1 + $0x278] sm:$0xff]
  %v117 = vld [vmem:[%s1 + $0x280] sm:$0xff]
  %v118 = vld [vmem:[%s1 + $0x288] sm:$0xff]
  %v119 = vld [vmem:[%s1 + $0x290] sm:$0xff]
  %v120 = vld [vmem:[%s1 + $0x298] sm:$0xff]
  %v121 = vld [vmem:[%s1 + $0x2a0] sm:$0xff]
  %v122 = vld [vmem:[%s1 + $0x2a8] sm:$0xff]
  %v123 = vld [vmem:[%s1 + $0x2b0] sm:$0xff]
  %v124 = vld [vmem:[%s1 + $0x2b8] sm:$0xff]
  %v125 = vld [vmem:[%s1 + $0x2c0] sm:$0xff]
  %v126 = vld [vmem:[%s1 + $0x2c8] sm:$0xff]
  %v127 = vld [vmem:[%s1 + $0x2d0] sm:$0xff]
  %v128 = vld [vmem:[%s1 + $0x2d8] sm:$0xff]
  %v129 = vld [vmem:[%s1 + $0x2e0] sm:$0xff]
  %v130 = vld [vmem:[%s1 + $0x2e8] sm:$0xff]
  %v131 = vld [vmem:[%s1 + $0x2f0] sm:$0xff]
  %v132 = vld [vmem:[%s1 + $0x2f8] sm:$0xff]
  %v133 = vld [vmem:[%s1 + $0x300] sm:$0xff]
  %v134 = vld [vmem:[%s1 + $0x308] sm:$0xff]
  %v135 = vld [vmem:[%s1 + $0x310] sm:$0xff]
  %v136 = vld [vmem:[%s1 + $0x318] sm:$0xff]
  %v137 = vld [vmem:[%s1 + $0x320] sm:$0xff]
  %v138 = vld [vmem:[%s1 + $0x328] sm:$0xff]
  %v139 = vld [vmem:[%s1 + $0x330] sm:$0xff]
  %v140 = vld [vmem:[%s1 + $0x338] sm:$0xff]
  %v141 = vld [vmem:[%s1 + $0x340] sm:$0xff]
  %v142 = vld [vmem:[%s1 + $0x348] sm:$0xff]
  %v143 = vld [vmem:[%s1 + $0x350] sm:$0xff]
  %v144 = vld [vmem:[%s1 + $0x358] sm:$0xff]
  %v145 = vld [vmem:[%s1 + $0x360] sm:$0xff]
  %v146 = vld [vmem:[%s1 + $0x368] sm:$0xff]
  %v147 = vld [vmem:[%s1 + $0x370] sm:$0xff]
  %v148 = vld [vmem:[%s1 + $0x378] sm:$0xff]
  %v149 = vld [vmem:[%s1 + $0x380] sm:$0xff]
  %v150 = vld [vmem:[%s1 + $0x388] sm:$0xff]
  %v151 = vld [vmem:[%s1 + $0x390] sm:$0xff]
  %v152 = vld [vmem:[%s1 + $0x398] sm:$0xff]
  %v153 = vld [vmem:[%s1 + $0x3a0] sm:$0xff]
  %v154 = vld [vmem:[%s1 + $0x3a8] sm:$0xff]
  %v155 = vld [vmem:[%s1 + $0x3b0] sm:$0xff]
  %v156 = vld [vmem:[%s1 + $0x3b8] sm:$0xff]
  %v157 = vld [vmem:[%s1 + $0x3c0] sm:$0xff]
  %v158 = vld [vmem:[%s1 + $0x3c8] sm:$0xff]
  %v159 = vld [vmem:[%s1 + $0x3d0] sm:$0xff]
  %v160 = vld [vmem:[%s1 + $0x3d8] sm:$0xff]
  %v161 = vld [vmem:[%s1 + $0x3e0] sm:$0xff]
  %v162 = vld [vmem:[%s1 + $0x3e8] sm:$0xff]
  %v163 = vld [vmem:[%s1 + $0x3f0] sm:$0xff]
  %v164 = vld [vmem:[%s1 + $0x3f8] sm:$0xff]
  %v165 = vld [vmem:[%s1 + $0x400] sm:$0xff]
  %v166 = vld [vmem:[%s1 + $0x408] sm:$0xff]
  %v167 = vld [vmem:[%s1 + $0x410] sm:$0xff]
  %v168 = vld [vmem:[%s1 + $0x418] sm:$0xff]
  %v169 = vld [vmem:[%s1 + $0x420] sm:$0xff]
  %v170 = vld [vmem:[%s1 + $0x428] sm:$0xff]
  %v171 = vld [vmem:[%s1 + $0x430] sm:$0xff]
  %v172 = vld [vmem:[%s1 + $0x438] sm:$0xff]
  %v173 = vld [vmem:[%s1 + $0x440] sm:$0xff]
  %v174 = vld [vmem:[%s1 + $0x448] sm:$0xff]
  %v175 = vld [vmem:[%s1 + $0x450] sm:$0xff]
  %v176 = vld [vmem:[%s1 + $0x458] sm:$0xff]
  %v177 = vld [vmem:[%s1 + $0x460] sm:$0xff]
  %v178 = vld [vmem:[%s1 + $0x468] sm:$0xff]
  %v179 = vld [vmem:[%s1 + $0x470] sm:$0xff]
  %v180 = vld [vmem:[%s1 + $0x478] sm:$0xff]
  %v181 = vld [vmem:[%s2] sm:$0x3]
  %v183 = vperm.slane %v181, 0
  %v184 = vperm.slane %v181, 1
  %v192 = vunpack.c.l.b16 %v32
  %v193 = vunpack.c.h.b16 %v32
  %v194 = vunpack.c.l.b16 %v33
  %v195 = vunpack.c.h.b16 %v33
  %v196 = vunpack.c.l.b16 %v34
  %v197 = vunpack.c.h.b16 %v34
  %v198 = vunpack.c.l.b16 %v35
  %v199 = vunpack.c.h.b16 %v35
  %v200 = vunpack.c.l.b16 %v36
  %v201 = vpack.c.b16 %v192, %v192
  %v202 = vpack.c.b16 %v193, %v193
  %v203 = vpack.c.b16 %v194, %v194
  %v204 = vpack.c.b16 %v195, %v195
  %v205 = vpack.c.b16 %v196, %v196
  %v206 = vpack.c.b16 %v197, %v197
  %v207 = vpack.c.b16 %v198, %v198
  %v208 = vpack.c.b16 %v199, %v199
  %v209 = vpack.c.b16 %v200, %v200
  %v363 = vunpack.c.l.b16 %v37
  %v364 = vunpack.c.h.b16 %v37
  %v365 = vunpack.c.l.b16 %v38
  %v366 = vunpack.c.h.b16 %v38
  %v367 = vunpack.c.l.b16 %v39
  %v368 = vunpack.c.h.b16 %v39
  %v369 = vunpack.c.l.b16 %v40
  %v370 = vunpack.c.h.b16 %v40
  %v371 = vunpack.c.l.b16 %v41
  %v372 = vunpack.c.h.b16 %v41
  %v373 = vunpack.c.l.b16 %v42
  %v374 = vunpack.c.h.b16 %v42
  %v375 = vunpack.c.l.b16 %v43
  %v376 = vunpack.c.h.b16 %v43
  %v377 = vunpack.c.l.b16 %v44
  %v378 = vunpack.c.h.b16 %v44
  %v379 = vunpack.c.l.b16 %v45
  %v380 = vunpack.c.h.b16 %v45
  %v381 = vunpack.c.l.b16 %v46
  %v382 = vunpack.c.h.b16 %v46
  %v383 = vunpack.c.l.b16 %v47
  %v384 = vunpack.c.h.b16 %v47
  %v385 = vunpack.c.l.b16 %v48
  %v386 = vunpack.c.h.b16 %v48
  %v387 = vunpack.c.l.b16 %v49
  %v388 = vunpack.c.h.b16 %v49
  %v389 = vunpack.c.l.b16 %v50
  %v390 = vunpack.c.h.b16 %v50
  %v391 = vunpack.c.l.b16 %v51
  %v392 = vunpack.c.h.b16 %v51
  %v393 = vunpack.c.l.b16 %v52
  %v394 = vunpack.c.h.b16 %v52
  %v395 = vunpack.c.l.b16 %v53
  %v396 = vunpack.c.h.b16 %v53
  %v397 = vunpack.c.l.b16 %v54
  %v398 = vunpack.c.h.b16 %v54
  %v399 = vunpack.c.l.b16 %v55
  %v400 = vunpack.c.h.b16 %v55
  %v401 = vunpack.c.l.b16 %v56
  %v402 = vunpack.c.h.b16 %v56
  %v403 = vunpack.c.l.b16 %v57
  %v404 = vunpack.c.h.b16 %v57
  %v405 = vunpack.c.l.b16 %v58
  %v406 = vunpack.c.h.b16 %v58
  %v407 = vunpack.c.l.b16 %v59
  %v408 = vunpack.c.h.b16 %v59
  %v409 = vunpack.c.l.b16 %v60
  %v410 = vunpack.c.h.b16 %v60
  %v411 = vunpack.c.l.b16 %v61
  %v412 = vunpack.c.h.b16 %v61
  %v413 = vunpack.c.l.b16 %v62
  %v414 = vunpack.c.h.b16 %v62
  %v415 = vunpack.c.l.b16 %v63
  %v416 = vunpack.c.h.b16 %v63
  %v417 = vunpack.c.l.b16 %v64
  %v418 = vunpack.c.h.b16 %v64
  %v419 = vunpack.c.l.b16 %v65
  %v420 = vunpack.c.h.b16 %v65
  %v421 = vunpack.c.l.b16 %v66
  %v422 = vunpack.c.h.b16 %v66
  %v423 = vunpack.c.l.b16 %v67
  %v424 = vunpack.c.h.b16 %v67
  %v425 = vunpack.c.l.b16 %v68
  %v426 = vunpack.c.h.b16 %v68
  %v427 = vunpack.c.l.b16 %v69
  %v428 = vunpack.c.h.b16 %v69
  %v429 = vunpack.c.l.b16 %v70
  %v430 = vunpack.c.h.b16 %v70
  %v431 = vunpack.c.l.b16 %v71
  %v432 = vunpack.c.h.b16 %v71
  %v433 = vunpack.c.l.b16 %v72
  %v434 = vunpack.c.h.b16 %v72
  %v435 = vunpack.c.l.b16 %v73
  %v436 = vunpack.c.h.b16 %v73
  %v437 = vunpack.c.l.b16 %v74
  %v438 = vunpack.c.h.b16 %v74
  %v439 = vunpack.c.l.b16 %v75
  %v440 = vunpack.c.h.b16 %v75
  %v441 = vunpack.c.l.b16 %v76
  %v442 = vunpack.c.h.b16 %v76
  %v443 = vunpack.c.l.b16 %v77
  %v444 = vunpack.c.h.b16 %v77
  %v445 = vunpack.c.l.b16 %v78
  %v446 = vunpack.c.h.b16 %v78
  %v447 = vunpack.c.l.b16 %v79
  %v448 = vunpack.c.h.b16 %v79
  %v449 = vunpack.c.l.b16 %v80
  %v450 = vunpack.c.h.b16 %v80
  %v451 = vunpack.c.l.b16 %v81
  %v452 = vunpack.c.h.b16 %v81
  %v453 = vunpack.c.l.b16 %v82
  %v454 = vunpack.c.h.b16 %v82
  %v455 = vunpack.c.l.b16 %v83
  %v456 = vunpack.c.h.b16 %v83
  %v457 = vunpack.c.l.b16 %v84
  %v458 = vunpack.c.h.b16 %v84
  %v459 = vunpack.c.l.b16 %v85
  %v460 = vunpack.c.h.b16 %v85
  %v461 = vunpack.c.l.b16 %v86
  %v462 = vunpack.c.h.b16 %v86
  %v463 = vunpack.c.l.b16 %v87
  %v464 = vunpack.c.h.b16 %v87
  %v465 = vunpack.c.l.b16 %v88
  %v466 = vunpack.c.h.b16 %v88
  %v467 = vunpack.c.l.b16 %v89
  %v468 = vunpack.c.h.b16 %v89
  %v469 = vunpack.c.l.b16 %v90
  %v470 = vunpack.c.h.b16 %v90
  %v471 = vunpack.c.l.b16 %v91
  %v472 = vunpack.c.h.b16 %v91
  %v473 = vunpack.c.l.b16 %v92
  %v474 = vunpack.c.h.b16 %v92
  %v475 = vunpack.c.l.b16 %v93
  %v476 = vunpack.c.h.b16 %v93
  %v477 = vunpack.c.l.b16 %v94
  %v478 = vunpack.c.h.b16 %v94
  %v479 = vunpack.c.l.b16 %v95
  %v480 = vunpack.c.h.b16 %v95
  %v481 = vunpack.c.l.b16 %v96
  %v482 = vunpack.c.h.b16 %v96
  %v483 = vunpack.c.l.b16 %v97
  %v484 = vunpack.c.h.b16 %v97
  %v485 = vunpack.c.l.b16 %v98
  %v486 = vunpack.c.h.b16 %v98
  %v487 = vunpack.c.l.b16 %v99
  %v488 = vunpack.c.h.b16 %v99
  %v489 = vunpack.c.l.b16 %v100
  %v490 = vunpack.c.h.b16 %v100
  %v491 = vunpack.c.l.b16 %v101
  %v492 = vunpack.c.h.b16 %v101
  %v493 = vunpack.c.l.b16 %v102
  %v494 = vunpack.c.h.b16 %v102
  %v495 = vunpack.c.l.b16 %v103
  %v496 = vunpack.c.h.b16 %v103
  %v497 = vunpack.c.l.b16 %v104
  %v498 = vunpack.c.h.b16 %v104
  %v499 = vunpack.c.l.b16 %v105
  %v500 = vunpack.c.h.b16 %v105
  %v501 = vunpack.c.l.b16 %v106
  %v502 = vunpack.c.h.b16 %v106
  %v503 = vunpack.c.l.b16 %v107
  %v504 = vunpack.c.h.b16 %v107
  %v505 = vunpack.c.l.b16 %v108
  %v506 = vunpack.c.h.b16 %v108
  %v507 = vunpack.c.l.b16 %v109
  %v508 = vunpack.c.h.b16 %v109
  %v509 = vunpack.c.l.b16 %v110
  %v510 = vunpack.c.h.b16 %v110
  %v511 = vunpack.c.l.b16 %v111
  %v512 = vunpack.c.h.b16 %v111
  %v513 = vunpack.c.l.b16 %v112
  %v514 = vunpack.c.h.b16 %v112
  %v515 = vunpack.c.l.b16 %v113
  %v516 = vunpack.c.h.b16 %v113
  %v517 = vunpack.c.l.b16 %v114
  %v518 = vunpack.c.h.b16 %v114
  %v519 = vunpack.c.l.b16 %v115
  %v520 = vunpack.c.h.b16 %v115
  %v521 = vunpack.c.l.b16 %v116
  %v522 = vunpack.c.h.b16 %v116
  %v523 = vunpack.c.l.b16 %v117
  %v524 = vunpack.c.h.b16 %v117
  %v525 = vunpack.c.l.b16 %v118
  %v526 = vunpack.c.h.b16 %v118
  %v527 = vunpack.c.l.b16 %v119
  %v528 = vunpack.c.h.b16 %v119
  %v529 = vunpack.c.l.b16 %v120
  %v530 = vunpack.c.h.b16 %v120
  %v531 = vunpack.c.l.b16 %v121
  %v532 = vunpack.c.h.b16 %v121
  %v533 = vunpack.c.l.b16 %v122
  %v534 = vunpack.c.h.b16 %v122
  %v535 = vunpack.c.l.b16 %v123
  %v536 = vunpack.c.h.b16 %v123
  %v537 = vunpack.c.l.b16 %v124
  %v538 = vunpack.c.h.b16 %v124
  %v539 = vunpack.c.l.b16 %v125
  %v540 = vunpack.c.h.b16 %v125
  %v541 = vunpack.c.l.b16 %v126
  %v542 = vunpack.c.h.b16 %v126
  %v543 = vunpack.c.l.b16 %v127
  %v544 = vunpack.c.h.b16 %v127
  %v545 = vunpack.c.l.b16 %v128
  %v546 = vunpack.c.h.b16 %v128
  %v547 = vunpack.c.l.b16 %v129
  %v548 = vunpack.c.h.b16 %v129
  %v549 = vunpack.c.l.b16 %v130
  %v550 = vunpack.c.h.b16 %v130
  %v551 = vunpack.c.l.b16 %v131
  %v552 = vunpack.c.h.b16 %v131
  %v553 = vunpack.c.l.b16 %v132
  %v554 = vunpack.c.h.b16 %v132
  %v555 = vunpack.c.l.b16 %v133
  %v556 = vunpack.c.h.b16 %v133
  %v557 = vunpack.c.l.b16 %v134
  %v558 = vunpack.c.h.b16 %v134
  %v559 = vunpack.c.l.b16 %v135
  %v560 = vunpack.c.h.b16 %v135
  %v561 = vunpack.c.l.b16 %v136
  %v562 = vunpack.c.h.b16 %v136
  %v563 = vunpack.c.l.b16 %v137
  %v564 = vunpack.c.h.b16 %v137
  %v565 = vunpack.c.l.b16 %v138
  %v566 = vunpack.c.h.b16 %v138
  %v567 = vunpack.c.l.b16 %v139
  %v568 = vunpack.c.h.b16 %v139
  %v569 = vunpack.c.l.b16 %v140
  %v570 = vunpack.c.h.b16 %v140
  %v571 = vunpack.c.l.b16 %v141
  %v572 = vunpack.c.h.b16 %v141
  %v573 = vunpack.c.l.b16 %v142
  %v574 = vunpack.c.h.b16 %v142
  %v575 = vunpack.c.l.b16 %v143
  %v576 = vunpack.c.h.b16 %v143
  %v577 = vunpack.c.l.b16 %v144
  %v578 = vunpack.c.h.b16 %v144
  %v579 = vunpack.c.l.b16 %v145
  %v580 = vunpack.c.h.b16 %v145
  %v581 = vunpack.c.l.b16 %v146
  %v582 = vunpack.c.h.b16 %v146
  %v583 = vunpack.c.l.b16 %v147
  %v584 = vunpack.c.h.b16 %v147
  %v585 = vunpack.c.l.b16 %v148
  %v586 = vunpack.c.h.b16 %v148
  %v587 = vunpack.c.l.b16 %v149
  %v588 = vunpack.c.h.b16 %v149
  %v589 = vunpack.c.l.b16 %v150
  %v590 = vunpack.c.h.b16 %v150
  %v591 = vunpack.c.l.b16 %v151
  %v592 = vunpack.c.h.b16 %v151
  %v593 = vunpack.c.l.b16 %v152
  %v594 = vunpack.c.h.b16 %v152
  %v595 = vunpack.c.l.b16 %v153
  %v596 = vunpack.c.h.b16 %v153
  %v597 = vunpack.c.l.b16 %v154
  %v598 = vunpack.c.h.b16 %v154
  %v599 = vunpack.c.l.b16 %v155
  %v600 = vunpack.c.h.b16 %v155
  %v601 = vunpack.c.l.b16 %v156
  %v602 = vunpack.c.h.b16 %v156
  %v603 = vunpack.c.l.b16 %v157
  %v604 = vunpack.c.h.b16 %v157
  %v605 = vunpack.c.l.b16 %v158
  %v606 = vunpack.c.h.b16 %v158
  %v607 = vunpack.c.l.b16 %v159
  %v608 = vunpack.c.h.b16 %v159
  %v609 = vunpack.c.l.b16 %v160
  %v610 = vunpack.c.h.b16 %v160
  %v611 = vunpack.c.l.b16 %v161
  %v612 = vunpack.c.h.b16 %v161
  %v613 = vunpack.c.l.b16 %v162
  %v614 = vunpack.c.h.b16 %v162
  %v615 = vunpack.c.l.b16 %v163
  %v616 = vunpack.c.h.b16 %v163
  %v617 = vunpack.c.l.b16 %v164
  %v618 = vunpack.c.h.b16 %v164
  %v619 = vunpack.c.l.b16 %v165
  %v620 = vunpack.c.h.b16 %v165
  %v621 = vunpack.c.l.b16 %v166
  %v622 = vunpack.c.h.b16 %v166
  %v623 = vunpack.c.l.b16 %v167
  %v624 = vunpack.c.h.b16 %v167
  %v625 = vunpack.c.l.b16 %v168
  %v626 = vunpack.c.h.b16 %v168
  %v627 = vunpack.c.l.b16 %v169
  %v628 = vunpack.c.h.b16 %v169
  %v629 = vunpack.c.l.b16 %v170
  %v630 = vunpack.c.h.b16 %v170
  %v631 = vunpack.c.l.b16 %v171
  %v632 = vunpack.c.h.b16 %v171
  %v633 = vunpack.c.l.b16 %v172
  %v634 = vunpack.c.h.b16 %v172
  %v635 = vunpack.c.l.b16 %v173
  %v636 = vunpack.c.h.b16 %v173
  %v637 = vunpack.c.l.b16 %v174
  %v638 = vunpack.c.h.b16 %v174
  %v639 = vunpack.c.l.b16 %v175
  %v640 = vunpack.c.h.b16 %v175
  %v641 = vunpack.c.l.b16 %v176
  %v642 = vunpack.c.h.b16 %v176
  %v643 = vunpack.c.l.b16 %v177
  %v644 = vunpack.c.h.b16 %v177
  %v645 = vunpack.c.l.b16 %v178
  %v646 = vunpack.c.h.b16 %v178
  %v647 = vunpack.c.l.b16 %v179
  %v648 = vunpack.c.h.b16 %v179
  %v649 = vunpack.c.l.b16 %v180
  %v650 = vunpack.c.h.b16 %v180
  %v651 = vpack.c.b16 %v365, %v363
  %v652 = vpack.c.b16 %v366, %v364
  %v653 = vpack.c.b16 %v369, %v367
  %v654 = vpack.c.b16 %v370, %v368
  %v655 = vpack.c.b16 %v373, %v371
  %v656 = vpack.c.b16 %v374, %v372
  %v657 = vpack.c.b16 %v377, %v375
  %v658 = vpack.c.b16 %v378, %v376
  %v659 = vpack.c.b16 %v381, %v379
  %v660 = vpack.c.b16 %v382, %v380
  %v661 = vpack.c.b16 %v385, %v383
  %v662 = vpack.c.b16 %v386, %v384
  %v663 = vpack.c.b16 %v389, %v387
  %v664 = vpack.c.b16 %v390, %v388
  %v665 = vpack.c.b16 %v393, %v391
  %v666 = vpack.c.b16 %v394, %v392
  %v667 = vpack.c.b16 %v397, %v395
  %v668 = vpack.c.b16 %v398, %v396
  %v669 = vpack.c.b16 %v401, %v399
  %v670 = vpack.c.b16 %v402, %v400
  %v671 = vpack.c.b16 %v405, %v403
  %v672 = vpack.c.b16 %v406, %v404
  %v673 = vpack.c.b16 %v409, %v407
  %v674 = vpack.c.b16 %v410, %v408
  %v675 = vpack.c.b16 %v413, %v411
  %v676 = vpack.c.b16 %v414, %v412
  %v677 = vpack.c.b16 %v417, %v415
  %v678 = vpack.c.b16 %v418, %v416
  %v679 = vpack.c.b16 %v421, %v419
  %v680 = vpack.c.b16 %v422, %v420
  %v681 = vpack.c.b16 %v425, %v423
  %v682 = vpack.c.b16 %v426, %v424
  %v683 = vpack.c.b16 %v429, %v427
  %v684 = vpack.c.b16 %v430, %v428
  %v685 = vpack.c.b16 %v433, %v431
  %v686 = vpack.c.b16 %v434, %v432
  %v687 = vpack.c.b16 %v437, %v435
  %v688 = vpack.c.b16 %v438, %v436
  %v689 = vpack.c.b16 %v441, %v439
  %v690 = vpack.c.b16 %v442, %v440
  %v691 = vpack.c.b16 %v445, %v443
  %v692 = vpack.c.b16 %v446, %v444
  %v693 = vpack.c.b16 %v449, %v447
  %v694 = vpack.c.b16 %v450, %v448
  %v695 = vpack.c.b16 %v453, %v451
  %v696 = vpack.c.b16 %v454, %v452
  %v697 = vpack.c.b16 %v457, %v455
  %v698 = vpack.c.b16 %v458, %v456
  %v699 = vpack.c.b16 %v461, %v459
  %v700 = vpack.c.b16 %v462, %v460
  %v701 = vpack.c.b16 %v465, %v463
  %v702 = vpack.c.b16 %v466, %v464
  %v703 = vpack.c.b16 %v469, %v467
  %v704 = vpack.c.b16 %v470, %v468
  %v705 = vpack.c.b16 %v473, %v471
  %v706 = vpack.c.b16 %v474, %v472
  %v707 = vpack.c.b16 %v477, %v475
  %v708 = vpack.c.b16 %v478, %v476
  %v709 = vpack.c.b16 %v481, %v479
  %v710 = vpack.c.b16 %v482, %v480
  %v711 = vpack.c.b16 %v485, %v483
  %v712 = vpack.c.b16 %v486, %v484
  %v713 = vpack.c.b16 %v489, %v487
  %v714 = vpack.c.b16 %v490, %v488
  %v715 = vpack.c.b16 %v493, %v491
  %v716 = vpack.c.b16 %v494, %v492
  %v717 = vpack.c.b16 %v497, %v495
  %v718 = vpack.c.b16 %v498, %v496
  %v719 = vpack.c.b16 %v501, %v499
  %v720 = vpack.c.b16 %v502, %v500
  %v721 = vpack.c.b16 %v505, %v503
  %v722 = vpack.c.b16 %v506, %v504
  %v723 = vpack.c.b16 %v509, %v507
  %v724 = vpack.c.b16 %v510, %v508
  %v725 = vpack.c.b16 %v513, %v511
  %v726 = vpack.c.b16 %v514, %v512
  %v727 = vpack.c.b16 %v517, %v515
  %v728 = vpack.c.b16 %v518, %v516
  %v729 = vpack.c.b16 %v521, %v519
  %v730 = vpack.c.b16 %v522, %v520
  %v731 = vpack.c.b16 %v525, %v523
  %v732 = vpack.c.b16 %v526, %v524
  %v733 = vpack.c.b16 %v529, %v527
  %v734 = vpack.c.b16 %v530, %v528
  %v735 = vpack.c.b16 %v533, %v531
  %v736 = vpack.c.b16 %v534, %v532
  %v737 = vpack.c.b16 %v537, %v535
  %v738 = vpack.c.b16 %v538, %v536
  %v739 = vpack.c.b16 %v541, %v539
  %v740 = vpack.c.b16 %v542, %v540
  %v741 = vpack.c.b16 %v545, %v543
  %v742 = vpack.c.b16 %v546, %v544
  %v743 = vpack.c.b16 %v549, %v547
  %v744 = vpack.c.b16 %v550, %v548
  %v745 = vpack.c.b16 %v553, %v551
  %v746 = vpack.c.b16 %v554, %v552
  %v747 = vpack.c.b16 %v557, %v555
  %v748 = vpack.c.b16 %v558, %v556
  %v749 = vpack.c.b16 %v561, %v559
  %v750 = vpack.c.b16 %v562, %v560
  %v751 = vpack.c.b16 %v565, %v563
  %v752 = vpack.c.b16 %v566, %v564
  %v753 = vpack.c.b16 %v569, %v567
  %v754 = vpack.c.b16 %v570, %v568
  %v755 = vpack.c.b16 %v573, %v571
  %v756 = vpack.c.b16 %v574, %v572
  %v757 = vpack.c.b16 %v577, %v575
  %v758 = vpack.c.b16 %v578, %v576
  %v759 = vpack.c.b16 %v581, %v579
  %v760 = vpack.c.b16 %v582, %v580
  %v761 = vpack.c.b16 %v585, %v583
  %v762 = vpack.c.b16 %v586, %v584
  %v763 = vpack.c.b16 %v589, %v587
  %v764 = vpack.c.b16 %v590, %v588
  %v765 = vpack.c.b16 %v593, %v591
  %v766 = vpack.c.b16 %v594, %v592
  %v767 = vpack.c.b16 %v597, %v595
  %v768 = vpack.c.b16 %v598, %v596
  %v769 = vpack.c.b16 %v601, %v599
  %v770 = vpack.c.b16 %v602, %v600
  %v771 = vpack.c.b16 %v605, %v603
  %v772 = vpack.c.b16 %v606, %v604
  %v773 = vpack.c.b16 %v609, %v607
  %v774 = vpack.c.b16 %v610, %v608
  %v775 = vpack.c.b16 %v613, %v611
  %v776 = vpack.c.b16 %v614, %v612
  %v777 = vpack.c.b16 %v617, %v615
  %v778 = vpack.c.b16 %v618, %v616
  %v779 = vpack.c.b16 %v621, %v619
  %v780 = vpack.c.b16 %v622, %v620
  %v781 = vpack.c.b16 %v625, %v623
  %v782 = vpack.c.b16 %v626, %v624
  %v783 = vpack.c.b16 %v629, %v627
  %v784 = vpack.c.b16 %v630, %v628
  %v785 = vpack.c.b16 %v633, %v631
  %v786 = vpack.c.b16 %v634, %v632
  %v787 = vpack.c.b16 %v637, %v635
  %v788 = vpack.c.b16 %v638, %v636
  %v789 = vpack.c.b16 %v641, %v639
  %v790 = vpack.c.b16 %v642, %v640
  %v791 = vpack.c.b16 %v645, %v643
  %v792 = vpack.c.b16 %v646, %v644
  %v793 = vpack.c.b16 %v649, %v647
  %v794 = vpack.c.b16 %v650, %v648
  %939 = vmatpush.bf16.msra.mxu0 %v665
  %940 = vmatpush.bf16.msra.mxu0 %v663
  %941 = vmatpush.bf16.msra.mxu0 %v661
  %942 = vmatpush.bf16.msra.mxu0 %v659
  %943 = vmatpush.bf16.msra.mxu0 %v657
  %944 = vmatpush.bf16.msra.mxu0 %v655
  %945 = vmatpush.bf16.msra.mxu0 %v653
  %946 = vmatpush.bf16.msra.mxu0 %v651
  %947 = vmatmul.bf16.gmra.mxu0 %v201
  %v948 = vpop.f32.mrf.mxu0
  %v949 = vadd.f32 %v183, %v948
  %v950 = vpop.f32.mrf.mxu0
  %951 = vdwg.mxu0
  %952 = vmatpush.bf16.msra.mxu0 %v681
  %953 = vmatpush.bf16.msra.mxu0 %v679
  %954 = vmatpush.bf16.msra.mxu0 %v677
  %955 = vmatpush.bf16.msra.mxu0 %v675
  %956 = vmatpush.bf16.msra.mxu0 %v673
  %957 = vmatpush.bf16.msra.mxu0 %v671
  %958 = vmatpush.bf16.msra.mxu0 %v669
  %959 = vmatpush.bf16.msra.mxu0 %v667
  %960 = vmatmul.bf16.gmra.mxu0 %v202
  %v961 = vpop.f32.mrf.mxu0
  %v962 = vadd.f32 %v949, %v961
  %v963 = vpop.f32.mrf.mxu0
  %964 = vdwg.mxu0
  %965 = vmatpush.bf16.msra.mxu0 %v697
  %966 = vmatpush.bf16.msra.mxu0 %v695
  %967 = vmatpush.bf16.msra.mxu0 %v693
  %968 = vmatpush.bf16.msra.mxu0 %v691
  %969 = vmatpush.bf16.msra.mxu0 %v689
  %970 = vmatpush.bf16.msra.mxu0 %v687
  %971 = vmatpush.bf16.msra.mxu0 %v685
  %972 = vmatpush.bf16.msra.mxu0 %v683
  %973 = vmatmul.bf16.gmra.mxu0 %v203
  %v974 = vpop.f32.mrf.mxu0
  %v975 = vadd.f32 %v962, %v974
  %v976 = vpop.f32.mrf.mxu0
  %977 = vdwg.mxu0
  %978 = vmatpush.bf16.msra.mxu0 %v713
  %979 = vmatpush.bf16.msra.mxu0 %v711
  %980 = vmatpush.bf16.msra.mxu0 %v709
  %981 = vmatpush.bf16.msra.mxu0 %v707
  %982 = vmatpush.bf16.msra.mxu0 %v705
  %983 = vmatpush.bf16.msra.mxu0 %v703
  %984 = vmatpush.bf16.msra.mxu0 %v701
  %985 = vmatpush.bf16.msra.mxu0 %v699
  %986 = vmatmul.bf16.gmra.mxu0 %v204
  %v987 = vpop.f32.mrf.mxu0
  %v988 = vadd.f32 %v975, %v987
  %v989 = vpop.f32.mrf.mxu0
  %990 = vdwg.mxu0
  %991 = vmatpush.bf16.msra.mxu0 %v729
  %992 = vmatpush.bf16.msra.mxu0 %v727
  %993 = vmatpush.bf16.msra.mxu0 %v725
  %994 = vmatpush.bf16.msra.mxu0 %v723
  %995 = vmatpush.bf16.msra.mxu0 %v721
  %996 = vmatpush.bf16.msra.mxu0 %v719
  %997 = vmatpush.bf16.msra.mxu0 %v717
  %998 = vmatpush.bf16.msra.mxu0 %v715
  %999 = vmatmul.bf16.gmra.mxu0 %v205
  %v1000 = vpop.f32.mrf.mxu0
  %v1001 = vadd.f32 %v988, %v1000
  %v1002 = vpop.f32.mrf.mxu0
  %1003 = vdwg.mxu0
  %1004 = vmatpush.bf16.msra.mxu0 %v745
  %1005 = vmatpush.bf16.msra.mxu0 %v743
  %1006 = vmatpush.bf16.msra.mxu0 %v741
  %1007 = vmatpush.bf16.msra.mxu0 %v739
  %1008 = vmatpush.bf16.msra.mxu0 %v737
  %1009 = vmatpush.bf16.msra.mxu0 %v735
  %1010 = vmatpush.bf16.msra.mxu0 %v733
  %1011 = vmatpush.bf16.msra.mxu0 %v731
  %1012 = vmatmul.bf16.gmra.mxu0 %v206
  %v1013 = vpop.f32.mrf.mxu0
  %v1014 = vadd.f32 %v1001, %v1013
  %v1015 = vpop.f32.mrf.mxu0
  %1016 = vdwg.mxu0
  %1017 = vmatpush.bf16.msra.mxu0 %v761
  %1018 = vmatpush.bf16.msra.mxu0 %v759
  %1019 = vmatpush.bf16.msra.mxu0 %v757
  %1020 = vmatpush.bf16.msra.mxu0 %v755
  %1021 = vmatpush.bf16.msra.mxu0 %v753
  %1022 = vmatpush.bf16.msra.mxu0 %v751
  %1023 = vmatpush.bf16.msra.mxu0 %v749
  %1024 = vmatpush.bf16.msra.mxu0 %v747
  %1025 = vmatmul.bf16.gmra.mxu0 %v207
  %v1026 = vpop.f32.mrf.mxu0
  %v1027 = vadd.f32 %v1014, %v1026
  %v1028 = vpop.f32.mrf.mxu0
  %1029 = vdwg.mxu0
  %1030 = vmatpush.bf16.msra.mxu0 %v777
  %1031 = vmatpush.bf16.msra.mxu0 %v775
  %1032 = vmatpush.bf16.msra.mxu0 %v773
  %1033 = vmatpush.bf16.msra.mxu0 %v771
  %1034 = vmatpush.bf16.msra.mxu0 %v769
  %1035 = vmatpush.bf16.msra.mxu0 %v767
  %1036 = vmatpush.bf16.msra.mxu0 %v765
  %1037 = vmatpush.bf16.msra.mxu0 %v763
  %1038 = vmatmul.bf16.gmra.mxu0 %v208
  %v1039 = vpop.f32.mrf.mxu0
  %v1040 = vadd.f32 %v1027, %v1039
  %v1041 = vpop.f32.mrf.mxu0
  %1042 = vdwg.mxu0
  %1043 = vmatpush.bf16.msra.mxu0 %v793
  %1044 = vmatpush.bf16.msra.mxu0 %v791
  %1045 = vmatpush.bf16.msra.mxu0 %v789
  %1046 = vmatpush.bf16.msra.mxu0 %v787
  %1047 = vmatpush.bf16.msra.mxu0 %v785
  %1048 = vmatpush.bf16.msra.mxu0 %v783
  %1049 = vmatpush.bf16.msra.mxu0 %v781
  %1050 = vmatpush.bf16.msra.mxu0 %v779
  %1051 = vmatmul.bf16.gmra.mxu0 %v209
  %v1052 = vpop.f32.mrf.mxu0
  %v1053 = vadd.f32 %v1040, %v1052
  %v1054 = vpop.f32.mrf.mxu0
  %1055 = vdwg.mxu0
  %1056 = vmatpush.bf16.msra.mxu0 %v666
  %1057 = vmatpush.bf16.msra.mxu0 %v664
  %1058 = vmatpush.bf16.msra.mxu0 %v662
  %1059 = vmatpush.bf16.msra.mxu0 %v660
  %1060 = vmatpush.bf16.msra.mxu0 %v658
  %1061 = vmatpush.bf16.msra.mxu0 %v656
  %1062 = vmatpush.bf16.msra.mxu0 %v654
  %1063 = vmatpush.bf16.msra.mxu0 %v652
  %1064 = vmatmul.bf16.gmra.mxu0 %v201
  %v1065 = vpop.f32.mrf.mxu0
  %v1066 = vadd.f32 %v184, %v1065
  %v1067 = vpop.f32.mrf.mxu0
  %1068 = vdwg.mxu0
  %1069 = vmatpush.bf16.msra.mxu0 %v682
  %1070 = vmatpush.bf16.msra.mxu0 %v680
  %1071 = vmatpush.bf16.msra.mxu0 %v678
  %1072 = vmatpush.bf16.msra.mxu0 %v676
  %1073 = vmatpush.bf16.msra.mxu0 %v674
  %1074 = vmatpush.bf16.msra.mxu0 %v672
  %1075 = vmatpush.bf16.msra.mxu0 %v670
  %1076 = vmatpush.bf16.msra.mxu0 %v668
  %1077 = vmatmul.bf16.gmra.mxu0 %v202
  %v1078 = vpop.f32.mrf.mxu0
  %v1079 = vadd.f32 %v1066, %v1078
  %v1080 = vpop.f32.mrf.mxu0
  %1081 = vdwg.mxu0
  %1082 = vmatpush.bf16.msra.mxu0 %v698
  %1083 = vmatpush.bf16.msra.mxu0 %v696
  %1084 = vmatpush.bf16.msra.mxu0 %v694
  %1085 = vmatpush.bf16.msra.mxu0 %v692
  %1086 = vmatpush.bf16.msra.mxu0 %v690
  %1087 = vmatpush.bf16.msra.mxu0 %v688
  %1088 = vmatpush.bf16.msra.mxu0 %v686
  %1089 = vmatpush.bf16.msra.mxu0 %v684
  %1090 = vmatmul.bf16.gmra.mxu0 %v203
  %v1091 = vpop.f32.mrf.mxu0
  %v1092 = vadd.f32 %v1079, %v1091
  %v1093 = vpop.f32.mrf.mxu0
  %1094 = vdwg.mxu0
  %1095 = vmatpush.bf16.msra.mxu0 %v714
  %1096 = vmatpush.bf16.msra.mxu0 %v712
  %1097 = vmatpush.bf16.msra.mxu0 %v710
  %1098 = vmatpush.bf16.msra.mxu0 %v708
  %1099 = vmatpush.bf16.msra.mxu0 %v706
  %1100 = vmatpush.bf16.msra.mxu0 %v704
  %1101 = vmatpush.bf16.msra.mxu0 %v702
  %1102 = vmatpush.bf16.msra.mxu0 %v700
  %1103 = vmatmul.bf16.gmra.mxu0 %v204
  %v1104 = vpop.f32.mrf.mxu0
  %v1105 = vadd.f32 %v1092, %v1104
  %v1106 = vpop.f32.mrf.mxu0
  %1107 = vdwg.mxu0
  %1108 = vmatpush.bf16.msra.mxu0 %v730
  %1109 = vmatpush.bf16.msra.mxu0 %v728
  %1110 = vmatpush.bf16.msra.mxu0 %v726
  %1111 = vmatpush.bf16.msra.mxu0 %v724
  %1112 = vmatpush.bf16.msra.mxu0 %v722
  %1113 = vmatpush.bf16.msra.mxu0 %v720
  %1114 = vmatpush.bf16.msra.mxu0 %v718
  %1115 = vmatpush.bf16.msra.mxu0 %v716
  %1116 = vmatmul.bf16.gmra.mxu0 %v205
  %v1117 = vpop.f32.mrf.mxu0
  %v1118 = vadd.f32 %v1105, %v1117
  %v1119 = vpop.f32.mrf.mxu0
  %1120 = vdwg.mxu0
  %1121 = vmatpush.bf16.msra.mxu0 %v746
  %1122 = vmatpush.bf16.msra.mxu0 %v744
  %1123 = vmatpush.bf16.msra.mxu0 %v742
  %1124 = vmatpush.bf16.msra.mxu0 %v740
  %1125 = vmatpush.bf16.msra.mxu0 %v738
  %1126 = vmatpush.bf16.msra.mxu0 %v736
  %1127 = vmatpush.bf16.msra.mxu0 %v734
  %1128 = vmatpush.bf16.msra.mxu0 %v732
  %1129 = vmatmul.bf16.gmra.mxu0 %v206
  %v1130 = vpop.f32.mrf.mxu0
  %v1131 = vadd.f32 %v1118, %v1130
  %v1132 = vpop.f32.mrf.mxu0
  %1133 = vdwg.mxu0
  %1134 = vmatpush.bf16.msra.mxu0 %v762
  %1135 = vmatpush.bf16.msra.mxu0 %v760
  %1136 = vmatpush.bf16.msra.mxu0 %v758
  %1137 = vmatpush.bf16.msra.mxu0 %v756
  %1138 = vmatpush.bf16.msra.mxu0 %v754
  %1139 = vmatpush.bf16.msra.mxu0 %v752
  %1140 = vmatpush.bf16.msra.mxu0 %v750
  %1141 = vmatpush.bf16.msra.mxu0 %v748
  %1142 = vmatmul.bf16.gmra.mxu0 %v207
  %v1143 = vpop.f32.mrf.mxu0
  %v1144 = vadd.f32 %v1131, %v1143
  %v1145 = vpop.f32.mrf.mxu0
  %1146 = vdwg.mxu0
  %1147 = vmatpush.bf16.msra.mxu0 %v778
  %1148 = vmatpush.bf16.msra.mxu0 %v776
  %1149 = vmatpush.bf16.msra.mxu0 %v774
  %1150 = vmatpush.bf16.msra.mxu0 %v772
  %1151 = vmatpush.bf16.msra.mxu0 %v770
  %1152 = vmatpush.bf16.msra.mxu0 %v768
  %1153 = vmatpush.bf16.msra.mxu0 %v766
  %1154 = vmatpush.bf16.msra.mxu0 %v764
  %1155 = vmatmul.bf16.gmra.mxu0 %v208
  %v1156 = vpop.f32.mrf.mxu0
  %v1157 = vadd.f32 %v1144, %v1156
  %v1158 = vpop.f32.mrf.mxu0
  %1159 = vdwg.mxu0
  %1160 = vmatpush.bf16.msra.mxu0 %v794
  %1161 = vmatpush.bf16.msra.mxu0 %v792
  %1162 = vmatpush.bf16.msra.mxu0 %v790
  %1163 = vmatpush.bf16.msra.mxu0 %v788
  %1164 = vmatpush.bf16.msra.mxu0 %v786
  %1165 = vmatpush.bf16.msra.mxu0 %v784
  %1166 = vmatpush.bf16.msra.mxu0 %v782
  %1167 = vmatpush.bf16.msra.mxu0 %v780
  %1168 = vmatmul.bf16.gmra.mxu0 %v209
  %v1169 = vpop.f32.mrf.mxu0
  %v1170 = vadd.f32 %v1157, %v1169
  %v1171 = vpop.f32.mrf.mxu0
  %1172 = vdwg.mxu0
  %v1173 = vmax.f32 %v1053, 0.0
  %v1174 = vmax.f32 %v1170, 0.0
  %v1175 = vpack.c.bf16 %v1173, %v1173
  %v1176 = vpack.c.bf16 %v1174, %v1174
  %v1177 = vld [vmem:[%s3] sm:$0xff]
  %v1178 = vld [vmem:[%s3 + $0x8] sm:$0xff]
  %v1179 = vld [vmem:[%s3 + $0x10] sm:$0xff]
  %v1180 = vld [vmem:[%s3 + $0x18] sm:$0xff]
  %v1181 = vld [vmem:[%s3 + $0x20] sm:$0xff]
  %v1182 = vld [vmem:[%s3 + $0x28] sm:$0xff]
  %v1183 = vld [vmem:[%s3 + $0x30] sm:$0xff]
  %v1184 = vld [vmem:[%s3 + $0x38] sm:$0xff]
  %v1185 = vld [vmem:[%s3 + $0x40] sm:$0xff]
  %v1186 = vld [vmem:[%s3 + $0x48] sm:$0xff]
  %v1187 = vld [vmem:[%s3 + $0x50] sm:$0xff]
  %v1188 = vld [vmem:[%s3 + $0x58] sm:$0xff]
  %v1189 = vld [vmem:[%s3 + $0x60] sm:$0xff]
  %v1190 = vld [vmem:[%s3 + $0x68] sm:$0xff]
  %v1191 = vld [vmem:[%s3 + $0x70] sm:$0xff]
  %v1192 = vld [vmem:[%s3 + $0x78] sm:$0xff]
  %v1193 = vld [vmem:[%s3 + $0x80] sm:$0xff]
  %v1194 = vld [vmem:[%s3 + $0x88] sm:$0xff]
  %v1195 = vld [vmem:[%s3 + $0x90] sm:$0xff]
  %v1196 = vld [vmem:[%s3 + $0x98] sm:$0xff]
  %v1197 = vld [vmem:[%s3 + $0xa0] sm:$0xff]
  %v1198 = vld [vmem:[%s3 + $0xa8] sm:$0xff]
  %v1199 = vld [vmem:[%s3 + $0xb0] sm:$0xff]
  %v1200 = vld [vmem:[%s3 + $0xb8] sm:$0xff]
  %v1201 = vld [vmem:[%s3 + $0xc0] sm:$0xff]
  %v1202 = vld [vmem:[%s3 + $0xc8] sm:$0xff]
  %v1203 = vld [vmem:[%s3 + $0xd0] sm:$0xff]
  %v1204 = vld [vmem:[%s3 + $0xd8] sm:$0xff]
  %v1205 = vld [vmem:[%s3 + $0xe0] sm:$0xff]
  %v1206 = vld [vmem:[%s3 + $0xe8] sm:$0xff]
  %v1207 = vld [vmem:[%s3 + $0xf0] sm:$0xff]
  %v1208 = vld [vmem:[%s3 + $0xf8] sm:$0xff]
  %v1209 = vld [vmem:[%s3 + $0x100] sm:$0xff]
  %v1210 = vld [vmem:[%s3 + $0x108] sm:$0xff]
  %v1211 = vld [vmem:[%s3 + $0x110] sm:$0xff]
  %v1212 = vld [vmem:[%s3 + $0x118] sm:$0xff]
  %v1213 = vld [vmem:[%s3 + $0x120] sm:$0xff]
  %v1214 = vld [vmem:[%s3 + $0x128] sm:$0xff]
  %v1215 = vld [vmem:[%s3 + $0x130] sm:$0xff]
  %v1216 = vld [vmem:[%s3 + $0x138] sm:$0xff]
  %v1217 = vld [vmem:[%s3 + $0x140] sm:$0xff]
  %v1218 = vld [vmem:[%s3 + $0x148] sm:$0xff]
  %v1219 = vld [vmem:[%s3 + $0x150] sm:$0xff]
  %v1220 = vld [vmem:[%s3 + $0x158] sm:$0xff]
  %v1221 = vld [vmem:[%s3 + $0x160] sm:$0xff]
  %v1222 = vld [vmem:[%s3 + $0x168] sm:$0xff]
  %v1223 = vld [vmem:[%s3 + $0x170] sm:$0xff]
  %v1224 = vld [vmem:[%s3 + $0x178] sm:$0xff]
  %v1225 = vld [vmem:[%s3 + $0x180] sm:$0xff]
  %v1226 = vld [vmem:[%s3 + $0x188] sm:$0xff]
  %v1227 = vld [vmem:[%s3 + $0x190] sm:$0xff]
  %v1228 = vld [vmem:[%s3 + $0x198] sm:$0xff]
  %v1229 = vld [vmem:[%s3 + $0x1a0] sm:$0xff]
  %v1230 = vld [vmem:[%s3 + $0x1a8] sm:$0xff]
  %v1231 = vld [vmem:[%s3 + $0x1b0] sm:$0xff]
  %v1232 = vld [vmem:[%s3 + $0x1b8] sm:$0xff]
  %v1233 = vld [vmem:[%s3 + $0x1c0] sm:$0xff]
  %v1234 = vld [vmem:[%s3 + $0x1c8] sm:$0xff]
  %v1235 = vld [vmem:[%s3 + $0x1d0] sm:$0xff]
  %v1236 = vld [vmem:[%s3 + $0x1d8] sm:$0xff]
  %v1237 = vld [vmem:[%s3 + $0x1e0] sm:$0xff]
  %v1238 = vld [vmem:[%s3 + $0x1e8] sm:$0xff]
  %v1239 = vld [vmem:[%s3 + $0x1f0] sm:$0xff]
  %v1240 = vld [vmem:[%s3 + $0x1f8] sm:$0xff]
  %v1241 = vld [vmem:[%s0 + $0x24] sm:$0xff]
  %v1242 = vld [vmem:[%s0 + $0x2c] sm:$0xff]
  %v1243 = vld [vmem:[%s0 + $0x34] sm:$0xff]
  %v1244 = vld [vmem:[%s0 + $0x3c] sm:$0xff]
  %v1245 = vld [vmem:[%s0 + $0x44] sm:$0xf]
  %v1251 = vunpack.c.l.b16 %v1241
  %v1252 = vunpack.c.h.b16 %v1241
  %v1253 = vunpack.c.l.b16 %v1242
  %v1254 = vunpack.c.h.b16 %v1242
  %v1255 = vunpack.c.l.b16 %v1243
  %v1256 = vunpack.c.h.b16 %v1243
  %v1257 = vunpack.c.l.b16 %v1244
  %v1258 = vunpack.c.h.b16 %v1244
  %v1259 = vunpack.c.l.b16 %v1245
  %v1260 = vpack.c.b16 %v1251, %v1251
  %v1261 = vpack.c.b16 %v1252, %v1252
  %v1262 = vpack.c.b16 %v1253, %v1253
  %v1263 = vpack.c.b16 %v1254, %v1254
  %v1264 = vpack.c.b16 %v1255, %v1255
  %v1265 = vpack.c.b16 %v1256, %v1256
  %v1266 = vpack.c.b16 %v1257, %v1257
  %v1267 = vpack.c.b16 %v1258, %v1258
  %v1268 = vpack.c.b16 %v1259, %v1259
  %1278 = vmatpush.bf16.msra.mxu0 %v665
  %1279 = vmatpush.bf16.msra.mxu0 %v663
  %1280 = vmatpush.bf16.msra.mxu0 %v661
  %1281 = vmatpush.bf16.msra.mxu0 %v659
  %1282 = vmatpush.bf16.msra.mxu0 %v657
  %1283 = vmatpush.bf16.msra.mxu0 %v655
  %1284 = vmatpush.bf16.msra.mxu0 %v653
  %1285 = vmatpush.bf16.msra.mxu0 %v651
  %1286 = vmatmul.bf16.gmra.mxu0 %v1260
  %v1287 = vpop.f32.mrf.mxu0
  %v1288 = vadd.f32 %v183, %v1287
  %v1289 = vpop.f32.mrf.mxu0
  %1290 = vdwg.mxu0
  %1291 = vmatpush.bf16.msra.mxu0 %v681
  %1292 = vmatpush.bf16.msra.mxu0 %v679
  %1293 = vmatpush.bf16.msra.mxu0 %v677
  %1294 = vmatpush.bf16.msra.mxu0 %v675
  %1295 = vmatpush.bf16.msra.mxu0 %v673
  %1296 = vmatpush.bf16.msra.mxu0 %v671
  %1297 = vmatpush.bf16.msra.mxu0 %v669
  %1298 = vmatpush.bf16.msra.mxu0 %v667
  %1299 = vmatmul.bf16.gmra.mxu0 %v1261
  %v1300 = vpop.f32.mrf.mxu0
  %v1301 = vadd.f32 %v1288, %v1300
  %v1302 = vpop.f32.mrf.mxu0
  %1303 = vdwg.mxu0
  %1304 = vmatpush.bf16.msra.mxu0 %v697
  %1305 = vmatpush.bf16.msra.mxu0 %v695
  %1306 = vmatpush.bf16.msra.mxu0 %v693
  %1307 = vmatpush.bf16.msra.mxu0 %v691
  %1308 = vmatpush.bf16.msra.mxu0 %v689
  %1309 = vmatpush.bf16.msra.mxu0 %v687
  %1310 = vmatpush.bf16.msra.mxu0 %v685
  %1311 = vmatpush.bf16.msra.mxu0 %v683
  %1312 = vmatmul.bf16.gmra.mxu0 %v1262
  %v1313 = vpop.f32.mrf.mxu0
  %v1314 = vadd.f32 %v1301, %v1313
  %v1315 = vpop.f32.mrf.mxu0
  %1316 = vdwg.mxu0
  %1317 = vmatpush.bf16.msra.mxu0 %v713
  %1318 = vmatpush.bf16.msra.mxu0 %v711
  %1319 = vmatpush.bf16.msra.mxu0 %v709
  %1320 = vmatpush.bf16.msra.mxu0 %v707
  %1321 = vmatpush.bf16.msra.mxu0 %v705
  %1322 = vmatpush.bf16.msra.mxu0 %v703
  %1323 = vmatpush.bf16.msra.mxu0 %v701
  %1324 = vmatpush.bf16.msra.mxu0 %v699
  %1325 = vmatmul.bf16.gmra.mxu0 %v1263
  %v1326 = vpop.f32.mrf.mxu0
  %v1327 = vadd.f32 %v1314, %v1326
  %v1328 = vpop.f32.mrf.mxu0
  %1329 = vdwg.mxu0
  %1330 = vmatpush.bf16.msra.mxu0 %v729
  %1331 = vmatpush.bf16.msra.mxu0 %v727
  %1332 = vmatpush.bf16.msra.mxu0 %v725
  %1333 = vmatpush.bf16.msra.mxu0 %v723
  %1334 = vmatpush.bf16.msra.mxu0 %v721
  %1335 = vmatpush.bf16.msra.mxu0 %v719
  %1336 = vmatpush.bf16.msra.mxu0 %v717
  %1337 = vmatpush.bf16.msra.mxu0 %v715
  %1338 = vmatmul.bf16.gmra.mxu0 %v1264
  %v1339 = vpop.f32.mrf.mxu0
  %v1340 = vadd.f32 %v1327, %v1339
  %v1341 = vpop.f32.mrf.mxu0
  %1342 = vdwg.mxu0
  %1343 = vmatpush.bf16.msra.mxu0 %v745
  %1344 = vmatpush.bf16.msra.mxu0 %v743
  %1345 = vmatpush.bf16.msra.mxu0 %v741
  %1346 = vmatpush.bf16.msra.mxu0 %v739
  %1347 = vmatpush.bf16.msra.mxu0 %v737
  %1348 = vmatpush.bf16.msra.mxu0 %v735
  %1349 = vmatpush.bf16.msra.mxu0 %v733
  %1350 = vmatpush.bf16.msra.mxu0 %v731
  %1351 = vmatmul.bf16.gmra.mxu0 %v1265
  %v1352 = vpop.f32.mrf.mxu0
  %v1353 = vadd.f32 %v1340, %v1352
  %v1354 = vpop.f32.mrf.mxu0
  %1355 = vdwg.mxu0
  %1356 = vmatpush.bf16.msra.mxu0 %v761
  %1357 = vmatpush.bf16.msra.mxu0 %v759
  %1358 = vmatpush.bf16.msra.mxu0 %v757
  %1359 = vmatpush.bf16.msra.mxu0 %v755
  %1360 = vmatpush.bf16.msra.mxu0 %v753
  %1361 = vmatpush.bf16.msra.mxu0 %v751
  %1362 = vmatpush.bf16.msra.mxu0 %v749
  %1363 = vmatpush.bf16.msra.mxu0 %v747
  %1364 = vmatmul.bf16.gmra.mxu0 %v1266
  %v1365 = vpop.f32.mrf.mxu0
  %v1366 = vadd.f32 %v1353, %v1365
  %v1367 = vpop.f32.mrf.mxu0
  %1368 = vdwg.mxu0
  %1369 = vmatpush.bf16.msra.mxu0 %v777
  %1370 = vmatpush.bf16.msra.mxu0 %v775
  %1371 = vmatpush.bf16.msra.mxu0 %v773
  %1372 = vmatpush.bf16.msra.mxu0 %v771
  %1373 = vmatpush.bf16.msra.mxu0 %v769
  %1374 = vmatpush.bf16.msra.mxu0 %v767
  %1375 = vmatpush.bf16.msra.mxu0 %v765
  %1376 = vmatpush.bf16.msra.mxu0 %v763
  %1377 = vmatmul.bf16.gmra.mxu0 %v1267
  %v1378 = vpop.f32.mrf.mxu0
  %v1379 = vadd.f32 %v1366, %v1378
  %v1380 = vpop.f32.mrf.mxu0
  %1381 = vdwg.mxu0
  %1382 = vmatpush.bf16.msra.mxu0 %v793
  %1383 = vmatpush.bf16.msra.mxu0 %v791
  %1384 = vmatpush.bf16.msra.mxu0 %v789
  %1385 = vmatpush.bf16.msra.mxu0 %v787
  %1386 = vmatpush.bf16.msra.mxu0 %v785
  %1387 = vmatpush.bf16.msra.mxu0 %v783
  %1388 = vmatpush.bf16.msra.mxu0 %v781
  %1389 = vmatpush.bf16.msra.mxu0 %v779
  %1390 = vmatmul.bf16.gmra.mxu0 %v1268
  %v1391 = vpop.f32.mrf.mxu0
  %v1392 = vadd.f32 %v1379, %v1391
  %v1393 = vpop.f32.mrf.mxu0
  %1394 = vdwg.mxu0
  %1395 = vmatpush.bf16.msra.mxu0 %v666
  %1396 = vmatpush.bf16.msra.mxu0 %v664
  %1397 = vmatpush.bf16.msra.mxu0 %v662
  %1398 = vmatpush.bf16.msra.mxu0 %v660
  %1399 = vmatpush.bf16.msra.mxu0 %v658
  %1400 = vmatpush.bf16.msra.mxu0 %v656
  %1401 = vmatpush.bf16.msra.mxu0 %v654
  %1402 = vmatpush.bf16.msra.mxu0 %v652
  %1403 = vmatmul.bf16.gmra.mxu0 %v1260
  %v1404 = vpop.f32.mrf.mxu0
  %v1405 = vadd.f32 %v184, %v1404
  %v1406 = vpop.f32.mrf.mxu0
  %1407 = vdwg.mxu0
  %1408 = vmatpush.bf16.msra.mxu0 %v682
  %1409 = vmatpush.bf16.msra.mxu0 %v680
  %1410 = vmatpush.bf16.msra.mxu0 %v678
  %1411 = vmatpush.bf16.msra.mxu0 %v676
  %1412 = vmatpush.bf16.msra.mxu0 %v674
  %1413 = vmatpush.bf16.msra.mxu0 %v672
  %1414 = vmatpush.bf16.msra.mxu0 %v670
  %1415 = vmatpush.bf16.msra.mxu0 %v668
  %1416 = vmatmul.bf16.gmra.mxu0 %v1261
  %v1417 = vpop.f32.mrf.mxu0
  %v1418 = vadd.f32 %v1405, %v1417
  %v1419 = vpop.f32.mrf.mxu0
  %1420 = vdwg.mxu0
  %1421 = vmatpush.bf16.msra.mxu0 %v698
  %1422 = vmatpush.bf16.msra.mxu0 %v696
  %1423 = vmatpush.bf16.msra.mxu0 %v694
  %1424 = vmatpush.bf16.msra.mxu0 %v692
  %1425 = vmatpush.bf16.msra.mxu0 %v690
  %1426 = vmatpush.bf16.msra.mxu0 %v688
  %1427 = vmatpush.bf16.msra.mxu0 %v686
  %1428 = vmatpush.bf16.msra.mxu0 %v684
  %1429 = vmatmul.bf16.gmra.mxu0 %v1262
  %v1430 = vpop.f32.mrf.mxu0
  %v1431 = vadd.f32 %v1418, %v1430
  %v1432 = vpop.f32.mrf.mxu0
  %1433 = vdwg.mxu0
  %1434 = vmatpush.bf16.msra.mxu0 %v714
  %1435 = vmatpush.bf16.msra.mxu0 %v712
  %1436 = vmatpush.bf16.msra.mxu0 %v710
  %1437 = vmatpush.bf16.msra.mxu0 %v708
  %1438 = vmatpush.bf16.msra.mxu0 %v706
  %1439 = vmatpush.bf16.msra.mxu0 %v704
  %1440 = vmatpush.bf16.msra.mxu0 %v702
  %1441 = vmatpush.bf16.msra.mxu0 %v700
  %1442 = vmatmul.bf16.gmra.mxu0 %v1263
  %v1443 = vpop.f32.mrf.mxu0
  %v1444 = vadd.f32 %v1431, %v1443
  %v1445 = vpop.f32.mrf.mxu0
  %1446 = vdwg.mxu0
  %1447 = vmatpush.bf16.msra.mxu0 %v730
  %1448 = vmatpush.bf16.msra.mxu0 %v728
  %1449 = vmatpush.bf16.msra.mxu0 %v726
  %1450 = vmatpush.bf16.msra.mxu0 %v724
  %1451 = vmatpush.bf16.msra.mxu0 %v722
  %1452 = vmatpush.bf16.msra.mxu0 %v720
  %1453 = vmatpush.bf16.msra.mxu0 %v718
  %1454 = vmatpush.bf16.msra.mxu0 %v716
  %1455 = vmatmul.bf16.gmra.mxu0 %v1264
  %v1456 = vpop.f32.mrf.mxu0
  %v1457 = vadd.f32 %v1444, %v1456
  %v1458 = vpop.f32.mrf.mxu0
  %1459 = vdwg.mxu0
  %1460 = vmatpush.bf16.msra.mxu0 %v746
  %1461 = vmatpush.bf16.msra.mxu0 %v744
  %1462 = vmatpush.bf16.msra.mxu0 %v742
  %1463 = vmatpush.bf16.msra.mxu0 %v740
  %1464 = vmatpush.bf16.msra.mxu0 %v738
  %1465 = vmatpush.bf16.msra.mxu0 %v736
  %1466 = vmatpush.bf16.msra.mxu0 %v734
  %1467 = vmatpush.bf16.msra.mxu0 %v732
  %1468 = vmatmul.bf16.gmra.mxu0 %v1265
  %v1469 = vpop.f32.mrf.mxu0
  %v1470 = vadd.f32 %v1457, %v1469
  %v1471 = vpop.f32.mrf.mxu0
  %1472 = vdwg.mxu0
  %1473 = vmatpush.bf16.msra.mxu0 %v762
  %1474 = vmatpush.bf16.msra.mxu0 %v760
  %1475 = vmatpush.bf16.msra.mxu0 %v758
  %1476 = vmatpush.bf16.msra.mxu0 %v756
  %1477 = vmatpush.bf16.msra.mxu0 %v754
  %1478 = vmatpush.bf16.msra.mxu0 %v752
  %1479 = vmatpush.bf16.msra.mxu0 %v750
  %1480 = vmatpush.bf16.msra.mxu0 %v748
  %1481 = vmatmul.bf16.gmra.mxu0 %v1266
  %v1482 = vpop.f32.mrf.mxu0
  %v1483 = vadd.f32 %v1470, %v1482
  %v1484 = vpop.f32.mrf.mxu0
  %1485 = vdwg.mxu0
  %1486 = vmatpush.bf16.msra.mxu0 %v778
  %1487 = vmatpush.bf16.msra.mxu0 %v776
  %1488 = vmatpush.bf16.msra.mxu0 %v774
  %1489 = vmatpush.bf16.msra.mxu0 %v772
  %1490 = vmatpush.bf16.msra.mxu0 %v770
  %1491 = vmatpush.bf16.msra.mxu0 %v768
  %1492 = vmatpush.bf16.msra.mxu0 %v766
  %1493 = vmatpush.bf16.msra.mxu0 %v764
  %1494 = vmatmul.bf16.gmra.mxu0 %v1267
  %v1495 = vpop.f32.mrf.mxu0
  %v1496 = vadd.f32 %v1483, %v1495
  %v1497 = vpop.f32.mrf.mxu0
  %1498 = vdwg.mxu0
  %1499 = vmatpush.bf16.msra.mxu0 %v794
  %1500 = vmatpush.bf16.msra.mxu0 %v792
  %1501 = vmatpush.bf16.msra.mxu0 %v790
  %1502 = vmatpush.bf16.msra.mxu0 %v788
  %1503 = vmatpush.bf16.msra.mxu0 %v786
  %1504 = vmatpush.bf16.msra.mxu0 %v784
  %1505 = vmatpush.bf16.msra.mxu0 %v782
  %1506 = vmatpush.bf16.msra.mxu0 %v780
  %1507 = vmatmul.bf16.gmra.mxu0 %v1268
  %v1508 = vpop.f32.mrf.mxu0
  %v1509 = vadd.f32 %v1496, %v1508
  %v1510 = vpop.f32.mrf.mxu0
  %1511 = vdwg.mxu0
  %v1512 = vmax.f32 %v1392, 0.0
  %v1513 = vmax.f32 %v1509, 0.0
  %v1514 = vpack.c.bf16 %v1512, %v1512
  %v1515 = vpack.c.bf16 %v1513, %v1513
  %v1516 = vld [vmem:[%s3 + $0x200] sm:$0xff]
  %v1517 = vld [vmem:[%s3 + $0x208] sm:$0xff]
  %v1518 = vld [vmem:[%s3 + $0x210] sm:$0xff]
  %v1519 = vld [vmem:[%s3 + $0x218] sm:$0xff]
  %v1520 = vld [vmem:[%s3 + $0x220] sm:$0xff]
  %v1521 = vld [vmem:[%s3 + $0x228] sm:$0xff]
  %v1522 = vld [vmem:[%s3 + $0x230] sm:$0xff]
  %v1523 = vld [vmem:[%s3 + $0x238] sm:$0xff]
  %v1524 = vld [vmem:[%s3 + $0x240] sm:$0xff]
  %v1525 = vld [vmem:[%s3 + $0x248] sm:$0xff]
  %v1526 = vld [vmem:[%s3 + $0x250] sm:$0xff]
  %v1527 = vld [vmem:[%s3 + $0x258] sm:$0xff]
  %v1528 = vld [vmem:[%s3 + $0x260] sm:$0xff]
  %v1529 = vld [vmem:[%s3 + $0x268] sm:$0xff]
  %v1530 = vld [vmem:[%s3 + $0x270] sm:$0xff]
  %v1531 = vld [vmem:[%s3 + $0x278] sm:$0xff]
  %v1532 = vld [vmem:[%s3 + $0x280] sm:$0xff]
  %v1533 = vld [vmem:[%s3 + $0x288] sm:$0xff]
  %v1534 = vld [vmem:[%s3 + $0x290] sm:$0xff]
  %v1535 = vld [vmem:[%s3 + $0x298] sm:$0xff]
  %v1536 = vld [vmem:[%s3 + $0x2a0] sm:$0xff]
  %v1537 = vld [vmem:[%s3 + $0x2a8] sm:$0xff]
  %v1538 = vld [vmem:[%s3 + $0x2b0] sm:$0xff]
  %v1539 = vld [vmem:[%s3 + $0x2b8] sm:$0xff]
  %v1540 = vld [vmem:[%s3 + $0x2c0] sm:$0xff]
  %v1541 = vld [vmem:[%s3 + $0x2c8] sm:$0xff]
  %v1542 = vld [vmem:[%s3 + $0x2d0] sm:$0xff]
  %v1543 = vld [vmem:[%s3 + $0x2d8] sm:$0xff]
  %v1544 = vld [vmem:[%s3 + $0x2e0] sm:$0xff]
  %v1545 = vld [vmem:[%s3 + $0x2e8] sm:$0xff]
  %v1546 = vld [vmem:[%s3 + $0x2f0] sm:$0xff]
  %v1547 = vld [vmem:[%s3 + $0x2f8] sm:$0xff]
  %v1548 = vld [vmem:[%s3 + $0x300] sm:$0xff]
  %v1549 = vld [vmem:[%s3 + $0x308] sm:$0xff]
  %v1550 = vld [vmem:[%s3 + $0x310] sm:$0xff]
  %v1551 = vld [vmem:[%s3 + $0x318] sm:$0xff]
  %v1552 = vld [vmem:[%s3 + $0x320] sm:$0xff]
  %v1553 = vld [vmem:[%s3 + $0x328] sm:$0xff]
  %v1554 = vld [vmem:[%s3 + $0x330] sm:$0xff]
  %v1555 = vld [vmem:[%s3 + $0x338] sm:$0xff]
  %v1556 = vld [vmem:[%s3 + $0x340] sm:$0xff]
  %v1557 = vld [vmem:[%s3 + $0x348] sm:$0xff]
  %v1558 = vld [vmem:[%s3 + $0x350] sm:$0xff]
  %v1559 = vld [vmem:[%s3 + $0x358] sm:$0xff]
  %v1560 = vld [vmem:[%s3 + $0x360] sm:$0xff]
  %v1561 = vld [vmem:[%s3 + $0x368] sm:$0xff]
  %v1562 = vld [vmem:[%s3 + $0x370] sm:$0xff]
  %v1563 = vld [vmem:[%s3 + $0x378] sm:$0xff]
  %v1564 = vld [vmem:[%s3 + $0x380] sm:$0xff]
  %v1565 = vld [vmem:[%s3 + $0x388] sm:$0xff]
  %v1566 = vld [vmem:[%s3 + $0x390] sm:$0xff]
  %v1567 = vld [vmem:[%s3 + $0x398] sm:$0xff]
  %v1568 = vld [vmem:[%s3 + $0x3a0] sm:$0xff]
  %v1569 = vld [vmem:[%s3 + $0x3a8] sm:$0xff]
  %v1570 = vld [vmem:[%s3 + $0x3b0] sm:$0xff]
  %v1571 = vld [vmem:[%s3 + $0x3b8] sm:$0xff]
  %v1572 = vld [vmem:[%s3 + $0x3c0] sm:$0xff]
  %v1573 = vld [vmem:[%s3 + $0x3c8] sm:$0xff]
  %v1574 = vld [vmem:[%s3 + $0x3d0] sm:$0xff]
  %v1575 = vld [vmem:[%s3 + $0x3d8] sm:$0xff]
  %v1576 = vld [vmem:[%s3 + $0x3e0] sm:$0xff]
  %v1577 = vld [vmem:[%s3 + $0x3e8] sm:$0xff]
  %v1578 = vld [vmem:[%s3 + $0x3f0] sm:$0xff]
  %v1579 = vld [vmem:[%s3 + $0x3f8] sm:$0xff]
  %v1644 = vunpack.c.l.b16 %v1516
  %v1645 = vunpack.c.h.b16 %v1516
  %v1646 = vunpack.c.l.b16 %v1517
  %v1647 = vunpack.c.h.b16 %v1517
  %v1648 = vunpack.c.l.b16 %v1518
  %v1649 = vunpack.c.h.b16 %v1518
  %v1650 = vunpack.c.l.b16 %v1519
  %v1651 = vunpack.c.h.b16 %v1519
  %v1652 = vunpack.c.l.b16 %v1520
  %v1653 = vunpack.c.h.b16 %v1520
  %v1654 = vunpack.c.l.b16 %v1521
  %v1655 = vunpack.c.h.b16 %v1521
  %v1656 = vunpack.c.l.b16 %v1522
  %v1657 = vunpack.c.h.b16 %v1522
  %v1658 = vunpack.c.l.b16 %v1523
  %v1659 = vunpack.c.h.b16 %v1523
  %v1660 = vunpack.c.l.b16 %v1524
  %v1661 = vunpack.c.h.b16 %v1524
  %v1662 = vunpack.c.l.b16 %v1525
  %v1663 = vunpack.c.h.b16 %v1525
  %v1664 = vunpack.c.l.b16 %v1526
  %v1665 = vunpack.c.h.b16 %v1526
  %v1666 = vunpack.c.l.b16 %v1527
  %v1667 = vunpack.c.h.b16 %v1527
  %v1668 = vunpack.c.l.b16 %v1528
  %v1669 = vunpack.c.h.b16 %v1528
  %v1670 = vunpack.c.l.b16 %v1529
  %v1671 = vunpack.c.h.b16 %v1529
  %v1672 = vunpack.c.l.b16 %v1530
  %v1673 = vunpack.c.h.b16 %v1530
  %v1674 = vunpack.c.l.b16 %v1531
  %v1675 = vunpack.c.h.b16 %v1531
  %v1676 = vunpack.c.l.b16 %v1532
  %v1677 = vunpack.c.h.b16 %v1532
  %v1678 = vunpack.c.l.b16 %v1533
  %v1679 = vunpack.c.h.b16 %v1533
  %v1680 = vunpack.c.l.b16 %v1534
  %v1681 = vunpack.c.h.b16 %v1534
  %v1682 = vunpack.c.l.b16 %v1535
  %v1683 = vunpack.c.h.b16 %v1535
  %v1684 = vunpack.c.l.b16 %v1536
  %v1685 = vunpack.c.h.b16 %v1536
  %v1686 = vunpack.c.l.b16 %v1537
  %v1687 = vunpack.c.h.b16 %v1537
  %v1688 = vunpack.c.l.b16 %v1538
  %v1689 = vunpack.c.h.b16 %v1538
  %v1690 = vunpack.c.l.b16 %v1539
  %v1691 = vunpack.c.h.b16 %v1539
  %v1692 = vunpack.c.l.b16 %v1540
  %v1693 = vunpack.c.h.b16 %v1540
  %v1694 = vunpack.c.l.b16 %v1541
  %v1695 = vunpack.c.h.b16 %v1541
  %v1696 = vunpack.c.l.b16 %v1542
  %v1697 = vunpack.c.h.b16 %v1542
  %v1698 = vunpack.c.l.b16 %v1543
  %v1699 = vunpack.c.h.b16 %v1543
  %v1700 = vunpack.c.l.b16 %v1544
  %v1701 = vunpack.c.h.b16 %v1544
  %v1702 = vunpack.c.l.b16 %v1545
  %v1703 = vunpack.c.h.b16 %v1545
  %v1704 = vunpack.c.l.b16 %v1546
  %v1705 = vunpack.c.h.b16 %v1546
  %v1706 = vunpack.c.l.b16 %v1547
  %v1707 = vunpack.c.h.b16 %v1547
  %v1708 = vunpack.c.l.b16 %v1548
  %v1709 = vunpack.c.h.b16 %v1548
  %v1710 = vunpack.c.l.b16 %v1549
  %v1711 = vunpack.c.h.b16 %v1549
  %v1712 = vunpack.c.l.b16 %v1550
  %v1713 = vunpack.c.h.b16 %v1550
  %v1714 = vunpack.c.l.b16 %v1551
  %v1715 = vunpack.c.h.b16 %v1551
  %v1716 = vunpack.c.l.b16 %v1552
  %v1717 = vunpack.c.h.b16 %v1552
  %v1718 = vunpack.c.l.b16 %v1553
  %v1719 = vunpack.c.h.b16 %v1553
  %v1720 = vunpack.c.l.b16 %v1554
  %v1721 = vunpack.c.h.b16 %v1554
  %v1722 = vunpack.c.l.b16 %v1555
  %v1723 = vunpack.c.h.b16 %v1555
  %v1724 = vunpack.c.l.b16 %v1556
  %v1725 = vunpack.c.h.b16 %v1556
  %v1726 = vunpack.c.l.b16 %v1557
  %v1727 = vunpack.c.h.b16 %v1557
  %v1728 = vunpack.c.l.b16 %v1558
  %v1729 = vunpack.c.h.b16 %v1558
  %v1730 = vunpack.c.l.b16 %v1559
  %v1731 = vunpack.c.h.b16 %v1559
  %v1732 = vunpack.c.l.b16 %v1560
  %v1733 = vunpack.c.h.b16 %v1560
  %v1734 = vunpack.c.l.b16 %v1561
  %v1735 = vunpack.c.h.b16 %v1561
  %v1736 = vunpack.c.l.b16 %v1562
  %v1737 = vunpack.c.h.b16 %v1562
  %v1738 = vunpack.c.l.b16 %v1563
  %v1739 = vunpack.c.h.b16 %v1563
  %v1740 = vunpack.c.l.b16 %v1564
  %v1741 = vunpack.c.h.b16 %v1564
  %v1742 = vunpack.c.l.b16 %v1565
  %v1743 = vunpack.c.h.b16 %v1565
  %v1744 = vunpack.c.l.b16 %v1566
  %v1745 = vunpack.c.h.b16 %v1566
  %v1746 = vunpack.c.l.b16 %v1567
  %v1747 = vunpack.c.h.b16 %v1567
  %v1748 = vunpack.c.l.b16 %v1568
  %v1749 = vunpack.c.h.b16 %v1568
  %v1750 = vunpack.c.l.b16 %v1569
  %v1751 = vunpack.c.h.b16 %v1569
  %v1752 = vunpack.c.l.b16 %v1570
  %v1753 = vunpack.c.h.b16 %v1570
  %v1754 = vunpack.c.l.b16 %v1571
  %v1755 = vunpack.c.h.b16 %v1571
  %v1756 = vunpack.c.l.b16 %v1572
  %v1757 = vunpack.c.h.b16 %v1572
  %v1758 = vunpack.c.l.b16 %v1573
  %v1759 = vunpack.c.h.b16 %v1573
  %v1760 = vunpack.c.l.b16 %v1574
  %v1761 = vunpack.c.h.b16 %v1574
  %v1762 = vunpack.c.l.b16 %v1575
  %v1763 = vunpack.c.h.b16 %v1575
  %v1764 = vunpack.c.l.b16 %v1576
  %v1765 = vunpack.c.h.b16 %v1576
  %v1766 = vunpack.c.l.b16 %v1577
  %v1767 = vunpack.c.h.b16 %v1577
  %v1768 = vunpack.c.l.b16 %v1578
  %v1769 = vunpack.c.h.b16 %v1578
  %v1770 = vunpack.c.l.b16 %v1579
  %v1771 = vunpack.c.h.b16 %v1579
  %v1772 = vpack.c.b16 %v1648, %v1644
  %v1773 = vpack.c.b16 %v1649, %v1645
  %v1774 = vpack.c.b16 %v1650, %v1646
  %v1775 = vpack.c.b16 %v1651, %v1647
  %v1776 = vpack.c.b16 %v1656, %v1652
  %v1777 = vpack.c.b16 %v1657, %v1653
  %v1778 = vpack.c.b16 %v1658, %v1654
  %v1779 = vpack.c.b16 %v1659, %v1655
  %v1780 = vpack.c.b16 %v1664, %v1660
  %v1781 = vpack.c.b16 %v1665, %v1661
  %v1782 = vpack.c.b16 %v1666, %v1662
  %v1783 = vpack.c.b16 %v1667, %v1663
  %v1784 = vpack.c.b16 %v1672, %v1668
  %v1785 = vpack.c.b16 %v1673, %v1669
  %v1786 = vpack.c.b16 %v1674, %v1670
  %v1787 = vpack.c.b16 %v1675, %v1671
  %v1788 = vpack.c.b16 %v1680, %v1676
  %v1789 = vpack.c.b16 %v1681, %v1677
  %v1790 = vpack.c.b16 %v1682, %v1678
  %v1791 = vpack.c.b16 %v1683, %v1679
  %v1792 = vpack.c.b16 %v1688, %v1684
  %v1793 = vpack.c.b16 %v1689, %v1685
  %v1794 = vpack.c.b16 %v1690, %v1686
  %v1795 = vpack.c.b16 %v1691, %v1687
  %v1796 = vpack.c.b16 %v1696, %v1692
  %v1797 = vpack.c.b16 %v1697, %v1693
  %v1798 = vpack.c.b16 %v1698, %v1694
  %v1799 = vpack.c.b16 %v1699, %v1695
  %v1800 = vpack.c.b16 %v1704, %v1700
  %v1801 = vpack.c.b16 %v1705, %v1701
  %v1802 = vpack.c.b16 %v1706, %v1702
  %v1803 = vpack.c.b16 %v1707, %v1703
  %v1804 = vpack.c.b16 %v1712, %v1708
  %v1805 = vpack.c.b16 %v1713, %v1709
  %v1806 = vpack.c.b16 %v1714, %v1710
  %v1807 = vpack.c.b16 %v1715, %v1711
  %v1808 = vpack.c.b16 %v1720, %v1716
  %v1809 = vpack.c.b16 %v1721, %v1717
  %v1810 = vpack.c.b16 %v1722, %v1718
  %v1811 = vpack.c.b16 %v1723, %v1719
  %v1812 = vpack.c.b16 %v1728, %v1724
  %v1813 = vpack.c.b16 %v1729, %v1725
  %v1814 = vpack.c.b16 %v1730, %v1726
  %v1815 = vpack.c.b16 %v1731, %v1727
  %v1816 = vpack.c.b16 %v1736, %v1732
  %v1817 = vpack.c.b16 %v1737, %v1733
  %v1818 = vpack.c.b16 %v1738, %v1734
  %v1819 = vpack.c.b16 %v1739, %v1735
  %v1820 = vpack.c.b16 %v1744, %v1740
  %v1821 = vpack.c.b16 %v1745, %v1741
  %v1822 = vpack.c.b16 %v1746, %v1742
  %v1823 = vpack.c.b16 %v1747, %v1743
  %v1824 = vpack.c.b16 %v1752, %v1748
  %v1825 = vpack.c.b16 %v1753, %v1749
  %v1826 = vpack.c.b16 %v1754, %v1750
  %v1827 = vpack.c.b16 %v1755, %v1751
  %v1828 = vpack.c.b16 %v1760, %v1756
  %v1829 = vpack.c.b16 %v1761, %v1757
  %v1830 = vpack.c.b16 %v1762, %v1758
  %v1831 = vpack.c.b16 %v1763, %v1759
  %v1832 = vpack.c.b16 %v1768, %v1764
  %v1833 = vpack.c.b16 %v1769, %v1765
  %v1834 = vpack.c.b16 %v1770, %v1766
  %v1835 = vpack.c.b16 %v1771, %v1767
  %1900 = vmatpush.bf16.msra.mxu0 %v1800
  %1901 = vmatpush.bf16.msra.mxu0 %v1796
  %1902 = vmatpush.bf16.msra.mxu0 %v1792
  %1903 = vmatpush.bf16.msra.mxu0 %v1788
  %1904 = vmatpush.bf16.msra.mxu0 %v1784
  %1905 = vmatpush.bf16.msra.mxu0 %v1780
  %1906 = vmatpush.bf16.msra.mxu0 %v1776
  %1907 = vmatpush.bf16.msra.mxu0 %v1772
  %1908 = vmatmul.bf16.gmra.mxu0 %v1514
  %v1909 = vpop.f32.mrf.mxu0
  %v1910 = vadd.f32 0.0, %v1909
  %v1911 = vpop.f32.mrf.mxu0
  %1912 = vdwg.mxu0
  %1913 = vmatpush.bf16.msra.mxu0 %v1832
  %1914 = vmatpush.bf16.msra.mxu0 %v1828
  %1915 = vmatpush.bf16.msra.mxu0 %v1824
  %1916 = vmatpush.bf16.msra.mxu0 %v1820
  %1917 = vmatpush.bf16.msra.mxu0 %v1816
  %1918 = vmatpush.bf16.msra.mxu0 %v1812
  %1919 = vmatpush.bf16.msra.mxu0 %v1808
  %1920 = vmatpush.bf16.msra.mxu0 %v1804
  %1921 = vmatmul.bf16.gmra.mxu0 %v1515
  %v1922 = vpop.f32.mrf.mxu0
  %v1923 = vadd.f32 %v1910, %v1922
  %v1924 = vpop.f32.mrf.mxu0
  %1925 = vdwg.mxu0
  %1926 = vmatpush.bf16.msra.mxu0 %v1801
  %1927 = vmatpush.bf16.msra.mxu0 %v1797
  %1928 = vmatpush.bf16.msra.mxu0 %v1793
  %1929 = vmatpush.bf16.msra.mxu0 %v1789
  %1930 = vmatpush.bf16.msra.mxu0 %v1785
  %1931 = vmatpush.bf16.msra.mxu0 %v1781
  %1932 = vmatpush.bf16.msra.mxu0 %v1777
  %1933 = vmatpush.bf16.msra.mxu0 %v1773
  %1934 = vmatmul.bf16.gmra.mxu0 %v1514
  %v1935 = vpop.f32.mrf.mxu0
  %v1936 = vadd.f32 0.0, %v1935
  %v1937 = vpop.f32.mrf.mxu0
  %1938 = vdwg.mxu0
  %1939 = vmatpush.bf16.msra.mxu0 %v1833
  %1940 = vmatpush.bf16.msra.mxu0 %v1829
  %1941 = vmatpush.bf16.msra.mxu0 %v1825
  %1942 = vmatpush.bf16.msra.mxu0 %v1821
  %1943 = vmatpush.bf16.msra.mxu0 %v1817
  %1944 = vmatpush.bf16.msra.mxu0 %v1813
  %1945 = vmatpush.bf16.msra.mxu0 %v1809
  %1946 = vmatpush.bf16.msra.mxu0 %v1805
  %1947 = vmatmul.bf16.gmra.mxu0 %v1515
  %v1948 = vpop.f32.mrf.mxu0
  %v1949 = vadd.f32 %v1936, %v1948
  %v1950 = vpop.f32.mrf.mxu0
  %1951 = vdwg.mxu0
  %1952 = vmatpush.bf16.msra.mxu0 %v1802
  %1953 = vmatpush.bf16.msra.mxu0 %v1798
  %1954 = vmatpush.bf16.msra.mxu0 %v1794
  %1955 = vmatpush.bf16.msra.mxu0 %v1790
  %1956 = vmatpush.bf16.msra.mxu0 %v1786
  %1957 = vmatpush.bf16.msra.mxu0 %v1782
  %1958 = vmatpush.bf16.msra.mxu0 %v1778
  %1959 = vmatpush.bf16.msra.mxu0 %v1774
  %1960 = vmatmul.bf16.gmra.mxu0 %v1514
  %v1961 = vpop.f32.mrf.mxu0
  %v1962 = vadd.f32 0.0, %v1961
  %v1963 = vpop.f32.mrf.mxu0
  %1964 = vdwg.mxu0
  %1965 = vmatpush.bf16.msra.mxu0 %v1834
  %1966 = vmatpush.bf16.msra.mxu0 %v1830
  %1967 = vmatpush.bf16.msra.mxu0 %v1826
  %1968 = vmatpush.bf16.msra.mxu0 %v1822
  %1969 = vmatpush.bf16.msra.mxu0 %v1818
  %1970 = vmatpush.bf16.msra.mxu0 %v1814
  %1971 = vmatpush.bf16.msra.mxu0 %v1810
  %1972 = vmatpush.bf16.msra.mxu0 %v1806
  %1973 = vmatmul.bf16.gmra.mxu0 %v1515
  %v1974 = vpop.f32.mrf.mxu0
  %v1975 = vadd.f32 %v1962, %v1974
  %v1976 = vpop.f32.mrf.mxu0
  %1977 = vdwg.mxu0
  %1978 = vmatpush.bf16.msra.mxu0 %v1803
  %1979 = vmatpush.bf16.msra.mxu0 %v1799
  %1980 = vmatpush.bf16.msra.mxu0 %v1795
  %1981 = vmatpush.bf16.msra.mxu0 %v1791
  %1982 = vmatpush.bf16.msra.mxu0 %v1787
  %1983 = vmatpush.bf16.msra.mxu0 %v1783
  %1984 = vmatpush.bf16.msra.mxu0 %v1779
  %1985 = vmatpush.bf16.msra.mxu0 %v1775
  %1986 = vmatmul.bf16.gmra.mxu0 %v1514
  %v1987 = vpop.f32.mrf.mxu0
  %v1988 = vadd.f32 0.0, %v1987
  %v1989 = vpop.f32.mrf.mxu0
  %1990 = vdwg.mxu0
  %1991 = vmatpush.bf16.msra.mxu0 %v1835
  %1992 = vmatpush.bf16.msra.mxu0 %v1831
  %1993 = vmatpush.bf16.msra.mxu0 %v1827
  %1994 = vmatpush.bf16.msra.mxu0 %v1823
  %1995 = vmatpush.bf16.msra.mxu0 %v1819
  %1996 = vmatpush.bf16.msra.mxu0 %v1815
  %1997 = vmatpush.bf16.msra.mxu0 %v1811
  %1998 = vmatpush.bf16.msra.mxu0 %v1807
  %1999 = vmatmul.bf16.gmra.mxu0 %v1515
  %v2000 = vpop.f32.mrf.mxu0
  %v2001 = vadd.f32 %v1988, %v2000
  %v2002 = vpop.f32.mrf.mxu0
  %2003 = vdwg.mxu0
  %v2068 = vunpack.c.l.b16 %v1177
  %v2069 = vunpack.c.h.b16 %v1177
  %v2070 = vunpack.c.l.b16 %v1178
  %v2071 = vunpack.c.h.b16 %v1178
  %v2072 = vunpack.c.l.b16 %v1179
  %v2073 = vunpack.c.h.b16 %v1179
  %v2074 = vunpack.c.l.b16 %v1180
  %v2075 = vunpack.c.h.b16 %v1180
  %v2076 = vunpack.c.l.b16 %v1181
  %v2077 = vunpack.c.h.b16 %v1181
  %v2078 = vunpack.c.l.b16 %v1182
  %v2079 = vunpack.c.h.b16 %v1182
  %v2080 = vunpack.c.l.b16 %v1183
  %v2081 = vunpack.c.h.b16 %v1183
  %v2082 = vunpack.c.l.b16 %v1184
  %v2083 = vunpack.c.h.b16 %v1184
  %v2084 = vunpack.c.l.b16 %v1185
  %v2085 = vunpack.c.h.b16 %v1185
  %v2086 = vunpack.c.l.b16 %v1186
  %v2087 = vunpack.c.h.b16 %v1186
  %v2088 = vunpack.c.l.b16 %v1187
  %v2089 = vunpack.c.h.b16 %v1187
  %v2090 = vunpack.c.l.b16 %v1188
  %v2091 = vunpack.c.h.b16 %v1188
  %v2092 = vunpack.c.l.b16 %v1189
  %v2093 = vunpack.c.h.b16 %v1189
  %v2094 = vunpack.c.l.b16 %v1190
  %v2095 = vunpack.c.h.b16 %v1190
  %v2096 = vunpack.c.l.b16 %v1191
  %v2097 = vunpack.c.h.b16 %v1191
  %v2098 = vunpack.c.l.b16 %v1192
  %v2099 = vunpack.c.h.b16 %v1192
  %v2100 = vunpack.c.l.b16 %v1193
  %v2101 = vunpack.c.h.b16 %v1193
  %v2102 = vunpack.c.l.b16 %v1194
  %v2103 = vunpack.c.h.b16 %v1194
  %v2104 = vunpack.c.l.b16 %v1195
  %v2105 = vunpack.c.h.b16 %v1195
  %v2106 = vunpack.c.l.b16 %v1196
  %v2107 = vunpack.c.h.b16 %v1196
  %v2108 = vunpack.c.l.b16 %v1197
  %v2109 = vunpack.c.h.b16 %v1197
  %v2110 = vunpack.c.l.b16 %v1198
  %v2111 = vunpack.c.h.b16 %v1198
  %v2112 = vunpack.c.l.b16 %v1199
  %v2113 = vunpack.c.h.b16 %v1199
  %v2114 = vunpack.c.l.b16 %v1200
  %v2115 = vunpack.c.h.b16 %v1200
  %v2116 = vunpack.c.l.b16 %v1201
  %v2117 = vunpack.c.h.b16 %v1201
  %v2118 = vunpack.c.l.b16 %v1202
  %v2119 = vunpack.c.h.b16 %v1202
  %v2120 = vunpack.c.l.b16 %v1203
  %v2121 = vunpack.c.h.b16 %v1203
  %v2122 = vunpack.c.l.b16 %v1204
  %v2123 = vunpack.c.h.b16 %v1204
  %v2124 = vunpack.c.l.b16 %v1205
  %v2125 = vunpack.c.h.b16 %v1205
  %v2126 = vunpack.c.l.b16 %v1206
  %v2127 = vunpack.c.h.b16 %v1206
  %v2128 = vunpack.c.l.b16 %v1207
  %v2129 = vunpack.c.h.b16 %v1207
  %v2130 = vunpack.c.l.b16 %v1208
  %v2131 = vunpack.c.h.b16 %v1208
  %v2132 = vunpack.c.l.b16 %v1209
  %v2133 = vunpack.c.h.b16 %v1209
  %v2134 = vunpack.c.l.b16 %v1210
  %v2135 = vunpack.c.h.b16 %v1210
  %v2136 = vunpack.c.l.b16 %v1211
  %v2137 = vunpack.c.h.b16 %v1211
  %v2138 = vunpack.c.l.b16 %v1212
  %v2139 = vunpack.c.h.b16 %v1212
  %v2140 = vunpack.c.l.b16 %v1213
  %v2141 = vunpack.c.h.b16 %v1213
  %v2142 = vunpack.c.l.b16 %v1214
  %v2143 = vunpack.c.h.b16 %v1214
  %v2144 = vunpack.c.l.b16 %v1215
  %v2145 = vunpack.c.h.b16 %v1215
  %v2146 = vunpack.c.l.b16 %v1216
  %v2147 = vunpack.c.h.b16 %v1216
  %v2148 = vunpack.c.l.b16 %v1217
  %v2149 = vunpack.c.h.b16 %v1217
  %v2150 = vunpack.c.l.b16 %v1218
  %v2151 = vunpack.c.h.b16 %v1218
  %v2152 = vunpack.c.l.b16 %v1219
  %v2153 = vunpack.c.h.b16 %v1219
  %v2154 = vunpack.c.l.b16 %v1220
  %v2155 = vunpack.c.h.b16 %v1220
  %v2156 = vunpack.c.l.b16 %v1221
  %v2157 = vunpack.c.h.b16 %v1221
  %v2158 = vunpack.c.l.b16 %v1222
  %v2159 = vunpack.c.h.b16 %v1222
  %v2160 = vunpack.c.l.b16 %v1223
  %v2161 = vunpack.c.h.b16 %v1223
  %v2162 = vunpack.c.l.b16 %v1224
  %v2163 = vunpack.c.h.b16 %v1224
  %v2164 = vunpack.c.l.b16 %v1225
  %v2165 = vunpack.c.h.b16 %v1225
  %v2166 = vunpack.c.l.b16 %v1226
  %v2167 = vunpack.c.h.b16 %v1226
  %v2168 = vunpack.c.l.b16 %v1227
  %v2169 = vunpack.c.h.b16 %v1227
  %v2170 = vunpack.c.l.b16 %v1228
  %v2171 = vunpack.c.h.b16 %v1228
  %v2172 = vunpack.c.l.b16 %v1229
  %v2173 = vunpack.c.h.b16 %v1229
  %v2174 = vunpack.c.l.b16 %v1230
  %v2175 = vunpack.c.h.b16 %v1230
  %v2176 = vunpack.c.l.b16 %v1231
  %v2177 = vunpack.c.h.b16 %v1231
  %v2178 = vunpack.c.l.b16 %v1232
  %v2179 = vunpack.c.h.b16 %v1232
  %v2180 = vunpack.c.l.b16 %v1233
  %v2181 = vunpack.c.h.b16 %v1233
  %v2182 = vunpack.c.l.b16 %v1234
  %v2183 = vunpack.c.h.b16 %v1234
  %v2184 = vunpack.c.l.b16 %v1235
  %v2185 = vunpack.c.h.b16 %v1235
  %v2186 = vunpack.c.l.b16 %v1236
  %v2187 = vunpack.c.h.b16 %v1236
  %v2188 = vunpack.c.l.b16 %v1237
  %v2189 = vunpack.c.h.b16 %v1237
  %v2190 = vunpack.c.l.b16 %v1238
  %v2191 = vunpack.c.h.b16 %v1238
  %v2192 = vunpack.c.l.b16 %v1239
  %v2193 = vunpack.c.h.b16 %v1239
  %v2194 = vunpack.c.l.b16 %v1240
  %v2195 = vunpack.c.h.b16 %v1240
  %v2196 = vpack.c.b16 %v2072, %v2068
  %v2197 = vpack.c.b16 %v2073, %v2069
  %v2198 = vpack.c.b16 %v2074, %v2070
  %v2199 = vpack.c.b16 %v2075, %v2071
  %v2200 = vpack.c.b16 %v2080, %v2076
  %v2201 = vpack.c.b16 %v2081, %v2077
  %v2202 = vpack.c.b16 %v2082, %v2078
  %v2203 = vpack.c.b16 %v2083, %v2079
  %v2204 = vpack.c.b16 %v2088, %v2084
  %v2205 = vpack.c.b16 %v2089, %v2085
  %v2206 = vpack.c.b16 %v2090, %v2086
  %v2207 = vpack.c.b16 %v2091, %v2087
  %v2208 = vpack.c.b16 %v2096, %v2092
  %v2209 = vpack.c.b16 %v2097, %v2093
  %v2210 = vpack.c.b16 %v2098, %v2094
  %v2211 = vpack.c.b16 %v2099, %v2095
  %v2212 = vpack.c.b16 %v2104, %v2100
  %v2213 = vpack.c.b16 %v2105, %v2101
  %v2214 = vpack.c.b16 %v2106, %v2102
  %v2215 = vpack.c.b16 %v2107, %v2103
  %v2216 = vpack.c.b16 %v2112, %v2108
  %v2217 = vpack.c.b16 %v2113, %v2109
  %v2218 = vpack.c.b16 %v2114, %v2110
  %v2219 = vpack.c.b16 %v2115, %v2111
  %v2220 = vpack.c.b16 %v2120, %v2116
  %v2221 = vpack.c.b16 %v2121, %v2117
  %v2222 = vpack.c.b16 %v2122, %v2118
  %v2223 = vpack.c.b16 %v2123, %v2119
  %v2224 = vpack.c.b16 %v2128, %v2124
  %v2225 = vpack.c.b16 %v2129, %v2125
  %v2226 = vpack.c.b16 %v2130, %v2126
  %v2227 = vpack.c.b16 %v2131, %v2127
  %v2228 = vpack.c.b16 %v2136, %v2132
  %v2229 = vpack.c.b16 %v2137, %v2133
  %v2230 = vpack.c.b16 %v2138, %v2134
  %v2231 = vpack.c.b16 %v2139, %v2135
  %v2232 = vpack.c.b16 %v2144, %v2140
  %v2233 = vpack.c.b16 %v2145, %v2141
  %v2234 = vpack.c.b16 %v2146, %v2142
  %v2235 = vpack.c.b16 %v2147, %v2143
  %v2236 = vpack.c.b16 %v2152, %v2148
  %v2237 = vpack.c.b16 %v2153, %v2149
  %v2238 = vpack.c.b16 %v2154, %v2150
  %v2239 = vpack.c.b16 %v2155, %v2151
  %v2240 = vpack.c.b16 %v2160, %v2156
  %v2241 = vpack.c.b16 %v2161, %v2157
  %v2242 = vpack.c.b16 %v2162, %v2158
  %v2243 = vpack.c.b16 %v2163, %v2159
  %v2244 = vpack.c.b16 %v2168, %v2164
  %v2245 = vpack.c.b16 %v2169, %v2165
  %v2246 = vpack.c.b16 %v2170, %v2166
  %v2247 = vpack.c.b16 %v2171, %v2167
  %v2248 = vpack.c.b16 %v2176, %v2172
  %v2249 = vpack.c.b16 %v2177, %v2173
  %v2250 = vpack.c.b16 %v2178, %v2174
  %v2251 = vpack.c.b16 %v2179, %v2175
  %v2252 = vpack.c.b16 %v2184, %v2180
  %v2253 = vpack.c.b16 %v2185, %v2181
  %v2254 = vpack.c.b16 %v2186, %v2182
  %v2255 = vpack.c.b16 %v2187, %v2183
  %v2256 = vpack.c.b16 %v2192, %v2188
  %v2257 = vpack.c.b16 %v2193, %v2189
  %v2258 = vpack.c.b16 %v2194, %v2190
  %v2259 = vpack.c.b16 %v2195, %v2191
  %2324 = vmatpush.bf16.msra.mxu0 %v2224
  %2325 = vmatpush.bf16.msra.mxu0 %v2220
  %2326 = vmatpush.bf16.msra.mxu0 %v2216
  %2327 = vmatpush.bf16.msra.mxu0 %v2212
  %2328 = vmatpush.bf16.msra.mxu0 %v2208
  %2329 = vmatpush.bf16.msra.mxu0 %v2204
  %2330 = vmatpush.bf16.msra.mxu0 %v2200
  %2331 = vmatpush.bf16.msra.mxu0 %v2196
  %2332 = vmatmul.bf16.gmra.mxu0 %v1175
  %v2333 = vpop.f32.mrf.mxu0
  %v2334 = vadd.f32 %v1923, %v2333
  %v2335 = vpop.f32.mrf.mxu0
  %2336 = vdwg.mxu0
  %2337 = vmatpush.bf16.msra.mxu0 %v2256
  %2338 = vmatpush.bf16.msra.mxu0 %v2252
  %2339 = vmatpush.bf16.msra.mxu0 %v2248
  %2340 = vmatpush.bf16.msra.mxu0 %v2244
  %2341 = vmatpush.bf16.msra.mxu0 %v2240
  %2342 = vmatpush.bf16.msra.mxu0 %v2236
  %2343 = vmatpush.bf16.msra.mxu0 %v2232
  %2344 = vmatpush.bf16.msra.mxu0 %v2228
  %2345 = vmatmul.bf16.gmra.mxu0 %v1176
  %v2346 = vpop.f32.mrf.mxu0
  %v2347 = vadd.f32 %v2334, %v2346
  %v2348 = vpop.f32.mrf.mxu0
  %2349 = vdwg.mxu0
  %2350 = vmatpush.bf16.msra.mxu0 %v2225
  %2351 = vmatpush.bf16.msra.mxu0 %v2221
  %2352 = vmatpush.bf16.msra.mxu0 %v2217
  %2353 = vmatpush.bf16.msra.mxu0 %v2213
  %2354 = vmatpush.bf16.msra.mxu0 %v2209
  %2355 = vmatpush.bf16.msra.mxu0 %v2205
  %2356 = vmatpush.bf16.msra.mxu0 %v2201
  %2357 = vmatpush.bf16.msra.mxu0 %v2197
  %2358 = vmatmul.bf16.gmra.mxu0 %v1175
  %v2359 = vpop.f32.mrf.mxu0
  %v2360 = vadd.f32 %v1949, %v2359
  %v2361 = vpop.f32.mrf.mxu0
  %2362 = vdwg.mxu0
  %2363 = vmatpush.bf16.msra.mxu0 %v2257
  %2364 = vmatpush.bf16.msra.mxu0 %v2253
  %2365 = vmatpush.bf16.msra.mxu0 %v2249
  %2366 = vmatpush.bf16.msra.mxu0 %v2245
  %2367 = vmatpush.bf16.msra.mxu0 %v2241
  %2368 = vmatpush.bf16.msra.mxu0 %v2237
  %2369 = vmatpush.bf16.msra.mxu0 %v2233
  %2370 = vmatpush.bf16.msra.mxu0 %v2229
  %2371 = vmatmul.bf16.gmra.mxu0 %v1176
  %v2372 = vpop.f32.mrf.mxu0
  %v2373 = vadd.f32 %v2360, %v2372
  %v2374 = vpop.f32.mrf.mxu0
  %2375 = vdwg.mxu0
  %2376 = vmatpush.bf16.msra.mxu0 %v2226
  %2377 = vmatpush.bf16.msra.mxu0 %v2222
  %2378 = vmatpush.bf16.msra.mxu0 %v2218
  %2379 = vmatpush.bf16.msra.mxu0 %v2214
  %2380 = vmatpush.bf16.msra.mxu0 %v2210
  %2381 = vmatpush.bf16.msra.mxu0 %v2206
  %2382 = vmatpush.bf16.msra.mxu0 %v2202
  %2383 = vmatpush.bf16.msra.mxu0 %v2198
  %2384 = vmatmul.bf16.gmra.mxu0 %v1175
  %v2385 = vpop.f32.mrf.mxu0
  %v2386 = vadd.f32 %v1975, %v2385
  %v2387 = vpop.f32.mrf.mxu0
  %2388 = vdwg.mxu0
  %2389 = vmatpush.bf16.msra.mxu0 %v2258
  %2390 = vmatpush.bf16.msra.mxu0 %v2254
  %2391 = vmatpush.bf16.msra.mxu0 %v2250
  %2392 = vmatpush.bf16.msra.mxu0 %v2246
  %2393 = vmatpush.bf16.msra.mxu0 %v2242
  %2394 = vmatpush.bf16.msra.mxu0 %v2238
  %2395 = vmatpush.bf16.msra.mxu0 %v2234
  %2396 = vmatpush.bf16.msra.mxu0 %v2230
  %2397 = vmatmul.bf16.gmra.mxu0 %v1176
  %v2398 = vpop.f32.mrf.mxu0
  %v2399 = vadd.f32 %v2386, %v2398
  %v2400 = vpop.f32.mrf.mxu0
  %2401 = vdwg.mxu0
  %2402 = vmatpush.bf16.msra.mxu0 %v2227
  %2403 = vmatpush.bf16.msra.mxu0 %v2223
  %2404 = vmatpush.bf16.msra.mxu0 %v2219
  %2405 = vmatpush.bf16.msra.mxu0 %v2215
  %2406 = vmatpush.bf16.msra.mxu0 %v2211
  %2407 = vmatpush.bf16.msra.mxu0 %v2207
  %2408 = vmatpush.bf16.msra.mxu0 %v2203
  %2409 = vmatpush.bf16.msra.mxu0 %v2199
  %2410 = vmatmul.bf16.gmra.mxu0 %v1175
  %v2411 = vpop.f32.mrf.mxu0
  %v2412 = vadd.f32 %v2001, %v2411
  %v2413 = vpop.f32.mrf.mxu0
  %2414 = vdwg.mxu0
  %2415 = vmatpush.bf16.msra.mxu0 %v2259
  %2416 = vmatpush.bf16.msra.mxu0 %v2255
  %2417 = vmatpush.bf16.msra.mxu0 %v2251
  %2418 = vmatpush.bf16.msra.mxu0 %v2247
  %2419 = vmatpush.bf16.msra.mxu0 %v2243
  %2420 = vmatpush.bf16.msra.mxu0 %v2239
  %2421 = vmatpush.bf16.msra.mxu0 %v2235
  %2422 = vmatpush.bf16.msra.mxu0 %v2231
  %2423 = vmatmul.bf16.gmra.mxu0 %v1176
  %v2424 = vpop.f32.mrf.mxu0
  %v2425 = vadd.f32 %v2412, %v2424
  %v2426 = vpop.f32.mrf.mxu0
  %2427 = vdwg.mxu0
  %v2428 = vld [vmem:[%s0 + $0x48] sm:$0xff]
  %v2429 = vld [vmem:[%s0 + $0x50] sm:$0xff]
  %v2430 = vld [vmem:[%s0 + $0x58] sm:$0xff]
  %v2431 = vld [vmem:[%s0 + $0x60] sm:$0xff]
  %v2432 = vld [vmem:[%s0 + $0x68] sm:$0xf]
  %v2438 = vunpack.c.l.b16 %v2428
  %v2439 = vunpack.c.h.b16 %v2428
  %v2440 = vunpack.c.l.b16 %v2429
  %v2441 = vunpack.c.h.b16 %v2429
  %v2442 = vunpack.c.l.b16 %v2430
  %v2443 = vunpack.c.h.b16 %v2430
  %v2444 = vunpack.c.l.b16 %v2431
  %v2445 = vunpack.c.h.b16 %v2431
  %v2446 = vunpack.c.l.b16 %v2432
  %v2447 = vpack.c.b16 %v2438, %v2438
  %v2448 = vpack.c.b16 %v2439, %v2439
  %v2449 = vpack.c.b16 %v2440, %v2440
  %v2450 = vpack.c.b16 %v2441, %v2441
  %v2451 = vpack.c.b16 %v2442, %v2442
  %v2452 = vpack.c.b16 %v2443, %v2443
  %v2453 = vpack.c.b16 %v2444, %v2444
  %v2454 = vpack.c.b16 %v2445, %v2445
  %v2455 = vpack.c.b16 %v2446, %v2446
  %2465 = vmatpush.bf16.msra.mxu0 %v665
  %2466 = vmatpush.bf16.msra.mxu0 %v663
  %2467 = vmatpush.bf16.msra.mxu0 %v661
  %2468 = vmatpush.bf16.msra.mxu0 %v659
  %2469 = vmatpush.bf16.msra.mxu0 %v657
  %2470 = vmatpush.bf16.msra.mxu0 %v655
  %2471 = vmatpush.bf16.msra.mxu0 %v653
  %2472 = vmatpush.bf16.msra.mxu0 %v651
  %2473 = vmatmul.bf16.gmra.mxu0 %v2447
  %v2474 = vpop.f32.mrf.mxu0
  %v2475 = vadd.f32 %v183, %v2474
  %v2476 = vpop.f32.mrf.mxu0
  %2477 = vdwg.mxu0
  %2478 = vmatpush.bf16.msra.mxu0 %v681
  %2479 = vmatpush.bf16.msra.mxu0 %v679
  %2480 = vmatpush.bf16.msra.mxu0 %v677
  %2481 = vmatpush.bf16.msra.mxu0 %v675
  %2482 = vmatpush.bf16.msra.mxu0 %v673
  %2483 = vmatpush.bf16.msra.mxu0 %v671
  %2484 = vmatpush.bf16.msra.mxu0 %v669
  %2485 = vmatpush.bf16.msra.mxu0 %v667
  %2486 = vmatmul.bf16.gmra.mxu0 %v2448
  %v2487 = vpop.f32.mrf.mxu0
  %v2488 = vadd.f32 %v2475, %v2487
  %v2489 = vpop.f32.mrf.mxu0
  %2490 = vdwg.mxu0
  %2491 = vmatpush.bf16.msra.mxu0 %v697
  %2492 = vmatpush.bf16.msra.mxu0 %v695
  %2493 = vmatpush.bf16.msra.mxu0 %v693
  %2494 = vmatpush.bf16.msra.mxu0 %v691
  %2495 = vmatpush.bf16.msra.mxu0 %v689
  %2496 = vmatpush.bf16.msra.mxu0 %v687
  %2497 = vmatpush.bf16.msra.mxu0 %v685
  %2498 = vmatpush.bf16.msra.mxu0 %v683
  %2499 = vmatmul.bf16.gmra.mxu0 %v2449
  %v2500 = vpop.f32.mrf.mxu0
  %v2501 = vadd.f32 %v2488, %v2500
  %v2502 = vpop.f32.mrf.mxu0
  %2503 = vdwg.mxu0
  %2504 = vmatpush.bf16.msra.mxu0 %v713
  %2505 = vmatpush.bf16.msra.mxu0 %v711
  %2506 = vmatpush.bf16.msra.mxu0 %v709
  %2507 = vmatpush.bf16.msra.mxu0 %v707
  %2508 = vmatpush.bf16.msra.mxu0 %v705
  %2509 = vmatpush.bf16.msra.mxu0 %v703
  %2510 = vmatpush.bf16.msra.mxu0 %v701
  %2511 = vmatpush.bf16.msra.mxu0 %v699
  %2512 = vmatmul.bf16.gmra.mxu0 %v2450
  %v2513 = vpop.f32.mrf.mxu0
  %v2514 = vadd.f32 %v2501, %v2513
  %v2515 = vpop.f32.mrf.mxu0
  %2516 = vdwg.mxu0
  %2517 = vmatpush.bf16.msra.mxu0 %v729
  %2518 = vmatpush.bf16.msra.mxu0 %v727
  %2519 = vmatpush.bf16.msra.mxu0 %v725
  %2520 = vmatpush.bf16.msra.mxu0 %v723
  %2521 = vmatpush.bf16.msra.mxu0 %v721
  %2522 = vmatpush.bf16.msra.mxu0 %v719
  %2523 = vmatpush.bf16.msra.mxu0 %v717
  %2524 = vmatpush.bf16.msra.mxu0 %v715
  %2525 = vmatmul.bf16.gmra.mxu0 %v2451
  %v2526 = vpop.f32.mrf.mxu0
  %v2527 = vadd.f32 %v2514, %v2526
  %v2528 = vpop.f32.mrf.mxu0
  %2529 = vdwg.mxu0
  %2530 = vmatpush.bf16.msra.mxu0 %v745
  %2531 = vmatpush.bf16.msra.mxu0 %v743
  %2532 = vmatpush.bf16.msra.mxu0 %v741
  %2533 = vmatpush.bf16.msra.mxu0 %v739
  %2534 = vmatpush.bf16.msra.mxu0 %v737
  %2535 = vmatpush.bf16.msra.mxu0 %v735
  %2536 = vmatpush.bf16.msra.mxu0 %v733
  %2537 = vmatpush.bf16.msra.mxu0 %v731
  %2538 = vmatmul.bf16.gmra.mxu0 %v2452
  %v2539 = vpop.f32.mrf.mxu0
  %v2540 = vadd.f32 %v2527, %v2539
  %v2541 = vpop.f32.mrf.mxu0
  %2542 = vdwg.mxu0
  %2543 = vmatpush.bf16.msra.mxu0 %v761
  %2544 = vmatpush.bf16.msra.mxu0 %v759
  %2545 = vmatpush.bf16.msra.mxu0 %v757
  %2546 = vmatpush.bf16.msra.mxu0 %v755
  %2547 = vmatpush.bf16.msra.mxu0 %v753
  %2548 = vmatpush.bf16.msra.mxu0 %v751
  %2549 = vmatpush.bf16.msra.mxu0 %v749
  %2550 = vmatpush.bf16.msra.mxu0 %v747
  %2551 = vmatmul.bf16.gmra.mxu0 %v2453
  %v2552 = vpop.f32.mrf.mxu0
  %v2553 = vadd.f32 %v2540, %v2552
  %v2554 = vpop.f32.mrf.mxu0
  %2555 = vdwg.mxu0
  %2556 = vmatpush.bf16.msra.mxu0 %v777
  %2557 = vmatpush.bf16.msra.mxu0 %v775
  %2558 = vmatpush.bf16.msra.mxu0 %v773
  %2559 = vmatpush.bf16.msra.mxu0 %v771
  %2560 = vmatpush.bf16.msra.mxu0 %v769
  %2561 = vmatpush.bf16.msra.mxu0 %v767
  %2562 = vmatpush.bf16.msra.mxu0 %v765
  %2563 = vmatpush.bf16.msra.mxu0 %v763
  %2564 = vmatmul.bf16.gmra.mxu0 %v2454
  %v2565 = vpop.f32.mrf.mxu0
  %v2566 = vadd.f32 %v2553, %v2565
  %v2567 = vpop.f32.mrf.mxu0
  %2568 = vdwg.mxu0
  %2569 = vmatpush.bf16.msra.mxu0 %v793
  %2570 = vmatpush.bf16.msra.mxu0 %v791
  %2571 = vmatpush.bf16.msra.mxu0 %v789
  %2572 = vmatpush.bf16.msra.mxu0 %v787
  %2573 = vmatpush.bf16.msra.mxu0 %v785
  %2574 = vmatpush.bf16.msra.mxu0 %v783
  %2575 = vmatpush.bf16.msra.mxu0 %v781
  %2576 = vmatpush.bf16.msra.mxu0 %v779
  %2577 = vmatmul.bf16.gmra.mxu0 %v2455
  %v2578 = vpop.f32.mrf.mxu0
  %v2579 = vadd.f32 %v2566, %v2578
  %v2580 = vpop.f32.mrf.mxu0
  %2581 = vdwg.mxu0
  %2582 = vmatpush.bf16.msra.mxu0 %v666
  %2583 = vmatpush.bf16.msra.mxu0 %v664
  %2584 = vmatpush.bf16.msra.mxu0 %v662
  %2585 = vmatpush.bf16.msra.mxu0 %v660
  %2586 = vmatpush.bf16.msra.mxu0 %v658
  %2587 = vmatpush.bf16.msra.mxu0 %v656
  %2588 = vmatpush.bf16.msra.mxu0 %v654
  %2589 = vmatpush.bf16.msra.mxu0 %v652
  %2590 = vmatmul.bf16.gmra.mxu0 %v2447
  %v2591 = vpop.f32.mrf.mxu0
  %v2592 = vadd.f32 %v184, %v2591
  %v2593 = vpop.f32.mrf.mxu0
  %2594 = vdwg.mxu0
  %2595 = vmatpush.bf16.msra.mxu0 %v682
  %2596 = vmatpush.bf16.msra.mxu0 %v680
  %2597 = vmatpush.bf16.msra.mxu0 %v678
  %2598 = vmatpush.bf16.msra.mxu0 %v676
  %2599 = vmatpush.bf16.msra.mxu0 %v674
  %2600 = vmatpush.bf16.msra.mxu0 %v672
  %2601 = vmatpush.bf16.msra.mxu0 %v670
  %2602 = vmatpush.bf16.msra.mxu0 %v668
  %2603 = vmatmul.bf16.gmra.mxu0 %v2448
  %v2604 = vpop.f32.mrf.mxu0
  %v2605 = vadd.f32 %v2592, %v2604
  %v2606 = vpop.f32.mrf.mxu0
  %2607 = vdwg.mxu0
  %2608 = vmatpush.bf16.msra.mxu0 %v698
  %2609 = vmatpush.bf16.msra.mxu0 %v696
  %2610 = vmatpush.bf16.msra.mxu0 %v694
  %2611 = vmatpush.bf16.msra.mxu0 %v692
  %2612 = vmatpush.bf16.msra.mxu0 %v690
  %2613 = vmatpush.bf16.msra.mxu0 %v688
  %2614 = vmatpush.bf16.msra.mxu0 %v686
  %2615 = vmatpush.bf16.msra.mxu0 %v684
  %2616 = vmatmul.bf16.gmra.mxu0 %v2449
  %v2617 = vpop.f32.mrf.mxu0
  %v2618 = vadd.f32 %v2605, %v2617
  %v2619 = vpop.f32.mrf.mxu0
  %2620 = vdwg.mxu0
  %2621 = vmatpush.bf16.msra.mxu0 %v714
  %2622 = vmatpush.bf16.msra.mxu0 %v712
  %2623 = vmatpush.bf16.msra.mxu0 %v710
  %2624 = vmatpush.bf16.msra.mxu0 %v708
  %2625 = vmatpush.bf16.msra.mxu0 %v706
  %2626 = vmatpush.bf16.msra.mxu0 %v704
  %2627 = vmatpush.bf16.msra.mxu0 %v702
  %2628 = vmatpush.bf16.msra.mxu0 %v700
  %2629 = vmatmul.bf16.gmra.mxu0 %v2450
  %v2630 = vpop.f32.mrf.mxu0
  %v2631 = vadd.f32 %v2618, %v2630
  %v2632 = vpop.f32.mrf.mxu0
  %2633 = vdwg.mxu0
  %2634 = vmatpush.bf16.msra.mxu0 %v730
  %2635 = vmatpush.bf16.msra.mxu0 %v728
  %2636 = vmatpush.bf16.msra.mxu0 %v726
  %2637 = vmatpush.bf16.msra.mxu0 %v724
  %2638 = vmatpush.bf16.msra.mxu0 %v722
  %2639 = vmatpush.bf16.msra.mxu0 %v720
  %2640 = vmatpush.bf16.msra.mxu0 %v718
  %2641 = vmatpush.bf16.msra.mxu0 %v716
  %2642 = vmatmul.bf16.gmra.mxu0 %v2451
  %v2643 = vpop.f32.mrf.mxu0
  %v2644 = vadd.f32 %v2631, %v2643
  %v2645 = vpop.f32.mrf.mxu0
  %2646 = vdwg.mxu0
  %2647 = vmatpush.bf16.msra.mxu0 %v746
  %2648 = vmatpush.bf16.msra.mxu0 %v744
  %2649 = vmatpush.bf16.msra.mxu0 %v742
  %2650 = vmatpush.bf16.msra.mxu0 %v740
  %2651 = vmatpush.bf16.msra.mxu0 %v738
  %2652 = vmatpush.bf16.msra.mxu0 %v736
  %2653 = vmatpush.bf16.msra.mxu0 %v734
  %2654 = vmatpush.bf16.msra.mxu0 %v732
  %2655 = vmatmul.bf16.gmra.mxu0 %v2452
  %v2656 = vpop.f32.mrf.mxu0
  %v2657 = vadd.f32 %v2644, %v2656
  %v2658 = vpop.f32.mrf.mxu0
  %2659 = vdwg.mxu0
  %2660 = vmatpush.bf16.msra.mxu0 %v762
  %2661 = vmatpush.bf16.msra.mxu0 %v760
  %2662 = vmatpush.bf16.msra.mxu0 %v758
  %2663 = vmatpush.bf16.msra.mxu0 %v756
  %2664 = vmatpush.bf16.msra.mxu0 %v754
  %2665 = vmatpush.bf16.msra.mxu0 %v752
  %2666 = vmatpush.bf16.msra.mxu0 %v750
  %2667 = vmatpush.bf16.msra.mxu0 %v748
  %2668 = vmatmul.bf16.gmra.mxu0 %v2453
  %v2669 = vpop.f32.mrf.mxu0
  %v2670 = vadd.f32 %v2657, %v2669
  %v2671 = vpop.f32.mrf.mxu0
  %2672 = vdwg.mxu0
  %2673 = vmatpush.bf16.msra.mxu0 %v778
  %2674 = vmatpush.bf16.msra.mxu0 %v776
  %2675 = vmatpush.bf16.msra.mxu0 %v774
  %2676 = vmatpush.bf16.msra.mxu0 %v772
  %2677 = vmatpush.bf16.msra.mxu0 %v770
  %2678 = vmatpush.bf16.msra.mxu0 %v768
  %2679 = vmatpush.bf16.msra.mxu0 %v766
  %2680 = vmatpush.bf16.msra.mxu0 %v764
  %2681 = vmatmul.bf16.gmra.mxu0 %v2454
  %v2682 = vpop.f32.mrf.mxu0
  %v2683 = vadd.f32 %v2670, %v2682
  %v2684 = vpop.f32.mrf.mxu0
  %2685 = vdwg.mxu0
  %2686 = vmatpush.bf16.msra.mxu0 %v794
  %2687 = vmatpush.bf16.msra.mxu0 %v792
  %2688 = vmatpush.bf16.msra.mxu0 %v790
  %2689 = vmatpush.bf16.msra.mxu0 %v788
  %2690 = vmatpush.bf16.msra.mxu0 %v786
  %2691 = vmatpush.bf16.msra.mxu0 %v784
  %2692 = vmatpush.bf16.msra.mxu0 %v782
  %2693 = vmatpush.bf16.msra.mxu0 %v780
  %2694 = vmatmul.bf16.gmra.mxu0 %v2455
  %v2695 = vpop.f32.mrf.mxu0
  %v2696 = vadd.f32 %v2683, %v2695
  %v2697 = vpop.f32.mrf.mxu0
  %2698 = vdwg.mxu0
  %v2699 = vmax.f32 %v2579, 0.0
  %v2700 = vmax.f32 %v2696, 0.0
  %v2701 = vpack.c.bf16 %v2699, %v2699
  %v2702 = vpack.c.bf16 %v2700, %v2700
  %v2703 = vld [vmem:[%s3 + $0x400] sm:$0xff]
  %v2704 = vld [vmem:[%s3 + $0x408] sm:$0xff]
  %v2705 = vld [vmem:[%s3 + $0x410] sm:$0xff]
  %v2706 = vld [vmem:[%s3 + $0x418] sm:$0xff]
  %v2707 = vld [vmem:[%s3 + $0x420] sm:$0xff]
  %v2708 = vld [vmem:[%s3 + $0x428] sm:$0xff]
  %v2709 = vld [vmem:[%s3 + $0x430] sm:$0xff]
  %v2710 = vld [vmem:[%s3 + $0x438] sm:$0xff]
  %v2711 = vld [vmem:[%s3 + $0x440] sm:$0xff]
  %v2712 = vld [vmem:[%s3 + $0x448] sm:$0xff]
  %v2713 = vld [vmem:[%s3 + $0x450] sm:$0xff]
  %v2714 = vld [vmem:[%s3 + $0x458] sm:$0xff]
  %v2715 = vld [vmem:[%s3 + $0x460] sm:$0xff]
  %v2716 = vld [vmem:[%s3 + $0x468] sm:$0xff]
  %v2717 = vld [vmem:[%s3 + $0x470] sm:$0xff]
  %v2718 = vld [vmem:[%s3 + $0x478] sm:$0xff]
  %v2719 = vld [vmem:[%s3 + $0x480] sm:$0xff]
  %v2720 = vld [vmem:[%s3 + $0x488] sm:$0xff]
  %v2721 = vld [vmem:[%s3 + $0x490] sm:$0xff]
  %v2722 = vld [vmem:[%s3 + $0x498] sm:$0xff]
  %v2723 = vld [vmem:[%s3 + $0x4a0] sm:$0xff]
  %v2724 = vld [vmem:[%s3 + $0x4a8] sm:$0xff]
  %v2725 = vld [vmem:[%s3 + $0x4b0] sm:$0xff]
  %v2726 = vld [vmem:[%s3 + $0x4b8] sm:$0xff]
  %v2727 = vld [vmem:[%s3 + $0x4c0] sm:$0xff]
  %v2728 = vld [vmem:[%s3 + $0x4c8] sm:$0xff]
  %v2729 = vld [vmem:[%s3 + $0x4d0] sm:$0xff]
  %v2730 = vld [vmem:[%s3 + $0x4d8] sm:$0xff]
  %v2731 = vld [vmem:[%s3 + $0x4e0] sm:$0xff]
  %v2732 = vld [vmem:[%s3 + $0x4e8] sm:$0xff]
  %v2733 = vld [vmem:[%s3 + $0x4f0] sm:$0xff]
  %v2734 = vld [vmem:[%s3 + $0x4f8] sm:$0xff]
  %v2735 = vld [vmem:[%s3 + $0x500] sm:$0xff]
  %v2736 = vld [vmem:[%s3 + $0x508] sm:$0xff]
  %v2737 = vld [vmem:[%s3 + $0x510] sm:$0xff]
  %v2738 = vld [vmem:[%s3 + $0x518] sm:$0xff]
  %v2739 = vld [vmem:[%s3 + $0x520] sm:$0xff]
  %v2740 = vld [vmem:[%s3 + $0x528] sm:$0xff]
  %v2741 = vld [vmem:[%s3 + $0x530] sm:$0xff]
  %v2742 = vld [vmem:[%s3 + $0x538] sm:$0xff]
  %v2743 = vld [vmem:[%s3 + $0x540] sm:$0xff]
  %v2744 = vld [vmem:[%s3 + $0x548] sm:$0xff]
  %v2745 = vld [vmem:[%s3 + $0x550] sm:$0xff]
  %v2746 = vld [vmem:[%s3 + $0x558] sm:$0xff]
  %v2747 = vld [vmem:[%s3 + $0x560] sm:$0xff]
  %v2748 = vld [vmem:[%s3 + $0x568] sm:$0xff]
  %v2749 = vld [vmem:[%s3 + $0x570] sm:$0xff]
  %v2750 = vld [vmem:[%s3 + $0x578] sm:$0xff]
  %v2751 = vld [vmem:[%s3 + $0x580] sm:$0xff]
  %v2752 = vld [vmem:[%s3 + $0x588] sm:$0xff]
  %v2753 = vld [vmem:[%s3 + $0x590] sm:$0xff]
  %v2754 = vld [vmem:[%s3 + $0x598] sm:$0xff]
  %v2755 = vld [vmem:[%s3 + $0x5a0] sm:$0xff]
  %v2756 = vld [vmem:[%s3 + $0x5a8] sm:$0xff]
  %v2757 = vld [vmem:[%s3 + $0x5b0] sm:$0xff]
  %v2758 = vld [vmem:[%s3 + $0x5b8] sm:$0xff]
  %v2759 = vld [vmem:[%s3 + $0x5c0] sm:$0xff]
  %v2760 = vld [vmem:[%s3 + $0x5c8] sm:$0xff]
  %v2761 = vld [vmem:[%s3 + $0x5d0] sm:$0xff]
  %v2762 = vld [vmem:[%s3 + $0x5d8] sm:$0xff]
  %v2763 = vld [vmem:[%s3 + $0x5e0] sm:$0xff]
  %v2764 = vld [vmem:[%s3 + $0x5e8] sm:$0xff]
  %v2765 = vld [vmem:[%s3 + $0x5f0] sm:$0xff]
  %v2766 = vld [vmem:[%s3 + $0x5f8] sm:$0xff]
  %v2831 = vunpack.c.l.b16 %v2703
  %v2832 = vunpack.c.h.b16 %v2703
  %v2833 = vunpack.c.l.b16 %v2704
  %v2834 = vunpack.c.h.b16 %v2704
  %v2835 = vunpack.c.l.b16 %v2705
  %v2836 = vunpack.c.h.b16 %v2705
  %v2837 = vunpack.c.l.b16 %v2706
  %v2838 = vunpack.c.h.b16 %v2706
  %v2839 = vunpack.c.l.b16 %v2707
  %v2840 = vunpack.c.h.b16 %v2707
  %v2841 = vunpack.c.l.b16 %v2708
  %v2842 = vunpack.c.h.b16 %v2708
  %v2843 = vunpack.c.l.b16 %v2709
  %v2844 = vunpack.c.h.b16 %v2709
  %v2845 = vunpack.c.l.b16 %v2710
  %v2846 = vunpack.c.h.b16 %v2710
  %v2847 = vunpack.c.l.b16 %v2711
  %v2848 = vunpack.c.h.b16 %v2711
  %v2849 = vunpack.c.l.b16 %v2712
  %v2850 = vunpack.c.h.b16 %v2712
  %v2851 = vunpack.c.l.b16 %v2713
  %v2852 = vunpack.c.h.b16 %v2713
  %v2853 = vunpack.c.l.b16 %v2714
  %v2854 = vunpack.c.h.b16 %v2714
  %v2855 = vunpack.c.l.b16 %v2715
  %v2856 = vunpack.c.h.b16 %v2715
  %v2857 = vunpack.c.l.b16 %v2716
  %v2858 = vunpack.c.h.b16 %v2716
  %v2859 = vunpack.c.l.b16 %v2717
  %v2860 = vunpack.c.h.b16 %v2717
  %v2861 = vunpack.c.l.b16 %v2718
  %v2862 = vunpack.c.h.b16 %v2718
  %v2863 = vunpack.c.l.b16 %v2719
  %v2864 = vunpack.c.h.b16 %v2719
  %v2865 = vunpack.c.l.b16 %v2720
  %v2866 = vunpack.c.h.b16 %v2720
  %v2867 = vunpack.c.l.b16 %v2721
  %v2868 = vunpack.c.h.b16 %v2721
  %v2869 = vunpack.c.l.b16 %v2722
  %v2870 = vunpack.c.h.b16 %v2722
  %v2871 = vunpack.c.l.b16 %v2723
  %v2872 = vunpack.c.h.b16 %v2723
  %v2873 = vunpack.c.l.b16 %v2724
  %v2874 = vunpack.c.h.b16 %v2724
  %v2875 = vunpack.c.l.b16 %v2725
  %v2876 = vunpack.c.h.b16 %v2725
  %v2877 = vunpack.c.l.b16 %v2726
  %v2878 = vunpack.c.h.b16 %v2726
  %v2879 = vunpack.c.l.b16 %v2727
  %v2880 = vunpack.c.h.b16 %v2727
  %v2881 = vunpack.c.l.b16 %v2728
  %v2882 = vunpack.c.h.b16 %v2728
  %v2883 = vunpack.c.l.b16 %v2729
  %v2884 = vunpack.c.h.b16 %v2729
  %v2885 = vunpack.c.l.b16 %v2730
  %v2886 = vunpack.c.h.b16 %v2730
  %v2887 = vunpack.c.l.b16 %v2731
  %v2888 = vunpack.c.h.b16 %v2731
  %v2889 = vunpack.c.l.b16 %v2732
  %v2890 = vunpack.c.h.b16 %v2732
  %v2891 = vunpack.c.l.b16 %v2733
  %v2892 = vunpack.c.h.b16 %v2733
  %v2893 = vunpack.c.l.b16 %v2734
  %v2894 = vunpack.c.h.b16 %v2734
  %v2895 = vunpack.c.l.b16 %v2735
  %v2896 = vunpack.c.h.b16 %v2735
  %v2897 = vunpack.c.l.b16 %v2736
  %v2898 = vunpack.c.h.b16 %v2736
  %v2899 = vunpack.c.l.b16 %v2737
  %v2900 = vunpack.c.h.b16 %v2737
  %v2901 = vunpack.c.l.b16 %v2738
  %v2902 = vunpack.c.h.b16 %v2738
  %v2903 = vunpack.c.l.b16 %v2739
  %v2904 = vunpack.c.h.b16 %v2739
  %v2905 = vunpack.c.l.b16 %v2740
  %v2906 = vunpack.c.h.b16 %v2740
  %v2907 = vunpack.c.l.b16 %v2741
  %v2908 = vunpack.c.h.b16 %v2741
  %v2909 = vunpack.c.l.b16 %v2742
  %v2910 = vunpack.c.h.b16 %v2742
  %v2911 = vunpack.c.l.b16 %v2743
  %v2912 = vunpack.c.h.b16 %v2743
  %v2913 = vunpack.c.l.b16 %v2744
  %v2914 = vunpack.c.h.b16 %v2744
  %v2915 = vunpack.c.l.b16 %v2745
  %v2916 = vunpack.c.h.b16 %v2745
  %v2917 = vunpack.c.l.b16 %v2746
  %v2918 = vunpack.c.h.b16 %v2746
  %v2919 = vunpack.c.l.b16 %v2747
  %v2920 = vunpack.c.h.b16 %v2747
  %v2921 = vunpack.c.l.b16 %v2748
  %v2922 = vunpack.c.h.b16 %v2748
  %v2923 = vunpack.c.l.b16 %v2749
  %v2924 = vunpack.c.h.b16 %v2749
  %v2925 = vunpack.c.l.b16 %v2750
  %v2926 = vunpack.c.h.b16 %v2750
  %v2927 = vunpack.c.l.b16 %v2751
  %v2928 = vunpack.c.h.b16 %v2751
  %v2929 = vunpack.c.l.b16 %v2752
  %v2930 = vunpack.c.h.b16 %v2752
  %v2931 = vunpack.c.l.b16 %v2753
  %v2932 = vunpack.c.h.b16 %v2753
  %v2933 = vunpack.c.l.b16 %v2754
  %v2934 = vunpack.c.h.b16 %v2754
  %v2935 = vunpack.c.l.b16 %v2755
  %v2936 = vunpack.c.h.b16 %v2755
  %v2937 = vunpack.c.l.b16 %v2756
  %v2938 = vunpack.c.h.b16 %v2756
  %v2939 = vunpack.c.l.b16 %v2757
  %v2940 = vunpack.c.h.b16 %v2757
  %v2941 = vunpack.c.l.b16 %v2758
  %v2942 = vunpack.c.h.b16 %v2758
  %v2943 = vunpack.c.l.b16 %v2759
  %v2944 = vunpack.c.h.b16 %v2759
  %v2945 = vunpack.c.l.b16 %v2760
  %v2946 = vunpack.c.h.b16 %v2760
  %v2947 = vunpack.c.l.b16 %v2761
  %v2948 = vunpack.c.h.b16 %v2761
  %v2949 = vunpack.c.l.b16 %v2762
  %v2950 = vunpack.c.h.b16 %v2762
  %v2951 = vunpack.c.l.b16 %v2763
  %v2952 = vunpack.c.h.b16 %v2763
  %v2953 = vunpack.c.l.b16 %v2764
  %v2954 = vunpack.c.h.b16 %v2764
  %v2955 = vunpack.c.l.b16 %v2765
  %v2956 = vunpack.c.h.b16 %v2765
  %v2957 = vunpack.c.l.b16 %v2766
  %v2958 = vunpack.c.h.b16 %v2766
  %v2959 = vpack.c.b16 %v2835, %v2831
  %v2960 = vpack.c.b16 %v2836, %v2832
  %v2961 = vpack.c.b16 %v2837, %v2833
  %v2962 = vpack.c.b16 %v2838, %v2834
  %v2963 = vpack.c.b16 %v2843, %v2839
  %v2964 = vpack.c.b16 %v2844, %v2840
  %v2965 = vpack.c.b16 %v2845, %v2841
  %v2966 = vpack.c.b16 %v2846, %v2842
  %v2967 = vpack.c.b16 %v2851, %v2847
  %v2968 = vpack.c.b16 %v2852, %v2848
  %v2969 = vpack.c.b16 %v2853, %v2849
  %v2970 = vpack.c.b16 %v2854, %v2850
  %v2971 = vpack.c.b16 %v2859, %v2855
  %v2972 = vpack.c.b16 %v2860, %v2856
  %v2973 = vpack.c.b16 %v2861, %v2857
  %v2974 = vpack.c.b16 %v2862, %v2858
  %v2975 = vpack.c.b16 %v2867, %v2863
  %v2976 = vpack.c.b16 %v2868, %v2864
  %v2977 = vpack.c.b16 %v2869, %v2865
  %v2978 = vpack.c.b16 %v2870, %v2866
  %v2979 = vpack.c.b16 %v2875, %v2871
  %v2980 = vpack.c.b16 %v2876, %v2872
  %v2981 = vpack.c.b16 %v2877, %v2873
  %v2982 = vpack.c.b16 %v2878, %v2874
  %v2983 = vpack.c.b16 %v2883, %v2879
  %v2984 = vpack.c.b16 %v2884, %v2880
  %v2985 = vpack.c.b16 %v2885, %v2881
  %v2986 = vpack.c.b16 %v2886, %v2882
  %v2987 = vpack.c.b16 %v2891, %v2887
  %v2988 = vpack.c.b16 %v2892, %v2888
  %v2989 = vpack.c.b16 %v2893, %v2889
  %v2990 = vpack.c.b16 %v2894, %v2890
  %v2991 = vpack.c.b16 %v2899, %v2895
  %v2992 = vpack.c.b16 %v2900, %v2896
  %v2993 = vpack.c.b16 %v2901, %v2897
  %v2994 = vpack.c.b16 %v2902, %v2898
  %v2995 = vpack.c.b16 %v2907, %v2903
  %v2996 = vpack.c.b16 %v2908, %v2904
  %v2997 = vpack.c.b16 %v2909, %v2905
  %v2998 = vpack.c.b16 %v2910, %v2906
  %v2999 = vpack.c.b16 %v2915, %v2911
  %v3000 = vpack.c.b16 %v2916, %v2912
  %v3001 = vpack.c.b16 %v2917, %v2913
  %v3002 = vpack.c.b16 %v2918, %v2914
  %v3003 = vpack.c.b16 %v2923, %v2919
  %v3004 = vpack.c.b16 %v2924, %v2920
  %v3005 = vpack.c.b16 %v2925, %v2921
  %v3006 = vpack.c.b16 %v2926, %v2922
  %v3007 = vpack.c.b16 %v2931, %v2927
  %v3008 = vpack.c.b16 %v2932, %v2928
  %v3009 = vpack.c.b16 %v2933, %v2929
  %v3010 = vpack.c.b16 %v2934, %v2930
  %v3011 = vpack.c.b16 %v2939, %v2935
  %v3012 = vpack.c.b16 %v2940, %v2936
  %v3013 = vpack.c.b16 %v2941, %v2937
  %v3014 = vpack.c.b16 %v2942, %v2938
  %v3015 = vpack.c.b16 %v2947, %v2943
  %v3016 = vpack.c.b16 %v2948, %v2944
  %v3017 = vpack.c.b16 %v2949, %v2945
  %v3018 = vpack.c.b16 %v2950, %v2946
  %v3019 = vpack.c.b16 %v2955, %v2951
  %v3020 = vpack.c.b16 %v2956, %v2952
  %v3021 = vpack.c.b16 %v2957, %v2953
  %v3022 = vpack.c.b16 %v2958, %v2954
  %3087 = vmatpush.bf16.msra.mxu0 %v2987
  %3088 = vmatpush.bf16.msra.mxu0 %v2983
  %3089 = vmatpush.bf16.msra.mxu0 %v2979
  %3090 = vmatpush.bf16.msra.mxu0 %v2975
  %3091 = vmatpush.bf16.msra.mxu0 %v2971
  %3092 = vmatpush.bf16.msra.mxu0 %v2967
  %3093 = vmatpush.bf16.msra.mxu0 %v2963
  %3094 = vmatpush.bf16.msra.mxu0 %v2959
  %3095 = vmatmul.bf16.gmra.mxu0 %v2701
  %v3096 = vpop.f32.mrf.mxu0
  %v3097 = vadd.f32 0.0, %v3096
  %v3098 = vpop.f32.mrf.mxu0
  %3099 = vdwg.mxu0
  %3100 = vmatpush.bf16.msra.mxu0 %v3019
  %3101 = vmatpush.bf16.msra.mxu0 %v3015
  %3102 = vmatpush.bf16.msra.mxu0 %v3011
  %3103 = vmatpush.bf16.msra.mxu0 %v3007
  %3104 = vmatpush.bf16.msra.mxu0 %v3003
  %3105 = vmatpush.bf16.msra.mxu0 %v2999
  %3106 = vmatpush.bf16.msra.mxu0 %v2995
  %3107 = vmatpush.bf16.msra.mxu0 %v2991
  %3108 = vmatmul.bf16.gmra.mxu0 %v2702
  %v3109 = vpop.f32.mrf.mxu0
  %v3110 = vadd.f32 %v3097, %v3109
  %v3111 = vpop.f32.mrf.mxu0
  %3112 = vdwg.mxu0
  %3113 = vmatpush.bf16.msra.mxu0 %v2988
  %3114 = vmatpush.bf16.msra.mxu0 %v2984
  %3115 = vmatpush.bf16.msra.mxu0 %v2980
  %3116 = vmatpush.bf16.msra.mxu0 %v2976
  %3117 = vmatpush.bf16.msra.mxu0 %v2972
  %3118 = vmatpush.bf16.msra.mxu0 %v2968
  %3119 = vmatpush.bf16.msra.mxu0 %v2964
  %3120 = vmatpush.bf16.msra.mxu0 %v2960
  %3121 = vmatmul.bf16.gmra.mxu0 %v2701
  %v3122 = vpop.f32.mrf.mxu0
  %v3123 = vadd.f32 0.0, %v3122
  %v3124 = vpop.f32.mrf.mxu0
  %3125 = vdwg.mxu0
  %3126 = vmatpush.bf16.msra.mxu0 %v3020
  %3127 = vmatpush.bf16.msra.mxu0 %v3016
  %3128 = vmatpush.bf16.msra.mxu0 %v3012
  %3129 = vmatpush.bf16.msra.mxu0 %v3008
  %3130 = vmatpush.bf16.msra.mxu0 %v3004
  %3131 = vmatpush.bf16.msra.mxu0 %v3000
  %3132 = vmatpush.bf16.msra.mxu0 %v2996
  %3133 = vmatpush.bf16.msra.mxu0 %v2992
  %3134 = vmatmul.bf16.gmra.mxu0 %v2702
  %v3135 = vpop.f32.mrf.mxu0
  %v3136 = vadd.f32 %v3123, %v3135
  %v3137 = vpop.f32.mrf.mxu0
  %3138 = vdwg.mxu0
  %3139 = vmatpush.bf16.msra.mxu0 %v2989
  %3140 = vmatpush.bf16.msra.mxu0 %v2985
  %3141 = vmatpush.bf16.msra.mxu0 %v2981
  %3142 = vmatpush.bf16.msra.mxu0 %v2977
  %3143 = vmatpush.bf16.msra.mxu0 %v2973
  %3144 = vmatpush.bf16.msra.mxu0 %v2969
  %3145 = vmatpush.bf16.msra.mxu0 %v2965
  %3146 = vmatpush.bf16.msra.mxu0 %v2961
  %3147 = vmatmul.bf16.gmra.mxu0 %v2701
  %v3148 = vpop.f32.mrf.mxu0
  %v3149 = vadd.f32 0.0, %v3148
  %v3150 = vpop.f32.mrf.mxu0
  %3151 = vdwg.mxu0
  %3152 = vmatpush.bf16.msra.mxu0 %v3021
  %3153 = vmatpush.bf16.msra.mxu0 %v3017
  %3154 = vmatpush.bf16.msra.mxu0 %v3013
  %3155 = vmatpush.bf16.msra.mxu0 %v3009
  %3156 = vmatpush.bf16.msra.mxu0 %v3005
  %3157 = vmatpush.bf16.msra.mxu0 %v3001
  %3158 = vmatpush.bf16.msra.mxu0 %v2997
  %3159 = vmatpush.bf16.msra.mxu0 %v2993
  %3160 = vmatmul.bf16.gmra.mxu0 %v2702
  %v3161 = vpop.f32.mrf.mxu0
  %v3162 = vadd.f32 %v3149, %v3161
  %v3163 = vpop.f32.mrf.mxu0
  %3164 = vdwg.mxu0
  %3165 = vmatpush.bf16.msra.mxu0 %v2990
  %3166 = vmatpush.bf16.msra.mxu0 %v2986
  %3167 = vmatpush.bf16.msra.mxu0 %v2982
  %3168 = vmatpush.bf16.msra.mxu0 %v2978
  %3169 = vmatpush.bf16.msra.mxu0 %v2974
  %3170 = vmatpush.bf16.msra.mxu0 %v2970
  %3171 = vmatpush.bf16.msra.mxu0 %v2966
  %3172 = vmatpush.bf16.msra.mxu0 %v2962
  %3173 = vmatmul.bf16.gmra.mxu0 %v2701
  %v3174 = vpop.f32.mrf.mxu0
  %v3175 = vadd.f32 0.0, %v3174
  %v3176 = vpop.f32.mrf.mxu0
  %3177 = vdwg.mxu0
  %3178 = vmatpush.bf16.msra.mxu0 %v3022
  %3179 = vmatpush.bf16.msra.mxu0 %v3018
  %3180 = vmatpush.bf16.msra.mxu0 %v3014
  %3181 = vmatpush.bf16.msra.mxu0 %v3010
  %3182 = vmatpush.bf16.msra.mxu0 %v3006
  %3183 = vmatpush.bf16.msra.mxu0 %v3002
  %3184 = vmatpush.bf16.msra.mxu0 %v2998
  %3185 = vmatpush.bf16.msra.mxu0 %v2994
  %3186 = vmatmul.bf16.gmra.mxu0 %v2702
  %v3187 = vpop.f32.mrf.mxu0
  %v3188 = vadd.f32 %v3175, %v3187
  %v3189 = vpop.f32.mrf.mxu0
  %3190 = vdwg.mxu0
  %v3191 = vadd.f32 %v2347, %v3110
  %v3192 = vadd.f32 %v2373, %v3136
  %v3193 = vadd.f32 %v2399, %v3162
  %v3194 = vadd.f32 %v2425, %v3188
  %v3195 = vld [vmem:[%s0 + $0x6c] sm:$0xff]
  %v3196 = vld [vmem:[%s0 + $0x74] sm:$0xff]
  %v3197 = vld [vmem:[%s0 + $0x7c] sm:$0xff]
  %v3198 = vld [vmem:[%s0 + $0x84] sm:$0xff]
  %v3199 = vld [vmem:[%s0 + $0x8c] sm:$0xf]
  %v3205 = vunpack.c.l.b16 %v3195
  %v3206 = vunpack.c.h.b16 %v3195
  %v3207 = vunpack.c.l.b16 %v3196
  %v3208 = vunpack.c.h.b16 %v3196
  %v3209 = vunpack.c.l.b16 %v3197
  %v3210 = vunpack.c.h.b16 %v3197
  %v3211 = vunpack.c.l.b16 %v3198
  %v3212 = vunpack.c.h.b16 %v3198
  %v3213 = vunpack.c.l.b16 %v3199
  %v3214 = vpack.c.b16 %v3205, %v3205
  %v3215 = vpack.c.b16 %v3206, %v3206
  %v3216 = vpack.c.b16 %v3207, %v3207
  %v3217 = vpack.c.b16 %v3208, %v3208
  %v3218 = vpack.c.b16 %v3209, %v3209
  %v3219 = vpack.c.b16 %v3210, %v3210
  %v3220 = vpack.c.b16 %v3211, %v3211
  %v3221 = vpack.c.b16 %v3212, %v3212
  %v3222 = vpack.c.b16 %v3213, %v3213
  %3232 = vmatpush.bf16.msra.mxu0 %v665
  %3233 = vmatpush.bf16.msra.mxu0 %v663
  %3234 = vmatpush.bf16.msra.mxu0 %v661
  %3235 = vmatpush.bf16.msra.mxu0 %v659
  %3236 = vmatpush.bf16.msra.mxu0 %v657
  %3237 = vmatpush.bf16.msra.mxu0 %v655
  %3238 = vmatpush.bf16.msra.mxu0 %v653
  %3239 = vmatpush.bf16.msra.mxu0 %v651
  %3240 = vmatmul.bf16.gmra.mxu0 %v3214
  %v3241 = vpop.f32.mrf.mxu0
  %v3242 = vadd.f32 %v183, %v3241
  %v3243 = vpop.f32.mrf.mxu0
  %3244 = vdwg.mxu0
  %3245 = vmatpush.bf16.msra.mxu0 %v681
  %3246 = vmatpush.bf16.msra.mxu0 %v679
  %3247 = vmatpush.bf16.msra.mxu0 %v677
  %3248 = vmatpush.bf16.msra.mxu0 %v675
  %3249 = vmatpush.bf16.msra.mxu0 %v673
  %3250 = vmatpush.bf16.msra.mxu0 %v671
  %3251 = vmatpush.bf16.msra.mxu0 %v669
  %3252 = vmatpush.bf16.msra.mxu0 %v667
  %3253 = vmatmul.bf16.gmra.mxu0 %v3215
  %v3254 = vpop.f32.mrf.mxu0
  %v3255 = vadd.f32 %v3242, %v3254
  %v3256 = vpop.f32.mrf.mxu0
  %3257 = vdwg.mxu0
  %3258 = vmatpush.bf16.msra.mxu0 %v697
  %3259 = vmatpush.bf16.msra.mxu0 %v695
  %3260 = vmatpush.bf16.msra.mxu0 %v693
  %3261 = vmatpush.bf16.msra.mxu0 %v691
  %3262 = vmatpush.bf16.msra.mxu0 %v689
  %3263 = vmatpush.bf16.msra.mxu0 %v687
  %3264 = vmatpush.bf16.msra.mxu0 %v685
  %3265 = vmatpush.bf16.msra.mxu0 %v683
  %3266 = vmatmul.bf16.gmra.mxu0 %v3216
  %v3267 = vpop.f32.mrf.mxu0
  %v3268 = vadd.f32 %v3255, %v3267
  %v3269 = vpop.f32.mrf.mxu0
  %3270 = vdwg.mxu0
  %3271 = vmatpush.bf16.msra.mxu0 %v713
  %3272 = vmatpush.bf16.msra.mxu0 %v711
  %3273 = vmatpush.bf16.msra.mxu0 %v709
  %3274 = vmatpush.bf16.msra.mxu0 %v707
  %3275 = vmatpush.bf16.msra.mxu0 %v705
  %3276 = vmatpush.bf16.msra.mxu0 %v703
  %3277 = vmatpush.bf16.msra.mxu0 %v701
  %3278 = vmatpush.bf16.msra.mxu0 %v699
  %3279 = vmatmul.bf16.gmra.mxu0 %v3217
  %v3280 = vpop.f32.mrf.mxu0
  %v3281 = vadd.f32 %v3268, %v3280
  %v3282 = vpop.f32.mrf.mxu0
  %3283 = vdwg.mxu0
  %3284 = vmatpush.bf16.msra.mxu0 %v729
  %3285 = vmatpush.bf16.msra.mxu0 %v727
  %3286 = vmatpush.bf16.msra.mxu0 %v725
  %3287 = vmatpush.bf16.msra.mxu0 %v723
  %3288 = vmatpush.bf16.msra.mxu0 %v721
  %3289 = vmatpush.bf16.msra.mxu0 %v719
  %3290 = vmatpush.bf16.msra.mxu0 %v717
  %3291 = vmatpush.bf16.msra.mxu0 %v715
  %3292 = vmatmul.bf16.gmra.mxu0 %v3218
  %v3293 = vpop.f32.mrf.mxu0
  %v3294 = vadd.f32 %v3281, %v3293
  %v3295 = vpop.f32.mrf.mxu0
  %3296 = vdwg.mxu0
  %3297 = vmatpush.bf16.msra.mxu0 %v745
  %3298 = vmatpush.bf16.msra.mxu0 %v743
  %3299 = vmatpush.bf16.msra.mxu0 %v741
  %3300 = vmatpush.bf16.msra.mxu0 %v739
  %3301 = vmatpush.bf16.msra.mxu0 %v737
  %3302 = vmatpush.bf16.msra.mxu0 %v735
  %3303 = vmatpush.bf16.msra.mxu0 %v733
  %3304 = vmatpush.bf16.msra.mxu0 %v731
  %3305 = vmatmul.bf16.gmra.mxu0 %v3219
  %v3306 = vpop.f32.mrf.mxu0
  %v3307 = vadd.f32 %v3294, %v3306
  %v3308 = vpop.f32.mrf.mxu0
  %3309 = vdwg.mxu0
  %3310 = vmatpush.bf16.msra.mxu0 %v761
  %3311 = vmatpush.bf16.msra.mxu0 %v759
  %3312 = vmatpush.bf16.msra.mxu0 %v757
  %3313 = vmatpush.bf16.msra.mxu0 %v755
  %3314 = vmatpush.bf16.msra.mxu0 %v753
  %3315 = vmatpush.bf16.msra.mxu0 %v751
  %3316 = vmatpush.bf16.msra.mxu0 %v749
  %3317 = vmatpush.bf16.msra.mxu0 %v747
  %3318 = vmatmul.bf16.gmra.mxu0 %v3220
  %v3319 = vpop.f32.mrf.mxu0
  %v3320 = vadd.f32 %v3307, %v3319
  %v3321 = vpop.f32.mrf.mxu0
  %3322 = vdwg.mxu0
  %3323 = vmatpush.bf16.msra.mxu0 %v777
  %3324 = vmatpush.bf16.msra.mxu0 %v775
  %3325 = vmatpush.bf16.msra.mxu0 %v773
  %3326 = vmatpush.bf16.msra.mxu0 %v771
  %3327 = vmatpush.bf16.msra.mxu0 %v769
  %3328 = vmatpush.bf16.msra.mxu0 %v767
  %3329 = vmatpush.bf16.msra.mxu0 %v765
  %3330 = vmatpush.bf16.msra.mxu0 %v763
  %3331 = vmatmul.bf16.gmra.mxu0 %v3221
  %v3332 = vpop.f32.mrf.mxu0
  %v3333 = vadd.f32 %v3320, %v3332
  %v3334 = vpop.f32.mrf.mxu0
  %3335 = vdwg.mxu0
  %3336 = vmatpush.bf16.msra.mxu0 %v793
  %3337 = vmatpush.bf16.msra.mxu0 %v791
  %3338 = vmatpush.bf16.msra.mxu0 %v789
  %3339 = vmatpush.bf16.msra.mxu0 %v787
  %3340 = vmatpush.bf16.msra.mxu0 %v785
  %3341 = vmatpush.bf16.msra.mxu0 %v783
  %3342 = vmatpush.bf16.msra.mxu0 %v781
  %3343 = vmatpush.bf16.msra.mxu0 %v779
  %3344 = vmatmul.bf16.gmra.mxu0 %v3222
  %v3345 = vpop.f32.mrf.mxu0
  %v3346 = vadd.f32 %v3333, %v3345
  %v3347 = vpop.f32.mrf.mxu0
  %3348 = vdwg.mxu0
  %3349 = vmatpush.bf16.msra.mxu0 %v666
  %3350 = vmatpush.bf16.msra.mxu0 %v664
  %3351 = vmatpush.bf16.msra.mxu0 %v662
  %3352 = vmatpush.bf16.msra.mxu0 %v660
  %3353 = vmatpush.bf16.msra.mxu0 %v658
  %3354 = vmatpush.bf16.msra.mxu0 %v656
  %3355 = vmatpush.bf16.msra.mxu0 %v654
  %3356 = vmatpush.bf16.msra.mxu0 %v652
  %3357 = vmatmul.bf16.gmra.mxu0 %v3214
  %v3358 = vpop.f32.mrf.mxu0
  %v3359 = vadd.f32 %v184, %v3358
  %v3360 = vpop.f32.mrf.mxu0
  %3361 = vdwg.mxu0
  %3362 = vmatpush.bf16.msra.mxu0 %v682
  %3363 = vmatpush.bf16.msra.mxu0 %v680
  %3364 = vmatpush.bf16.msra.mxu0 %v678
  %3365 = vmatpush.bf16.msra.mxu0 %v676
  %3366 = vmatpush.bf16.msra.mxu0 %v674
  %3367 = vmatpush.bf16.msra.mxu0 %v672
  %3368 = vmatpush.bf16.msra.mxu0 %v670
  %3369 = vmatpush.bf16.msra.mxu0 %v668
  %3370 = vmatmul.bf16.gmra.mxu0 %v3215
  %v3371 = vpop.f32.mrf.mxu0
  %v3372 = vadd.f32 %v3359, %v3371
  %v3373 = vpop.f32.mrf.mxu0
  %3374 = vdwg.mxu0
  %3375 = vmatpush.bf16.msra.mxu0 %v698
  %3376 = vmatpush.bf16.msra.mxu0 %v696
  %3377 = vmatpush.bf16.msra.mxu0 %v694
  %3378 = vmatpush.bf16.msra.mxu0 %v692
  %3379 = vmatpush.bf16.msra.mxu0 %v690
  %3380 = vmatpush.bf16.msra.mxu0 %v688
  %3381 = vmatpush.bf16.msra.mxu0 %v686
  %3382 = vmatpush.bf16.msra.mxu0 %v684
  %3383 = vmatmul.bf16.gmra.mxu0 %v3216
  %v3384 = vpop.f32.mrf.mxu0
  %v3385 = vadd.f32 %v3372, %v3384
  %v3386 = vpop.f32.mrf.mxu0
  %3387 = vdwg.mxu0
  %3388 = vmatpush.bf16.msra.mxu0 %v714
  %3389 = vmatpush.bf16.msra.mxu0 %v712
  %3390 = vmatpush.bf16.msra.mxu0 %v710
  %3391 = vmatpush.bf16.msra.mxu0 %v708
  %3392 = vmatpush.bf16.msra.mxu0 %v706
  %3393 = vmatpush.bf16.msra.mxu0 %v704
  %3394 = vmatpush.bf16.msra.mxu0 %v702
  %3395 = vmatpush.bf16.msra.mxu0 %v700
  %3396 = vmatmul.bf16.gmra.mxu0 %v3217
  %v3397 = vpop.f32.mrf.mxu0
  %v3398 = vadd.f32 %v3385, %v3397
  %v3399 = vpop.f32.mrf.mxu0
  %3400 = vdwg.mxu0
  %3401 = vmatpush.bf16.msra.mxu0 %v730
  %3402 = vmatpush.bf16.msra.mxu0 %v728
  %3403 = vmatpush.bf16.msra.mxu0 %v726
  %3404 = vmatpush.bf16.msra.mxu0 %v724
  %3405 = vmatpush.bf16.msra.mxu0 %v722
  %3406 = vmatpush.bf16.msra.mxu0 %v720
  %3407 = vmatpush.bf16.msra.mxu0 %v718
  %3408 = vmatpush.bf16.msra.mxu0 %v716
  %3409 = vmatmul.bf16.gmra.mxu0 %v3218
  %v3410 = vpop.f32.mrf.mxu0
  %v3411 = vadd.f32 %v3398, %v3410
  %v3412 = vpop.f32.mrf.mxu0
  %3413 = vdwg.mxu0
  %3414 = vmatpush.bf16.msra.mxu0 %v746
  %3415 = vmatpush.bf16.msra.mxu0 %v744
  %3416 = vmatpush.bf16.msra.mxu0 %v742
  %3417 = vmatpush.bf16.msra.mxu0 %v740
  %3418 = vmatpush.bf16.msra.mxu0 %v738
  %3419 = vmatpush.bf16.msra.mxu0 %v736
  %3420 = vmatpush.bf16.msra.mxu0 %v734
  %3421 = vmatpush.bf16.msra.mxu0 %v732
  %3422 = vmatmul.bf16.gmra.mxu0 %v3219
  %v3423 = vpop.f32.mrf.mxu0
  %v3424 = vadd.f32 %v3411, %v3423
  %v3425 = vpop.f32.mrf.mxu0
  %3426 = vdwg.mxu0
  %3427 = vmatpush.bf16.msra.mxu0 %v762
  %3428 = vmatpush.bf16.msra.mxu0 %v760
  %3429 = vmatpush.bf16.msra.mxu0 %v758
  %3430 = vmatpush.bf16.msra.mxu0 %v756
  %3431 = vmatpush.bf16.msra.mxu0 %v754
  %3432 = vmatpush.bf16.msra.mxu0 %v752
  %3433 = vmatpush.bf16.msra.mxu0 %v750
  %3434 = vmatpush.bf16.msra.mxu0 %v748
  %3435 = vmatmul.bf16.gmra.mxu0 %v3220
  %v3436 = vpop.f32.mrf.mxu0
  %v3437 = vadd.f32 %v3424, %v3436
  %v3438 = vpop.f32.mrf.mxu0
  %3439 = vdwg.mxu0
  %3440 = vmatpush.bf16.msra.mxu0 %v778
  %3441 = vmatpush.bf16.msra.mxu0 %v776
  %3442 = vmatpush.bf16.msra.mxu0 %v774
  %3443 = vmatpush.bf16.msra.mxu0 %v772
  %3444 = vmatpush.bf16.msra.mxu0 %v770
  %3445 = vmatpush.bf16.msra.mxu0 %v768
  %3446 = vmatpush.bf16.msra.mxu0 %v766
  %3447 = vmatpush.bf16.msra.mxu0 %v764
  %3448 = vmatmul.bf16.gmra.mxu0 %v3221
  %v3449 = vpop.f32.mrf.mxu0
  %v3450 = vadd.f32 %v3437, %v3449
  %v3451 = vpop.f32.mrf.mxu0
  %3452 = vdwg.mxu0
  %3453 = vmatpush.bf16.msra.mxu0 %v794
  %3454 = vmatpush.bf16.msra.mxu0 %v792
  %3455 = vmatpush.bf16.msra.mxu0 %v790
  %3456 = vmatpush.bf16.msra.mxu0 %v788
  %3457 = vmatpush.bf16.msra.mxu0 %v786
  %3458 = vmatpush.bf16.msra.mxu0 %v784
  %3459 = vmatpush.bf16.msra.mxu0 %v782
  %3460 = vmatpush.bf16.msra.mxu0 %v780
  %3461 = vmatmul.bf16.gmra.mxu0 %v3222
  %v3462 = vpop.f32.mrf.mxu0
  %v3463 = vadd.f32 %v3450, %v3462
  %v3464 = vpop.f32.mrf.mxu0
  %3465 = vdwg.mxu0
  %v3466 = vmax.f32 %v3346, 0.0
  %v3467 = vmax.f32 %v3463, 0.0
  %v3468 = vpack.c.bf16 %v3466, %v3466
  %v3469 = vpack.c.bf16 %v3467, %v3467
  %v3470 = vld [vmem:[%s3 + $0x600] sm:$0xff]
  %v3471 = vld [vmem:[%s3 + $0x608] sm:$0xff]
  %v3472 = vld [vmem:[%s3 + $0x610] sm:$0xff]
  %v3473 = vld [vmem:[%s3 + $0x618] sm:$0xff]
  %v3474 = vld [vmem:[%s3 + $0x620] sm:$0xff]
  %v3475 = vld [vmem:[%s3 + $0x628] sm:$0xff]
  %v3476 = vld [vmem:[%s3 + $0x630] sm:$0xff]
  %v3477 = vld [vmem:[%s3 + $0x638] sm:$0xff]
  %v3478 = vld [vmem:[%s3 + $0x640] sm:$0xff]
  %v3479 = vld [vmem:[%s3 + $0x648] sm:$0xff]
  %v3480 = vld [vmem:[%s3 + $0x650] sm:$0xff]
  %v3481 = vld [vmem:[%s3 + $0x658] sm:$0xff]
  %v3482 = vld [vmem:[%s3 + $0x660] sm:$0xff]
  %v3483 = vld [vmem:[%s3 + $0x668] sm:$0xff]
  %v3484 = vld [vmem:[%s3 + $0x670] sm:$0xff]
  %v3485 = vld [vmem:[%s3 + $0x678] sm:$0xff]
  %v3486 = vld [vmem:[%s3 + $0x680] sm:$0xff]
  %v3487 = vld [vmem:[%s3 + $0x688] sm:$0xff]
  %v3488 = vld [vmem:[%s3 + $0x690] sm:$0xff]
  %v3489 = vld [vmem:[%s3 + $0x698] sm:$0xff]
  %v3490 = vld [vmem:[%s3 + $0x6a0] sm:$0xff]
  %v3491 = vld [vmem:[%s3 + $0x6a8] sm:$0xff]
  %v3492 = vld [vmem:[%s3 + $0x6b0] sm:$0xff]
  %v3493 = vld [vmem:[%s3 + $0x6b8] sm:$0xff]
  %v3494 = vld [vmem:[%s3 + $0x6c0] sm:$0xff]
  %v3495 = vld [vmem:[%s3 + $0x6c8] sm:$0xff]
  %v3496 = vld [vmem:[%s3 + $0x6d0] sm:$0xff]
  %v3497 = vld [vmem:[%s3 + $0x6d8] sm:$0xff]
  %v3498 = vld [vmem:[%s3 + $0x6e0] sm:$0xff]
  %v3499 = vld [vmem:[%s3 + $0x6e8] sm:$0xff]
  %v3500 = vld [vmem:[%s3 + $0x6f0] sm:$0xff]
  %v3501 = vld [vmem:[%s3 + $0x6f8] sm:$0xff]
  %v3502 = vld [vmem:[%s3 + $0x700] sm:$0xff]
  %v3503 = vld [vmem:[%s3 + $0x708] sm:$0xff]
  %v3504 = vld [vmem:[%s3 + $0x710] sm:$0xff]
  %v3505 = vld [vmem:[%s3 + $0x718] sm:$0xff]
  %v3506 = vld [vmem:[%s3 + $0x720] sm:$0xff]
  %v3507 = vld [vmem:[%s3 + $0x728] sm:$0xff]
  %v3508 = vld [vmem:[%s3 + $0x730] sm:$0xff]
  %v3509 = vld [vmem:[%s3 + $0x738] sm:$0xff]
  %v3510 = vld [vmem:[%s3 + $0x740] sm:$0xff]
  %v3511 = vld [vmem:[%s3 + $0x748] sm:$0xff]
  %v3512 = vld [vmem:[%s3 + $0x750] sm:$0xff]
  %v3513 = vld [vmem:[%s3 + $0x758] sm:$0xff]
  %v3514 = vld [vmem:[%s3 + $0x760] sm:$0xff]
  %v3515 = vld [vmem:[%s3 + $0x768] sm:$0xff]
  %v3516 = vld [vmem:[%s3 + $0x770] sm:$0xff]
  %v3517 = vld [vmem:[%s3 + $0x778] sm:$0xff]
  %v3518 = vld [vmem:[%s3 + $0x780] sm:$0xff]
  %v3519 = vld [vmem:[%s3 + $0x788] sm:$0xff]
  %v3520 = vld [vmem:[%s3 + $0x790] sm:$0xff]
  %v3521 = vld [vmem:[%s3 + $0x798] sm:$0xff]
  %v3522 = vld [vmem:[%s3 + $0x7a0] sm:$0xff]
  %v3523 = vld [vmem:[%s3 + $0x7a8] sm:$0xff]
  %v3524 = vld [vmem:[%s3 + $0x7b0] sm:$0xff]
  %v3525 = vld [vmem:[%s3 + $0x7b8] sm:$0xff]
  %v3526 = vld [vmem:[%s3 + $0x7c0] sm:$0xff]
  %v3527 = vld [vmem:[%s3 + $0x7c8] sm:$0xff]
  %v3528 = vld [vmem:[%s3 + $0x7d0] sm:$0xff]
  %v3529 = vld [vmem:[%s3 + $0x7d8] sm:$0xff]
  %v3530 = vld [vmem:[%s3 + $0x7e0] sm:$0xff]
  %v3531 = vld [vmem:[%s3 + $0x7e8] sm:$0xff]
  %v3532 = vld [vmem:[%s3 + $0x7f0] sm:$0xff]
  %v3533 = vld [vmem:[%s3 + $0x7f8] sm:$0xff]
  %v3598 = vunpack.c.l.b16 %v3470
  %v3599 = vunpack.c.h.b16 %v3470
  %v3600 = vunpack.c.l.b16 %v3471
  %v3601 = vunpack.c.h.b16 %v3471
  %v3602 = vunpack.c.l.b16 %v3472
  %v3603 = vunpack.c.h.b16 %v3472
  %v3604 = vunpack.c.l.b16 %v3473
  %v3605 = vunpack.c.h.b16 %v3473
  %v3606 = vunpack.c.l.b16 %v3474
  %v3607 = vunpack.c.h.b16 %v3474
  %v3608 = vunpack.c.l.b16 %v3475
  %v3609 = vunpack.c.h.b16 %v3475
  %v3610 = vunpack.c.l.b16 %v3476
  %v3611 = vunpack.c.h.b16 %v3476
  %v3612 = vunpack.c.l.b16 %v3477
  %v3613 = vunpack.c.h.b16 %v3477
  %v3614 = vunpack.c.l.b16 %v3478
  %v3615 = vunpack.c.h.b16 %v3478
  %v3616 = vunpack.c.l.b16 %v3479
  %v3617 = vunpack.c.h.b16 %v3479
  %v3618 = vunpack.c.l.b16 %v3480
  %v3619 = vunpack.c.h.b16 %v3480
  %v3620 = vunpack.c.l.b16 %v3481
  %v3621 = vunpack.c.h.b16 %v3481
  %v3622 = vunpack.c.l.b16 %v3482
  %v3623 = vunpack.c.h.b16 %v3482
  %v3624 = vunpack.c.l.b16 %v3483
  %v3625 = vunpack.c.h.b16 %v3483
  %v3626 = vunpack.c.l.b16 %v3484
  %v3627 = vunpack.c.h.b16 %v3484
  %v3628 = vunpack.c.l.b16 %v3485
  %v3629 = vunpack.c.h.b16 %v3485
  %v3630 = vunpack.c.l.b16 %v3486
  %v3631 = vunpack.c.h.b16 %v3486
  %v3632 = vunpack.c.l.b16 %v3487
  %v3633 = vunpack.c.h.b16 %v3487
  %v3634 = vunpack.c.l.b16 %v3488
  %v3635 = vunpack.c.h.b16 %v3488
  %v3636 = vunpack.c.l.b16 %v3489
  %v3637 = vunpack.c.h.b16 %v3489
  %v3638 = vunpack.c.l.b16 %v3490
  %v3639 = vunpack.c.h.b16 %v3490
  %v3640 = vunpack.c.l.b16 %v3491
  %v3641 = vunpack.c.h.b16 %v3491
  %v3642 = vunpack.c.l.b16 %v3492
  %v3643 = vunpack.c.h.b16 %v3492
  %v3644 = vunpack.c.l.b16 %v3493
  %v3645 = vunpack.c.h.b16 %v3493
  %v3646 = vunpack.c.l.b16 %v3494
  %v3647 = vunpack.c.h.b16 %v3494
  %v3648 = vunpack.c.l.b16 %v3495
  %v3649 = vunpack.c.h.b16 %v3495
  %v3650 = vunpack.c.l.b16 %v3496
  %v3651 = vunpack.c.h.b16 %v3496
  %v3652 = vunpack.c.l.b16 %v3497
  %v3653 = vunpack.c.h.b16 %v3497
  %v3654 = vunpack.c.l.b16 %v3498
  %v3655 = vunpack.c.h.b16 %v3498
  %v3656 = vunpack.c.l.b16 %v3499
  %v3657 = vunpack.c.h.b16 %v3499
  %v3658 = vunpack.c.l.b16 %v3500
  %v3659 = vunpack.c.h.b16 %v3500
  %v3660 = vunpack.c.l.b16 %v3501
  %v3661 = vunpack.c.h.b16 %v3501
  %v3662 = vunpack.c.l.b16 %v3502
  %v3663 = vunpack.c.h.b16 %v3502
  %v3664 = vunpack.c.l.b16 %v3503
  %v3665 = vunpack.c.h.b16 %v3503
  %v3666 = vunpack.c.l.b16 %v3504
  %v3667 = vunpack.c.h.b16 %v3504
  %v3668 = vunpack.c.l.b16 %v3505
  %v3669 = vunpack.c.h.b16 %v3505
  %v3670 = vunpack.c.l.b16 %v3506
  %v3671 = vunpack.c.h.b16 %v3506
  %v3672 = vunpack.c.l.b16 %v3507
  %v3673 = vunpack.c.h.b16 %v3507
  %v3674 = vunpack.c.l.b16 %v3508
  %v3675 = vunpack.c.h.b16 %v3508
  %v3676 = vunpack.c.l.b16 %v3509
  %v3677 = vunpack.c.h.b16 %v3509
  %v3678 = vunpack.c.l.b16 %v3510
  %v3679 = vunpack.c.h.b16 %v3510
  %v3680 = vunpack.c.l.b16 %v3511
  %v3681 = vunpack.c.h.b16 %v3511
  %v3682 = vunpack.c.l.b16 %v3512
  %v3683 = vunpack.c.h.b16 %v3512
  %v3684 = vunpack.c.l.b16 %v3513
  %v3685 = vunpack.c.h.b16 %v3513
  %v3686 = vunpack.c.l.b16 %v3514
  %v3687 = vunpack.c.h.b16 %v3514
  %v3688 = vunpack.c.l.b16 %v3515
  %v3689 = vunpack.c.h.b16 %v3515
  %v3690 = vunpack.c.l.b16 %v3516
  %v3691 = vunpack.c.h.b16 %v3516
  %v3692 = vunpack.c.l.b16 %v3517
  %v3693 = vunpack.c.h.b16 %v3517
  %v3694 = vunpack.c.l.b16 %v3518
  %v3695 = vunpack.c.h.b16 %v3518
  %v3696 = vunpack.c.l.b16 %v3519
  %v3697 = vunpack.c.h.b16 %v3519
  %v3698 = vunpack.c.l.b16 %v3520
  %v3699 = vunpack.c.h.b16 %v3520
  %v3700 = vunpack.c.l.b16 %v3521
  %v3701 = vunpack.c.h.b16 %v3521
  %v3702 = vunpack.c.l.b16 %v3522
  %v3703 = vunpack.c.h.b16 %v3522
  %v3704 = vunpack.c.l.b16 %v3523
  %v3705 = vunpack.c.h.b16 %v3523
  %v3706 = vunpack.c.l.b16 %v3524
  %v3707 = vunpack.c.h.b16 %v3524
  %v3708 = vunpack.c.l.b16 %v3525
  %v3709 = vunpack.c.h.b16 %v3525
  %v3710 = vunpack.c.l.b16 %v3526
  %v3711 = vunpack.c.h.b16 %v3526
  %v3712 = vunpack.c.l.b16 %v3527
  %v3713 = vunpack.c.h.b16 %v3527
  %v3714 = vunpack.c.l.b16 %v3528
  %v3715 = vunpack.c.h.b16 %v3528
  %v3716 = vunpack.c.l.b16 %v3529
  %v3717 = vunpack.c.h.b16 %v3529
  %v3718 = vunpack.c.l.b16 %v3530
  %v3719 = vunpack.c.h.b16 %v3530
  %v3720 = vunpack.c.l.b16 %v3531
  %v3721 = vunpack.c.h.b16 %v3531
  %v3722 = vunpack.c.l.b16 %v3532
  %v3723 = vunpack.c.h.b16 %v3532
  %v3724 = vunpack.c.l.b16 %v3533
  %v3725 = vunpack.c.h.b16 %v3533
  %v3726 = vpack.c.b16 %v3602, %v3598
  %v3727 = vpack.c.b16 %v3603, %v3599
  %v3728 = vpack.c.b16 %v3604, %v3600
  %v3729 = vpack.c.b16 %v3605, %v3601
  %v3730 = vpack.c.b16 %v3610, %v3606
  %v3731 = vpack.c.b16 %v3611, %v3607
  %v3732 = vpack.c.b16 %v3612, %v3608
  %v3733 = vpack.c.b16 %v3613, %v3609
  %v3734 = vpack.c.b16 %v3618, %v3614
  %v3735 = vpack.c.b16 %v3619, %v3615
  %v3736 = vpack.c.b16 %v3620, %v3616
  %v3737 = vpack.c.b16 %v3621, %v3617
  %v3738 = vpack.c.b16 %v3626, %v3622
  %v3739 = vpack.c.b16 %v3627, %v3623
  %v3740 = vpack.c.b16 %v3628, %v3624
  %v3741 = vpack.c.b16 %v3629, %v3625
  %v3742 = vpack.c.b16 %v3634, %v3630
  %v3743 = vpack.c.b16 %v3635, %v3631
  %v3744 = vpack.c.b16 %v3636, %v3632
  %v3745 = vpack.c.b16 %v3637, %v3633
  %v3746 = vpack.c.b16 %v3642, %v3638
  %v3747 = vpack.c.b16 %v3643, %v3639
  %v3748 = vpack.c.b16 %v3644, %v3640
  %v3749 = vpack.c.b16 %v3645, %v3641
  %v3750 = vpack.c.b16 %v3650, %v3646
  %v3751 = vpack.c.b16 %v3651, %v3647
  %v3752 = vpack.c.b16 %v3652, %v3648
  %v3753 = vpack.c.b16 %v3653, %v3649
  %v3754 = vpack.c.b16 %v3658, %v3654
  %v3755 = vpack.c.b16 %v3659, %v3655
  %v3756 = vpack.c.b16 %v3660, %v3656
  %v3757 = vpack.c.b16 %v3661, %v3657
  %v3758 = vpack.c.b16 %v3666, %v3662
  %v3759 = vpack.c.b16 %v3667, %v3663
  %v3760 = vpack.c.b16 %v3668, %v3664
  %v3761 = vpack.c.b16 %v3669, %v3665
  %v3762 = vpack.c.b16 %v3674, %v3670
  %v3763 = vpack.c.b16 %v3675, %v3671
  %v3764 = vpack.c.b16 %v3676, %v3672
  %v3765 = vpack.c.b16 %v3677, %v3673
  %v3766 = vpack.c.b16 %v3682, %v3678
  %v3767 = vpack.c.b16 %v3683, %v3679
  %v3768 = vpack.c.b16 %v3684, %v3680
  %v3769 = vpack.c.b16 %v3685, %v3681
  %v3770 = vpack.c.b16 %v3690, %v3686
  %v3771 = vpack.c.b16 %v3691, %v3687
  %v3772 = vpack.c.b16 %v3692, %v3688
  %v3773 = vpack.c.b16 %v3693, %v3689
  %v3774 = vpack.c.b16 %v3698, %v3694
  %v3775 = vpack.c.b16 %v3699, %v3695
  %v3776 = vpack.c.b16 %v3700, %v3696
  %v3777 = vpack.c.b16 %v3701, %v3697
  %v3778 = vpack.c.b16 %v3706, %v3702
  %v3779 = vpack.c.b16 %v3707, %v3703
  %v3780 = vpack.c.b16 %v3708, %v3704
  %v3781 = vpack.c.b16 %v3709, %v3705
  %v3782 = vpack.c.b16 %v3714, %v3710
  %v3783 = vpack.c.b16 %v3715, %v3711
  %v3784 = vpack.c.b16 %v3716, %v3712
  %v3785 = vpack.c.b16 %v3717, %v3713
  %v3786 = vpack.c.b16 %v3722, %v3718
  %v3787 = vpack.c.b16 %v3723, %v3719
  %v3788 = vpack.c.b16 %v3724, %v3720
  %v3789 = vpack.c.b16 %v3725, %v3721
  %3854 = vmatpush.bf16.msra.mxu0 %v3754
  %3855 = vmatpush.bf16.msra.mxu0 %v3750
  %3856 = vmatpush.bf16.msra.mxu0 %v3746
  %3857 = vmatpush.bf16.msra.mxu0 %v3742
  %3858 = vmatpush.bf16.msra.mxu0 %v3738
  %3859 = vmatpush.bf16.msra.mxu0 %v3734
  %3860 = vmatpush.bf16.msra.mxu0 %v3730
  %3861 = vmatpush.bf16.msra.mxu0 %v3726
  %3862 = vmatmul.bf16.gmra.mxu0 %v3468
  %v3863 = vpop.f32.mrf.mxu0
  %v3864 = vadd.f32 0.0, %v3863
  %v3865 = vpop.f32.mrf.mxu0
  %3866 = vdwg.mxu0
  %3867 = vmatpush.bf16.msra.mxu0 %v3786
  %3868 = vmatpush.bf16.msra.mxu0 %v3782
  %3869 = vmatpush.bf16.msra.mxu0 %v3778
  %3870 = vmatpush.bf16.msra.mxu0 %v3774
  %3871 = vmatpush.bf16.msra.mxu0 %v3770
  %3872 = vmatpush.bf16.msra.mxu0 %v3766
  %3873 = vmatpush.bf16.msra.mxu0 %v3762
  %3874 = vmatpush.bf16.msra.mxu0 %v3758
  %3875 = vmatmul.bf16.gmra.mxu0 %v3469
  %v3876 = vpop.f32.mrf.mxu0
  %v3877 = vadd.f32 %v3864, %v3876
  %v3878 = vpop.f32.mrf.mxu0
  %3879 = vdwg.mxu0
  %3880 = vmatpush.bf16.msra.mxu0 %v3755
  %3881 = vmatpush.bf16.msra.mxu0 %v3751
  %3882 = vmatpush.bf16.msra.mxu0 %v3747
  %3883 = vmatpush.bf16.msra.mxu0 %v3743
  %3884 = vmatpush.bf16.msra.mxu0 %v3739
  %3885 = vmatpush.bf16.msra.mxu0 %v3735
  %3886 = vmatpush.bf16.msra.mxu0 %v3731
  %3887 = vmatpush.bf16.msra.mxu0 %v3727
  %3888 = vmatmul.bf16.gmra.mxu0 %v3468
  %v3889 = vpop.f32.mrf.mxu0
  %v3890 = vadd.f32 0.0, %v3889
  %v3891 = vpop.f32.mrf.mxu0
  %3892 = vdwg.mxu0
  %3893 = vmatpush.bf16.msra.mxu0 %v3787
  %3894 = vmatpush.bf16.msra.mxu0 %v3783
  %3895 = vmatpush.bf16.msra.mxu0 %v3779
  %3896 = vmatpush.bf16.msra.mxu0 %v3775
  %3897 = vmatpush.bf16.msra.mxu0 %v3771
  %3898 = vmatpush.bf16.msra.mxu0 %v3767
  %3899 = vmatpush.bf16.msra.mxu0 %v3763
  %3900 = vmatpush.bf16.msra.mxu0 %v3759
  %3901 = vmatmul.bf16.gmra.mxu0 %v3469
  %v3902 = vpop.f32.mrf.mxu0
  %v3903 = vadd.f32 %v3890, %v3902
  %v3904 = vpop.f32.mrf.mxu0
  %3905 = vdwg.mxu0
  %3906 = vmatpush.bf16.msra.mxu0 %v3756
  %3907 = vmatpush.bf16.msra.mxu0 %v3752
  %3908 = vmatpush.bf16.msra.mxu0 %v3748
  %3909 = vmatpush.bf16.msra.mxu0 %v3744
  %3910 = vmatpush.bf16.msra.mxu0 %v3740
  %3911 = vmatpush.bf16.msra.mxu0 %v3736
  %3912 = vmatpush.bf16.msra.mxu0 %v3732
  %3913 = vmatpush.bf16.msra.mxu0 %v3728
  %3914 = vmatmul.bf16.gmra.mxu0 %v3468
  %v3915 = vpop.f32.mrf.mxu0
  %v3916 = vadd.f32 0.0, %v3915
  %v3917 = vpop.f32.mrf.mxu0
  %3918 = vdwg.mxu0
  %3919 = vmatpush.bf16.msra.mxu0 %v3788
  %3920 = vmatpush.bf16.msra.mxu0 %v3784
  %3921 = vmatpush.bf16.msra.mxu0 %v3780
  %3922 = vmatpush.bf16.msra.mxu0 %v3776
  %3923 = vmatpush.bf16.msra.mxu0 %v3772
  %3924 = vmatpush.bf16.msra.mxu0 %v3768
  %3925 = vmatpush.bf16.msra.mxu0 %v3764
  %3926 = vmatpush.bf16.msra.mxu0 %v3760
  %3927 = vmatmul.bf16.gmra.mxu0 %v3469
  %v3928 = vpop.f32.mrf.mxu0
  %v3929 = vadd.f32 %v3916, %v3928
  %v3930 = vpop.f32.mrf.mxu0
  %3931 = vdwg.mxu0
  %3932 = vmatpush.bf16.msra.mxu0 %v3757
  %3933 = vmatpush.bf16.msra.mxu0 %v3753
  %3934 = vmatpush.bf16.msra.mxu0 %v3749
  %3935 = vmatpush.bf16.msra.mxu0 %v3745
  %3936 = vmatpush.bf16.msra.mxu0 %v3741
  %3937 = vmatpush.bf16.msra.mxu0 %v3737
  %3938 = vmatpush.bf16.msra.mxu0 %v3733
  %3939 = vmatpush.bf16.msra.mxu0 %v3729
  %3940 = vmatmul.bf16.gmra.mxu0 %v3468
  %v3941 = vpop.f32.mrf.mxu0
  %v3942 = vadd.f32 0.0, %v3941
  %v3943 = vpop.f32.mrf.mxu0
  %3944 = vdwg.mxu0
  %3945 = vmatpush.bf16.msra.mxu0 %v3789
  %3946 = vmatpush.bf16.msra.mxu0 %v3785
  %3947 = vmatpush.bf16.msra.mxu0 %v3781
  %3948 = vmatpush.bf16.msra.mxu0 %v3777
  %3949 = vmatpush.bf16.msra.mxu0 %v3773
  %3950 = vmatpush.bf16.msra.mxu0 %v3769
  %3951 = vmatpush.bf16.msra.mxu0 %v3765
  %3952 = vmatpush.bf16.msra.mxu0 %v3761
  %3953 = vmatmul.bf16.gmra.mxu0 %v3469
  %v3954 = vpop.f32.mrf.mxu0
  %v3955 = vadd.f32 %v3942, %v3954
  %v3956 = vpop.f32.mrf.mxu0
  %3957 = vdwg.mxu0
  %v3958 = vadd.f32 %v3191, %v3877
  %v3959 = vadd.f32 %v3192, %v3903
  %v3960 = vadd.f32 %v3193, %v3929
  %v3961 = vadd.f32 %v3194, %v3955
  %v3962 = vld [vmem:[%s4] sm:$0xf]
  %v3964 = vperm.slane %v3962, 0
  %v3965 = vperm.slane %v3962, 1
  %v3966 = vperm.slane %v3962, 2
  %v3967 = vperm.slane %v3962, 3
  %v3972 = vadd.f32 %v3958, %v3964
  %v3973 = vadd.f32 %v3959, %v3965
  %v3974 = vadd.f32 %v3960, %v3966
  %v3975 = vadd.f32 %v3961, %v3967
  %v3976 = vmax.f32 %v3972, 0.0
  %v3977 = vmax.f32 %v3973, 0.0
  %v3978 = vmax.f32 %v3974, 0.0
  %v3979 = vmax.f32 %v3975, 0.0
  %v3980 = vpack.c.bf16 %v3976, %v3976
  %v3981 = vpack.c.bf16 %v3977, %v3977
  %v3982 = vpack.c.bf16 %v3978, %v3978
  %v3983 = vpack.c.bf16 %v3979, %v3979
  %v3984 = vld [vmem:[%s5] sm:$0xff]
  %v3985 = vld [vmem:[%s5 + $0x8] sm:$0xff]
  %v3986 = vld [vmem:[%s5 + $0x10] sm:$0xff]
  %v3987 = vld [vmem:[%s5 + $0x18] sm:$0xff]
  %v3988 = vld [vmem:[%s5 + $0x20] sm:$0xff]
  %v3989 = vld [vmem:[%s5 + $0x28] sm:$0xff]
  %v3990 = vld [vmem:[%s5 + $0x30] sm:$0xff]
  %v3991 = vld [vmem:[%s5 + $0x38] sm:$0xff]
  %v3992 = vld [vmem:[%s5 + $0x40] sm:$0xff]
  %v3993 = vld [vmem:[%s5 + $0x48] sm:$0xff]
  %v3994 = vld [vmem:[%s5 + $0x50] sm:$0xff]
  %v3995 = vld [vmem:[%s5 + $0x58] sm:$0xff]
  %v3996 = vld [vmem:[%s5 + $0x60] sm:$0xff]
  %v3997 = vld [vmem:[%s5 + $0x68] sm:$0xff]
  %v3998 = vld [vmem:[%s5 + $0x70] sm:$0xff]
  %v3999 = vld [vmem:[%s5 + $0x78] sm:$0xff]
  %v4000 = vld [vmem:[%s5 + $0x80] sm:$0xff]
  %v4001 = vld [vmem:[%s5 + $0x88] sm:$0xff]
  %v4002 = vld [vmem:[%s5 + $0x90] sm:$0xff]
  %v4003 = vld [vmem:[%s5 + $0x98] sm:$0xff]
  %v4004 = vld [vmem:[%s5 + $0xa0] sm:$0xff]
  %v4005 = vld [vmem:[%s5 + $0xa8] sm:$0xff]
  %v4006 = vld [vmem:[%s5 + $0xb0] sm:$0xff]
  %v4007 = vld [vmem:[%s5 + $0xb8] sm:$0xff]
  %v4008 = vld [vmem:[%s5 + $0xc0] sm:$0xff]
  %v4009 = vld [vmem:[%s5 + $0xc8] sm:$0xff]
  %v4010 = vld [vmem:[%s5 + $0xd0] sm:$0xff]
  %v4011 = vld [vmem:[%s5 + $0xd8] sm:$0xff]
  %v4012 = vld [vmem:[%s5 + $0xe0] sm:$0xff]
  %v4013 = vld [vmem:[%s5 + $0xe8] sm:$0xff]
  %v4014 = vld [vmem:[%s5 + $0xf0] sm:$0xff]
  %v4015 = vld [vmem:[%s5 + $0xf8] sm:$0xff]
  %v4016 = vld [vmem:[%s5 + $0x100] sm:$0xff]
  %v4017 = vld [vmem:[%s5 + $0x108] sm:$0xff]
  %v4018 = vld [vmem:[%s5 + $0x110] sm:$0xff]
  %v4019 = vld [vmem:[%s5 + $0x118] sm:$0xff]
  %v4020 = vld [vmem:[%s5 + $0x120] sm:$0xff]
  %v4021 = vld [vmem:[%s5 + $0x128] sm:$0xff]
  %v4022 = vld [vmem:[%s5 + $0x130] sm:$0xff]
  %v4023 = vld [vmem:[%s5 + $0x138] sm:$0xff]
  %v4024 = vld [vmem:[%s5 + $0x140] sm:$0xff]
  %v4025 = vld [vmem:[%s5 + $0x148] sm:$0xff]
  %v4026 = vld [vmem:[%s5 + $0x150] sm:$0xff]
  %v4027 = vld [vmem:[%s5 + $0x158] sm:$0xff]
  %v4028 = vld [vmem:[%s5 + $0x160] sm:$0xff]
  %v4029 = vld [vmem:[%s5 + $0x168] sm:$0xff]
  %v4030 = vld [vmem:[%s5 + $0x170] sm:$0xff]
  %v4031 = vld [vmem:[%s5 + $0x178] sm:$0xff]
  %v4032 = vld [vmem:[%s5 + $0x180] sm:$0xff]
  %v4033 = vld [vmem:[%s5 + $0x188] sm:$0xff]
  %v4034 = vld [vmem:[%s5 + $0x190] sm:$0xff]
  %v4035 = vld [vmem:[%s5 + $0x198] sm:$0xff]
  %v4036 = vld [vmem:[%s5 + $0x1a0] sm:$0xff]
  %v4037 = vld [vmem:[%s5 + $0x1a8] sm:$0xff]
  %v4038 = vld [vmem:[%s5 + $0x1b0] sm:$0xff]
  %v4039 = vld [vmem:[%s5 + $0x1b8] sm:$0xff]
  %v4040 = vld [vmem:[%s5 + $0x1c0] sm:$0xff]
  %v4041 = vld [vmem:[%s5 + $0x1c8] sm:$0xff]
  %v4042 = vld [vmem:[%s5 + $0x1d0] sm:$0xff]
  %v4043 = vld [vmem:[%s5 + $0x1d8] sm:$0xff]
  %v4044 = vld [vmem:[%s5 + $0x1e0] sm:$0xff]
  %v4045 = vld [vmem:[%s5 + $0x1e8] sm:$0xff]
  %v4046 = vld [vmem:[%s5 + $0x1f0] sm:$0xff]
  %v4047 = vld [vmem:[%s5 + $0x1f8] sm:$0xff]
  %v4048 = vld [vmem:[%s6] sm:$0x3]
  %v4050 = vperm.slane %v4048, 0
  %v4051 = vperm.slane %v4048, 1
  %v4118 = vunpack.c.l.b16 %v3984
  %v4119 = vunpack.c.h.b16 %v3984
  %v4120 = vunpack.c.l.b16 %v3985
  %v4121 = vunpack.c.h.b16 %v3985
  %v4122 = vunpack.c.l.b16 %v3986
  %v4123 = vunpack.c.h.b16 %v3986
  %v4124 = vunpack.c.l.b16 %v3987
  %v4125 = vunpack.c.h.b16 %v3987
  %v4126 = vunpack.c.l.b16 %v3988
  %v4127 = vunpack.c.h.b16 %v3988
  %v4128 = vunpack.c.l.b16 %v3989
  %v4129 = vunpack.c.h.b16 %v3989
  %v4130 = vunpack.c.l.b16 %v3990
  %v4131 = vunpack.c.h.b16 %v3990
  %v4132 = vunpack.c.l.b16 %v3991
  %v4133 = vunpack.c.h.b16 %v3991
  %v4134 = vunpack.c.l.b16 %v3992
  %v4135 = vunpack.c.h.b16 %v3992
  %v4136 = vunpack.c.l.b16 %v3993
  %v4137 = vunpack.c.h.b16 %v3993
  %v4138 = vunpack.c.l.b16 %v3994
  %v4139 = vunpack.c.h.b16 %v3994
  %v4140 = vunpack.c.l.b16 %v3995
  %v4141 = vunpack.c.h.b16 %v3995
  %v4142 = vunpack.c.l.b16 %v3996
  %v4143 = vunpack.c.h.b16 %v3996
  %v4144 = vunpack.c.l.b16 %v3997
  %v4145 = vunpack.c.h.b16 %v3997
  %v4146 = vunpack.c.l.b16 %v3998
  %v4147 = vunpack.c.h.b16 %v3998
  %v4148 = vunpack.c.l.b16 %v3999
  %v4149 = vunpack.c.h.b16 %v3999
  %v4150 = vunpack.c.l.b16 %v4000
  %v4151 = vunpack.c.h.b16 %v4000
  %v4152 = vunpack.c.l.b16 %v4001
  %v4153 = vunpack.c.h.b16 %v4001
  %v4154 = vunpack.c.l.b16 %v4002
  %v4155 = vunpack.c.h.b16 %v4002
  %v4156 = vunpack.c.l.b16 %v4003
  %v4157 = vunpack.c.h.b16 %v4003
  %v4158 = vunpack.c.l.b16 %v4004
  %v4159 = vunpack.c.h.b16 %v4004
  %v4160 = vunpack.c.l.b16 %v4005
  %v4161 = vunpack.c.h.b16 %v4005
  %v4162 = vunpack.c.l.b16 %v4006
  %v4163 = vunpack.c.h.b16 %v4006
  %v4164 = vunpack.c.l.b16 %v4007
  %v4165 = vunpack.c.h.b16 %v4007
  %v4166 = vunpack.c.l.b16 %v4008
  %v4167 = vunpack.c.h.b16 %v4008
  %v4168 = vunpack.c.l.b16 %v4009
  %v4169 = vunpack.c.h.b16 %v4009
  %v4170 = vunpack.c.l.b16 %v4010
  %v4171 = vunpack.c.h.b16 %v4010
  %v4172 = vunpack.c.l.b16 %v4011
  %v4173 = vunpack.c.h.b16 %v4011
  %v4174 = vunpack.c.l.b16 %v4012
  %v4175 = vunpack.c.h.b16 %v4012
  %v4176 = vunpack.c.l.b16 %v4013
  %v4177 = vunpack.c.h.b16 %v4013
  %v4178 = vunpack.c.l.b16 %v4014
  %v4179 = vunpack.c.h.b16 %v4014
  %v4180 = vunpack.c.l.b16 %v4015
  %v4181 = vunpack.c.h.b16 %v4015
  %v4182 = vunpack.c.l.b16 %v4016
  %v4183 = vunpack.c.h.b16 %v4016
  %v4184 = vunpack.c.l.b16 %v4017
  %v4185 = vunpack.c.h.b16 %v4017
  %v4186 = vunpack.c.l.b16 %v4018
  %v4187 = vunpack.c.h.b16 %v4018
  %v4188 = vunpack.c.l.b16 %v4019
  %v4189 = vunpack.c.h.b16 %v4019
  %v4190 = vunpack.c.l.b16 %v4020
  %v4191 = vunpack.c.h.b16 %v4020
  %v4192 = vunpack.c.l.b16 %v4021
  %v4193 = vunpack.c.h.b16 %v4021
  %v4194 = vunpack.c.l.b16 %v4022
  %v4195 = vunpack.c.h.b16 %v4022
  %v4196 = vunpack.c.l.b16 %v4023
  %v4197 = vunpack.c.h.b16 %v4023
  %v4198 = vunpack.c.l.b16 %v4024
  %v4199 = vunpack.c.h.b16 %v4024
  %v4200 = vunpack.c.l.b16 %v4025
  %v4201 = vunpack.c.h.b16 %v4025
  %v4202 = vunpack.c.l.b16 %v4026
  %v4203 = vunpack.c.h.b16 %v4026
  %v4204 = vunpack.c.l.b16 %v4027
  %v4205 = vunpack.c.h.b16 %v4027
  %v4206 = vunpack.c.l.b16 %v4028
  %v4207 = vunpack.c.h.b16 %v4028
  %v4208 = vunpack.c.l.b16 %v4029
  %v4209 = vunpack.c.h.b16 %v4029
  %v4210 = vunpack.c.l.b16 %v4030
  %v4211 = vunpack.c.h.b16 %v4030
  %v4212 = vunpack.c.l.b16 %v4031
  %v4213 = vunpack.c.h.b16 %v4031
  %v4214 = vunpack.c.l.b16 %v4032
  %v4215 = vunpack.c.h.b16 %v4032
  %v4216 = vunpack.c.l.b16 %v4033
  %v4217 = vunpack.c.h.b16 %v4033
  %v4218 = vunpack.c.l.b16 %v4034
  %v4219 = vunpack.c.h.b16 %v4034
  %v4220 = vunpack.c.l.b16 %v4035
  %v4221 = vunpack.c.h.b16 %v4035
  %v4222 = vunpack.c.l.b16 %v4036
  %v4223 = vunpack.c.h.b16 %v4036
  %v4224 = vunpack.c.l.b16 %v4037
  %v4225 = vunpack.c.h.b16 %v4037
  %v4226 = vunpack.c.l.b16 %v4038
  %v4227 = vunpack.c.h.b16 %v4038
  %v4228 = vunpack.c.l.b16 %v4039
  %v4229 = vunpack.c.h.b16 %v4039
  %v4230 = vunpack.c.l.b16 %v4040
  %v4231 = vunpack.c.h.b16 %v4040
  %v4232 = vunpack.c.l.b16 %v4041
  %v4233 = vunpack.c.h.b16 %v4041
  %v4234 = vunpack.c.l.b16 %v4042
  %v4235 = vunpack.c.h.b16 %v4042
  %v4236 = vunpack.c.l.b16 %v4043
  %v4237 = vunpack.c.h.b16 %v4043
  %v4238 = vunpack.c.l.b16 %v4044
  %v4239 = vunpack.c.h.b16 %v4044
  %v4240 = vunpack.c.l.b16 %v4045
  %v4241 = vunpack.c.h.b16 %v4045
  %v4242 = vunpack.c.l.b16 %v4046
  %v4243 = vunpack.c.h.b16 %v4046
  %v4244 = vunpack.c.l.b16 %v4047
  %v4245 = vunpack.c.h.b16 %v4047
  %v4246 = vpack.c.b16 %v4120, %v4118
  %v4247 = vpack.c.b16 %v4121, %v4119
  %v4248 = vpack.c.b16 %v4124, %v4122
  %v4249 = vpack.c.b16 %v4125, %v4123
  %v4250 = vpack.c.b16 %v4128, %v4126
  %v4251 = vpack.c.b16 %v4129, %v4127
  %v4252 = vpack.c.b16 %v4132, %v4130
  %v4253 = vpack.c.b16 %v4133, %v4131
  %v4254 = vpack.c.b16 %v4136, %v4134
  %v4255 = vpack.c.b16 %v4137, %v4135
  %v4256 = vpack.c.b16 %v4140, %v4138
  %v4257 = vpack.c.b16 %v4141, %v4139
  %v4258 = vpack.c.b16 %v4144, %v4142
  %v4259 = vpack.c.b16 %v4145, %v4143
  %v4260 = vpack.c.b16 %v4148, %v4146
  %v4261 = vpack.c.b16 %v4149, %v4147
  %v4262 = vpack.c.b16 %v4152, %v4150
  %v4263 = vpack.c.b16 %v4153, %v4151
  %v4264 = vpack.c.b16 %v4156, %v4154
  %v4265 = vpack.c.b16 %v4157, %v4155
  %v4266 = vpack.c.b16 %v4160, %v4158
  %v4267 = vpack.c.b16 %v4161, %v4159
  %v4268 = vpack.c.b16 %v4164, %v4162
  %v4269 = vpack.c.b16 %v4165, %v4163
  %v4270 = vpack.c.b16 %v4168, %v4166
  %v4271 = vpack.c.b16 %v4169, %v4167
  %v4272 = vpack.c.b16 %v4172, %v4170
  %v4273 = vpack.c.b16 %v4173, %v4171
  %v4274 = vpack.c.b16 %v4176, %v4174
  %v4275 = vpack.c.b16 %v4177, %v4175
  %v4276 = vpack.c.b16 %v4180, %v4178
  %v4277 = vpack.c.b16 %v4181, %v4179
  %v4278 = vpack.c.b16 %v4184, %v4182
  %v4279 = vpack.c.b16 %v4185, %v4183
  %v4280 = vpack.c.b16 %v4188, %v4186
  %v4281 = vpack.c.b16 %v4189, %v4187
  %v4282 = vpack.c.b16 %v4192, %v4190
  %v4283 = vpack.c.b16 %v4193, %v4191
  %v4284 = vpack.c.b16 %v4196, %v4194
  %v4285 = vpack.c.b16 %v4197, %v4195
  %v4286 = vpack.c.b16 %v4200, %v4198
  %v4287 = vpack.c.b16 %v4201, %v4199
  %v4288 = vpack.c.b16 %v4204, %v4202
  %v4289 = vpack.c.b16 %v4205, %v4203
  %v4290 = vpack.c.b16 %v4208, %v4206
  %v4291 = vpack.c.b16 %v4209, %v4207
  %v4292 = vpack.c.b16 %v4212, %v4210
  %v4293 = vpack.c.b16 %v4213, %v4211
  %v4294 = vpack.c.b16 %v4216, %v4214
  %v4295 = vpack.c.b16 %v4217, %v4215
  %v4296 = vpack.c.b16 %v4220, %v4218
  %v4297 = vpack.c.b16 %v4221, %v4219
  %v4298 = vpack.c.b16 %v4224, %v4222
  %v4299 = vpack.c.b16 %v4225, %v4223
  %v4300 = vpack.c.b16 %v4228, %v4226
  %v4301 = vpack.c.b16 %v4229, %v4227
  %v4302 = vpack.c.b16 %v4232, %v4230
  %v4303 = vpack.c.b16 %v4233, %v4231
  %v4304 = vpack.c.b16 %v4236, %v4234
  %v4305 = vpack.c.b16 %v4237, %v4235
  %v4306 = vpack.c.b16 %v4240, %v4238
  %v4307 = vpack.c.b16 %v4241, %v4239
  %v4308 = vpack.c.b16 %v4244, %v4242
  %v4309 = vpack.c.b16 %v4245, %v4243
  %4374 = vmatpush.bf16.msra.mxu0 %v4260
  %4375 = vmatpush.bf16.msra.mxu0 %v4258
  %4376 = vmatpush.bf16.msra.mxu0 %v4256
  %4377 = vmatpush.bf16.msra.mxu0 %v4254
  %4378 = vmatpush.bf16.msra.mxu0 %v4252
  %4379 = vmatpush.bf16.msra.mxu0 %v4250
  %4380 = vmatpush.bf16.msra.mxu0 %v4248
  %4381 = vmatpush.bf16.msra.mxu0 %v4246
  %4382 = vmatmul.bf16.gmra.mxu0 %v3980
  %v4383 = vpop.f32.mrf.mxu0
  %v4384 = vadd.f32 %v4050, %v4383
  %v4385 = vpop.f32.mrf.mxu0
  %4386 = vdwg.mxu0
  %4387 = vmatpush.bf16.msra.mxu0 %v4276
  %4388 = vmatpush.bf16.msra.mxu0 %v4274
  %4389 = vmatpush.bf16.msra.mxu0 %v4272
  %4390 = vmatpush.bf16.msra.mxu0 %v4270
  %4391 = vmatpush.bf16.msra.mxu0 %v4268
  %4392 = vmatpush.bf16.msra.mxu0 %v4266
  %4393 = vmatpush.bf16.msra.mxu0 %v4264
  %4394 = vmatpush.bf16.msra.mxu0 %v4262
  %4395 = vmatmul.bf16.gmra.mxu0 %v3981
  %v4396 = vpop.f32.mrf.mxu0
  %v4397 = vadd.f32 %v4384, %v4396
  %v4398 = vpop.f32.mrf.mxu0
  %4399 = vdwg.mxu0
  %4400 = vmatpush.bf16.msra.mxu0 %v4292
  %4401 = vmatpush.bf16.msra.mxu0 %v4290
  %4402 = vmatpush.bf16.msra.mxu0 %v4288
  %4403 = vmatpush.bf16.msra.mxu0 %v4286
  %4404 = vmatpush.bf16.msra.mxu0 %v4284
  %4405 = vmatpush.bf16.msra.mxu0 %v4282
  %4406 = vmatpush.bf16.msra.mxu0 %v4280
  %4407 = vmatpush.bf16.msra.mxu0 %v4278
  %4408 = vmatmul.bf16.gmra.mxu0 %v3982
  %v4409 = vpop.f32.mrf.mxu0
  %v4410 = vadd.f32 %v4397, %v4409
  %v4411 = vpop.f32.mrf.mxu0
  %4412 = vdwg.mxu0
  %4413 = vmatpush.bf16.msra.mxu0 %v4308
  %4414 = vmatpush.bf16.msra.mxu0 %v4306
  %4415 = vmatpush.bf16.msra.mxu0 %v4304
  %4416 = vmatpush.bf16.msra.mxu0 %v4302
  %4417 = vmatpush.bf16.msra.mxu0 %v4300
  %4418 = vmatpush.bf16.msra.mxu0 %v4298
  %4419 = vmatpush.bf16.msra.mxu0 %v4296
  %4420 = vmatpush.bf16.msra.mxu0 %v4294
  %4421 = vmatmul.bf16.gmra.mxu0 %v3983
  %v4422 = vpop.f32.mrf.mxu0
  %v4423 = vadd.f32 %v4410, %v4422
  %v4424 = vpop.f32.mrf.mxu0
  %4425 = vdwg.mxu0
  %4426 = vmatpush.bf16.msra.mxu0 %v4261
  %4427 = vmatpush.bf16.msra.mxu0 %v4259
  %4428 = vmatpush.bf16.msra.mxu0 %v4257
  %4429 = vmatpush.bf16.msra.mxu0 %v4255
  %4430 = vmatpush.bf16.msra.mxu0 %v4253
  %4431 = vmatpush.bf16.msra.mxu0 %v4251
  %4432 = vmatpush.bf16.msra.mxu0 %v4249
  %4433 = vmatpush.bf16.msra.mxu0 %v4247
  %4434 = vmatmul.bf16.gmra.mxu0 %v3980
  %v4435 = vpop.f32.mrf.mxu0
  %v4436 = vadd.f32 %v4051, %v4435
  %v4437 = vpop.f32.mrf.mxu0
  %4438 = vdwg.mxu0
  %4439 = vmatpush.bf16.msra.mxu0 %v4277
  %4440 = vmatpush.bf16.msra.mxu0 %v4275
  %4441 = vmatpush.bf16.msra.mxu0 %v4273
  %4442 = vmatpush.bf16.msra.mxu0 %v4271
  %4443 = vmatpush.bf16.msra.mxu0 %v4269
  %4444 = vmatpush.bf16.msra.mxu0 %v4267
  %4445 = vmatpush.bf16.msra.mxu0 %v4265
  %4446 = vmatpush.bf16.msra.mxu0 %v4263
  %4447 = vmatmul.bf16.gmra.mxu0 %v3981
  %v4448 = vpop.f32.mrf.mxu0
  %v4449 = vadd.f32 %v4436, %v4448
  %v4450 = vpop.f32.mrf.mxu0
  %4451 = vdwg.mxu0
  %4452 = vmatpush.bf16.msra.mxu0 %v4293
  %4453 = vmatpush.bf16.msra.mxu0 %v4291
  %4454 = vmatpush.bf16.msra.mxu0 %v4289
  %4455 = vmatpush.bf16.msra.mxu0 %v4287
  %4456 = vmatpush.bf16.msra.mxu0 %v4285
  %4457 = vmatpush.bf16.msra.mxu0 %v4283
  %4458 = vmatpush.bf16.msra.mxu0 %v4281
  %4459 = vmatpush.bf16.msra.mxu0 %v4279
  %4460 = vmatmul.bf16.gmra.mxu0 %v3982
  %v4461 = vpop.f32.mrf.mxu0
  %v4462 = vadd.f32 %v4449, %v4461
  %v4463 = vpop.f32.mrf.mxu0
  %4464 = vdwg.mxu0
  %4465 = vmatpush.bf16.msra.mxu0 %v4309
  %4466 = vmatpush.bf16.msra.mxu0 %v4307
  %4467 = vmatpush.bf16.msra.mxu0 %v4305
  %4468 = vmatpush.bf16.msra.mxu0 %v4303
  %4469 = vmatpush.bf16.msra.mxu0 %v4301
  %4470 = vmatpush.bf16.msra.mxu0 %v4299
  %4471 = vmatpush.bf16.msra.mxu0 %v4297
  %4472 = vmatpush.bf16.msra.mxu0 %v4295
  %4473 = vmatmul.bf16.gmra.mxu0 %v3983
  %v4474 = vpop.f32.mrf.mxu0
  %v4475 = vadd.f32 %v4462, %v4474
  %v4476 = vpop.f32.mrf.mxu0
  %4477 = vdwg.mxu0
  %v4478 = vmax.f32 %v4423, 0.0
  %v4479 = vmax.f32 %v4475, 0.0
  %v4480 = vpack.c.bf16 %v4478, %v4478
  %v4481 = vpack.c.bf16 %v4479, %v4479
  %v4482 = vld [vmem:[%s7] sm:$0xf]
  %v4483 = vld [vmem:[%s7 + $0x4] sm:$0xf]
  %v4484 = vld [vmem:[%s7 + $0x8] sm:$0xf]
  %v4485 = vld [vmem:[%s7 + $0xc] sm:$0xf]
  %v4486 = vld [vmem:[%s7 + $0x10] sm:$0xf]
  %v4487 = vld [vmem:[%s7 + $0x14] sm:$0xf]
  %v4488 = vld [vmem:[%s7 + $0x18] sm:$0xf]
  %v4489 = vld [vmem:[%s7 + $0x1c] sm:$0xf]
  %v4490 = vld [vmem:[%s7 + $0x20] sm:$0xf]
  %v4491 = vld [vmem:[%s7 + $0x24] sm:$0xf]
  %v4492 = vld [vmem:[%s7 + $0x28] sm:$0xf]
  %v4493 = vld [vmem:[%s7 + $0x2c] sm:$0xf]
  %v4494 = vld [vmem:[%s7 + $0x30] sm:$0xf]
  %v4495 = vld [vmem:[%s7 + $0x34] sm:$0xf]
  %v4496 = vld [vmem:[%s7 + $0x38] sm:$0xf]
  %v4497 = vld [vmem:[%s7 + $0x3c] sm:$0xf]
  %v4498 = vld [vmem:[%s7 + $0x40] sm:$0xf]
  %v4499 = vld [vmem:[%s7 + $0x44] sm:$0xf]
  %v4500 = vld [vmem:[%s7 + $0x48] sm:$0xf]
  %v4501 = vld [vmem:[%s7 + $0x4c] sm:$0xf]
  %v4502 = vld [vmem:[%s7 + $0x50] sm:$0xf]
  %v4503 = vld [vmem:[%s7 + $0x54] sm:$0xf]
  %v4504 = vld [vmem:[%s7 + $0x58] sm:$0xf]
  %v4505 = vld [vmem:[%s7 + $0x5c] sm:$0xf]
  %v4506 = vld [vmem:[%s7 + $0x60] sm:$0xf]
  %v4507 = vld [vmem:[%s7 + $0x64] sm:$0xf]
  %v4508 = vld [vmem:[%s7 + $0x68] sm:$0xf]
  %v4509 = vld [vmem:[%s7 + $0x6c] sm:$0xf]
  %v4510 = vld [vmem:[%s7 + $0x70] sm:$0xf]
  %v4511 = vld [vmem:[%s7 + $0x74] sm:$0xf]
  %v4512 = vld [vmem:[%s7 + $0x78] sm:$0xf]
  %v4513 = vld [vmem:[%s7 + $0x7c] sm:$0xf]
  %v4514 = vld [vmem:[%s8] sm:$0x1]
  %v4516 = vperm.slane %v4514, 0
  %v4550 = vunpack.c.l.b16 %v4482
  %v4551 = vunpack.c.l.b16 %v4483
  %v4552 = vunpack.c.l.b16 %v4484
  %v4553 = vunpack.c.l.b16 %v4485
  %v4554 = vunpack.c.l.b16 %v4486
  %v4555 = vunpack.c.l.b16 %v4487
  %v4556 = vunpack.c.l.b16 %v4488
  %v4557 = vunpack.c.l.b16 %v4489
  %v4558 = vunpack.c.l.b16 %v4490
  %v4559 = vunpack.c.l.b16 %v4491
  %v4560 = vunpack.c.l.b16 %v4492
  %v4561 = vunpack.c.l.b16 %v4493
  %v4562 = vunpack.c.l.b16 %v4494
  %v4563 = vunpack.c.l.b16 %v4495
  %v4564 = vunpack.c.l.b16 %v4496
  %v4565 = vunpack.c.l.b16 %v4497
  %v4566 = vunpack.c.l.b16 %v4498
  %v4567 = vunpack.c.l.b16 %v4499
  %v4568 = vunpack.c.l.b16 %v4500
  %v4569 = vunpack.c.l.b16 %v4501
  %v4570 = vunpack.c.l.b16 %v4502
  %v4571 = vunpack.c.l.b16 %v4503
  %v4572 = vunpack.c.l.b16 %v4504
  %v4573 = vunpack.c.l.b16 %v4505
  %v4574 = vunpack.c.l.b16 %v4506
  %v4575 = vunpack.c.l.b16 %v4507
  %v4576 = vunpack.c.l.b16 %v4508
  %v4577 = vunpack.c.l.b16 %v4509
  %v4578 = vunpack.c.l.b16 %v4510
  %v4579 = vunpack.c.l.b16 %v4511
  %v4580 = vunpack.c.l.b16 %v4512
  %v4581 = vunpack.c.l.b16 %v4513
  %v4582 = vpack.c.b16 %v4551, %v4550
  %v4583 = vpack.c.b16 %v4553, %v4552
  %v4584 = vpack.c.b16 %v4555, %v4554
  %v4585 = vpack.c.b16 %v4557, %v4556
  %v4586 = vpack.c.b16 %v4559, %v4558
  %v4587 = vpack.c.b16 %v4561, %v4560
  %v4588 = vpack.c.b16 %v4563, %v4562
  %v4589 = vpack.c.b16 %v4565, %v4564
  %v4590 = vpack.c.b16 %v4567, %v4566
  %v4591 = vpack.c.b16 %v4569, %v4568
  %v4592 = vpack.c.b16 %v4571, %v4570
  %v4593 = vpack.c.b16 %v4573, %v4572
  %v4594 = vpack.c.b16 %v4575, %v4574
  %v4595 = vpack.c.b16 %v4577, %v4576
  %v4596 = vpack.c.b16 %v4579, %v4578
  %v4597 = vpack.c.b16 %v4581, %v4580
  %4614 = vmatpush.bf16.msra.mxu0 %v4589
  %4615 = vmatpush.bf16.msra.mxu0 %v4588
  %4616 = vmatpush.bf16.msra.mxu0 %v4587
  %4617 = vmatpush.bf16.msra.mxu0 %v4586
  %4618 = vmatpush.bf16.msra.mxu0 %v4585
  %4619 = vmatpush.bf16.msra.mxu0 %v4584
  %4620 = vmatpush.bf16.msra.mxu0 %v4583
  %4621 = vmatpush.bf16.msra.mxu0 %v4582
  %4622 = vmatmul.bf16.gmra.mxu0 %v4480
  %v4623 = vpop.f32.mrf.mxu0
  %v4624 = vadd.f32 %v4516, %v4623
  %v4625 = vpop.f32.mrf.mxu0
  %4626 = vdwg.mxu0
  %4627 = vmatpush.bf16.msra.mxu0 %v4597
  %4628 = vmatpush.bf16.msra.mxu0 %v4596
  %4629 = vmatpush.bf16.msra.mxu0 %v4595
  %4630 = vmatpush.bf16.msra.mxu0 %v4594
  %4631 = vmatpush.bf16.msra.mxu0 %v4593
  %4632 = vmatpush.bf16.msra.mxu0 %v4592
  %4633 = vmatpush.bf16.msra.mxu0 %v4591
  %4634 = vmatpush.bf16.msra.mxu0 %v4590
  %4635 = vmatmul.bf16.gmra.mxu0 %v4481
  %v4636 = vpop.f32.mrf.mxu0
  %v4637 = vadd.f32 %v4624, %v4636
  %v4638 = vpop.f32.mrf.mxu0
  %4639 = vdwg.mxu0
  %vm4640 = vcmask 48128
  %4641 = vst.msk [vmem:[%s9] sm:$0xff] %vm4640, %v4637
  // Predicated region
  $region38: #{dqn_forward.7} parent=0 // pred_check
    _
  $region39: #{dqn_forward.7} parent=0 // pred_check_branch
    %4643 = sbr.rel (0) target = $region41
  $region40: #{dqn_forward.7} parent=0 // pred_region
    _
  $region41: #{dqn_forward.7} parent=0 // pred_fallthru
    _
  // Predicated region
  $region42: #{dqn_forward.7} parent=0 // pred_check
    _
  $region43: #{dqn_forward.7} parent=0 // pred_check_branch
    %4645 = sbr.rel (0) target = $region45
  $region44: #{dqn_forward.7} parent=0 // pred_region
    _
  $region45: #{dqn_forward.7} parent=0 // pred_fallthru
    _

</llo_original>
